<compile_context>
chip_gen: v5e
topology: v5e:2x2
jax: 0.10.0
libtpu: 0.0.40
codegen_flags: <defaults>
</compile_context>

<pallas_src>
import jax
import jax.numpy as jnp
from jax import lax
from jax.experimental import pallas as pl
from jax.experimental.pallas import tpu as pltpu


def _round_up(x, m):
    return (x + m - 1) // m * m


def _make_resblock_kernel(Wp2, R1c, R2):
    """Build the fused residual-block kernel for fixed static geometry.

    Row layouts (all flattened with row width Wp2 = W + 4):
      input  : (R_in, Cp)  padded image, pixel (a, b) at row a*Wp2 + b
      conv1  : rows r = a*Wp2 + b hold conv1 output at original (a-1, b-1);
               after BN+ReLU+mask this IS the zero-padded hidden image.
      conv2  : rows r = i*Wp2 + j hold the final output pixel (i, j), j < W.
    """
    taps = [(ky, kx) for ky in range(3) for kx in range(3)]

    def kernel(mask_ref, xin_ref, w1_ref, s1_ref, b1_ref,
               w2_ref, s2_ref, b2_ref, out_ref, h_ref):
        # ---- conv1: 9 contiguous-span taps, value accumulation on the MXU ----
        acc1 = None
        for ky, kx in taps:
            start = ky * Wp2 + kx                       # static offset
            tap = xin_ref[0, start:start + R1c, :]      # bf16 (R1c, Cp) load
            p = jnp.dot(tap, w1_ref[ky, kx],
                        preferred_element_type=jnp.float32)
            acc1 = p if acc1 is None else acc1 + p

        # Folded BN1 scale/bias + ReLU, then zero the halo rows/columns so the
        # result doubles as conv2's zero-padded input (no hpad restage).
        h = jnp.maximum(acc1 * s1_ref[...] + b1_ref[...], 0.0) * mask_ref[...]
        # TODO(synk): training-mode Dropout2d (whole-channel dropout) not
        # implemented; forward matches eval()/inference semantics (identity).
        h_ref[...] = h.astype(h_ref.dtype)              # single aligned store

        # ---- conv2: same contiguous-span trick over the hidden activation ----
        acc2 = None
        for ky, kx in taps:
            start = ky * Wp2 + kx
            tap = h_ref[start:start + R2, :]            # bf16 (R2, Hcp) load
            p = jnp.dot(tap, w2_ref[ky, kx],
                        preferred_element_type=jnp.float32)
            acc2 = p if acc2 is None else acc2 + p

        # Folded BN2 + residual (identity path) + ReLU.  The residual is a
        # contiguous span: original pixel (i, j) sits at row r + 2*Wp2 + 2.
        res = xin_ref[0, 2 * Wp2 + 2:2 * Wp2 + 2 + R2, :].astype(jnp.float32)
        out = jnp.maximum(acc2 * s2_ref[...] + b2_ref[...] + res, 0.0)
        out_ref[0] = out.astype(out_ref.dtype)

    return kernel


def residual_block(x_nchw, params, *, eps=1e-5):
    """Forward pass of ResidualBlock (inference semantics).  x: (B, C, H, W)."""
    B, C, H, W = x_nchw.shape
    Hc = params["w1"].shape[-1]
    Cp = _round_up(C, 128)
    Hcp = _round_up(Hc, 128)

    Wp2 = W + 4                               # row width of the flattened grids
    Hp2 = H + 4
    R2 = H * Wp2                              # conv2 / output row span
    R1 = (H + 2) * Wp2                        # rows of zero-padded hidden image
    R1c = _round_up(R1 + 2, 8)                # conv1 rows computed (conv2 taps in-bounds)
    R_in = _round_up(2 * Wp2 + 2 + R1c, 8)    # flattened input rows incl. tap overreach

    # NHWC, channel-pad to 128 lanes, 2-pixel spatial halo, flatten rows.
    # bf16 MXU operands (f32 accumulation happens in-kernel).
    x = jnp.transpose(x_nchw, (0, 2, 3, 1)).astype(jnp.float32)
    xp = jnp.pad(x, ((0, 0), (2, 2), (2, 2), (0, Cp - C)))
    x_flat = xp.reshape(B, Hp2 * Wp2, Cp)
    x_flat = jnp.pad(x_flat, ((0, 0), (0, R_in - Hp2 * Wp2), (0, 0)))
    x_flat = x_flat.astype(jnp.bfloat16)

    # Fold conv bias + BatchNorm running stats into per-channel scale/bias:
    # bn(conv(x)+b) = conv(x)*s + ((b - mean)*s + beta),  s = gamma/sqrt(var+eps)
    s1 = params["g1"] / jnp.sqrt(params["v1"] + eps)
    b1 = (params["b1"] - params["m1"]) * s1 + params["beta1"]
    s2 = params["g2"] / jnp.sqrt(params["v2"] + eps)
    b2 = (params["b2"] - params["m2"]) * s2 + params["beta2"]

    w1p = jnp.pad(params["w1"], ((0, 0), (0, 0), (0, Cp - C), (0, Hcp - Hc))
                  ).astype(jnp.bfloat16)
    w2p = jnp.pad(params["w2"], ((0, 0), (0, 0), (0, Hcp - Hc), (0, Cp - C))
                  ).astype(jnp.bfloat16)
    s1p = jnp.pad(s1, (0, Hcp - Hc)).reshape(1, Hcp).astype(jnp.float32)
    b1p = jnp.pad(b1, (0, Hcp - Hc)).reshape(1, Hcp).astype(jnp.float32)
    s2p = jnp.pad(s2, (0, Cp - C)).reshape(1, Cp).astype(jnp.float32)
    b2p = jnp.pad(b2, (0, Cp - C)).reshape(1, Cp).astype(jnp.float32)

    # Row-validity mask: 1 on interior rows (1<=a<=H, 1<=b<=W) of the padded
    # hidden grid, 0 on halo / junk rows.  One VPU multiply in-kernel.
    r = jnp.arange(R1c)
    a_idx = r // Wp2
    b_idx = r % Wp2
    mask = (((a_idx >= 1) & (a_idx <= H) & (b_idx >= 1) & (b_idx <= W))
            .astype(jnp.float32).reshape(R1c, 1))

    # Explicit VMEM budget (double-buffered I/O + weights + scratch + temps)
    # with headroom, instead of relying on the default scoped limit.
    dbl = 2
    vmem_bytes = int(1.5 * (
        dbl * R_in * Cp * 2             # input block (bf16)
        + dbl * R2 * Cp * 4             # output block (f32)
        + dbl * 2 * 9 * Cp * Hcp * 2    # conv1 + conv2 weights (bf16)
        + dbl * R1c * 128 * 4           # mask (lane-padded)
        + R1c * Hcp * 2                 # hidden-activation scratch (bf16)
        + 6 * R1c * max(Cp, Hcp) * 4    # value accumulators / temporaries
    ))
    vmem_bytes = max(vmem_bytes, 8 * 1024 * 1024)
    vmem_bytes = min(vmem_bytes, 100 * 1024 * 1024)

    kernel = _make_resblock_kernel(Wp2, R1c, R2)

    out = pl.pallas_call(
        kernel,
        out_shape=jax.ShapeDtypeStruct((B, R2, Cp), jnp.float32),
        grid_spec=pltpu.PrefetchScalarGridSpec(
            num_scalar_prefetch=0,
            grid=(B,),
            in_specs=[
                pl.BlockSpec((R1c, 1), lambda b: (0, 0)),            # mask
                pl.BlockSpec((1, R_in, Cp), lambda b: (b, 0, 0)),    # input
                pl.BlockSpec((3, 3, Cp, Hcp), lambda b: (0, 0, 0, 0)),
                pl.BlockSpec((1, Hcp), lambda b: (0, 0)),
                pl.BlockSpec((1, Hcp), lambda b: (0, 0)),
                pl.BlockSpec((3, 3, Hcp, Cp), lambda b: (0, 0, 0, 0)),
                pl.BlockSpec((1, Cp), lambda b: (0, 0)),
                pl.BlockSpec((1, Cp), lambda b: (0, 0)),
            ],
            out_specs=pl.BlockSpec((1, R2, Cp), lambda b: (b, 0, 0)),
            scratch_shapes=[pltpu.VMEM((R1c, Hcp), jnp.bfloat16)],
        ),
        compiler_params=pltpu.CompilerParams(
            dimension_semantics=("parallel",),
            vmem_limit_bytes=vmem_bytes),
    )(mask, x_flat, w1p, s1p, b1p, w2p, s2p, b2p)

    # Row r = i*Wp2 + j holds output pixel (i, j); drop junk columns / padded
    # channels and return NCHW.
    out = out.reshape(B, H, Wp2, Cp)[:, :, :W, :C]
    return jnp.transpose(out, (0, 3, 1, 2))


def _reference(x_nchw, params, *, eps=1e-5):
    """Pure-JAX f32 reference mirroring the PyTorch forward (eval mode)."""
    x = jnp.transpose(x_nchw, (0, 2, 3, 1))

    def conv(h, w, b):
        y = lax.conv_general_dilated(h, w, (1, 1), ((1, 1), (1, 1)),
                                     dimension_numbers=("NHWC", "HWIO", "NHWC"))
        return y + b

    def bn(h, g, beta, m, v):
        return (h - m) / jnp.sqrt(v + eps) * g + beta

    h = jax.nn.relu(bn(conv(x, params["w1"], params["b1"]),
                       params["g1"], params["beta1"], params["m1"], params["v1"]))
    o = bn(conv(h, params["w2"], params["b2"]),
           params["g2"], params["beta2"], params["m2"], params["v2"]) + x
    return jnp.transpose(jax.nn.relu(o), (0, 3, 1, 2))


if __name__ == "__main__":
    key = jax.random.PRNGKey(0)
    ks = jax.random.split(key, 13)

    B, C, H, W, HC = 2, 4, 16, 16, 8
    x = jax.random.normal(ks[0], (B, C, H, W), dtype=jnp.float32)

    params = dict(
        w1=0.1 * jax.random.normal(ks[1], (3, 3, C, HC), jnp.float32),
        b1=0.1 * jax.random.normal(ks[2], (HC,), jnp.float32),
        g1=jax.random.uniform(ks[3], (HC,), jnp.float32, 0.5, 1.5),
        beta1=0.1 * jax.random.normal(ks[4], (HC,), jnp.float32),
        m1=0.1 * jax.random.normal(ks[5], (HC,), jnp.float32),
        v1=jax.random.uniform(ks[6], (HC,), jnp.float32, 0.5, 1.5),
        w2=0.1 * jax.random.normal(ks[7], (3, 3, HC, C), jnp.float32),
        b2=0.1 * jax.random.normal(ks[8], (C,), jnp.float32),
        g2=jax.random.uniform(ks[9], (C,), jnp.float32, 0.5, 1.5),
        beta2=0.1 * jax.random.normal(ks[10], (C,), jnp.float32),
        m2=0.1 * jax.random.normal(ks[11], (C,), jnp.float32),
        v2=jax.random.uniform(ks[12], (C,), jnp.float32, 0.5, 1.5),
    )

    out = jax.block_until_ready(residual_block(x, params))
    assert out.shape == (B, C, H, W)

    ref = jax.block_until_ready(_reference(x, params))
    err = float(jnp.max(jnp.abs(out - ref)))
    # bf16 MXU operands (incl. residual path) vs. an f32 reference -> loose tol.
    assert bool(jnp.all(jnp.isfinite(out))) and err < 5e-2, f"max_abs_err={err}"
    print("KERNEL_OK")
</pallas_src>

<mosaic_0001>
module attributes {stable_mosaic.version = 11 : i64} {
  func.func @kernel(%arg0: i32, %arg1: memref<368x1xf32, #tpu.memory_space<vmem>>, %arg2: memref<1x416x128xbf16, #tpu.memory_space<vmem>>, %arg3: memref<3x3x128x128xbf16, #tpu.memory_space<vmem>>, %arg4: memref<1x128xf32, #tpu.memory_space<vmem>>, %arg5: memref<1x128xf32, #tpu.memory_space<vmem>>, %arg6: memref<3x3x128x128xbf16, #tpu.memory_space<vmem>>, %arg7: memref<1x128xf32, #tpu.memory_space<vmem>>, %arg8: memref<1x128xf32, #tpu.memory_space<vmem>>, %arg9: memref<1x320x128xf32, #tpu.memory_space<vmem>>, %arg10: memref<368x128xbf16, #tpu.memory_space<vmem>>) attributes {dimension_semantics = [#tpu.dimension_semantics<parallel>], iteration_bounds = array<i64: 2>, scalar_prefetch = 0 : i64, scratch_operands = 1 : i64, tpu.core_type = #tpu.core_type<tc>, window_params = [{pipeline_mode = #tpu.pipeline_mode<synchronous>, transform_indices = @transform_0, window_bounds = array<i64: 368, 1>}, {transform_indices = @transform_1, window_bounds = array<i64: 1, 416, 128>}, {pipeline_mode = #tpu.pipeline_mode<synchronous>, transform_indices = @transform_2, window_bounds = array<i64: 3, 3, 128, 128>}, {pipeline_mode = #tpu.pipeline_mode<synchronous>, transform_indices = @transform_3, window_bounds = array<i64: 1, 128>}, {pipeline_mode = #tpu.pipeline_mode<synchronous>, transform_indices = @transform_4, window_bounds = array<i64: 1, 128>}, {pipeline_mode = #tpu.pipeline_mode<synchronous>, transform_indices = @transform_5, window_bounds = array<i64: 3, 3, 128, 128>}, {pipeline_mode = #tpu.pipeline_mode<synchronous>, transform_indices = @transform_6, window_bounds = array<i64: 1, 128>}, {pipeline_mode = #tpu.pipeline_mode<synchronous>, transform_indices = @transform_7, window_bounds = array<i64: 1, 128>}, {transform_indices = @transform_8, window_bounds = array<i64: 1, 320, 128>}]} {
    %c0 = arith.constant 0 : index
    %c0_0 = arith.constant 0 : index
    %c0_1 = arith.constant 0 : index
    %0 = vector.load %arg2[%c0, %c0_0, %c0_1] : memref<1x416x128xbf16, #tpu.memory_space<vmem>>, vector<1x368x128xbf16>
    %1 = vector.shape_cast %0 : vector<1x368x128xbf16> to vector<368x128xbf16>
    %c0_2 = arith.constant 0 : index
    %c0_3 = arith.constant 0 : index
    %c0_4 = arith.constant 0 : index
    %c0_5 = arith.constant 0 : index
    %2 = vector.load %arg3[%c0_2, %c0_3, %c0_4, %c0_5] : memref<3x3x128x128xbf16, #tpu.memory_space<vmem>>, vector<1x1x128x128xbf16>
    %3 = vector.shape_cast %2 : vector<1x1x128x128xbf16> to vector<128x128xbf16>
    %cst = arith.constant dense<0.000000e+00> : vector<368x128xf32>
    %4 = tpu.matmul %1, %3, %cst {dimension_numbers = #tpu.dot_dimension_numbers<[1], [0], [0], [1], [0, 0, 1, 1], [], []>} : vector<368x128xbf16>, vector<128x128xbf16>, vector<368x128xf32> -> vector<368x128xf32>
    %c0_6 = arith.constant 0 : index
    %c1 = arith.constant 1 : index
    %c0_7 = arith.constant 0 : index
    %5 = vector.load %arg2[%c0_6, %c1, %c0_7] : memref<1x416x128xbf16, #tpu.memory_space<vmem>>, vector<1x368x128xbf16>
    %6 = vector.shape_cast %5 : vector<1x368x128xbf16> to vector<368x128xbf16>
    %c0_8 = arith.constant 0 : index
    %c1_9 = arith.constant 1 : index
    %c0_10 = arith.constant 0 : index
    %c0_11 = arith.constant 0 : index
    %7 = vector.load %arg3[%c0_8, %c1_9, %c0_10, %c0_11] : memref<3x3x128x128xbf16, #tpu.memory_space<vmem>>, vector<1x1x128x128xbf16>
    %8 = vector.shape_cast %7 : vector<1x1x128x128xbf16> to vector<128x128xbf16>
    %cst_12 = arith.constant dense<0.000000e+00> : vector<368x128xf32>
    %9 = tpu.matmul %6, %8, %cst_12 {dimension_numbers = #tpu.dot_dimension_numbers<[1], [0], [0], [1], [0, 0, 1, 1], [], []>} : vector<368x128xbf16>, vector<128x128xbf16>, vector<368x128xf32> -> vector<368x128xf32>
    %10 = arith.addf %4, %9 : vector<368x128xf32>
    %c0_13 = arith.constant 0 : index
    %c2 = arith.constant 2 : index
    %c0_14 = arith.constant 0 : index
    %11 = vector.load %arg2[%c0_13, %c2, %c0_14] : memref<1x416x128xbf16, #tpu.memory_space<vmem>>, vector<1x368x128xbf16>
    %12 = vector.shape_cast %11 : vector<1x368x128xbf16> to vector<368x128xbf16>
    %c0_15 = arith.constant 0 : index
    %c2_16 = arith.constant 2 : index
    %c0_17 = arith.constant 0 : index
    %c0_18 = arith.constant 0 : index
    %13 = vector.load %arg3[%c0_15, %c2_16, %c0_17, %c0_18] : memref<3x3x128x128xbf16, #tpu.memory_space<vmem>>, vector<1x1x128x128xbf16>
    %14 = vector.shape_cast %13 : vector<1x1x128x128xbf16> to vector<128x128xbf16>
    %cst_19 = arith.constant dense<0.000000e+00> : vector<368x128xf32>
    %15 = tpu.matmul %12, %14, %cst_19 {dimension_numbers = #tpu.dot_dimension_numbers<[1], [0], [0], [1], [0, 0, 1, 1], [], []>} : vector<368x128xbf16>, vector<128x128xbf16>, vector<368x128xf32> -> vector<368x128xf32>
    %16 = arith.addf %10, %15 : vector<368x128xf32>
    %c0_20 = arith.constant 0 : index
    %c20 = arith.constant 20 : index
    %c0_21 = arith.constant 0 : index
    %17 = vector.load %arg2[%c0_20, %c20, %c0_21] : memref<1x416x128xbf16, #tpu.memory_space<vmem>>, vector<1x368x128xbf16>
    %18 = vector.shape_cast %17 : vector<1x368x128xbf16> to vector<368x128xbf16>
    %c1_22 = arith.constant 1 : index
    %c0_23 = arith.constant 0 : index
    %c0_24 = arith.constant 0 : index
    %c0_25 = arith.constant 0 : index
    %19 = vector.load %arg3[%c1_22, %c0_23, %c0_24, %c0_25] : memref<3x3x128x128xbf16, #tpu.memory_space<vmem>>, vector<1x1x128x128xbf16>
    %20 = vector.shape_cast %19 : vector<1x1x128x128xbf16> to vector<128x128xbf16>
    %cst_26 = arith.constant dense<0.000000e+00> : vector<368x128xf32>
    %21 = tpu.matmul %18, %20, %cst_26 {dimension_numbers = #tpu.dot_dimension_numbers<[1], [0], [0], [1], [0, 0, 1, 1], [], []>} : vector<368x128xbf16>, vector<128x128xbf16>, vector<368x128xf32> -> vector<368x128xf32>
    %22 = arith.addf %16, %21 : vector<368x128xf32>
    %c0_27 = arith.constant 0 : index
    %c21 = arith.constant 21 : index
    %c0_28 = arith.constant 0 : index
    %23 = vector.load %arg2[%c0_27, %c21, %c0_28] : memref<1x416x128xbf16, #tpu.memory_space<vmem>>, vector<1x368x128xbf16>
    %24 = vector.shape_cast %23 : vector<1x368x128xbf16> to vector<368x128xbf16>
    %c1_29 = arith.constant 1 : index
    %c1_30 = arith.constant 1 : index
    %c0_31 = arith.constant 0 : index
    %c0_32 = arith.constant 0 : index
    %25 = vector.load %arg3[%c1_29, %c1_30, %c0_31, %c0_32] : memref<3x3x128x128xbf16, #tpu.memory_space<vmem>>, vector<1x1x128x128xbf16>
    %26 = vector.shape_cast %25 : vector<1x1x128x128xbf16> to vector<128x128xbf16>
    %cst_33 = arith.constant dense<0.000000e+00> : vector<368x128xf32>
    %27 = tpu.matmul %24, %26, %cst_33 {dimension_numbers = #tpu.dot_dimension_numbers<[1], [0], [0], [1], [0, 0, 1, 1], [], []>} : vector<368x128xbf16>, vector<128x128xbf16>, vector<368x128xf32> -> vector<368x128xf32>
    %28 = arith.addf %22, %27 : vector<368x128xf32>
    %c0_34 = arith.constant 0 : index
    %c22 = arith.constant 22 : index
    %c0_35 = arith.constant 0 : index
    %29 = vector.load %arg2[%c0_34, %c22, %c0_35] : memref<1x416x128xbf16, #tpu.memory_space<vmem>>, vector<1x368x128xbf16>
    %30 = vector.shape_cast %29 : vector<1x368x128xbf16> to vector<368x128xbf16>
    %c1_36 = arith.constant 1 : index
    %c2_37 = arith.constant 2 : index
    %c0_38 = arith.constant 0 : index
    %c0_39 = arith.constant 0 : index
    %31 = vector.load %arg3[%c1_36, %c2_37, %c0_38, %c0_39] : memref<3x3x128x128xbf16, #tpu.memory_space<vmem>>, vector<1x1x128x128xbf16>
    %32 = vector.shape_cast %31 : vector<1x1x128x128xbf16> to vector<128x128xbf16>
    %cst_40 = arith.constant dense<0.000000e+00> : vector<368x128xf32>
    %33 = tpu.matmul %30, %32, %cst_40 {dimension_numbers = #tpu.dot_dimension_numbers<[1], [0], [0], [1], [0, 0, 1, 1], [], []>} : vector<368x128xbf16>, vector<128x128xbf16>, vector<368x128xf32> -> vector<368x128xf32>
    %34 = arith.addf %28, %33 : vector<368x128xf32>
    %c0_41 = arith.constant 0 : index
    %c40 = arith.constant 40 : index
    %c0_42 = arith.constant 0 : index
    %35 = vector.load %arg2[%c0_41, %c40, %c0_42] : memref<1x416x128xbf16, #tpu.memory_space<vmem>>, vector<1x368x128xbf16>
    %36 = vector.shape_cast %35 : vector<1x368x128xbf16> to vector<368x128xbf16>
    %c2_43 = arith.constant 2 : index
    %c0_44 = arith.constant 0 : index
    %c0_45 = arith.constant 0 : index
    %c0_46 = arith.constant 0 : index
    %37 = vector.load %arg3[%c2_43, %c0_44, %c0_45, %c0_46] : memref<3x3x128x128xbf16, #tpu.memory_space<vmem>>, vector<1x1x128x128xbf16>
    %38 = vector.shape_cast %37 : vector<1x1x128x128xbf16> to vector<128x128xbf16>
    %cst_47 = arith.constant dense<0.000000e+00> : vector<368x128xf32>
    %39 = tpu.matmul %36, %38, %cst_47 {dimension_numbers = #tpu.dot_dimension_numbers<[1], [0], [0], [1], [0, 0, 1, 1], [], []>} : vector<368x128xbf16>, vector<128x128xbf16>, vector<368x128xf32> -> vector<368x128xf32>
    %40 = arith.addf %34, %39 : vector<368x128xf32>
    %c0_48 = arith.constant 0 : index
    %c41 = arith.constant 41 : index
    %c0_49 = arith.constant 0 : index
    %41 = vector.load %arg2[%c0_48, %c41, %c0_49] : memref<1x416x128xbf16, #tpu.memory_space<vmem>>, vector<1x368x128xbf16>
    %42 = vector.shape_cast %41 : vector<1x368x128xbf16> to vector<368x128xbf16>
    %c2_50 = arith.constant 2 : index
    %c1_51 = arith.constant 1 : index
    %c0_52 = arith.constant 0 : index
    %c0_53 = arith.constant 0 : index
    %43 = vector.load %arg3[%c2_50, %c1_51, %c0_52, %c0_53] : memref<3x3x128x128xbf16, #tpu.memory_space<vmem>>, vector<1x1x128x128xbf16>
    %44 = vector.shape_cast %43 : vector<1x1x128x128xbf16> to vector<128x128xbf16>
    %cst_54 = arith.constant dense<0.000000e+00> : vector<368x128xf32>
    %45 = tpu.matmul %42, %44, %cst_54 {dimension_numbers = #tpu.dot_dimension_numbers<[1], [0], [0], [1], [0, 0, 1, 1], [], []>} : vector<368x128xbf16>, vector<128x128xbf16>, vector<368x128xf32> -> vector<368x128xf32>
    %46 = arith.addf %40, %45 : vector<368x128xf32>
    %c0_55 = arith.constant 0 : index
    %c42 = arith.constant 42 : index
    %c0_56 = arith.constant 0 : index
    %47 = vector.load %arg2[%c0_55, %c42, %c0_56] : memref<1x416x128xbf16, #tpu.memory_space<vmem>>, vector<1x368x128xbf16>
    %48 = vector.shape_cast %47 : vector<1x368x128xbf16> to vector<368x128xbf16>
    %c2_57 = arith.constant 2 : index
    %c2_58 = arith.constant 2 : index
    %c0_59 = arith.constant 0 : index
    %c0_60 = arith.constant 0 : index
    %49 = vector.load %arg3[%c2_57, %c2_58, %c0_59, %c0_60] : memref<3x3x128x128xbf16, #tpu.memory_space<vmem>>, vector<1x1x128x128xbf16>
    %50 = vector.shape_cast %49 : vector<1x1x128x128xbf16> to vector<128x128xbf16>
    %cst_61 = arith.constant dense<0.000000e+00> : vector<368x128xf32>
    %51 = tpu.matmul %48, %50, %cst_61 {dimension_numbers = #tpu.dot_dimension_numbers<[1], [0], [0], [1], [0, 0, 1, 1], [], []>} : vector<368x128xbf16>, vector<128x128xbf16>, vector<368x128xf32> -> vector<368x128xf32>
    %52 = arith.addf %46, %51 : vector<368x128xf32>
    %c0_62 = arith.constant 0 : index
    %c0_63 = arith.constant 0 : index
    %53 = vector.load %arg4[%c0_62, %c0_63] : memref<1x128xf32, #tpu.memory_space<vmem>>, vector<1x128xf32>
    %54 = vector.broadcast %53 : vector<1x128xf32> to vector<368x128xf32>
    %55 = arith.mulf %52, %54 : vector<368x128xf32>
    %c0_64 = arith.constant 0 : index
    %c0_65 = arith.constant 0 : index
    %56 = vector.load %arg5[%c0_64, %c0_65] : memref<1x128xf32, #tpu.memory_space<vmem>>, vector<1x128xf32>
    %57 = vector.broadcast %56 : vector<1x128xf32> to vector<368x128xf32>
    %58 = arith.addf %55, %57 : vector<368x128xf32>
    %cst_66 = arith.constant 0.000000e+00 : f32
    %59 = vector.broadcast %cst_66 : f32 to vector<368x128xf32>
    %60 = arith.maximumf %58, %59 : vector<368x128xf32>
    %c0_67 = arith.constant 0 : index
    %c0_68 = arith.constant 0 : index
    %61 = vector.load %arg1[%c0_67, %c0_68] : memref<368x1xf32, #tpu.memory_space<vmem>>, vector<368x1xf32>
    %62 = vector.broadcast %61 : vector<368x1xf32> to vector<368x128xf32>
    %63 = arith.mulf %60, %62 : vector<368x128xf32>
    %64 = arith.truncf %63 : vector<368x128xf32> to vector<368x128xbf16>
    %c0_69 = arith.constant 0 : index
    %c0_70 = arith.constant 0 : index
    %65 = vector.load %arg10[%c0_69, %c0_70] : memref<368x128xbf16, #tpu.memory_space<vmem>>, vector<368x128xbf16>
    tpu.vector_store %arg10[%c0_69, %c0_70], %64 {strides = array<i32>} : memref<368x128xbf16, #tpu.memory_space<vmem>>, vector<368x128xbf16>,
    %c0_71 = arith.constant 0 : index
    %c0_72 = arith.constant 0 : index
    %66 = vector.load %arg10[%c0_71, %c0_72] : memref<368x128xbf16, #tpu.memory_space<vmem>>, vector<320x128xbf16>
    %c0_73 = arith.constant 0 : index
    %c0_74 = arith.constant 0 : index
    %c0_75 = arith.constant 0 : index
    %c0_76 = arith.constant 0 : index
    %67 = vector.load %arg6[%c0_73, %c0_74, %c0_75, %c0_76] : memref<3x3x128x128xbf16, #tpu.memory_space<vmem>>, vector<1x1x128x128xbf16>
    %68 = vector.shape_cast %67 : vector<1x1x128x128xbf16> to vector<128x128xbf16>
    %cst_77 = arith.constant dense<0.000000e+00> : vector<320x128xf32>
    %69 = tpu.matmul %66, %68, %cst_77 {dimension_numbers = #tpu.dot_dimension_numbers<[1], [0], [0], [1], [0, 0, 1, 1], [], []>} : vector<320x128xbf16>, vector<128x128xbf16>, vector<320x128xf32> -> vector<320x128xf32>
    %c1_78 = arith.constant 1 : index
    %c0_79 = arith.constant 0 : index
    %70 = vector.load %arg10[%c1_78, %c0_79] : memref<368x128xbf16, #tpu.memory_space<vmem>>, vector<320x128xbf16>
    %c0_80 = arith.constant 0 : index
    %c1_81 = arith.constant 1 : index
    %c0_82 = arith.constant 0 : index
    %c0_83 = arith.constant 0 : index
    %71 = vector.load %arg6[%c0_80, %c1_81, %c0_82, %c0_83] : memref<3x3x128x128xbf16, #tpu.memory_space<vmem>>, vector<1x1x128x128xbf16>
    %72 = vector.shape_cast %71 : vector<1x1x128x128xbf16> to vector<128x128xbf16>
    %cst_84 = arith.constant dense<0.000000e+00> : vector<320x128xf32>
    %73 = tpu.matmul %70, %72, %cst_84 {dimension_numbers = #tpu.dot_dimension_numbers<[1], [0], [0], [1], [0, 0, 1, 1], [], []>} : vector<320x128xbf16>, vector<128x128xbf16>, vector<320x128xf32> -> vector<320x128xf32>
    %74 = arith.addf %69, %73 : vector<320x128xf32>
    %c2_85 = arith.constant 2 : index
    %c0_86 = arith.constant 0 : index
    %75 = vector.load %arg10[%c2_85, %c0_86] : memref<368x128xbf16, #tpu.memory_space<vmem>>, vector<320x128xbf16>
    %c0_87 = arith.constant 0 : index
    %c2_88 = arith.constant 2 : index
    %c0_89 = arith.constant 0 : index
    %c0_90 = arith.constant 0 : index
    %76 = vector.load %arg6[%c0_87, %c2_88, %c0_89, %c0_90] : memref<3x3x128x128xbf16, #tpu.memory_space<vmem>>, vector<1x1x128x128xbf16>
    %77 = vector.shape_cast %76 : vector<1x1x128x128xbf16> to vector<128x128xbf16>
    %cst_91 = arith.constant dense<0.000000e+00> : vector<320x128xf32>
    %78 = tpu.matmul %75, %77, %cst_91 {dimension_numbers = #tpu.dot_dimension_numbers<[1], [0], [0], [1], [0, 0, 1, 1], [], []>} : vector<320x128xbf16>, vector<128x128xbf16>, vector<320x128xf32> -> vector<320x128xf32>
    %79 = arith.addf %74, %78 : vector<320x128xf32>
    %c20_92 = arith.constant 20 : index
    %c0_93 = arith.constant 0 : index
    %80 = vector.load %arg10[%c20_92, %c0_93] : memref<368x128xbf16, #tpu.memory_space<vmem>>, vector<320x128xbf16>
    %c1_94 = arith.constant 1 : index
    %c0_95 = arith.constant 0 : index
    %c0_96 = arith.constant 0 : index
    %c0_97 = arith.constant 0 : index
    %81 = vector.load %arg6[%c1_94, %c0_95, %c0_96, %c0_97] : memref<3x3x128x128xbf16, #tpu.memory_space<vmem>>, vector<1x1x128x128xbf16>
    %82 = vector.shape_cast %81 : vector<1x1x128x128xbf16> to vector<128x128xbf16>
    %cst_98 = arith.constant dense<0.000000e+00> : vector<320x128xf32>
    %83 = tpu.matmul %80, %82, %cst_98 {dimension_numbers = #tpu.dot_dimension_numbers<[1], [0], [0], [1], [0, 0, 1, 1], [], []>} : vector<320x128xbf16>, vector<128x128xbf16>, vector<320x128xf32> -> vector<320x128xf32>
    %84 = arith.addf %79, %83 : vector<320x128xf32>
    %c21_99 = arith.constant 21 : index
    %c0_100 = arith.constant 0 : index
    %85 = vector.load %arg10[%c21_99, %c0_100] : memref<368x128xbf16, #tpu.memory_space<vmem>>, vector<320x128xbf16>
    %c1_101 = arith.constant 1 : index
    %c1_102 = arith.constant 1 : index
    %c0_103 = arith.constant 0 : index
    %c0_104 = arith.constant 0 : index
    %86 = vector.load %arg6[%c1_101, %c1_102, %c0_103, %c0_104] : memref<3x3x128x128xbf16, #tpu.memory_space<vmem>>, vector<1x1x128x128xbf16>
    %87 = vector.shape_cast %86 : vector<1x1x128x128xbf16> to vector<128x128xbf16>
    %cst_105 = arith.constant dense<0.000000e+00> : vector<320x128xf32>
    %88 = tpu.matmul %85, %87, %cst_105 {dimension_numbers = #tpu.dot_dimension_numbers<[1], [0], [0], [1], [0, 0, 1, 1], [], []>} : vector<320x128xbf16>, vector<128x128xbf16>, vector<320x128xf32> -> vector<320x128xf32>
    %89 = arith.addf %84, %88 : vector<320x128xf32>
    %c22_106 = arith.constant 22 : index
    %c0_107 = arith.constant 0 : index
    %90 = vector.load %arg10[%c22_106, %c0_107] : memref<368x128xbf16, #tpu.memory_space<vmem>>, vector<320x128xbf16>
    %c1_108 = arith.constant 1 : index
    %c2_109 = arith.constant 2 : index
    %c0_110 = arith.constant 0 : index
    %c0_111 = arith.constant 0 : index
    %91 = vector.load %arg6[%c1_108, %c2_109, %c0_110, %c0_111] : memref<3x3x128x128xbf16, #tpu.memory_space<vmem>>, vector<1x1x128x128xbf16>
    %92 = vector.shape_cast %91 : vector<1x1x128x128xbf16> to vector<128x128xbf16>
    %cst_112 = arith.constant dense<0.000000e+00> : vector<320x128xf32>
    %93 = tpu.matmul %90, %92, %cst_112 {dimension_numbers = #tpu.dot_dimension_numbers<[1], [0], [0], [1], [0, 0, 1, 1], [], []>} : vector<320x128xbf16>, vector<128x128xbf16>, vector<320x128xf32> -> vector<320x128xf32>
    %94 = arith.addf %89, %93 : vector<320x128xf32>
    %c40_113 = arith.constant 40 : index
    %c0_114 = arith.constant 0 : index
    %95 = vector.load %arg10[%c40_113, %c0_114] : memref<368x128xbf16, #tpu.memory_space<vmem>>, vector<320x128xbf16>
    %c2_115 = arith.constant 2 : index
    %c0_116 = arith.constant 0 : index
    %c0_117 = arith.constant 0 : index
    %c0_118 = arith.constant 0 : index
    %96 = vector.load %arg6[%c2_115, %c0_116, %c0_117, %c0_118] : memref<3x3x128x128xbf16, #tpu.memory_space<vmem>>, vector<1x1x128x128xbf16>
    %97 = vector.shape_cast %96 : vector<1x1x128x128xbf16> to vector<128x128xbf16>
    %cst_119 = arith.constant dense<0.000000e+00> : vector<320x128xf32>
    %98 = tpu.matmul %95, %97, %cst_119 {dimension_numbers = #tpu.dot_dimension_numbers<[1], [0], [0], [1], [0, 0, 1, 1], [], []>} : vector<320x128xbf16>, vector<128x128xbf16>, vector<320x128xf32> -> vector<320x128xf32>
    %99 = arith.addf %94, %98 : vector<320x128xf32>
    %c41_120 = arith.constant 41 : index
    %c0_121 = arith.constant 0 : index
    %100 = vector.load %arg10[%c41_120, %c0_121] : memref<368x128xbf16, #tpu.memory_space<vmem>>, vector<320x128xbf16>
    %c2_122 = arith.constant 2 : index
    %c1_123 = arith.constant 1 : index
    %c0_124 = arith.constant 0 : index
    %c0_125 = arith.constant 0 : index
    %101 = vector.load %arg6[%c2_122, %c1_123, %c0_124, %c0_125] : memref<3x3x128x128xbf16, #tpu.memory_space<vmem>>, vector<1x1x128x128xbf16>
    %102 = vector.shape_cast %101 : vector<1x1x128x128xbf16> to vector<128x128xbf16>
    %cst_126 = arith.constant dense<0.000000e+00> : vector<320x128xf32>
    %103 = tpu.matmul %100, %102, %cst_126 {dimension_numbers = #tpu.dot_dimension_numbers<[1], [0], [0], [1], [0, 0, 1, 1], [], []>} : vector<320x128xbf16>, vector<128x128xbf16>, vector<320x128xf32> -> vector<320x128xf32>
    %104 = arith.addf %99, %103 : vector<320x128xf32>
    %c42_127 = arith.constant 42 : index
    %c0_128 = arith.constant 0 : index
    %105 = vector.load %arg10[%c42_127, %c0_128] : memref<368x128xbf16, #tpu.memory_space<vmem>>, vector<320x128xbf16>
    %c2_129 = arith.constant 2 : index
    %c2_130 = arith.constant 2 : index
    %c0_131 = arith.constant 0 : index
    %c0_132 = arith.constant 0 : index
    %106 = vector.load %arg6[%c2_129, %c2_130, %c0_131, %c0_132] : memref<3x3x128x128xbf16, #tpu.memory_space<vmem>>, vector<1x1x128x128xbf16>
    %107 = vector.shape_cast %106 : vector<1x1x128x128xbf16> to vector<128x128xbf16>
    %cst_133 = arith.constant dense<0.000000e+00> : vector<320x128xf32>
    %108 = tpu.matmul %105, %107, %cst_133 {dimension_numbers = #tpu.dot_dimension_numbers<[1], [0], [0], [1], [0, 0, 1, 1], [], []>} : vector<320x128xbf16>, vector<128x128xbf16>, vector<320x128xf32> -> vector<320x128xf32>
    %109 = arith.addf %104, %108 : vector<320x128xf32>
    %c0_134 = arith.constant 0 : index
    %c42_135 = arith.constant 42 : index
    %c0_136 = arith.constant 0 : index
    %110 = vector.load %arg2[%c0_134, %c42_135, %c0_136] : memref<1x416x128xbf16, #tpu.memory_space<vmem>>, vector<1x320x128xbf16>
    %111 = vector.shape_cast %110 : vector<1x320x128xbf16> to vector<320x128xbf16>
    %112 = arith.extf %111 : vector<320x128xbf16> to vector<320x128xf32>
    %c0_137 = arith.constant 0 : index
    %c0_138 = arith.constant 0 : index
    %113 = vector.load %arg7[%c0_137, %c0_138] : memref<1x128xf32, #tpu.memory_space<vmem>>, vector<1x128xf32>
    %114 = vector.broadcast %113 : vector<1x128xf32> to vector<320x128xf32>
    %115 = arith.mulf %109, %114 : vector<320x128xf32>
    %c0_139 = arith.constant 0 : index
    %c0_140 = arith.constant 0 : index
    %116 = vector.load %arg8[%c0_139, %c0_140] : memref<1x128xf32, #tpu.memory_space<vmem>>, vector<1x128xf32>
    %117 = vector.broadcast %116 : vector<1x128xf32> to vector<320x128xf32>
    %118 = arith.addf %115, %117 : vector<320x128xf32>
    %119 = arith.addf %118, %112 : vector<320x128xf32>
    %cst_141 = arith.constant 0.000000e+00 : f32
    %120 = vector.broadcast %cst_141 : f32 to vector<320x128xf32>
    %121 = arith.maximumf %119, %120 : vector<320x128xf32>
    %c0_142 = arith.constant 0 : index
    %c0_143 = arith.constant 0 : index
    %c0_144 = arith.constant 0 : index
    %122 = vector.load %arg9[%c0_142, %c0_143, %c0_144] : memref<1x320x128xf32, #tpu.memory_space<vmem>>, vector<1x320x128xf32>
    %123 = vector.shape_cast %122 : vector<1x320x128xf32> to vector<320x128xf32>
    %124 = vector.shape_cast %121 : vector<320x128xf32> to vector<1x320x128xf32>
    tpu.vector_store %arg9[%c0_142, %c0_143, %c0_144], %124 {strides = array<i32>} : memref<1x320x128xf32, #tpu.memory_space<vmem>>, vector<1x320x128xf32>,
    return
  }
  func.func @transform_0(%arg0: i32) -> (i32, i32) {
    %c0_i32 = arith.constant 0 : i32
    %c0_i32_0 = arith.constant 0 : i32
    %c0_i32_1 = arith.constant 0 : i32
    return %c0_i32, %c0_i32_0 : i32, i32
  }
  func.func @transform_1(%arg0: i32) -> (i32, i32, i32) {
    %c0_i32 = arith.constant 0 : i32
    %c0_i32_0 = arith.constant 0 : i32
    %c0_i32_1 = arith.constant 0 : i32
    return %arg0, %c0_i32, %c0_i32_0 : i32, i32, i32
  }
  func.func @transform_2(%arg0: i32) -> (i32, i32, i32, i32) {
    %c0_i32 = arith.constant 0 : i32
    %c0_i32_0 = arith.constant 0 : i32
    %c0_i32_1 = arith.constant 0 : i32
    %c0_i32_2 = arith.constant 0 : i32
    %c0_i32_3 = arith.constant 0 : i32
    return %c0_i32, %c0_i32_0, %c0_i32_1, %c0_i32_2 : i32, i32, i32, i32
  }
  func.func @transform_3(%arg0: i32) -> (i32, i32) {
    %c0_i32 = arith.constant 0 : i32
    %c0_i32_0 = arith.constant 0 : i32
    %c0_i32_1 = arith.constant 0 : i32
    return %c0_i32, %c0_i32_0 : i32, i32
  }
  func.func @transform_4(%arg0: i32) -> (i32, i32) {
    %c0_i32 = arith.constant 0 : i32
    %c0_i32_0 = arith.constant 0 : i32
    %c0_i32_1 = arith.constant 0 : i32
    return %c0_i32, %c0_i32_0 : i32, i32
  }
  func.func @transform_5(%arg0: i32) -> (i32, i32, i32, i32) {
    %c0_i32 = arith.constant 0 : i32
    %c0_i32_0 = arith.constant 0 : i32
    %c0_i32_1 = arith.constant 0 : i32
    %c0_i32_2 = arith.constant 0 : i32
    %c0_i32_3 = arith.constant 0 : i32
    return %c0_i32, %c0_i32_0, %c0_i32_1, %c0_i32_2 : i32, i32, i32, i32
  }
  func.func @transform_6(%arg0: i32) -> (i32, i32) {
    %c0_i32 = arith.constant 0 : i32
    %c0_i32_0 = arith.constant 0 : i32
    %c0_i32_1 = arith.constant 0 : i32
    return %c0_i32, %c0_i32_0 : i32, i32
  }
  func.func @transform_7(%arg0: i32) -> (i32, i32) {
    %c0_i32 = arith.constant 0 : i32
    %c0_i32_0 = arith.constant 0 : i32
    %c0_i32_1 = arith.constant 0 : i32
    return %c0_i32, %c0_i32_0 : i32, i32
  }
  func.func @transform_8(%arg0: i32) -> (i32, i32, i32) {
    %c0_i32 = arith.constant 0 : i32
    %c0_i32_0 = arith.constant 0 : i32
    %c0_i32_1 = arith.constant 0 : i32
    return %arg0, %c0_i32, %c0_i32_0 : i32, i32, i32
  }
}

</mosaic_0001>

<llo_original>
// kernel: tpu_custom_call.1
$region0: #{tpu_custom_call.1}
  #allocation0 [shape = 'u32[]', space=smem, size = 0x4, offset = 0x4, fixed_abs, tag = 'smem constant byte address 0x4 - core index']
  #allocation1 [shape = 'u32[72,128]{1,0:T(1,128)}', space=vmem, size = 0x9000, scoped, tag = 'internal scratch']
  #allocation2 [shape = 'bf16[368,128]{1,0:T(8,128)(2,1)}', space=vmem, size = 0x17000, scoped, tag = 'scratch operand']
  %s0 = inlined_call_operand.vmem [shape: f32[368,1], index: 0, kind: input, shape index: {}]
  %s1 = inlined_call_operand.hbm [shape: bf16[2,416,128], index: 1, kind: input, shape index: {}]
  %s2 = inlined_call_operand.hbm [shape: bf16[3,3,128,128], index: 2, kind: input, shape index: {}]
  %s3 = inlined_call_operand.vmem [shape: f32[1,128], index: 3, kind: input, shape index: {}]
  %s4 = inlined_call_operand.vmem [shape: f32[1,128], index: 4, kind: input, shape index: {}]
  %s5 = inlined_call_operand.hbm [shape: bf16[3,3,128,128], index: 5, kind: input, shape index: {}]
  %s6 = inlined_call_operand.vmem [shape: f32[1,128], index: 6, kind: input, shape index: {}]
  %s7 = inlined_call_operand.vmem [shape: f32[1,128], index: 7, kind: input, shape index: {}]
  %s8 = inlined_call_operand.hbm [shape: f32[2,320,128], index: 8, kind: output, shape index: {}]
  %s9 = sld [smem:[#allocation0]]
  $region77: #{tpu_custom_call.1} parent=0
    _
  %s11 = ssub.s32 1, %s9
  %s12 = scalar_select 0, %s11, %s9
  $region1: #{tpu_custom_call.1} parent=0
    #allocation3 [shape = 'u8[212992]{0}', space=vmem, size = 0x34000, scoped, tag = 'input window, operand 1']
    #allocation4 [shape = 's32[2]{0}', space=sflag, size = 0x8, scoped, tag = 'scoped memory for tpu_custom_call.1']
    #allocation5 [shape = 's32[2]{0}', space=sflag, size = 0x8, scoped, tag = 'scoped memory for tpu_custom_call.1']
    #allocation6 [shape = 'u8[294912]{0}', space=vmem, size = 0x48000, scoped, tag = 'input window, operand 2, single buffered']
    #allocation7 [shape = 's32[1]{0}', space=sflag, size = 0x4, scoped, tag = 'scoped memory for tpu_custom_call.1']
    #allocation8 [shape = 'u8[294912]{0}', space=vmem, size = 0x48000, scoped, tag = 'input window, operand 5, single buffered']
    #allocation9 [shape = 'u8[327680]{0}', space=vmem, size = 0x50000, scoped, tag = 'output window, operand 0']
    %13 = vsyncpa [#allocation4], 0
    %s14 = scalar_lea.sflag [#allocation4], 1
    %15 = vsyncpa %s14, 0
    %16 = vsyncpa [#allocation7], 0
    %17 = vsyncpa [#allocation5], 0
    %s18 = scalar_lea.sflag [#allocation5], 1
    %19 = vsyncpa %s18, 0
    loop: start=0, step=1, limit=4
    $region2: #{tpu_custom_call.1} parent=1 // loop_pre_header
      _
    $region3: #{tpu_custom_call.1} parent=1 // loop_header
      %s21 = sphi 0, %s25
      %p22 = scmp.ge.s32.totalorder %s21, 4
      %s29 = sphi 0, %s29
      %s31 = sphi 0, %s29
      %s32 = sphi 0, %s31
      %s46 = sphi 0, %s32
      %s52 = sphi 0, %s54
      %s55 = sphi 0, %s52
      %s56 = sphi 0, %s55
      %s72 = sphi 0, %s56
      %s76 = sphi 0, %s76
      %s78 = sphi 0, %s76
      %s79 = sphi 0, %s78
      %s93 = sphi 0, %s79
      %s97 = sphi 0, %s97
      %s99 = sphi 0, %s97
      %s100 = sphi 0, %s99
      %s114 = sphi 0, %s100
      %s118 = sphi 0, %s118
      %s120 = sphi 0, %s118
      %s121 = sphi 0, %s120
      %s135 = sphi 0, %s121
      %s139 = sphi 0, %s139
      %s141 = sphi 0, %s139
      %s142 = sphi 0, %s141
      %s156 = sphi 0, %s142
      %s160 = sphi 0, %s160
      %s162 = sphi 0, %s160
      %s163 = sphi 0, %s162
      %s177 = sphi 0, %s163
      %s181 = sphi 0, %s181
      %s183 = sphi 0, %s181
      %s184 = sphi 0, %s183
      %s198 = sphi 0, %s184
      %s204 = sphi 0, %s206
      %s207 = sphi 0, %s204
      %s208 = sphi 0, %s207
      %s224 = sphi 0, %s208
    $region4: #{tpu_custom_call.1} parent=1 // loop_header_branch
      %24 = sbr.rel (%p22) target = $region8
    $region5: #{tpu_custom_call.1} parent=1 // loop_body
      %s26 = ssub.s32 %s21, 1
      %s27 = ssub.s32 %s21, 2
      %s28 = sadd.s32 %s21, 1
      %s30 = sadd.s32 %s29, 1
      %p33 = scmp.eq.s32.totalorder %s21, 1
      %p34 = scmp.ne.s32.totalorder %s29, %s31
      %p35 = scmp.eq.s32.totalorder %s21, 0
      %p36 = por %p34, %p35
      %p37 = scmp.ne.s32.totalorder %s29, %s31
      %p38 = scmp.eq.s32.totalorder %s26, 1
      %p39 = por %p37, %p38
      %p40 = scmp.ne.s32.totalorder %s31, %s32
      %p41 = scmp.eq.s32.totalorder %s26, 0
      %p42 = por %p40, %p41
      %p43 = scmp.ne.s32.totalorder %s31, %s32
      %p44 = scmp.eq.s32.totalorder %s27, 1
      %p45 = por %p43, %p44
      %p47 = scmp.ne.s32.totalorder %s32, %s46
      %p48 = scmp.eq.s32.totalorder %s27, 0
      %p49 = por %p47, %p48
      %s50 = ssub.s32 %s21, %s28
      %p51 = scmp.eq.s32.totalorder %s50, 0
      %s53 = sadd.s32 %s52, 1
      %s54 = scalar_select %p51, %s52, %s53
      %p57 = pneg %p51
      %p58 = scmp.eq.s32.totalorder %s21, 1
      %p59 = por %p57, %p58
      %p60 = scmp.ne.s32.totalorder %s52, %s55
      %p61 = scmp.eq.s32.totalorder %s21, 0
      %p62 = por %p60, %p61
      %p63 = scmp.ne.s32.totalorder %s52, %s55
      %p64 = scmp.eq.s32.totalorder %s26, 1
      %p65 = por %p63, %p64
      %p66 = scmp.ne.s32.totalorder %s55, %s56
      %p67 = scmp.eq.s32.totalorder %s26, 0
      %p68 = por %p66, %p67
      %p69 = scmp.ne.s32.totalorder %s55, %s56
      %p70 = scmp.eq.s32.totalorder %s27, 1
      %p71 = por %p69, %p70
      %p73 = scmp.ne.s32.totalorder %s56, %s72
      %p74 = scmp.eq.s32.totalorder %s27, 0
      %p75 = por %p73, %p74
      %s77 = sadd.s32 %s76, 1
      %p80 = scmp.eq.s32.totalorder %s21, 1
      %p81 = scmp.ne.s32.totalorder %s76, %s78
      %p82 = scmp.eq.s32.totalorder %s21, 0
      %p83 = por %p81, %p82
      %p84 = scmp.ne.s32.totalorder %s76, %s78
      %p85 = scmp.eq.s32.totalorder %s26, 1
      %p86 = por %p84, %p85
      %p87 = scmp.ne.s32.totalorder %s78, %s79
      %p88 = scmp.eq.s32.totalorder %s26, 0
      %p89 = por %p87, %p88
      %p90 = scmp.ne.s32.totalorder %s78, %s79
      %p91 = scmp.eq.s32.totalorder %s27, 1
      %p92 = por %p90, %p91
      %p94 = scmp.ne.s32.totalorder %s79, %s93
      %p95 = scmp.eq.s32.totalorder %s27, 0
      %p96 = por %p94, %p95
      %s98 = sadd.s32 %s97, 1
      %p101 = scmp.eq.s32.totalorder %s21, 1
      %p102 = scmp.ne.s32.totalorder %s97, %s99
      %p103 = scmp.eq.s32.totalorder %s21, 0
      %p104 = por %p102, %p103
      %p105 = scmp.ne.s32.totalorder %s97, %s99
      %p106 = scmp.eq.s32.totalorder %s26, 1
      %p107 = por %p105, %p106
      %p108 = scmp.ne.s32.totalorder %s99, %s100
      %p109 = scmp.eq.s32.totalorder %s26, 0
      %p110 = por %p108, %p109
      %p111 = scmp.ne.s32.totalorder %s99, %s100
      %p112 = scmp.eq.s32.totalorder %s27, 1
      %p113 = por %p111, %p112
      %p115 = scmp.ne.s32.totalorder %s100, %s114
      %p116 = scmp.eq.s32.totalorder %s27, 0
      %p117 = por %p115, %p116
      %s119 = sadd.s32 %s118, 1
      %p122 = scmp.eq.s32.totalorder %s21, 1
      %p123 = scmp.ne.s32.totalorder %s118, %s120
      %p124 = scmp.eq.s32.totalorder %s21, 0
      %p125 = por %p123, %p124
      %p126 = scmp.ne.s32.totalorder %s118, %s120
      %p127 = scmp.eq.s32.totalorder %s26, 1
      %p128 = por %p126, %p127
      %p129 = scmp.ne.s32.totalorder %s120, %s121
      %p130 = scmp.eq.s32.totalorder %s26, 0
      %p131 = por %p129, %p130
      %p132 = scmp.ne.s32.totalorder %s120, %s121
      %p133 = scmp.eq.s32.totalorder %s27, 1
      %p134 = por %p132, %p133
      %p136 = scmp.ne.s32.totalorder %s121, %s135
      %p137 = scmp.eq.s32.totalorder %s27, 0
      %p138 = por %p136, %p137
      %s140 = sadd.s32 %s139, 1
      %p143 = scmp.eq.s32.totalorder %s21, 1
      %p144 = scmp.ne.s32.totalorder %s139, %s141
      %p145 = scmp.eq.s32.totalorder %s21, 0
      %p146 = por %p144, %p145
      %p147 = scmp.ne.s32.totalorder %s139, %s141
      %p148 = scmp.eq.s32.totalorder %s26, 1
      %p149 = por %p147, %p148
      %p150 = scmp.ne.s32.totalorder %s141, %s142
      %p151 = scmp.eq.s32.totalorder %s26, 0
      %p152 = por %p150, %p151
      %p153 = scmp.ne.s32.totalorder %s141, %s142
      %p154 = scmp.eq.s32.totalorder %s27, 1
      %p155 = por %p153, %p154
      %p157 = scmp.ne.s32.totalorder %s142, %s156
      %p158 = scmp.eq.s32.totalorder %s27, 0
      %p159 = por %p157, %p158
      %s161 = sadd.s32 %s160, 1
      %p164 = scmp.eq.s32.totalorder %s21, 1
      %p165 = scmp.ne.s32.totalorder %s160, %s162
      %p166 = scmp.eq.s32.totalorder %s21, 0
      %p167 = por %p165, %p166
      %p168 = scmp.ne.s32.totalorder %s160, %s162
      %p169 = scmp.eq.s32.totalorder %s26, 1
      %p170 = por %p168, %p169
      %p171 = scmp.ne.s32.totalorder %s162, %s163
      %p172 = scmp.eq.s32.totalorder %s26, 0
      %p173 = por %p171, %p172
      %p174 = scmp.ne.s32.totalorder %s162, %s163
      %p175 = scmp.eq.s32.totalorder %s27, 1
      %p176 = por %p174, %p175
      %p178 = scmp.ne.s32.totalorder %s163, %s177
      %p179 = scmp.eq.s32.totalorder %s27, 0
      %p180 = por %p178, %p179
      %s182 = sadd.s32 %s181, 1
      %p185 = scmp.eq.s32.totalorder %s21, 1
      %p186 = scmp.ne.s32.totalorder %s181, %s183
      %p187 = scmp.eq.s32.totalorder %s21, 0
      %p188 = por %p186, %p187
      %p189 = scmp.ne.s32.totalorder %s181, %s183
      %p190 = scmp.eq.s32.totalorder %s26, 1
      %p191 = por %p189, %p190
      %p192 = scmp.ne.s32.totalorder %s183, %s184
      %p193 = scmp.eq.s32.totalorder %s26, 0
      %p194 = por %p192, %p193
      %p195 = scmp.ne.s32.totalorder %s183, %s184
      %p196 = scmp.eq.s32.totalorder %s27, 1
      %p197 = por %p195, %p196
      %p199 = scmp.ne.s32.totalorder %s184, %s198
      %p200 = scmp.eq.s32.totalorder %s27, 0
      %p201 = por %p199, %p200
      %s202 = ssub.s32 %s21, %s28
      %p203 = scmp.eq.s32.totalorder %s202, 0
      %s205 = sadd.s32 %s204, 1
      %s206 = scalar_select %p203, %s204, %s205
      %p209 = pneg %p203
      %p210 = scmp.eq.s32.totalorder %s21, 1
      %p211 = por %p209, %p210
      %p212 = scmp.ne.s32.totalorder %s204, %s207
      %p213 = scmp.eq.s32.totalorder %s21, 0
      %p214 = por %p212, %p213
      %p215 = scmp.ne.s32.totalorder %s204, %s207
      %p216 = scmp.eq.s32.totalorder %s26, 1
      %p217 = por %p215, %p216
      %p218 = scmp.ne.s32.totalorder %s207, %s208
      %p219 = scmp.eq.s32.totalorder %s26, 0
      %p220 = por %p218, %p219
      %p221 = scmp.ne.s32.totalorder %s207, %s208
      %p222 = scmp.eq.s32.totalorder %s27, 1
      %p223 = por %p221, %p222
      %p225 = scmp.ne.s32.totalorder %s208, %s224
      %p226 = scmp.eq.s32.totalorder %s27, 0
      %p227 = por %p225, %p226
      %p228 = scmp.le.s32.totalorder 1, %s21
      %p229 = scmp.lt.s32.totalorder %s21, 3
      %p230 = pnand %p228, %p229
      %p231 = pneg %p230
      // Predicated region
      $region9: #{tpu_custom_call.1} parent=5 // pred_check
        _
      $region10: #{tpu_custom_call.1} parent=5 // pred_check_branch
        %233 = sbr.rel (%p230) target = $region12
      $region11: #{tpu_custom_call.1} parent=5 // pred_region
        %s234 = ssub.s32 %s21, 1
        // Predicated region
        $region13: #{tpu_custom_call.1} parent=11 // pred_check
          %p235 = pneg %p42
        $region14: #{tpu_custom_call.1} parent=11 // pred_check_branch
          %237 = sbr.rel (%p235) target = $region16
        $region15: #{tpu_custom_call.1} parent=11 // pred_region
          _
        $region16: #{tpu_custom_call.1} parent=11 // pred_fallthru
          _
        // Predicated region
        $region17: #{tpu_custom_call.1} parent=11 // pred_check
          %p238 = pneg %p89
        $region18: #{tpu_custom_call.1} parent=11 // pred_check_branch
          %240 = sbr.rel (%p238) target = $region20
        $region19: #{tpu_custom_call.1} parent=11 // pred_region
          %242 = vsyncadd [#allocation7], 0
          %s243 = sshll.u32 %s2, 4
          %s244 = int_to_ptr.hbm [resolvable:$true] %s243
          %s245 = sshll.u32 [#allocation6], 4
          %s246 = int_to_ptr.vmem [resolvable:$true] %s245
          %251 = dma.hbm_to_vmem [thread:$0]  %s244, 9216, %s246, [#allocation7], 64, 64, 4
        $region20: #{tpu_custom_call.1} parent=11 // pred_fallthru
          _
        // Predicated region
        $region21: #{tpu_custom_call.1} parent=11 // pred_check
          %p252 = pneg %p110
        $region22: #{tpu_custom_call.1} parent=11 // pred_check_branch
          %254 = sbr.rel (%p252) target = $region24
        $region23: #{tpu_custom_call.1} parent=11 // pred_region
          _
        $region24: #{tpu_custom_call.1} parent=11 // pred_fallthru
          _
        // Predicated region
        $region25: #{tpu_custom_call.1} parent=11 // pred_check
          %p255 = pneg %p131
        $region26: #{tpu_custom_call.1} parent=11 // pred_check_branch
          %257 = sbr.rel (%p255) target = $region28
        $region27: #{tpu_custom_call.1} parent=11 // pred_region
          _
        $region28: #{tpu_custom_call.1} parent=11 // pred_fallthru
          _
        // Predicated region
        $region29: #{tpu_custom_call.1} parent=11 // pred_check
          %p258 = pneg %p152
        $region30: #{tpu_custom_call.1} parent=11 // pred_check_branch
          %260 = sbr.rel (%p258) target = $region32
        $region31: #{tpu_custom_call.1} parent=11 // pred_region
          %262 = vsyncadd [#allocation7], 0
          %s263 = sshll.u32 %s5, 4
          %s264 = int_to_ptr.hbm [resolvable:$true] %s263
          %s265 = sshll.u32 [#allocation8], 4
          %s266 = int_to_ptr.vmem [resolvable:$true] %s265
          %271 = dma.hbm_to_vmem [thread:$0]  %s264, 9216, %s266, [#allocation7], 64, 64, 4
        $region32: #{tpu_custom_call.1} parent=11 // pred_fallthru
          _
        // Predicated region
        $region33: #{tpu_custom_call.1} parent=11 // pred_check
          %p272 = pneg %p173
        $region34: #{tpu_custom_call.1} parent=11 // pred_check_branch
          %274 = sbr.rel (%p272) target = $region36
        $region35: #{tpu_custom_call.1} parent=11 // pred_region
          _
        $region36: #{tpu_custom_call.1} parent=11 // pred_fallthru
          _
        // Predicated region
        $region37: #{tpu_custom_call.1} parent=11 // pred_check
          %p275 = pneg %p194
        $region38: #{tpu_custom_call.1} parent=11 // pred_check_branch
          %277 = sbr.rel (%p275) target = $region40
        $region39: #{tpu_custom_call.1} parent=11 // pred_region
          _
        $region40: #{tpu_custom_call.1} parent=11 // pred_fallthru
          _
      $region12: #{tpu_custom_call.1} parent=5 // pred_fallthru
        _
      %p278 = scmp.lt.s32.totalorder %s21, 2
      // Predicated region
      $region41: #{tpu_custom_call.1} parent=5 // pred_check
        %p279 = pneg %p278
      $region42: #{tpu_custom_call.1} parent=5 // pred_check_branch
        %281 = sbr.rel (%p279) target = $region44
      $region43: #{tpu_custom_call.1} parent=5 // pred_region
        // Predicated region
        $region45: #{tpu_custom_call.1} parent=43 // pred_check
          %p282 = pneg %p62
        $region46: #{tpu_custom_call.1} parent=43 // pred_check_branch
          %284 = sbr.rel (%p282) target = $region48
        $region47: #{tpu_custom_call.1} parent=43 // pred_region
          %s285 = sand.u32 %s52, 1
          %s286 = scalar_lea.sflag [#allocation4], %s285
          %s287 = sand.u32 %s52, 1
          %s288 = smul.addr %s287, 208
          %s289 = scalar_lea.vmem [#allocation3], %s288
          %291 = vsyncadd %s286, 0
          %s292 = smul.addr %s21, 52
          %s293 = smul.addr %s292, 4
          %s294 = scalar_lea.hbm %s1, %s293
          %s295 = sshll.u32 %s294, 4
          %s296 = int_to_ptr.hbm [resolvable:$true] %s295
          %s297 = sshll.u32 %s289, 4
          %s298 = int_to_ptr.vmem [resolvable:$true] %s297
          %303 = dma.hbm_to_vmem [thread:$0]  %s296, 3328, %s298, %s286, 64, 64, 4
        $region48: #{tpu_custom_call.1} parent=43 // pred_fallthru
          _
      $region44: #{tpu_custom_call.1} parent=5 // pred_fallthru
        _
      %p304 = scmp.le.s32.totalorder 1, %s21
      %p305 = scmp.lt.s32.totalorder %s21, 3
      %p306 = pnand %p304, %p305
      %p307 = pneg %p306
      // Predicated region
      $region49: #{tpu_custom_call.1} parent=5 // pred_check
        _
      $region50: #{tpu_custom_call.1} parent=5 // pred_check_branch
        %309 = sbr.rel (%p306) target = $region52
      $region51: #{tpu_custom_call.1} parent=5 // pred_region
        %s310 = ssub.s32 %s21, 1
        %s311 = sand.u32 %s55, 1
        %s312 = scalar_lea.sflag [#allocation4], %s311
        %s313 = sand.u32 %s55, 1
        %s314 = smul.addr %s313, 208
        %s315 = scalar_lea.vmem [#allocation3], %s314
        // Predicated region
        $region53: #{tpu_custom_call.1} parent=51 // pred_check
          %p316 = pneg %p68
        $region54: #{tpu_custom_call.1} parent=51 // pred_check_branch
          %318 = sbr.rel (%p316) target = $region56
        $region55: #{tpu_custom_call.1} parent=51 // pred_region
          %320 = dma.done %s312, 3328
        $region56: #{tpu_custom_call.1} parent=51 // pred_fallthru
          _
        // Predicated region
        $region57: #{tpu_custom_call.1} parent=51 // pred_check
          %p321 = pneg %p89
        $region58: #{tpu_custom_call.1} parent=51 // pred_check_branch
          %323 = sbr.rel (%p321) target = $region60
        $region59: #{tpu_custom_call.1} parent=51 // pred_region
          %325 = dma.done [#allocation7], 9216
        $region60: #{tpu_custom_call.1} parent=51 // pred_fallthru
          _
        // Predicated region
        $region61: #{tpu_custom_call.1} parent=51 // pred_check
          %p326 = pneg %p152
        $region62: #{tpu_custom_call.1} parent=51 // pred_check_branch
          %328 = sbr.rel (%p326) target = $region64
        $region63: #{tpu_custom_call.1} parent=51 // pred_region
          %330 = dma.done [#allocation7], 9216
        $region64: #{tpu_custom_call.1} parent=51 // pred_fallthru
          _
        %p331 = pneg %p42
        %p332 = pneg %p39
        %s333 = sand.u32 %s55, 1
        %s334 = scalar_lea.sflag [#allocation4], %s333
        %s335 = sand.u32 %s55, 1
        %s336 = smul.addr %s335, 208
        %s337 = scalar_lea.vmem [#allocation3], %s336
        %p338 = pneg %p68
        %p339 = pneg %p65
        %p340 = pneg %p89
        %p341 = pneg %p86
        %p342 = pneg %p110
        %p343 = pneg %p107
        %p344 = pneg %p131
        %p345 = pneg %p128
        %p346 = pneg %p152
        %p347 = pneg %p149
        %p348 = pneg %p173
        %p349 = pneg %p170
        %p350 = pneg %p194
        %p351 = pneg %p191
        %p352 = pneg %p220
        %p353 = pneg %p217
        %s354 = sand.u32 %s207, 1
        %s355 = scalar_lea.sflag [#allocation5], %s354
        %s356 = sand.u32 %s207, 1
        %s357 = smul.addr %s356, 320
        %s358 = scalar_lea.vmem [#allocation9], %s357
        %v359 = vld [vmem:[%s315] sm:$0xf]
        %v360 = vld [vmem:[%s315 + $0x4] sm:$0xf]
        %v361 = vld [vmem:[%s315 + $0x8] sm:$0xf]
        %v362 = vld [vmem:[%s315 + $0xc] sm:$0xf]
        %v363 = vld [vmem:[%s315 + $0x10] sm:$0xf]
        %v364 = vld [vmem:[%s315 + $0x14] sm:$0xf]
        %v365 = vld [vmem:[%s315 + $0x18] sm:$0xf]
        %v366 = vld [vmem:[%s315 + $0x1c] sm:$0xf]
        %v367 = vld [vmem:[%s315 + $0x20] sm:$0xf]
        %v368 = vld [vmem:[%s315 + $0x24] sm:$0xf]
        %v369 = vld [vmem:[%s315 + $0x28] sm:$0xf]
        %v370 = vld [vmem:[%s315 + $0x2c] sm:$0xf]
        %v371 = vld [vmem:[%s315 + $0x30] sm:$0xf]
        %v372 = vld [vmem:[%s315 + $0x34] sm:$0xf]
        %v373 = vld [vmem:[%s315 + $0x38] sm:$0xf]
        %v374 = vld [vmem:[%s315 + $0x3c] sm:$0xf]
        %v375 = vld [vmem:[%s315 + $0x40] sm:$0xf]
        %v376 = vld [vmem:[%s315 + $0x44] sm:$0xf]
        %v377 = vld [vmem:[%s315 + $0x48] sm:$0xf]
        %v378 = vld [vmem:[%s315 + $0x4c] sm:$0xf]
        %v379 = vld [vmem:[%s315 + $0x50] sm:$0xf]
        %v380 = vld [vmem:[%s315 + $0x54] sm:$0xf]
        %v381 = vld [vmem:[%s315 + $0x58] sm:$0xf]
        %v382 = vld [vmem:[%s315 + $0x5c] sm:$0xf]
        %v383 = vld [vmem:[%s315 + $0x60] sm:$0xf]
        %v384 = vld [vmem:[%s315 + $0x64] sm:$0xf]
        %v385 = vld [vmem:[%s315 + $0x68] sm:$0xf]
        %v386 = vld [vmem:[%s315 + $0x6c] sm:$0xf]
        %v387 = vld [vmem:[%s315 + $0x70] sm:$0xf]
        %v388 = vld [vmem:[%s315 + $0x74] sm:$0xf]
        %v389 = vld [vmem:[%s315 + $0x78] sm:$0xf]
        %v390 = vld [vmem:[%s315 + $0x7c] sm:$0xf]
        %v391 = vld [vmem:[%s315 + $0x80] sm:$0xf]
        %v392 = vld [vmem:[%s315 + $0x84] sm:$0xf]
        %v393 = vld [vmem:[%s315 + $0x88] sm:$0xf]
        %v394 = vld [vmem:[%s315 + $0x8c] sm:$0xf]
        %v395 = vld [vmem:[%s315 + $0x90] sm:$0xf]
        %v396 = vld [vmem:[%s315 + $0x94] sm:$0xf]
        %v397 = vld [vmem:[%s315 + $0x98] sm:$0xf]
        %v398 = vld [vmem:[%s315 + $0x9c] sm:$0xf]
        %v399 = vld [vmem:[%s315 + $0xa0] sm:$0xf]
        %v400 = vld [vmem:[%s315 + $0xa4] sm:$0xf]
        %v401 = vld [vmem:[%s315 + $0xa8] sm:$0xf]
        %v402 = vld [vmem:[%s315 + $0xac] sm:$0xf]
        %v403 = vld [vmem:[%s315 + $0xb0] sm:$0xf]
        %v404 = vld [vmem:[%s315 + $0xb4] sm:$0xf]
        %v405 = vld [vmem:[#allocation6] sm:$0xf]
        %v406 = vld [vmem:[#allocation6 + $0x4] sm:$0xf]
        %v407 = vld [vmem:[#allocation6 + $0x8] sm:$0xf]
        %v408 = vld [vmem:[#allocation6 + $0xc] sm:$0xf]
        %v409 = vld [vmem:[#allocation6 + $0x10] sm:$0xf]
        %v410 = vld [vmem:[#allocation6 + $0x14] sm:$0xf]
        %v411 = vld [vmem:[#allocation6 + $0x18] sm:$0xf]
        %v412 = vld [vmem:[#allocation6 + $0x1c] sm:$0xf]
        %v413 = vld [vmem:[#allocation6 + $0x20] sm:$0xf]
        %v414 = vld [vmem:[#allocation6 + $0x24] sm:$0xf]
        %v415 = vld [vmem:[#allocation6 + $0x28] sm:$0xf]
        %v416 = vld [vmem:[#allocation6 + $0x2c] sm:$0xf]
        %v417 = vld [vmem:[#allocation6 + $0x30] sm:$0xf]
        %v418 = vld [vmem:[#allocation6 + $0x34] sm:$0xf]
        %v419 = vld [vmem:[#allocation6 + $0x38] sm:$0xf]
        %v420 = vld [vmem:[#allocation6 + $0x3c] sm:$0xf]
        %v421 = vld [vmem:[%s315 + $0xb8] sm:$0x1]
        %s422 = scalar_lea.vmem [#allocation6], 64
        %v423 = vld [vmem:[%s422] sm:$0xf]
        %v424 = vld [vmem:[%s422 + $0x4] sm:$0xf]
        %v425 = vld [vmem:[%s422 + $0x8] sm:$0xf]
        %v426 = vld [vmem:[%s422 + $0xc] sm:$0xf]
        %v427 = vld [vmem:[%s422 + $0x10] sm:$0xf]
        %v428 = vld [vmem:[%s422 + $0x14] sm:$0xf]
        %v429 = vld [vmem:[%s422 + $0x18] sm:$0xf]
        %v430 = vld [vmem:[%s422 + $0x1c] sm:$0xf]
        %v431 = vld [vmem:[%s422 + $0x20] sm:$0xf]
        %v432 = vld [vmem:[%s422 + $0x24] sm:$0xf]
        %v433 = vld [vmem:[%s422 + $0x28] sm:$0xf]
        %v434 = vld [vmem:[%s422 + $0x2c] sm:$0xf]
        %v435 = vld [vmem:[%s422 + $0x30] sm:$0xf]
        %v436 = vld [vmem:[%s422 + $0x34] sm:$0xf]
        %v437 = vld [vmem:[%s422 + $0x38] sm:$0xf]
        %v438 = vld [vmem:[%s422 + $0x3c] sm:$0xf]
        %v486 = vunpack.c.l.b16 %v359
        %v487 = vunpack.c.l.b16 %v360
        %v488 = vunpack.c.l.b16 %v361
        %v489 = vunpack.c.l.b16 %v362
        %v490 = vunpack.c.l.b16 %v363
        %v491 = vunpack.c.l.b16 %v364
        %v492 = vunpack.c.l.b16 %v365
        %v493 = vunpack.c.l.b16 %v366
        %v494 = vunpack.c.l.b16 %v367
        %v495 = vunpack.c.l.b16 %v368
        %v496 = vunpack.c.l.b16 %v369
        %v497 = vunpack.c.l.b16 %v370
        %v498 = vunpack.c.l.b16 %v371
        %v499 = vunpack.c.l.b16 %v372
        %v500 = vunpack.c.l.b16 %v373
        %v501 = vunpack.c.l.b16 %v374
        %v502 = vunpack.c.l.b16 %v375
        %v503 = vunpack.c.l.b16 %v376
        %v504 = vunpack.c.l.b16 %v377
        %v505 = vunpack.c.l.b16 %v378
        %v506 = vunpack.c.l.b16 %v379
        %v507 = vunpack.c.l.b16 %v380
        %v508 = vunpack.c.l.b16 %v381
        %v509 = vunpack.c.l.b16 %v382
        %v510 = vunpack.c.l.b16 %v383
        %v511 = vunpack.c.l.b16 %v384
        %v512 = vunpack.c.l.b16 %v385
        %v513 = vunpack.c.l.b16 %v386
        %v514 = vunpack.c.l.b16 %v387
        %v515 = vunpack.c.l.b16 %v388
        %v516 = vunpack.c.l.b16 %v389
        %v517 = vunpack.c.l.b16 %v390
        %v518 = vunpack.c.l.b16 %v391
        %v519 = vunpack.c.l.b16 %v392
        %v520 = vunpack.c.l.b16 %v393
        %v521 = vunpack.c.l.b16 %v394
        %v522 = vunpack.c.l.b16 %v395
        %v523 = vunpack.c.l.b16 %v396
        %v524 = vunpack.c.l.b16 %v397
        %v525 = vunpack.c.l.b16 %v398
        %v526 = vunpack.c.l.b16 %v399
        %v527 = vunpack.c.l.b16 %v400
        %v528 = vunpack.c.l.b16 %v401
        %v529 = vunpack.c.l.b16 %v402
        %v530 = vunpack.c.l.b16 %v403
        %v531 = vunpack.c.l.b16 %v404
        %v532 = vunpack.c.l.b16 %v421
        %v533 = vpack.c.b16 %v487, %v486
        %v534 = vpack.c.b16 %v489, %v488
        %v535 = vpack.c.b16 %v491, %v490
        %v536 = vpack.c.b16 %v493, %v492
        %v537 = vpack.c.b16 %v495, %v494
        %v538 = vpack.c.b16 %v497, %v496
        %v539 = vpack.c.b16 %v499, %v498
        %v540 = vpack.c.b16 %v501, %v500
        %v541 = vpack.c.b16 %v503, %v502
        %v542 = vpack.c.b16 %v505, %v504
        %v543 = vpack.c.b16 %v507, %v506
        %v544 = vpack.c.b16 %v509, %v508
        %v545 = vpack.c.b16 %v511, %v510
        %v546 = vpack.c.b16 %v513, %v512
        %v547 = vpack.c.b16 %v515, %v514
        %v548 = vpack.c.b16 %v517, %v516
        %v549 = vpack.c.b16 %v519, %v518
        %v550 = vpack.c.b16 %v521, %v520
        %v551 = vpack.c.b16 %v523, %v522
        %v552 = vpack.c.b16 %v525, %v524
        %v553 = vpack.c.b16 %v527, %v526
        %v554 = vpack.c.b16 %v529, %v528
        %v555 = vpack.c.b16 %v531, %v530
        %v556 = vpack.c.b16 %v532, %v532
        %vm557 = vsmask.f32 7424
        %v559 = vshrl.u32 %v533, 16
        %v561 = vshll.u32 %v533, 16
        %v563 = vrot.slane %v561, 1
        %v564 = vor.u32 %v559, %v563
        %v566 = vshll.u32 %v534, 16
        %v568 = vrot.slane %v566, 1
        %v569 = vsel %vm557, %v564, %v568
        %v570 = vshrl.u32 %v534, 16
        %v572 = vor.u32 %v570, %v568
        %v574 = vshll.u32 %v535, 16
        %v576 = vrot.slane %v574, 1
        %v577 = vsel %vm557, %v572, %v576
        %v578 = vshrl.u32 %v535, 16
        %v580 = vor.u32 %v578, %v576
        %v582 = vshll.u32 %v536, 16
        %v584 = vrot.slane %v582, 1
        %v585 = vsel %vm557, %v580, %v584
        %v586 = vshrl.u32 %v536, 16
        %v588 = vor.u32 %v586, %v584
        %v590 = vshll.u32 %v537, 16
        %v592 = vrot.slane %v590, 1
        %v593 = vsel %vm557, %v588, %v592
        %v594 = vshrl.u32 %v537, 16
        %v596 = vor.u32 %v594, %v592
        %v598 = vshll.u32 %v538, 16
        %v600 = vrot.slane %v598, 1
        %v601 = vsel %vm557, %v596, %v600
        %v602 = vshrl.u32 %v538, 16
        %v604 = vor.u32 %v602, %v600
        %v606 = vshll.u32 %v539, 16
        %v608 = vrot.slane %v606, 1
        %v609 = vsel %vm557, %v604, %v608
        %v610 = vshrl.u32 %v539, 16
        %v612 = vor.u32 %v610, %v608
        %v614 = vshll.u32 %v540, 16
        %v616 = vrot.slane %v614, 1
        %v617 = vsel %vm557, %v612, %v616
        %v618 = vshrl.u32 %v540, 16
        %v620 = vor.u32 %v618, %v616
        %v622 = vshll.u32 %v541, 16
        %v624 = vrot.slane %v622, 1
        %v625 = vsel %vm557, %v620, %v624
        %v626 = vshrl.u32 %v541, 16
        %v628 = vor.u32 %v626, %v624
        %v630 = vshll.u32 %v542, 16
        %v632 = vrot.slane %v630, 1
        %v633 = vsel %vm557, %v628, %v632
        %v634 = vshrl.u32 %v542, 16
        %v636 = vor.u32 %v634, %v632
        %v638 = vshll.u32 %v543, 16
        %v640 = vrot.slane %v638, 1
        %v641 = vsel %vm557, %v636, %v640
        %v642 = vshrl.u32 %v543, 16
        %v644 = vor.u32 %v642, %v640
        %v646 = vshll.u32 %v544, 16
        %v648 = vrot.slane %v646, 1
        %v649 = vsel %vm557, %v644, %v648
        %v650 = vshrl.u32 %v544, 16
        %v652 = vor.u32 %v650, %v648
        %v654 = vshll.u32 %v545, 16
        %v656 = vrot.slane %v654, 1
        %v657 = vsel %vm557, %v652, %v656
        %v658 = vshrl.u32 %v545, 16
        %v660 = vor.u32 %v658, %v656
        %v662 = vshll.u32 %v546, 16
        %v664 = vrot.slane %v662, 1
        %v665 = vsel %vm557, %v660, %v664
        %v666 = vshrl.u32 %v546, 16
        %v668 = vor.u32 %v666, %v664
        %v670 = vshll.u32 %v547, 16
        %v672 = vrot.slane %v670, 1
        %v673 = vsel %vm557, %v668, %v672
        %v674 = vshrl.u32 %v547, 16
        %v676 = vor.u32 %v674, %v672
        %v678 = vshll.u32 %v548, 16
        %v680 = vrot.slane %v678, 1
        %v681 = vsel %vm557, %v676, %v680
        %v682 = vshrl.u32 %v548, 16
        %v684 = vor.u32 %v682, %v680
        %v686 = vshll.u32 %v549, 16
        %v688 = vrot.slane %v686, 1
        %v689 = vsel %vm557, %v684, %v688
        %v690 = vshrl.u32 %v549, 16
        %v692 = vor.u32 %v690, %v688
        %v694 = vshll.u32 %v550, 16
        %v696 = vrot.slane %v694, 1
        %v697 = vsel %vm557, %v692, %v696
        %v698 = vshrl.u32 %v550, 16
        %v700 = vor.u32 %v698, %v696
        %v702 = vshll.u32 %v551, 16
        %v704 = vrot.slane %v702, 1
        %v705 = vsel %vm557, %v700, %v704
        %v706 = vshrl.u32 %v551, 16
        %v708 = vor.u32 %v706, %v704
        %v710 = vshll.u32 %v552, 16
        %v712 = vrot.slane %v710, 1
        %v713 = vsel %vm557, %v708, %v712
        %v714 = vshrl.u32 %v552, 16
        %v716 = vor.u32 %v714, %v712
        %v718 = vshll.u32 %v553, 16
        %v720 = vrot.slane %v718, 1
        %v721 = vsel %vm557, %v716, %v720
        %v722 = vshrl.u32 %v553, 16
        %v724 = vor.u32 %v722, %v720
        %v726 = vshll.u32 %v554, 16
        %v728 = vrot.slane %v726, 1
        %v729 = vsel %vm557, %v724, %v728
        %v730 = vshrl.u32 %v554, 16
        %v732 = vor.u32 %v730, %v728
        %v734 = vshll.u32 %v555, 16
        %v736 = vrot.slane %v734, 1
        %v737 = vsel %vm557, %v732, %v736
        %v738 = vshrl.u32 %v555, 16
        %v740 = vor.u32 %v738, %v736
        %v742 = vshll.u32 %v556, 16
        %v744 = vrot.slane %v742, 1
        %v745 = vsel %vm557, %v740, %v744
        %v785 = vunpack.c.l.b16 %v423
        %v786 = vunpack.c.l.b16 %v424
        %v787 = vunpack.c.l.b16 %v425
        %v788 = vunpack.c.l.b16 %v426
        %v789 = vunpack.c.l.b16 %v427
        %v790 = vunpack.c.l.b16 %v428
        %v791 = vunpack.c.l.b16 %v429
        %v792 = vunpack.c.l.b16 %v430
        %v793 = vunpack.c.l.b16 %v431
        %v794 = vunpack.c.l.b16 %v432
        %v795 = vunpack.c.l.b16 %v433
        %v796 = vunpack.c.l.b16 %v434
        %v797 = vunpack.c.l.b16 %v435
        %v798 = vunpack.c.l.b16 %v436
        %v799 = vunpack.c.l.b16 %v437
        %v800 = vunpack.c.l.b16 %v438
        %v801 = vpack.c.b16 %v786, %v785
        %v802 = vpack.c.b16 %v788, %v787
        %v803 = vpack.c.b16 %v790, %v789
        %v804 = vpack.c.b16 %v792, %v791
        %v805 = vpack.c.b16 %v794, %v793
        %v806 = vpack.c.b16 %v796, %v795
        %v807 = vpack.c.b16 %v798, %v797
        %v808 = vpack.c.b16 %v800, %v799
        %817 = vmatpush.bf16.msra.mxu0 %v808
        %818 = vmatpush.bf16.msra.mxu0 %v807
        %819 = vmatpush.bf16.msra.mxu0 %v806
        %820 = vmatpush.bf16.msra.mxu0 %v805
        %821 = vmatpush.bf16.msra.mxu0 %v804
        %822 = vmatpush.bf16.msra.mxu0 %v803
        %823 = vmatpush.bf16.msra.mxu0 %v802
        %824 = vmatpush.bf16.msra.mxu0 %v801
        %825 = vmatmul.bf16.gmra.mxu0 %v569
        %v826 = vpop.f32.mrf.mxu0
        %v827 = vadd.f32 0.0, %v826
        %v828 = vpop.f32.mrf.mxu0
        %v829 = vadd.f32 0.0, %v828
        %830 = vmatmul.bf16.gmra.mxu0 %v577
        %v831 = vpop.f32.mrf.mxu0
        %v832 = vadd.f32 0.0, %v831
        %v833 = vpop.f32.mrf.mxu0
        %v834 = vadd.f32 0.0, %v833
        %835 = vmatmul.bf16.gmra.mxu0 %v585
        %v836 = vpop.f32.mrf.mxu0
        %v837 = vadd.f32 0.0, %v836
        %v838 = vpop.f32.mrf.mxu0
        %v839 = vadd.f32 0.0, %v838
        %840 = vmatmul.bf16.gmra.mxu0 %v593
        %v841 = vpop.f32.mrf.mxu0
        %v842 = vadd.f32 0.0, %v841
        %v843 = vpop.f32.mrf.mxu0
        %v844 = vadd.f32 0.0, %v843
        %845 = vmatmul.bf16.gmra.mxu0 %v601
        %v846 = vpop.f32.mrf.mxu0
        %v847 = vadd.f32 0.0, %v846
        %v848 = vpop.f32.mrf.mxu0
        %v849 = vadd.f32 0.0, %v848
        %850 = vmatmul.bf16.gmra.mxu0 %v609
        %v851 = vpop.f32.mrf.mxu0
        %v852 = vadd.f32 0.0, %v851
        %v853 = vpop.f32.mrf.mxu0
        %v854 = vadd.f32 0.0, %v853
        %855 = vmatmul.bf16.gmra.mxu0 %v617
        %v856 = vpop.f32.mrf.mxu0
        %v857 = vadd.f32 0.0, %v856
        %v858 = vpop.f32.mrf.mxu0
        %v859 = vadd.f32 0.0, %v858
        %860 = vmatmul.bf16.gmra.mxu0 %v625
        %v861 = vpop.f32.mrf.mxu0
        %v862 = vadd.f32 0.0, %v861
        %v863 = vpop.f32.mrf.mxu0
        %v864 = vadd.f32 0.0, %v863
        %865 = vmatmul.bf16.gmra.mxu0 %v633
        %v866 = vpop.f32.mrf.mxu0
        %v867 = vadd.f32 0.0, %v866
        %v868 = vpop.f32.mrf.mxu0
        %v869 = vadd.f32 0.0, %v868
        %870 = vmatmul.bf16.gmra.mxu0 %v641
        %v871 = vpop.f32.mrf.mxu0
        %v872 = vadd.f32 0.0, %v871
        %v873 = vpop.f32.mrf.mxu0
        %v874 = vadd.f32 0.0, %v873
        %875 = vmatmul.bf16.gmra.mxu0 %v649
        %v876 = vpop.f32.mrf.mxu0
        %v877 = vadd.f32 0.0, %v876
        %v878 = vpop.f32.mrf.mxu0
        %v879 = vadd.f32 0.0, %v878
        %880 = vmatmul.bf16.gmra.mxu0 %v657
        %v881 = vpop.f32.mrf.mxu0
        %v882 = vadd.f32 0.0, %v881
        %v883 = vpop.f32.mrf.mxu0
        %v884 = vadd.f32 0.0, %v883
        %885 = vmatmul.bf16.gmra.mxu0 %v665
        %v886 = vpop.f32.mrf.mxu0
        %v887 = vadd.f32 0.0, %v886
        %v888 = vpop.f32.mrf.mxu0
        %v889 = vadd.f32 0.0, %v888
        %890 = vmatmul.bf16.gmra.mxu0 %v673
        %v891 = vpop.f32.mrf.mxu0
        %v892 = vadd.f32 0.0, %v891
        %v893 = vpop.f32.mrf.mxu0
        %v894 = vadd.f32 0.0, %v893
        %895 = vmatmul.bf16.gmra.mxu0 %v681
        %v896 = vpop.f32.mrf.mxu0
        %v897 = vadd.f32 0.0, %v896
        %v898 = vpop.f32.mrf.mxu0
        %v899 = vadd.f32 0.0, %v898
        %900 = vmatmul.bf16.gmra.mxu0 %v689
        %v901 = vpop.f32.mrf.mxu0
        %v902 = vadd.f32 0.0, %v901
        %v903 = vpop.f32.mrf.mxu0
        %v904 = vadd.f32 0.0, %v903
        %905 = vmatmul.bf16.gmra.mxu0 %v697
        %v906 = vpop.f32.mrf.mxu0
        %v907 = vadd.f32 0.0, %v906
        %v908 = vpop.f32.mrf.mxu0
        %v909 = vadd.f32 0.0, %v908
        %910 = vmatmul.bf16.gmra.mxu0 %v705
        %v911 = vpop.f32.mrf.mxu0
        %v912 = vadd.f32 0.0, %v911
        %v913 = vpop.f32.mrf.mxu0
        %v914 = vadd.f32 0.0, %v913
        %915 = vmatmul.bf16.gmra.mxu0 %v713
        %v916 = vpop.f32.mrf.mxu0
        %v917 = vadd.f32 0.0, %v916
        %v918 = vpop.f32.mrf.mxu0
        %v919 = vadd.f32 0.0, %v918
        %920 = vmatmul.bf16.gmra.mxu0 %v721
        %v921 = vpop.f32.mrf.mxu0
        %v922 = vadd.f32 0.0, %v921
        %v923 = vpop.f32.mrf.mxu0
        %v924 = vadd.f32 0.0, %v923
        %925 = vmatmul.bf16.gmra.mxu0 %v729
        %v926 = vpop.f32.mrf.mxu0
        %v927 = vadd.f32 0.0, %v926
        %v928 = vpop.f32.mrf.mxu0
        %v929 = vadd.f32 0.0, %v928
        %930 = vmatmul.bf16.gmra.mxu0 %v737
        %v931 = vpop.f32.mrf.mxu0
        %v932 = vadd.f32 0.0, %v931
        %v933 = vpop.f32.mrf.mxu0
        %v934 = vadd.f32 0.0, %v933
        %935 = vmatmul.bf16.gmra.mxu0 %v745
        %v936 = vpop.f32.mrf.mxu0
        %v937 = vadd.f32 0.0, %v936
        %v938 = vpop.f32.mrf.mxu0
        %v939 = vadd.f32 0.0, %v938
        %940 = vdwg.mxu0
        %v980 = vunpack.c.l.b16 %v405
        %v981 = vunpack.c.l.b16 %v406
        %v982 = vunpack.c.l.b16 %v407
        %v983 = vunpack.c.l.b16 %v408
        %v984 = vunpack.c.l.b16 %v409
        %v985 = vunpack.c.l.b16 %v410
        %v986 = vunpack.c.l.b16 %v411
        %v987 = vunpack.c.l.b16 %v412
        %v988 = vunpack.c.l.b16 %v413
        %v989 = vunpack.c.l.b16 %v414
        %v990 = vunpack.c.l.b16 %v415
        %v991 = vunpack.c.l.b16 %v416
        %v992 = vunpack.c.l.b16 %v417
        %v993 = vunpack.c.l.b16 %v418
        %v994 = vunpack.c.l.b16 %v419
        %v995 = vunpack.c.l.b16 %v420
        %v996 = vpack.c.b16 %v981, %v980
        %v997 = vpack.c.b16 %v983, %v982
        %v998 = vpack.c.b16 %v985, %v984
        %v999 = vpack.c.b16 %v987, %v986
        %v1000 = vpack.c.b16 %v989, %v988
        %v1001 = vpack.c.b16 %v991, %v990
        %v1002 = vpack.c.b16 %v993, %v992
        %v1003 = vpack.c.b16 %v995, %v994
        %1012 = vmatpush.bf16.msra.mxu0 %v1003
        %1013 = vmatpush.bf16.msra.mxu0 %v1002
        %1014 = vmatpush.bf16.msra.mxu0 %v1001
        %1015 = vmatpush.bf16.msra.mxu0 %v1000
        %1016 = vmatpush.bf16.msra.mxu0 %v999
        %1017 = vmatpush.bf16.msra.mxu0 %v998
        %1018 = vmatpush.bf16.msra.mxu0 %v997
        %1019 = vmatpush.bf16.msra.mxu0 %v996
        %1020 = vmatmul.bf16.gmra.mxu0 %v533
        %v1021 = vpop.f32.mrf.mxu0
        %v1022 = vadd.f32 %v827, %v1021
        %v1023 = vpop.f32.mrf.mxu0
        %v1024 = vadd.f32 %v829, %v1023
        %1025 = vmatmul.bf16.gmra.mxu0 %v534
        %v1026 = vpop.f32.mrf.mxu0
        %v1027 = vadd.f32 %v832, %v1026
        %v1028 = vpop.f32.mrf.mxu0
        %v1029 = vadd.f32 %v834, %v1028
        %1030 = vmatmul.bf16.gmra.mxu0 %v535
        %v1031 = vpop.f32.mrf.mxu0
        %v1032 = vadd.f32 %v837, %v1031
        %v1033 = vpop.f32.mrf.mxu0
        %v1034 = vadd.f32 %v839, %v1033
        %1035 = vmatmul.bf16.gmra.mxu0 %v536
        %v1036 = vpop.f32.mrf.mxu0
        %v1037 = vadd.f32 %v842, %v1036
        %v1038 = vpop.f32.mrf.mxu0
        %v1039 = vadd.f32 %v844, %v1038
        %1040 = vmatmul.bf16.gmra.mxu0 %v537
        %v1041 = vpop.f32.mrf.mxu0
        %v1042 = vadd.f32 %v847, %v1041
        %v1043 = vpop.f32.mrf.mxu0
        %v1044 = vadd.f32 %v849, %v1043
        %1045 = vmatmul.bf16.gmra.mxu0 %v538
        %v1046 = vpop.f32.mrf.mxu0
        %v1047 = vadd.f32 %v852, %v1046
        %v1048 = vpop.f32.mrf.mxu0
        %v1049 = vadd.f32 %v854, %v1048
        %1050 = vmatmul.bf16.gmra.mxu0 %v539
        %v1051 = vpop.f32.mrf.mxu0
        %v1052 = vadd.f32 %v857, %v1051
        %v1053 = vpop.f32.mrf.mxu0
        %v1054 = vadd.f32 %v859, %v1053
        %1055 = vmatmul.bf16.gmra.mxu0 %v540
        %v1056 = vpop.f32.mrf.mxu0
        %v1057 = vadd.f32 %v862, %v1056
        %v1058 = vpop.f32.mrf.mxu0
        %v1059 = vadd.f32 %v864, %v1058
        %1060 = vmatmul.bf16.gmra.mxu0 %v541
        %v1061 = vpop.f32.mrf.mxu0
        %v1062 = vadd.f32 %v867, %v1061
        %v1063 = vpop.f32.mrf.mxu0
        %v1064 = vadd.f32 %v869, %v1063
        %1065 = vmatmul.bf16.gmra.mxu0 %v542
        %v1066 = vpop.f32.mrf.mxu0
        %v1067 = vadd.f32 %v872, %v1066
        %v1068 = vpop.f32.mrf.mxu0
        %v1069 = vadd.f32 %v874, %v1068
        %1070 = vmatmul.bf16.gmra.mxu0 %v543
        %v1071 = vpop.f32.mrf.mxu0
        %v1072 = vadd.f32 %v877, %v1071
        %v1073 = vpop.f32.mrf.mxu0
        %v1074 = vadd.f32 %v879, %v1073
        %1075 = vmatmul.bf16.gmra.mxu0 %v544
        %v1076 = vpop.f32.mrf.mxu0
        %v1077 = vadd.f32 %v882, %v1076
        %v1078 = vpop.f32.mrf.mxu0
        %v1079 = vadd.f32 %v884, %v1078
        %1080 = vmatmul.bf16.gmra.mxu0 %v545
        %v1081 = vpop.f32.mrf.mxu0
        %v1082 = vadd.f32 %v887, %v1081
        %v1083 = vpop.f32.mrf.mxu0
        %v1084 = vadd.f32 %v889, %v1083
        %1085 = vmatmul.bf16.gmra.mxu0 %v546
        %v1086 = vpop.f32.mrf.mxu0
        %v1087 = vadd.f32 %v892, %v1086
        %v1088 = vpop.f32.mrf.mxu0
        %v1089 = vadd.f32 %v894, %v1088
        %1090 = vmatmul.bf16.gmra.mxu0 %v547
        %v1091 = vpop.f32.mrf.mxu0
        %v1092 = vadd.f32 %v897, %v1091
        %v1093 = vpop.f32.mrf.mxu0
        %v1094 = vadd.f32 %v899, %v1093
        %1095 = vmatmul.bf16.gmra.mxu0 %v548
        %v1096 = vpop.f32.mrf.mxu0
        %v1097 = vadd.f32 %v902, %v1096
        %v1098 = vpop.f32.mrf.mxu0
        %v1099 = vadd.f32 %v904, %v1098
        %1100 = vmatmul.bf16.gmra.mxu0 %v549
        %v1101 = vpop.f32.mrf.mxu0
        %v1102 = vadd.f32 %v907, %v1101
        %v1103 = vpop.f32.mrf.mxu0
        %v1104 = vadd.f32 %v909, %v1103
        %1105 = vmatmul.bf16.gmra.mxu0 %v550
        %v1106 = vpop.f32.mrf.mxu0
        %v1107 = vadd.f32 %v912, %v1106
        %v1108 = vpop.f32.mrf.mxu0
        %v1109 = vadd.f32 %v914, %v1108
        %1110 = vmatmul.bf16.gmra.mxu0 %v551
        %v1111 = vpop.f32.mrf.mxu0
        %v1112 = vadd.f32 %v917, %v1111
        %v1113 = vpop.f32.mrf.mxu0
        %v1114 = vadd.f32 %v919, %v1113
        %1115 = vmatmul.bf16.gmra.mxu0 %v552
        %v1116 = vpop.f32.mrf.mxu0
        %v1117 = vadd.f32 %v922, %v1116
        %v1118 = vpop.f32.mrf.mxu0
        %v1119 = vadd.f32 %v924, %v1118
        %1120 = vmatmul.bf16.gmra.mxu0 %v553
        %v1121 = vpop.f32.mrf.mxu0
        %v1122 = vadd.f32 %v927, %v1121
        %v1123 = vpop.f32.mrf.mxu0
        %v1124 = vadd.f32 %v929, %v1123
        %1125 = vmatmul.bf16.gmra.mxu0 %v554
        %v1126 = vpop.f32.mrf.mxu0
        %v1127 = vadd.f32 %v932, %v1126
        %v1128 = vpop.f32.mrf.mxu0
        %v1129 = vadd.f32 %v934, %v1128
        %1130 = vmatmul.bf16.gmra.mxu0 %v555
        %v1131 = vpop.f32.mrf.mxu0
        %v1132 = vadd.f32 %v937, %v1131
        %v1133 = vpop.f32.mrf.mxu0
        %v1134 = vadd.f32 %v939, %v1133
        %1135 = vdwg.mxu0
        %v1136 = vld [vmem:[%s315] sm:$0xe]
        %s1137 = scalar_lea.vmem [#allocation6], 128
        %v1138 = vld [vmem:[%s1137] sm:$0xf]
        %v1139 = vld [vmem:[%s1137 + $0x4] sm:$0xf]
        %v1140 = vld [vmem:[%s1137 + $0x8] sm:$0xf]
        %v1141 = vld [vmem:[%s1137 + $0xc] sm:$0xf]
        %v1142 = vld [vmem:[%s1137 + $0x10] sm:$0xf]
        %v1143 = vld [vmem:[%s1137 + $0x14] sm:$0xf]
        %v1144 = vld [vmem:[%s1137 + $0x18] sm:$0xf]
        %v1145 = vld [vmem:[%s1137 + $0x1c] sm:$0xf]
        %v1146 = vld [vmem:[%s1137 + $0x20] sm:$0xf]
        %v1147 = vld [vmem:[%s1137 + $0x24] sm:$0xf]
        %v1148 = vld [vmem:[%s1137 + $0x28] sm:$0xf]
        %v1149 = vld [vmem:[%s1137 + $0x2c] sm:$0xf]
        %v1150 = vld [vmem:[%s1137 + $0x30] sm:$0xf]
        %v1151 = vld [vmem:[%s1137 + $0x34] sm:$0xf]
        %v1152 = vld [vmem:[%s1137 + $0x38] sm:$0xf]
        %v1153 = vld [vmem:[%s1137 + $0x3c] sm:$0xf]
        %v1155 = vunpack.c.l.b16 %v1136
        %v1156 = vpack.c.b16 %v487, %v1155
        %vm1157 = vcmask 1046528
        %v1158 = vrot.slane %v1156, 1
        %v1159 = vrot.slane %v534, 1
        %v1160 = vsel %vm1157, %v1158, %v1159
        %v1161 = vrot.slane %v535, 1
        %v1162 = vsel %vm1157, %v1159, %v1161
        %v1163 = vrot.slane %v536, 1
        %v1164 = vsel %vm1157, %v1161, %v1163
        %v1165 = vrot.slane %v537, 1
        %v1166 = vsel %vm1157, %v1163, %v1165
        %v1167 = vrot.slane %v538, 1
        %v1168 = vsel %vm1157, %v1165, %v1167
        %v1169 = vrot.slane %v539, 1
        %v1170 = vsel %vm1157, %v1167, %v1169
        %v1171 = vrot.slane %v540, 1
        %v1172 = vsel %vm1157, %v1169, %v1171
        %v1173 = vrot.slane %v541, 1
        %v1174 = vsel %vm1157, %v1171, %v1173
        %v1175 = vrot.slane %v542, 1
        %v1176 = vsel %vm1157, %v1173, %v1175
        %v1177 = vrot.slane %v543, 1
        %v1178 = vsel %vm1157, %v1175, %v1177
        %v1179 = vrot.slane %v544, 1
        %v1180 = vsel %vm1157, %v1177, %v1179
        %v1181 = vrot.slane %v545, 1
        %v1182 = vsel %vm1157, %v1179, %v1181
        %v1183 = vrot.slane %v546, 1
        %v1184 = vsel %vm1157, %v1181, %v1183
        %v1185 = vrot.slane %v547, 1
        %v1186 = vsel %vm1157, %v1183, %v1185
        %v1187 = vrot.slane %v548, 1
        %v1188 = vsel %vm1157, %v1185, %v1187
        %v1189 = vrot.slane %v549, 1
        %v1190 = vsel %vm1157, %v1187, %v1189
        %v1191 = vrot.slane %v550, 1
        %v1192 = vsel %vm1157, %v1189, %v1191
        %v1193 = vrot.slane %v551, 1
        %v1194 = vsel %vm1157, %v1191, %v1193
        %v1195 = vrot.slane %v552, 1
        %v1196 = vsel %vm1157, %v1193, %v1195
        %v1197 = vrot.slane %v553, 1
        %v1198 = vsel %vm1157, %v1195, %v1197
        %v1199 = vrot.slane %v554, 1
        %v1200 = vsel %vm1157, %v1197, %v1199
        %v1201 = vrot.slane %v555, 1
        %v1202 = vsel %vm1157, %v1199, %v1201
        %v1203 = vrot.slane %v556, 1
        %v1204 = vsel %vm1157, %v1201, %v1203
        %v1244 = vunpack.c.l.b16 %v1138
        %v1245 = vunpack.c.l.b16 %v1139
        %v1246 = vunpack.c.l.b16 %v1140
        %v1247 = vunpack.c.l.b16 %v1141
        %v1248 = vunpack.c.l.b16 %v1142
        %v1249 = vunpack.c.l.b16 %v1143
        %v1250 = vunpack.c.l.b16 %v1144
        %v1251 = vunpack.c.l.b16 %v1145
        %v1252 = vunpack.c.l.b16 %v1146
        %v1253 = vunpack.c.l.b16 %v1147
        %v1254 = vunpack.c.l.b16 %v1148
        %v1255 = vunpack.c.l.b16 %v1149
        %v1256 = vunpack.c.l.b16 %v1150
        %v1257 = vunpack.c.l.b16 %v1151
        %v1258 = vunpack.c.l.b16 %v1152
        %v1259 = vunpack.c.l.b16 %v1153
        %v1260 = vpack.c.b16 %v1245, %v1244
        %v1261 = vpack.c.b16 %v1247, %v1246
        %v1262 = vpack.c.b16 %v1249, %v1248
        %v1263 = vpack.c.b16 %v1251, %v1250
        %v1264 = vpack.c.b16 %v1253, %v1252
        %v1265 = vpack.c.b16 %v1255, %v1254
        %v1266 = vpack.c.b16 %v1257, %v1256
        %v1267 = vpack.c.b16 %v1259, %v1258
        %1276 = vmatpush.bf16.msra.mxu0 %v1267
        %1277 = vmatpush.bf16.msra.mxu0 %v1266
        %1278 = vmatpush.bf16.msra.mxu0 %v1265
        %1279 = vmatpush.bf16.msra.mxu0 %v1264
        %1280 = vmatpush.bf16.msra.mxu0 %v1263
        %1281 = vmatpush.bf16.msra.mxu0 %v1262
        %1282 = vmatpush.bf16.msra.mxu0 %v1261
        %1283 = vmatpush.bf16.msra.mxu0 %v1260
        %1284 = vmatmul.bf16.gmra.mxu0 %v1160
        %v1285 = vpop.f32.mrf.mxu0
        %v1286 = vadd.f32 0.0, %v1285
        %v1287 = vpop.f32.mrf.mxu0
        %v1288 = vadd.f32 0.0, %v1287
        %1289 = vmatmul.bf16.gmra.mxu0 %v1162
        %v1290 = vpop.f32.mrf.mxu0
        %v1291 = vadd.f32 0.0, %v1290
        %v1292 = vpop.f32.mrf.mxu0
        %v1293 = vadd.f32 0.0, %v1292
        %1294 = vmatmul.bf16.gmra.mxu0 %v1164
        %v1295 = vpop.f32.mrf.mxu0
        %v1296 = vadd.f32 0.0, %v1295
        %v1297 = vpop.f32.mrf.mxu0
        %v1298 = vadd.f32 0.0, %v1297
        %1299 = vmatmul.bf16.gmra.mxu0 %v1166
        %v1300 = vpop.f32.mrf.mxu0
        %v1301 = vadd.f32 0.0, %v1300
        %v1302 = vpop.f32.mrf.mxu0
        %v1303 = vadd.f32 0.0, %v1302
        %1304 = vmatmul.bf16.gmra.mxu0 %v1168
        %v1305 = vpop.f32.mrf.mxu0
        %v1306 = vadd.f32 0.0, %v1305
        %v1307 = vpop.f32.mrf.mxu0
        %v1308 = vadd.f32 0.0, %v1307
        %1309 = vmatmul.bf16.gmra.mxu0 %v1170
        %v1310 = vpop.f32.mrf.mxu0
        %v1311 = vadd.f32 0.0, %v1310
        %v1312 = vpop.f32.mrf.mxu0
        %v1313 = vadd.f32 0.0, %v1312
        %1314 = vmatmul.bf16.gmra.mxu0 %v1172
        %v1315 = vpop.f32.mrf.mxu0
        %v1316 = vadd.f32 0.0, %v1315
        %v1317 = vpop.f32.mrf.mxu0
        %v1318 = vadd.f32 0.0, %v1317
        %1319 = vmatmul.bf16.gmra.mxu0 %v1174
        %v1320 = vpop.f32.mrf.mxu0
        %v1321 = vadd.f32 0.0, %v1320
        %v1322 = vpop.f32.mrf.mxu0
        %v1323 = vadd.f32 0.0, %v1322
        %1324 = vmatmul.bf16.gmra.mxu0 %v1176
        %v1325 = vpop.f32.mrf.mxu0
        %v1326 = vadd.f32 0.0, %v1325
        %v1327 = vpop.f32.mrf.mxu0
        %v1328 = vadd.f32 0.0, %v1327
        %1329 = vmatmul.bf16.gmra.mxu0 %v1178
        %v1330 = vpop.f32.mrf.mxu0
        %v1331 = vadd.f32 0.0, %v1330
        %v1332 = vpop.f32.mrf.mxu0
        %v1333 = vadd.f32 0.0, %v1332
        %1334 = vmatmul.bf16.gmra.mxu0 %v1180
        %v1335 = vpop.f32.mrf.mxu0
        %v1336 = vadd.f32 0.0, %v1335
        %v1337 = vpop.f32.mrf.mxu0
        %v1338 = vadd.f32 0.0, %v1337
        %1339 = vmatmul.bf16.gmra.mxu0 %v1182
        %v1340 = vpop.f32.mrf.mxu0
        %v1341 = vadd.f32 0.0, %v1340
        %v1342 = vpop.f32.mrf.mxu0
        %v1343 = vadd.f32 0.0, %v1342
        %1344 = vmatmul.bf16.gmra.mxu0 %v1184
        %v1345 = vpop.f32.mrf.mxu0
        %v1346 = vadd.f32 0.0, %v1345
        %v1347 = vpop.f32.mrf.mxu0
        %v1348 = vadd.f32 0.0, %v1347
        %1349 = vmatmul.bf16.gmra.mxu0 %v1186
        %v1350 = vpop.f32.mrf.mxu0
        %v1351 = vadd.f32 0.0, %v1350
        %v1352 = vpop.f32.mrf.mxu0
        %v1353 = vadd.f32 0.0, %v1352
        %1354 = vmatmul.bf16.gmra.mxu0 %v1188
        %v1355 = vpop.f32.mrf.mxu0
        %v1356 = vadd.f32 0.0, %v1355
        %v1357 = vpop.f32.mrf.mxu0
        %v1358 = vadd.f32 0.0, %v1357
        %1359 = vmatmul.bf16.gmra.mxu0 %v1190
        %v1360 = vpop.f32.mrf.mxu0
        %v1361 = vadd.f32 0.0, %v1360
        %v1362 = vpop.f32.mrf.mxu0
        %v1363 = vadd.f32 0.0, %v1362
        %1364 = vmatmul.bf16.gmra.mxu0 %v1192
        %v1365 = vpop.f32.mrf.mxu0
        %v1366 = vadd.f32 0.0, %v1365
        %v1367 = vpop.f32.mrf.mxu0
        %v1368 = vadd.f32 0.0, %v1367
        %1369 = vmatmul.bf16.gmra.mxu0 %v1194
        %v1370 = vpop.f32.mrf.mxu0
        %v1371 = vadd.f32 0.0, %v1370
        %v1372 = vpop.f32.mrf.mxu0
        %v1373 = vadd.f32 0.0, %v1372
        %1374 = vmatmul.bf16.gmra.mxu0 %v1196
        %v1375 = vpop.f32.mrf.mxu0
        %v1376 = vadd.f32 0.0, %v1375
        %v1377 = vpop.f32.mrf.mxu0
        %v1378 = vadd.f32 0.0, %v1377
        %1379 = vmatmul.bf16.gmra.mxu0 %v1198
        %v1380 = vpop.f32.mrf.mxu0
        %v1381 = vadd.f32 0.0, %v1380
        %v1382 = vpop.f32.mrf.mxu0
        %v1383 = vadd.f32 0.0, %v1382
        %1384 = vmatmul.bf16.gmra.mxu0 %v1200
        %v1385 = vpop.f32.mrf.mxu0
        %v1386 = vadd.f32 0.0, %v1385
        %v1387 = vpop.f32.mrf.mxu0
        %v1388 = vadd.f32 0.0, %v1387
        %1389 = vmatmul.bf16.gmra.mxu0 %v1202
        %v1390 = vpop.f32.mrf.mxu0
        %v1391 = vadd.f32 0.0, %v1390
        %v1392 = vpop.f32.mrf.mxu0
        %v1393 = vadd.f32 0.0, %v1392
        %1394 = vmatmul.bf16.gmra.mxu0 %v1204
        %v1395 = vpop.f32.mrf.mxu0
        %v1396 = vadd.f32 0.0, %v1395
        %v1397 = vpop.f32.mrf.mxu0
        %v1398 = vadd.f32 0.0, %v1397
        %1399 = vdwg.mxu0
        %v1400 = vadd.f32 %v1022, %v1286
        %v1401 = vadd.f32 %v1024, %v1288
        %v1402 = vadd.f32 %v1027, %v1291
        %v1403 = vadd.f32 %v1029, %v1293
        %v1404 = vadd.f32 %v1032, %v1296
        %v1405 = vadd.f32 %v1034, %v1298
        %v1406 = vadd.f32 %v1037, %v1301
        %v1407 = vadd.f32 %v1039, %v1303
        %v1408 = vadd.f32 %v1042, %v1306
        %v1409 = vadd.f32 %v1044, %v1308
        %v1410 = vadd.f32 %v1047, %v1311
        %v1411 = vadd.f32 %v1049, %v1313
        %v1412 = vadd.f32 %v1052, %v1316
        %v1413 = vadd.f32 %v1054, %v1318
        %v1414 = vadd.f32 %v1057, %v1321
        %v1415 = vadd.f32 %v1059, %v1323
        %v1416 = vadd.f32 %v1062, %v1326
        %v1417 = vadd.f32 %v1064, %v1328
        %v1418 = vadd.f32 %v1067, %v1331
        %v1419 = vadd.f32 %v1069, %v1333
        %v1420 = vadd.f32 %v1072, %v1336
        %v1421 = vadd.f32 %v1074, %v1338
        %v1422 = vadd.f32 %v1077, %v1341
        %v1423 = vadd.f32 %v1079, %v1343
        %v1424 = vadd.f32 %v1082, %v1346
        %v1425 = vadd.f32 %v1084, %v1348
        %v1426 = vadd.f32 %v1087, %v1351
        %v1427 = vadd.f32 %v1089, %v1353
        %v1428 = vadd.f32 %v1092, %v1356
        %v1429 = vadd.f32 %v1094, %v1358
        %v1430 = vadd.f32 %v1097, %v1361
        %v1431 = vadd.f32 %v1099, %v1363
        %v1432 = vadd.f32 %v1102, %v1366
        %v1433 = vadd.f32 %v1104, %v1368
        %v1434 = vadd.f32 %v1107, %v1371
        %v1435 = vadd.f32 %v1109, %v1373
        %v1436 = vadd.f32 %v1112, %v1376
        %v1437 = vadd.f32 %v1114, %v1378
        %v1438 = vadd.f32 %v1117, %v1381
        %v1439 = vadd.f32 %v1119, %v1383
        %v1440 = vadd.f32 %v1122, %v1386
        %v1441 = vadd.f32 %v1124, %v1388
        %v1442 = vadd.f32 %v1127, %v1391
        %v1443 = vadd.f32 %v1129, %v1393
        %v1444 = vadd.f32 %v1132, %v1396
        %v1445 = vadd.f32 %v1134, %v1398
        %v1446 = vld [vmem:[%s315 + $0x8] sm:$0xc]
        %v1447 = vld [vmem:[%s315 + $0xc] sm:$0xf]
        %v1448 = vld [vmem:[%s315 + $0x10] sm:$0xf]
        %v1449 = vld [vmem:[%s315 + $0x14] sm:$0xf]
        %v1450 = vld [vmem:[%s315 + $0x18] sm:$0xf]
        %v1451 = vld [vmem:[%s315 + $0x1c] sm:$0xf]
        %v1452 = vld [vmem:[%s315 + $0x20] sm:$0xf]
        %v1453 = vld [vmem:[%s315 + $0x24] sm:$0xf]
        %v1454 = vld [vmem:[%s315 + $0x28] sm:$0xf]
        %v1455 = vld [vmem:[%s315 + $0x2c] sm:$0xf]
        %v1456 = vld [vmem:[%s315 + $0x30] sm:$0xf]
        %v1457 = vld [vmem:[%s315 + $0x34] sm:$0xf]
        %v1458 = vld [vmem:[%s315 + $0x38] sm:$0xf]
        %v1459 = vld [vmem:[%s315 + $0x3c] sm:$0xf]
        %v1460 = vld [vmem:[%s315 + $0x40] sm:$0xf]
        %v1461 = vld [vmem:[%s315 + $0x44] sm:$0xf]
        %v1462 = vld [vmem:[%s315 + $0x48] sm:$0xf]
        %v1463 = vld [vmem:[%s315 + $0x4c] sm:$0xf]
        %v1464 = vld [vmem:[%s315 + $0x50] sm:$0xf]
        %v1465 = vld [vmem:[%s315 + $0x54] sm:$0xf]
        %v1466 = vld [vmem:[%s315 + $0x58] sm:$0xf]
        %v1467 = vld [vmem:[%s315 + $0x5c] sm:$0xf]
        %v1468 = vld [vmem:[%s315 + $0x60] sm:$0xf]
        %v1469 = vld [vmem:[%s315 + $0x64] sm:$0xf]
        %v1470 = vld [vmem:[%s315 + $0x68] sm:$0xf]
        %v1471 = vld [vmem:[%s315 + $0x6c] sm:$0xf]
        %v1472 = vld [vmem:[%s315 + $0x70] sm:$0xf]
        %v1473 = vld [vmem:[%s315 + $0x74] sm:$0xf]
        %v1474 = vld [vmem:[%s315 + $0x78] sm:$0xf]
        %v1475 = vld [vmem:[%s315 + $0x7c] sm:$0xf]
        %v1476 = vld [vmem:[%s315 + $0x80] sm:$0xf]
        %v1477 = vld [vmem:[%s315 + $0x84] sm:$0xf]
        %v1478 = vld [vmem:[%s315 + $0x88] sm:$0xf]
        %v1479 = vld [vmem:[%s315 + $0x8c] sm:$0xf]
        %v1480 = vld [vmem:[%s315 + $0x90] sm:$0xf]
        %v1481 = vld [vmem:[%s315 + $0x94] sm:$0xf]
        %v1482 = vld [vmem:[%s315 + $0x98] sm:$0xf]
        %v1483 = vld [vmem:[%s315 + $0x9c] sm:$0xf]
        %v1484 = vld [vmem:[%s315 + $0xa0] sm:$0xf]
        %v1485 = vld [vmem:[%s315 + $0xa4] sm:$0xf]
        %v1486 = vld [vmem:[%s315 + $0xa8] sm:$0xf]
        %v1487 = vld [vmem:[%s315 + $0xac] sm:$0xf]
        %v1488 = vld [vmem:[%s315 + $0xb0] sm:$0xf]
        %v1489 = vld [vmem:[%s315 + $0xb4] sm:$0xf]
        %v1490 = vld [vmem:[%s315 + $0xb8] sm:$0xf]
        %v1491 = vld [vmem:[%s315 + $0xbc] sm:$0xf]
        %v1492 = vld [vmem:[%s315 + $0xc0] sm:$0x3]
        %s1493 = scalar_lea.vmem [#allocation6], 192
        %v1494 = vld [vmem:[%s1493] sm:$0xf]
        %v1495 = vld [vmem:[%s1493 + $0x4] sm:$0xf]
        %v1496 = vld [vmem:[%s1493 + $0x8] sm:$0xf]
        %v1497 = vld [vmem:[%s1493 + $0xc] sm:$0xf]
        %v1498 = vld [vmem:[%s1493 + $0x10] sm:$0xf]
        %v1499 = vld [vmem:[%s1493 + $0x14] sm:$0xf]
        %v1500 = vld [vmem:[%s1493 + $0x18] sm:$0xf]
        %v1501 = vld [vmem:[%s1493 + $0x1c] sm:$0xf]
        %v1502 = vld [vmem:[%s1493 + $0x20] sm:$0xf]
        %v1503 = vld [vmem:[%s1493 + $0x24] sm:$0xf]
        %v1504 = vld [vmem:[%s1493 + $0x28] sm:$0xf]
        %v1505 = vld [vmem:[%s1493 + $0x2c] sm:$0xf]
        %v1506 = vld [vmem:[%s1493 + $0x30] sm:$0xf]
        %v1507 = vld [vmem:[%s1493 + $0x34] sm:$0xf]
        %v1508 = vld [vmem:[%s1493 + $0x38] sm:$0xf]
        %v1509 = vld [vmem:[%s1493 + $0x3c] sm:$0xf]
        %v1557 = vunpack.c.l.b16 %v1446
        %v1558 = vunpack.c.l.b16 %v1447
        %v1559 = vunpack.c.l.b16 %v1448
        %v1560 = vunpack.c.l.b16 %v1449
        %v1561 = vunpack.c.l.b16 %v1450
        %v1562 = vunpack.c.l.b16 %v1451
        %v1563 = vunpack.c.l.b16 %v1452
        %v1564 = vunpack.c.l.b16 %v1453
        %v1565 = vunpack.c.l.b16 %v1454
        %v1566 = vunpack.c.l.b16 %v1455
        %v1567 = vunpack.c.l.b16 %v1456
        %v1568 = vunpack.c.l.b16 %v1457
        %v1569 = vunpack.c.l.b16 %v1458
        %v1570 = vunpack.c.l.b16 %v1459
        %v1571 = vunpack.c.l.b16 %v1460
        %v1572 = vunpack.c.l.b16 %v1461
        %v1573 = vunpack.c.l.b16 %v1462
        %v1574 = vunpack.c.l.b16 %v1463
        %v1575 = vunpack.c.l.b16 %v1464
        %v1576 = vunpack.c.l.b16 %v1465
        %v1577 = vunpack.c.l.b16 %v1466
        %v1578 = vunpack.c.l.b16 %v1467
        %v1579 = vunpack.c.l.b16 %v1468
        %v1580 = vunpack.c.l.b16 %v1469
        %v1581 = vunpack.c.l.b16 %v1470
        %v1582 = vunpack.c.l.b16 %v1471
        %v1583 = vunpack.c.l.b16 %v1472
        %v1584 = vunpack.c.l.b16 %v1473
        %v1585 = vunpack.c.l.b16 %v1474
        %v1586 = vunpack.c.l.b16 %v1475
        %v1587 = vunpack.c.l.b16 %v1476
        %v1588 = vunpack.c.l.b16 %v1477
        %v1589 = vunpack.c.l.b16 %v1478
        %v1590 = vunpack.c.l.b16 %v1479
        %v1591 = vunpack.c.l.b16 %v1480
        %v1592 = vunpack.c.l.b16 %v1481
        %v1593 = vunpack.c.l.b16 %v1482
        %v1594 = vunpack.c.l.b16 %v1483
        %v1595 = vunpack.c.l.b16 %v1484
        %v1596 = vunpack.c.l.b16 %v1485
        %v1597 = vunpack.c.l.b16 %v1486
        %v1598 = vunpack.c.l.b16 %v1487
        %v1599 = vunpack.c.l.b16 %v1488
        %v1600 = vunpack.c.l.b16 %v1489
        %v1601 = vunpack.c.l.b16 %v1490
        %v1602 = vunpack.c.l.b16 %v1491
        %v1603 = vunpack.c.l.b16 %v1492
        %v1604 = vpack.c.b16 %v1558, %v1557
        %v1605 = vpack.c.b16 %v1560, %v1559
        %v1606 = vpack.c.b16 %v1562, %v1561
        %v1607 = vpack.c.b16 %v1564, %v1563
        %v1608 = vpack.c.b16 %v1566, %v1565
        %v1609 = vpack.c.b16 %v1568, %v1567
        %v1610 = vpack.c.b16 %v1570, %v1569
        %v1611 = vpack.c.b16 %v1572, %v1571
        %v1612 = vpack.c.b16 %v1574, %v1573
        %v1613 = vpack.c.b16 %v1576, %v1575
        %v1614 = vpack.c.b16 %v1578, %v1577
        %v1615 = vpack.c.b16 %v1580, %v1579
        %v1616 = vpack.c.b16 %v1582, %v1581
        %v1617 = vpack.c.b16 %v1584, %v1583
        %v1618 = vpack.c.b16 %v1586, %v1585
        %v1619 = vpack.c.b16 %v1588, %v1587
        %v1620 = vpack.c.b16 %v1590, %v1589
        %v1621 = vpack.c.b16 %v1592, %v1591
        %v1622 = vpack.c.b16 %v1594, %v1593
        %v1623 = vpack.c.b16 %v1596, %v1595
        %v1624 = vpack.c.b16 %v1598, %v1597
        %v1625 = vpack.c.b16 %v1600, %v1599
        %v1626 = vpack.c.b16 %v1602, %v1601
        %v1627 = vpack.c.b16 %v1603, %v1603
        %vm1628 = vcmask 1045504
        %v1629 = vrot.slane %v1604, 2
        %v1630 = vrot.slane %v1605, 2
        %v1631 = vsel %vm1628, %v1629, %v1630
        %v1632 = vrot.slane %v1606, 2
        %v1633 = vsel %vm1628, %v1630, %v1632
        %v1634 = vrot.slane %v1607, 2
        %v1635 = vsel %vm1628, %v1632, %v1634
        %v1636 = vrot.slane %v1608, 2
        %v1637 = vsel %vm1628, %v1634, %v1636
        %v1638 = vrot.slane %v1609, 2
        %v1639 = vsel %vm1628, %v1636, %v1638
        %v1640 = vrot.slane %v1610, 2
        %v1641 = vsel %vm1628, %v1638, %v1640
        %v1642 = vrot.slane %v1611, 2
        %v1643 = vsel %vm1628, %v1640, %v1642
        %v1644 = vrot.slane %v1612, 2
        %v1645 = vsel %vm1628, %v1642, %v1644
        %v1646 = vrot.slane %v1613, 2
        %v1647 = vsel %vm1628, %v1644, %v1646
        %v1648 = vrot.slane %v1614, 2
        %v1649 = vsel %vm1628, %v1646, %v1648
        %v1650 = vrot.slane %v1615, 2
        %v1651 = vsel %vm1628, %v1648, %v1650
        %v1652 = vrot.slane %v1616, 2
        %v1653 = vsel %vm1628, %v1650, %v1652
        %v1654 = vrot.slane %v1617, 2
        %v1655 = vsel %vm1628, %v1652, %v1654
        %v1656 = vrot.slane %v1618, 2
        %v1657 = vsel %vm1628, %v1654, %v1656
        %v1658 = vrot.slane %v1619, 2
        %v1659 = vsel %vm1628, %v1656, %v1658
        %v1660 = vrot.slane %v1620, 2
        %v1661 = vsel %vm1628, %v1658, %v1660
        %v1662 = vrot.slane %v1621, 2
        %v1663 = vsel %vm1628, %v1660, %v1662
        %v1664 = vrot.slane %v1622, 2
        %v1665 = vsel %vm1628, %v1662, %v1664
        %v1666 = vrot.slane %v1623, 2
        %v1667 = vsel %vm1628, %v1664, %v1666
        %v1668 = vrot.slane %v1624, 2
        %v1669 = vsel %vm1628, %v1666, %v1668
        %v1670 = vrot.slane %v1625, 2
        %v1671 = vsel %vm1628, %v1668, %v1670
        %v1672 = vrot.slane %v1626, 2
        %v1673 = vsel %vm1628, %v1670, %v1672
        %v1674 = vrot.slane %v1627, 2
        %v1675 = vsel %vm1628, %v1672, %v1674
        %v1715 = vunpack.c.l.b16 %v1494
        %v1716 = vunpack.c.l.b16 %v1495
        %v1717 = vunpack.c.l.b16 %v1496
        %v1718 = vunpack.c.l.b16 %v1497
        %v1719 = vunpack.c.l.b16 %v1498
        %v1720 = vunpack.c.l.b16 %v1499
        %v1721 = vunpack.c.l.b16 %v1500
        %v1722 = vunpack.c.l.b16 %v1501
        %v1723 = vunpack.c.l.b16 %v1502
        %v1724 = vunpack.c.l.b16 %v1503
        %v1725 = vunpack.c.l.b16 %v1504
        %v1726 = vunpack.c.l.b16 %v1505
        %v1727 = vunpack.c.l.b16 %v1506
        %v1728 = vunpack.c.l.b16 %v1507
        %v1729 = vunpack.c.l.b16 %v1508
        %v1730 = vunpack.c.l.b16 %v1509
        %v1731 = vpack.c.b16 %v1716, %v1715
        %v1732 = vpack.c.b16 %v1718, %v1717
        %v1733 = vpack.c.b16 %v1720, %v1719
        %v1734 = vpack.c.b16 %v1722, %v1721
        %v1735 = vpack.c.b16 %v1724, %v1723
        %v1736 = vpack.c.b16 %v1726, %v1725
        %v1737 = vpack.c.b16 %v1728, %v1727
        %v1738 = vpack.c.b16 %v1730, %v1729
        %1747 = vmatpush.bf16.msra.mxu0 %v1738
        %1748 = vmatpush.bf16.msra.mxu0 %v1737
        %1749 = vmatpush.bf16.msra.mxu0 %v1736
        %1750 = vmatpush.bf16.msra.mxu0 %v1735
        %1751 = vmatpush.bf16.msra.mxu0 %v1734
        %1752 = vmatpush.bf16.msra.mxu0 %v1733
        %1753 = vmatpush.bf16.msra.mxu0 %v1732
        %1754 = vmatpush.bf16.msra.mxu0 %v1731
        %1755 = vmatmul.bf16.gmra.mxu0 %v1631
        %v1756 = vpop.f32.mrf.mxu0
        %v1757 = vadd.f32 0.0, %v1756
        %v1758 = vpop.f32.mrf.mxu0
        %v1759 = vadd.f32 0.0, %v1758
        %1760 = vmatmul.bf16.gmra.mxu0 %v1633
        %v1761 = vpop.f32.mrf.mxu0
        %v1762 = vadd.f32 0.0, %v1761
        %v1763 = vpop.f32.mrf.mxu0
        %v1764 = vadd.f32 0.0, %v1763
        %1765 = vmatmul.bf16.gmra.mxu0 %v1635
        %v1766 = vpop.f32.mrf.mxu0
        %v1767 = vadd.f32 0.0, %v1766
        %v1768 = vpop.f32.mrf.mxu0
        %v1769 = vadd.f32 0.0, %v1768
        %1770 = vmatmul.bf16.gmra.mxu0 %v1637
        %v1771 = vpop.f32.mrf.mxu0
        %v1772 = vadd.f32 0.0, %v1771
        %v1773 = vpop.f32.mrf.mxu0
        %v1774 = vadd.f32 0.0, %v1773
        %1775 = vmatmul.bf16.gmra.mxu0 %v1639
        %v1776 = vpop.f32.mrf.mxu0
        %v1777 = vadd.f32 0.0, %v1776
        %v1778 = vpop.f32.mrf.mxu0
        %v1779 = vadd.f32 0.0, %v1778
        %1780 = vmatmul.bf16.gmra.mxu0 %v1641
        %v1781 = vpop.f32.mrf.mxu0
        %v1782 = vadd.f32 0.0, %v1781
        %v1783 = vpop.f32.mrf.mxu0
        %v1784 = vadd.f32 0.0, %v1783
        %1785 = vmatmul.bf16.gmra.mxu0 %v1643
        %v1786 = vpop.f32.mrf.mxu0
        %v1787 = vadd.f32 0.0, %v1786
        %v1788 = vpop.f32.mrf.mxu0
        %v1789 = vadd.f32 0.0, %v1788
        %1790 = vmatmul.bf16.gmra.mxu0 %v1645
        %v1791 = vpop.f32.mrf.mxu0
        %v1792 = vadd.f32 0.0, %v1791
        %v1793 = vpop.f32.mrf.mxu0
        %v1794 = vadd.f32 0.0, %v1793
        %1795 = vmatmul.bf16.gmra.mxu0 %v1647
        %v1796 = vpop.f32.mrf.mxu0
        %v1797 = vadd.f32 0.0, %v1796
        %v1798 = vpop.f32.mrf.mxu0
        %v1799 = vadd.f32 0.0, %v1798
        %1800 = vmatmul.bf16.gmra.mxu0 %v1649
        %v1801 = vpop.f32.mrf.mxu0
        %v1802 = vadd.f32 0.0, %v1801
        %v1803 = vpop.f32.mrf.mxu0
        %v1804 = vadd.f32 0.0, %v1803
        %1805 = vmatmul.bf16.gmra.mxu0 %v1651
        %v1806 = vpop.f32.mrf.mxu0
        %v1807 = vadd.f32 0.0, %v1806
        %v1808 = vpop.f32.mrf.mxu0
        %v1809 = vadd.f32 0.0, %v1808
        %1810 = vmatmul.bf16.gmra.mxu0 %v1653
        %v1811 = vpop.f32.mrf.mxu0
        %v1812 = vadd.f32 0.0, %v1811
        %v1813 = vpop.f32.mrf.mxu0
        %v1814 = vadd.f32 0.0, %v1813
        %1815 = vmatmul.bf16.gmra.mxu0 %v1655
        %v1816 = vpop.f32.mrf.mxu0
        %v1817 = vadd.f32 0.0, %v1816
        %v1818 = vpop.f32.mrf.mxu0
        %v1819 = vadd.f32 0.0, %v1818
        %1820 = vmatmul.bf16.gmra.mxu0 %v1657
        %v1821 = vpop.f32.mrf.mxu0
        %v1822 = vadd.f32 0.0, %v1821
        %v1823 = vpop.f32.mrf.mxu0
        %v1824 = vadd.f32 0.0, %v1823
        %1825 = vmatmul.bf16.gmra.mxu0 %v1659
        %v1826 = vpop.f32.mrf.mxu0
        %v1827 = vadd.f32 0.0, %v1826
        %v1828 = vpop.f32.mrf.mxu0
        %v1829 = vadd.f32 0.0, %v1828
        %1830 = vmatmul.bf16.gmra.mxu0 %v1661
        %v1831 = vpop.f32.mrf.mxu0
        %v1832 = vadd.f32 0.0, %v1831
        %v1833 = vpop.f32.mrf.mxu0
        %v1834 = vadd.f32 0.0, %v1833
        %1835 = vmatmul.bf16.gmra.mxu0 %v1663
        %v1836 = vpop.f32.mrf.mxu0
        %v1837 = vadd.f32 0.0, %v1836
        %v1838 = vpop.f32.mrf.mxu0
        %v1839 = vadd.f32 0.0, %v1838
        %1840 = vmatmul.bf16.gmra.mxu0 %v1665
        %v1841 = vpop.f32.mrf.mxu0
        %v1842 = vadd.f32 0.0, %v1841
        %v1843 = vpop.f32.mrf.mxu0
        %v1844 = vadd.f32 0.0, %v1843
        %1845 = vmatmul.bf16.gmra.mxu0 %v1667
        %v1846 = vpop.f32.mrf.mxu0
        %v1847 = vadd.f32 0.0, %v1846
        %v1848 = vpop.f32.mrf.mxu0
        %v1849 = vadd.f32 0.0, %v1848
        %1850 = vmatmul.bf16.gmra.mxu0 %v1669
        %v1851 = vpop.f32.mrf.mxu0
        %v1852 = vadd.f32 0.0, %v1851
        %v1853 = vpop.f32.mrf.mxu0
        %v1854 = vadd.f32 0.0, %v1853
        %1855 = vmatmul.bf16.gmra.mxu0 %v1671
        %v1856 = vpop.f32.mrf.mxu0
        %v1857 = vadd.f32 0.0, %v1856
        %v1858 = vpop.f32.mrf.mxu0
        %v1859 = vadd.f32 0.0, %v1858
        %1860 = vmatmul.bf16.gmra.mxu0 %v1673
        %v1861 = vpop.f32.mrf.mxu0
        %v1862 = vadd.f32 0.0, %v1861
        %v1863 = vpop.f32.mrf.mxu0
        %v1864 = vadd.f32 0.0, %v1863
        %1865 = vmatmul.bf16.gmra.mxu0 %v1675
        %v1866 = vpop.f32.mrf.mxu0
        %v1867 = vadd.f32 0.0, %v1866
        %v1868 = vpop.f32.mrf.mxu0
        %v1869 = vadd.f32 0.0, %v1868
        %1870 = vdwg.mxu0
        %v1871 = vadd.f32 %v1400, %v1757
        %v1872 = vadd.f32 %v1401, %v1759
        %v1873 = vadd.f32 %v1402, %v1762
        %v1874 = vadd.f32 %v1403, %v1764
        %v1875 = vadd.f32 %v1404, %v1767
        %v1876 = vadd.f32 %v1405, %v1769
        %v1877 = vadd.f32 %v1406, %v1772
        %v1878 = vadd.f32 %v1407, %v1774
        %v1879 = vadd.f32 %v1408, %v1777
        %v1880 = vadd.f32 %v1409, %v1779
        %v1881 = vadd.f32 %v1410, %v1782
        %v1882 = vadd.f32 %v1411, %v1784
        %v1883 = vadd.f32 %v1412, %v1787
        %v1884 = vadd.f32 %v1413, %v1789
        %v1885 = vadd.f32 %v1414, %v1792
        %v1886 = vadd.f32 %v1415, %v1794
        %v1887 = vadd.f32 %v1416, %v1797
        %v1888 = vadd.f32 %v1417, %v1799
        %v1889 = vadd.f32 %v1418, %v1802
        %v1890 = vadd.f32 %v1419, %v1804
        %v1891 = vadd.f32 %v1420, %v1807
        %v1892 = vadd.f32 %v1421, %v1809
        %v1893 = vadd.f32 %v1422, %v1812
        %v1894 = vadd.f32 %v1423, %v1814
        %v1895 = vadd.f32 %v1424, %v1817
        %v1896 = vadd.f32 %v1425, %v1819
        %v1897 = vadd.f32 %v1426, %v1822
        %v1898 = vadd.f32 %v1427, %v1824
        %v1899 = vadd.f32 %v1428, %v1827
        %v1900 = vadd.f32 %v1429, %v1829
        %v1901 = vadd.f32 %v1430, %v1832
        %v1902 = vadd.f32 %v1431, %v1834
        %v1903 = vadd.f32 %v1432, %v1837
        %v1904 = vadd.f32 %v1433, %v1839
        %v1905 = vadd.f32 %v1434, %v1842
        %v1906 = vadd.f32 %v1435, %v1844
        %v1907 = vadd.f32 %v1436, %v1847
        %v1908 = vadd.f32 %v1437, %v1849
        %v1909 = vadd.f32 %v1438, %v1852
        %v1910 = vadd.f32 %v1439, %v1854
        %v1911 = vadd.f32 %v1440, %v1857
        %v1912 = vadd.f32 %v1441, %v1859
        %v1913 = vadd.f32 %v1442, %v1862
        %v1914 = vadd.f32 %v1443, %v1864
        %v1915 = vadd.f32 %v1444, %v1867
        %v1916 = vadd.f32 %v1445, %v1869
        %v1917 = vld [vmem:[%s315 + $0xc0] sm:$0x7]
        %s1918 = scalar_lea.vmem [#allocation6], 256
        %v1919 = vld [vmem:[%s1918] sm:$0xf]
        %v1920 = vld [vmem:[%s1918 + $0x4] sm:$0xf]
        %v1921 = vld [vmem:[%s1918 + $0x8] sm:$0xf]
        %v1922 = vld [vmem:[%s1918 + $0xc] sm:$0xf]
        %v1923 = vld [vmem:[%s1918 + $0x10] sm:$0xf]
        %v1924 = vld [vmem:[%s1918 + $0x14] sm:$0xf]
        %v1925 = vld [vmem:[%s1918 + $0x18] sm:$0xf]
        %v1926 = vld [vmem:[%s1918 + $0x1c] sm:$0xf]
        %v1927 = vld [vmem:[%s1918 + $0x20] sm:$0xf]
        %v1928 = vld [vmem:[%s1918 + $0x24] sm:$0xf]
        %v1929 = vld [vmem:[%s1918 + $0x28] sm:$0xf]
        %v1930 = vld [vmem:[%s1918 + $0x2c] sm:$0xf]
        %v1931 = vld [vmem:[%s1918 + $0x30] sm:$0xf]
        %v1932 = vld [vmem:[%s1918 + $0x34] sm:$0xf]
        %v1933 = vld [vmem:[%s1918 + $0x38] sm:$0xf]
        %v1934 = vld [vmem:[%s1918 + $0x3c] sm:$0xf]
        %v1936 = vunpack.c.l.b16 %v1917
        %v1937 = vpack.c.b16 %v1936, %v1936
        %vm1938 = vsmask.f32 5376
        %v1940 = vshrl.u32 %v1604, 16
        %v1942 = vrot.slane %v1940, 2
        %v1943 = vshll.u32 %v1604, 16
        %v1945 = vrot.slane %v1943, 3
        %v1946 = vor.u32 %v1942, %v1945
        %v1948 = vshrl.u32 %v1605, 16
        %v1950 = vrot.slane %v1948, 2
        %v1951 = vshll.u32 %v1605, 16
        %v1953 = vrot.slane %v1951, 3
        %v1954 = vor.u32 %v1950, %v1953
        %v1955 = vsel %vm1938, %v1946, %v1954
        %v1957 = vshrl.u32 %v1606, 16
        %v1959 = vrot.slane %v1957, 2
        %v1960 = vshll.u32 %v1606, 16
        %v1962 = vrot.slane %v1960, 3
        %v1963 = vor.u32 %v1959, %v1962
        %v1964 = vsel %vm1938, %v1954, %v1963
        %v1966 = vshrl.u32 %v1607, 16
        %v1968 = vrot.slane %v1966, 2
        %v1969 = vshll.u32 %v1607, 16
        %v1971 = vrot.slane %v1969, 3
        %v1972 = vor.u32 %v1968, %v1971
        %v1973 = vsel %vm1938, %v1963, %v1972
        %v1975 = vshrl.u32 %v1608, 16
        %v1977 = vrot.slane %v1975, 2
        %v1978 = vshll.u32 %v1608, 16
        %v1980 = vrot.slane %v1978, 3
        %v1981 = vor.u32 %v1977, %v1980
        %v1982 = vsel %vm1938, %v1972, %v1981
        %v1984 = vshrl.u32 %v1609, 16
        %v1986 = vrot.slane %v1984, 2
        %v1987 = vshll.u32 %v1609, 16
        %v1989 = vrot.slane %v1987, 3
        %v1990 = vor.u32 %v1986, %v1989
        %v1991 = vsel %vm1938, %v1981, %v1990
        %v1993 = vshrl.u32 %v1610, 16
        %v1995 = vrot.slane %v1993, 2
        %v1996 = vshll.u32 %v1610, 16
        %v1998 = vrot.slane %v1996, 3
        %v1999 = vor.u32 %v1995, %v1998
        %v2000 = vsel %vm1938, %v1990, %v1999
        %v2002 = vshrl.u32 %v1611, 16
        %v2004 = vrot.slane %v2002, 2
        %v2005 = vshll.u32 %v1611, 16
        %v2007 = vrot.slane %v2005, 3
        %v2008 = vor.u32 %v2004, %v2007
        %v2009 = vsel %vm1938, %v1999, %v2008
        %v2011 = vshrl.u32 %v1612, 16
        %v2013 = vrot.slane %v2011, 2
        %v2014 = vshll.u32 %v1612, 16
        %v2016 = vrot.slane %v2014, 3
        %v2017 = vor.u32 %v2013, %v2016
        %v2018 = vsel %vm1938, %v2008, %v2017
        %v2020 = vshrl.u32 %v1613, 16
        %v2022 = vrot.slane %v2020, 2
        %v2023 = vshll.u32 %v1613, 16
        %v2025 = vrot.slane %v2023, 3
        %v2026 = vor.u32 %v2022, %v2025
        %v2027 = vsel %vm1938, %v2017, %v2026
        %v2029 = vshrl.u32 %v1614, 16
        %v2031 = vrot.slane %v2029, 2
        %v2032 = vshll.u32 %v1614, 16
        %v2034 = vrot.slane %v2032, 3
        %v2035 = vor.u32 %v2031, %v2034
        %v2036 = vsel %vm1938, %v2026, %v2035
        %v2038 = vshrl.u32 %v1615, 16
        %v2040 = vrot.slane %v2038, 2
        %v2041 = vshll.u32 %v1615, 16
        %v2043 = vrot.slane %v2041, 3
        %v2044 = vor.u32 %v2040, %v2043
        %v2045 = vsel %vm1938, %v2035, %v2044
        %v2047 = vshrl.u32 %v1616, 16
        %v2049 = vrot.slane %v2047, 2
        %v2050 = vshll.u32 %v1616, 16
        %v2052 = vrot.slane %v2050, 3
        %v2053 = vor.u32 %v2049, %v2052
        %v2054 = vsel %vm1938, %v2044, %v2053
        %v2056 = vshrl.u32 %v1617, 16
        %v2058 = vrot.slane %v2056, 2
        %v2059 = vshll.u32 %v1617, 16
        %v2061 = vrot.slane %v2059, 3
        %v2062 = vor.u32 %v2058, %v2061
        %v2063 = vsel %vm1938, %v2053, %v2062
        %v2065 = vshrl.u32 %v1618, 16
        %v2067 = vrot.slane %v2065, 2
        %v2068 = vshll.u32 %v1618, 16
        %v2070 = vrot.slane %v2068, 3
        %v2071 = vor.u32 %v2067, %v2070
        %v2072 = vsel %vm1938, %v2062, %v2071
        %v2074 = vshrl.u32 %v1619, 16
        %v2076 = vrot.slane %v2074, 2
        %v2077 = vshll.u32 %v1619, 16
        %v2079 = vrot.slane %v2077, 3
        %v2080 = vor.u32 %v2076, %v2079
        %v2081 = vsel %vm1938, %v2071, %v2080
        %v2083 = vshrl.u32 %v1620, 16
        %v2085 = vrot.slane %v2083, 2
        %v2086 = vshll.u32 %v1620, 16
        %v2088 = vrot.slane %v2086, 3
        %v2089 = vor.u32 %v2085, %v2088
        %v2090 = vsel %vm1938, %v2080, %v2089
        %v2092 = vshrl.u32 %v1621, 16
        %v2094 = vrot.slane %v2092, 2
        %v2095 = vshll.u32 %v1621, 16
        %v2097 = vrot.slane %v2095, 3
        %v2098 = vor.u32 %v2094, %v2097
        %v2099 = vsel %vm1938, %v2089, %v2098
        %v2101 = vshrl.u32 %v1622, 16
        %v2103 = vrot.slane %v2101, 2
        %v2104 = vshll.u32 %v1622, 16
        %v2106 = vrot.slane %v2104, 3
        %v2107 = vor.u32 %v2103, %v2106
        %v2108 = vsel %vm1938, %v2098, %v2107
        %v2110 = vshrl.u32 %v1623, 16
        %v2112 = vrot.slane %v2110, 2
        %v2113 = vshll.u32 %v1623, 16
        %v2115 = vrot.slane %v2113, 3
        %v2116 = vor.u32 %v2112, %v2115
        %v2117 = vsel %vm1938, %v2107, %v2116
        %v2119 = vshrl.u32 %v1624, 16
        %v2121 = vrot.slane %v2119, 2
        %v2122 = vshll.u32 %v1624, 16
        %v2124 = vrot.slane %v2122, 3
        %v2125 = vor.u32 %v2121, %v2124
        %v2126 = vsel %vm1938, %v2116, %v2125
        %v2128 = vshrl.u32 %v1625, 16
        %v2130 = vrot.slane %v2128, 2
        %v2131 = vshll.u32 %v1625, 16
        %v2133 = vrot.slane %v2131, 3
        %v2134 = vor.u32 %v2130, %v2133
        %v2135 = vsel %vm1938, %v2125, %v2134
        %v2137 = vshrl.u32 %v1626, 16
        %v2139 = vrot.slane %v2137, 2
        %v2140 = vshll.u32 %v1626, 16
        %v2142 = vrot.slane %v2140, 3
        %v2143 = vor.u32 %v2139, %v2142
        %v2144 = vsel %vm1938, %v2134, %v2143
        %v2146 = vshrl.u32 %v1937, 16
        %v2148 = vrot.slane %v2146, 2
        %v2149 = vshll.u32 %v1937, 16
        %v2151 = vrot.slane %v2149, 3
        %v2152 = vor.u32 %v2148, %v2151
        %v2153 = vsel %vm1938, %v2143, %v2152
        %v2193 = vunpack.c.l.b16 %v1919
        %v2194 = vunpack.c.l.b16 %v1920
        %v2195 = vunpack.c.l.b16 %v1921
        %v2196 = vunpack.c.l.b16 %v1922
        %v2197 = vunpack.c.l.b16 %v1923
        %v2198 = vunpack.c.l.b16 %v1924
        %v2199 = vunpack.c.l.b16 %v1925
        %v2200 = vunpack.c.l.b16 %v1926
        %v2201 = vunpack.c.l.b16 %v1927
        %v2202 = vunpack.c.l.b16 %v1928
        %v2203 = vunpack.c.l.b16 %v1929
        %v2204 = vunpack.c.l.b16 %v1930
        %v2205 = vunpack.c.l.b16 %v1931
        %v2206 = vunpack.c.l.b16 %v1932
        %v2207 = vunpack.c.l.b16 %v1933
        %v2208 = vunpack.c.l.b16 %v1934
        %v2209 = vpack.c.b16 %v2194, %v2193
        %v2210 = vpack.c.b16 %v2196, %v2195
        %v2211 = vpack.c.b16 %v2198, %v2197
        %v2212 = vpack.c.b16 %v2200, %v2199
        %v2213 = vpack.c.b16 %v2202, %v2201
        %v2214 = vpack.c.b16 %v2204, %v2203
        %v2215 = vpack.c.b16 %v2206, %v2205
        %v2216 = vpack.c.b16 %v2208, %v2207
        %2225 = vmatpush.bf16.msra.mxu0 %v2216
        %2226 = vmatpush.bf16.msra.mxu0 %v2215
        %2227 = vmatpush.bf16.msra.mxu0 %v2214
        %2228 = vmatpush.bf16.msra.mxu0 %v2213
        %2229 = vmatpush.bf16.msra.mxu0 %v2212
        %2230 = vmatpush.bf16.msra.mxu0 %v2211
        %2231 = vmatpush.bf16.msra.mxu0 %v2210
        %2232 = vmatpush.bf16.msra.mxu0 %v2209
        %2233 = vmatmul.bf16.gmra.mxu0 %v1955
        %v2234 = vpop.f32.mrf.mxu0
        %v2235 = vadd.f32 0.0, %v2234
        %v2236 = vpop.f32.mrf.mxu0
        %v2237 = vadd.f32 0.0, %v2236
        %2238 = vmatmul.bf16.gmra.mxu0 %v1964
        %v2239 = vpop.f32.mrf.mxu0
        %v2240 = vadd.f32 0.0, %v2239
        %v2241 = vpop.f32.mrf.mxu0
        %v2242 = vadd.f32 0.0, %v2241
        %2243 = vmatmul.bf16.gmra.mxu0 %v1973
        %v2244 = vpop.f32.mrf.mxu0
        %v2245 = vadd.f32 0.0, %v2244
        %v2246 = vpop.f32.mrf.mxu0
        %v2247 = vadd.f32 0.0, %v2246
        %2248 = vmatmul.bf16.gmra.mxu0 %v1982
        %v2249 = vpop.f32.mrf.mxu0
        %v2250 = vadd.f32 0.0, %v2249
        %v2251 = vpop.f32.mrf.mxu0
        %v2252 = vadd.f32 0.0, %v2251
        %2253 = vmatmul.bf16.gmra.mxu0 %v1991
        %v2254 = vpop.f32.mrf.mxu0
        %v2255 = vadd.f32 0.0, %v2254
        %v2256 = vpop.f32.mrf.mxu0
        %v2257 = vadd.f32 0.0, %v2256
        %2258 = vmatmul.bf16.gmra.mxu0 %v2000
        %v2259 = vpop.f32.mrf.mxu0
        %v2260 = vadd.f32 0.0, %v2259
        %v2261 = vpop.f32.mrf.mxu0
        %v2262 = vadd.f32 0.0, %v2261
        %2263 = vmatmul.bf16.gmra.mxu0 %v2009
        %v2264 = vpop.f32.mrf.mxu0
        %v2265 = vadd.f32 0.0, %v2264
        %v2266 = vpop.f32.mrf.mxu0
        %v2267 = vadd.f32 0.0, %v2266
        %2268 = vmatmul.bf16.gmra.mxu0 %v2018
        %v2269 = vpop.f32.mrf.mxu0
        %v2270 = vadd.f32 0.0, %v2269
        %v2271 = vpop.f32.mrf.mxu0
        %v2272 = vadd.f32 0.0, %v2271
        %2273 = vmatmul.bf16.gmra.mxu0 %v2027
        %v2274 = vpop.f32.mrf.mxu0
        %v2275 = vadd.f32 0.0, %v2274
        %v2276 = vpop.f32.mrf.mxu0
        %v2277 = vadd.f32 0.0, %v2276
        %2278 = vmatmul.bf16.gmra.mxu0 %v2036
        %v2279 = vpop.f32.mrf.mxu0
        %v2280 = vadd.f32 0.0, %v2279
        %v2281 = vpop.f32.mrf.mxu0
        %v2282 = vadd.f32 0.0, %v2281
        %2283 = vmatmul.bf16.gmra.mxu0 %v2045
        %v2284 = vpop.f32.mrf.mxu0
        %v2285 = vadd.f32 0.0, %v2284
        %v2286 = vpop.f32.mrf.mxu0
        %v2287 = vadd.f32 0.0, %v2286
        %2288 = vmatmul.bf16.gmra.mxu0 %v2054
        %v2289 = vpop.f32.mrf.mxu0
        %v2290 = vadd.f32 0.0, %v2289
        %v2291 = vpop.f32.mrf.mxu0
        %v2292 = vadd.f32 0.0, %v2291
        %2293 = vmatmul.bf16.gmra.mxu0 %v2063
        %v2294 = vpop.f32.mrf.mxu0
        %v2295 = vadd.f32 0.0, %v2294
        %v2296 = vpop.f32.mrf.mxu0
        %v2297 = vadd.f32 0.0, %v2296
        %2298 = vmatmul.bf16.gmra.mxu0 %v2072
        %v2299 = vpop.f32.mrf.mxu0
        %v2300 = vadd.f32 0.0, %v2299
        %v2301 = vpop.f32.mrf.mxu0
        %v2302 = vadd.f32 0.0, %v2301
        %2303 = vmatmul.bf16.gmra.mxu0 %v2081
        %v2304 = vpop.f32.mrf.mxu0
        %v2305 = vadd.f32 0.0, %v2304
        %v2306 = vpop.f32.mrf.mxu0
        %v2307 = vadd.f32 0.0, %v2306
        %2308 = vmatmul.bf16.gmra.mxu0 %v2090
        %v2309 = vpop.f32.mrf.mxu0
        %v2310 = vadd.f32 0.0, %v2309
        %v2311 = vpop.f32.mrf.mxu0
        %v2312 = vadd.f32 0.0, %v2311
        %2313 = vmatmul.bf16.gmra.mxu0 %v2099
        %v2314 = vpop.f32.mrf.mxu0
        %v2315 = vadd.f32 0.0, %v2314
        %v2316 = vpop.f32.mrf.mxu0
        %v2317 = vadd.f32 0.0, %v2316
        %2318 = vmatmul.bf16.gmra.mxu0 %v2108
        %v2319 = vpop.f32.mrf.mxu0
        %v2320 = vadd.f32 0.0, %v2319
        %v2321 = vpop.f32.mrf.mxu0
        %v2322 = vadd.f32 0.0, %v2321
        %2323 = vmatmul.bf16.gmra.mxu0 %v2117
        %v2324 = vpop.f32.mrf.mxu0
        %v2325 = vadd.f32 0.0, %v2324
        %v2326 = vpop.f32.mrf.mxu0
        %v2327 = vadd.f32 0.0, %v2326
        %2328 = vmatmul.bf16.gmra.mxu0 %v2126
        %v2329 = vpop.f32.mrf.mxu0
        %v2330 = vadd.f32 0.0, %v2329
        %v2331 = vpop.f32.mrf.mxu0
        %v2332 = vadd.f32 0.0, %v2331
        %2333 = vmatmul.bf16.gmra.mxu0 %v2135
        %v2334 = vpop.f32.mrf.mxu0
        %v2335 = vadd.f32 0.0, %v2334
        %v2336 = vpop.f32.mrf.mxu0
        %v2337 = vadd.f32 0.0, %v2336
        %2338 = vmatmul.bf16.gmra.mxu0 %v2144
        %v2339 = vpop.f32.mrf.mxu0
        %v2340 = vadd.f32 0.0, %v2339
        %v2341 = vpop.f32.mrf.mxu0
        %v2342 = vadd.f32 0.0, %v2341
        %2343 = vmatmul.bf16.gmra.mxu0 %v2153
        %v2344 = vpop.f32.mrf.mxu0
        %v2345 = vadd.f32 0.0, %v2344
        %v2346 = vpop.f32.mrf.mxu0
        %v2347 = vadd.f32 0.0, %v2346
        %2348 = vdwg.mxu0
        %v2349 = vadd.f32 %v1871, %v2235
        %v2350 = vadd.f32 %v1872, %v2237
        %v2351 = vadd.f32 %v1873, %v2240
        %v2352 = vadd.f32 %v1874, %v2242
        %v2353 = vadd.f32 %v1875, %v2245
        %v2354 = vadd.f32 %v1876, %v2247
        %v2355 = vadd.f32 %v1877, %v2250
        %v2356 = vadd.f32 %v1878, %v2252
        %v2357 = vadd.f32 %v1879, %v2255
        %v2358 = vadd.f32 %v1880, %v2257
        %v2359 = vadd.f32 %v1881, %v2260
        %v2360 = vadd.f32 %v1882, %v2262
        %v2361 = vadd.f32 %v1883, %v2265
        %v2362 = vadd.f32 %v1884, %v2267
        %v2363 = vadd.f32 %v1885, %v2270
        %v2364 = vadd.f32 %v1886, %v2272
        %v2365 = vadd.f32 %v1887, %v2275
        %v2366 = vadd.f32 %v1888, %v2277
        %v2367 = vadd.f32 %v1889, %v2280
        %v2368 = vadd.f32 %v1890, %v2282
        %v2369 = vadd.f32 %v1891, %v2285
        %v2370 = vadd.f32 %v1892, %v2287
        %v2371 = vadd.f32 %v1893, %v2290
        %v2372 = vadd.f32 %v1894, %v2292
        %v2373 = vadd.f32 %v1895, %v2295
        %v2374 = vadd.f32 %v1896, %v2297
        %v2375 = vadd.f32 %v1897, %v2300
        %v2376 = vadd.f32 %v1898, %v2302
        %v2377 = vadd.f32 %v1899, %v2305
        %v2378 = vadd.f32 %v1900, %v2307
        %v2379 = vadd.f32 %v1901, %v2310
        %v2380 = vadd.f32 %v1902, %v2312
        %v2381 = vadd.f32 %v1903, %v2315
        %v2382 = vadd.f32 %v1904, %v2317
        %v2383 = vadd.f32 %v1905, %v2320
        %v2384 = vadd.f32 %v1906, %v2322
        %v2385 = vadd.f32 %v1907, %v2325
        %v2386 = vadd.f32 %v1908, %v2327
        %v2387 = vadd.f32 %v1909, %v2330
        %v2388 = vadd.f32 %v1910, %v2332
        %v2389 = vadd.f32 %v1911, %v2335
        %v2390 = vadd.f32 %v1912, %v2337
        %v2391 = vadd.f32 %v1913, %v2340
        %v2392 = vadd.f32 %v1914, %v2342
        %v2393 = vadd.f32 %v1915, %v2345
        %v2394 = vadd.f32 %v1916, %v2347
        %v2395 = vld [vmem:[%s315 + $0x8] sm:$0x8]
        %s2396 = scalar_lea.vmem [#allocation6], 320
        %v2397 = vld [vmem:[%s2396] sm:$0xf]
        %v2398 = vld [vmem:[%s2396 + $0x4] sm:$0xf]
        %v2399 = vld [vmem:[%s2396 + $0x8] sm:$0xf]
        %v2400 = vld [vmem:[%s2396 + $0xc] sm:$0xf]
        %v2401 = vld [vmem:[%s2396 + $0x10] sm:$0xf]
        %v2402 = vld [vmem:[%s2396 + $0x14] sm:$0xf]
        %v2403 = vld [vmem:[%s2396 + $0x18] sm:$0xf]
        %v2404 = vld [vmem:[%s2396 + $0x1c] sm:$0xf]
        %v2405 = vld [vmem:[%s2396 + $0x20] sm:$0xf]
        %v2406 = vld [vmem:[%s2396 + $0x24] sm:$0xf]
        %v2407 = vld [vmem:[%s2396 + $0x28] sm:$0xf]
        %v2408 = vld [vmem:[%s2396 + $0x2c] sm:$0xf]
        %v2409 = vld [vmem:[%s2396 + $0x30] sm:$0xf]
        %v2410 = vld [vmem:[%s2396 + $0x34] sm:$0xf]
        %v2411 = vld [vmem:[%s2396 + $0x38] sm:$0xf]
        %v2412 = vld [vmem:[%s2396 + $0x3c] sm:$0xf]
        %v2414 = vunpack.c.l.b16 %v2395
        %v2415 = vpack.c.b16 %v1558, %v2414
        %vm2416 = vcmask 1044480
        %v2417 = vrot.slane %v2415, 3
        %v2418 = vrot.slane %v1605, 3
        %v2419 = vsel %vm2416, %v2417, %v2418
        %v2420 = vrot.slane %v1606, 3
        %v2421 = vsel %vm2416, %v2418, %v2420
        %v2422 = vrot.slane %v1607, 3
        %v2423 = vsel %vm2416, %v2420, %v2422
        %v2424 = vrot.slane %v1608, 3
        %v2425 = vsel %vm2416, %v2422, %v2424
        %v2426 = vrot.slane %v1609, 3
        %v2427 = vsel %vm2416, %v2424, %v2426
        %v2428 = vrot.slane %v1610, 3
        %v2429 = vsel %vm2416, %v2426, %v2428
        %v2430 = vrot.slane %v1611, 3
        %v2431 = vsel %vm2416, %v2428, %v2430
        %v2432 = vrot.slane %v1612, 3
        %v2433 = vsel %vm2416, %v2430, %v2432
        %v2434 = vrot.slane %v1613, 3
        %v2435 = vsel %vm2416, %v2432, %v2434
        %v2436 = vrot.slane %v1614, 3
        %v2437 = vsel %vm2416, %v2434, %v2436
        %v2438 = vrot.slane %v1615, 3
        %v2439 = vsel %vm2416, %v2436, %v2438
        %v2440 = vrot.slane %v1616, 3
        %v2441 = vsel %vm2416, %v2438, %v2440
        %v2442 = vrot.slane %v1617, 3
        %v2443 = vsel %vm2416, %v2440, %v2442
        %v2444 = vrot.slane %v1618, 3
        %v2445 = vsel %vm2416, %v2442, %v2444
        %v2446 = vrot.slane %v1619, 3
        %v2447 = vsel %vm2416, %v2444, %v2446
        %v2448 = vrot.slane %v1620, 3
        %v2449 = vsel %vm2416, %v2446, %v2448
        %v2450 = vrot.slane %v1621, 3
        %v2451 = vsel %vm2416, %v2448, %v2450
        %v2452 = vrot.slane %v1622, 3
        %v2453 = vsel %vm2416, %v2450, %v2452
        %v2454 = vrot.slane %v1623, 3
        %v2455 = vsel %vm2416, %v2452, %v2454
        %v2456 = vrot.slane %v1624, 3
        %v2457 = vsel %vm2416, %v2454, %v2456
        %v2458 = vrot.slane %v1625, 3
        %v2459 = vsel %vm2416, %v2456, %v2458
        %v2460 = vrot.slane %v1626, 3
        %v2461 = vsel %vm2416, %v2458, %v2460
        %v2462 = vrot.slane %v1937, 3
        %v2463 = vsel %vm2416, %v2460, %v2462
        %v2503 = vunpack.c.l.b16 %v2397
        %v2504 = vunpack.c.l.b16 %v2398
        %v2505 = vunpack.c.l.b16 %v2399
        %v2506 = vunpack.c.l.b16 %v2400
        %v2507 = vunpack.c.l.b16 %v2401
        %v2508 = vunpack.c.l.b16 %v2402
        %v2509 = vunpack.c.l.b16 %v2403
        %v2510 = vunpack.c.l.b16 %v2404
        %v2511 = vunpack.c.l.b16 %v2405
        %v2512 = vunpack.c.l.b16 %v2406
        %v2513 = vunpack.c.l.b16 %v2407
        %v2514 = vunpack.c.l.b16 %v2408
        %v2515 = vunpack.c.l.b16 %v2409
        %v2516 = vunpack.c.l.b16 %v2410
        %v2517 = vunpack.c.l.b16 %v2411
        %v2518 = vunpack.c.l.b16 %v2412
        %v2519 = vpack.c.b16 %v2504, %v2503
        %v2520 = vpack.c.b16 %v2506, %v2505
        %v2521 = vpack.c.b16 %v2508, %v2507
        %v2522 = vpack.c.b16 %v2510, %v2509
        %v2523 = vpack.c.b16 %v2512, %v2511
        %v2524 = vpack.c.b16 %v2514, %v2513
        %v2525 = vpack.c.b16 %v2516, %v2515
        %v2526 = vpack.c.b16 %v2518, %v2517
        %2535 = vmatpush.bf16.msra.mxu0 %v2526
        %2536 = vmatpush.bf16.msra.mxu0 %v2525
        %2537 = vmatpush.bf16.msra.mxu0 %v2524
        %2538 = vmatpush.bf16.msra.mxu0 %v2523
        %2539 = vmatpush.bf16.msra.mxu0 %v2522
        %2540 = vmatpush.bf16.msra.mxu0 %v2521
        %2541 = vmatpush.bf16.msra.mxu0 %v2520
        %2542 = vmatpush.bf16.msra.mxu0 %v2519
        %2543 = vmatmul.bf16.gmra.mxu0 %v2419
        %v2544 = vpop.f32.mrf.mxu0
        %v2545 = vadd.f32 0.0, %v2544
        %v2546 = vpop.f32.mrf.mxu0
        %v2547 = vadd.f32 0.0, %v2546
        %2548 = vmatmul.bf16.gmra.mxu0 %v2421
        %v2549 = vpop.f32.mrf.mxu0
        %v2550 = vadd.f32 0.0, %v2549
        %v2551 = vpop.f32.mrf.mxu0
        %v2552 = vadd.f32 0.0, %v2551
        %2553 = vmatmul.bf16.gmra.mxu0 %v2423
        %v2554 = vpop.f32.mrf.mxu0
        %v2555 = vadd.f32 0.0, %v2554
        %v2556 = vpop.f32.mrf.mxu0
        %v2557 = vadd.f32 0.0, %v2556
        %2558 = vmatmul.bf16.gmra.mxu0 %v2425
        %v2559 = vpop.f32.mrf.mxu0
        %v2560 = vadd.f32 0.0, %v2559
        %v2561 = vpop.f32.mrf.mxu0
        %v2562 = vadd.f32 0.0, %v2561
        %2563 = vmatmul.bf16.gmra.mxu0 %v2427
        %v2564 = vpop.f32.mrf.mxu0
        %v2565 = vadd.f32 0.0, %v2564
        %v2566 = vpop.f32.mrf.mxu0
        %v2567 = vadd.f32 0.0, %v2566
        %2568 = vmatmul.bf16.gmra.mxu0 %v2429
        %v2569 = vpop.f32.mrf.mxu0
        %v2570 = vadd.f32 0.0, %v2569
        %v2571 = vpop.f32.mrf.mxu0
        %v2572 = vadd.f32 0.0, %v2571
        %2573 = vmatmul.bf16.gmra.mxu0 %v2431
        %v2574 = vpop.f32.mrf.mxu0
        %v2575 = vadd.f32 0.0, %v2574
        %v2576 = vpop.f32.mrf.mxu0
        %v2577 = vadd.f32 0.0, %v2576
        %2578 = vmatmul.bf16.gmra.mxu0 %v2433
        %v2579 = vpop.f32.mrf.mxu0
        %v2580 = vadd.f32 0.0, %v2579
        %v2581 = vpop.f32.mrf.mxu0
        %v2582 = vadd.f32 0.0, %v2581
        %2583 = vmatmul.bf16.gmra.mxu0 %v2435
        %v2584 = vpop.f32.mrf.mxu0
        %v2585 = vadd.f32 0.0, %v2584
        %v2586 = vpop.f32.mrf.mxu0
        %v2587 = vadd.f32 0.0, %v2586
        %2588 = vmatmul.bf16.gmra.mxu0 %v2437
        %v2589 = vpop.f32.mrf.mxu0
        %v2590 = vadd.f32 0.0, %v2589
        %v2591 = vpop.f32.mrf.mxu0
        %v2592 = vadd.f32 0.0, %v2591
        %2593 = vmatmul.bf16.gmra.mxu0 %v2439
        %v2594 = vpop.f32.mrf.mxu0
        %v2595 = vadd.f32 0.0, %v2594
        %v2596 = vpop.f32.mrf.mxu0
        %v2597 = vadd.f32 0.0, %v2596
        %2598 = vmatmul.bf16.gmra.mxu0 %v2441
        %v2599 = vpop.f32.mrf.mxu0
        %v2600 = vadd.f32 0.0, %v2599
        %v2601 = vpop.f32.mrf.mxu0
        %v2602 = vadd.f32 0.0, %v2601
        %2603 = vmatmul.bf16.gmra.mxu0 %v2443
        %v2604 = vpop.f32.mrf.mxu0
        %v2605 = vadd.f32 0.0, %v2604
        %v2606 = vpop.f32.mrf.mxu0
        %v2607 = vadd.f32 0.0, %v2606
        %2608 = vmatmul.bf16.gmra.mxu0 %v2445
        %v2609 = vpop.f32.mrf.mxu0
        %v2610 = vadd.f32 0.0, %v2609
        %v2611 = vpop.f32.mrf.mxu0
        %v2612 = vadd.f32 0.0, %v2611
        %2613 = vmatmul.bf16.gmra.mxu0 %v2447
        %v2614 = vpop.f32.mrf.mxu0
        %v2615 = vadd.f32 0.0, %v2614
        %v2616 = vpop.f32.mrf.mxu0
        %v2617 = vadd.f32 0.0, %v2616
        %2618 = vmatmul.bf16.gmra.mxu0 %v2449
        %v2619 = vpop.f32.mrf.mxu0
        %v2620 = vadd.f32 0.0, %v2619
        %v2621 = vpop.f32.mrf.mxu0
        %v2622 = vadd.f32 0.0, %v2621
        %2623 = vmatmul.bf16.gmra.mxu0 %v2451
        %v2624 = vpop.f32.mrf.mxu0
        %v2625 = vadd.f32 0.0, %v2624
        %v2626 = vpop.f32.mrf.mxu0
        %v2627 = vadd.f32 0.0, %v2626
        %2628 = vmatmul.bf16.gmra.mxu0 %v2453
        %v2629 = vpop.f32.mrf.mxu0
        %v2630 = vadd.f32 0.0, %v2629
        %v2631 = vpop.f32.mrf.mxu0
        %v2632 = vadd.f32 0.0, %v2631
        %2633 = vmatmul.bf16.gmra.mxu0 %v2455
        %v2634 = vpop.f32.mrf.mxu0
        %v2635 = vadd.f32 0.0, %v2634
        %v2636 = vpop.f32.mrf.mxu0
        %v2637 = vadd.f32 0.0, %v2636
        %2638 = vmatmul.bf16.gmra.mxu0 %v2457
        %v2639 = vpop.f32.mrf.mxu0
        %v2640 = vadd.f32 0.0, %v2639
        %v2641 = vpop.f32.mrf.mxu0
        %v2642 = vadd.f32 0.0, %v2641
        %2643 = vmatmul.bf16.gmra.mxu0 %v2459
        %v2644 = vpop.f32.mrf.mxu0
        %v2645 = vadd.f32 0.0, %v2644
        %v2646 = vpop.f32.mrf.mxu0
        %v2647 = vadd.f32 0.0, %v2646
        %2648 = vmatmul.bf16.gmra.mxu0 %v2461
        %v2649 = vpop.f32.mrf.mxu0
        %v2650 = vadd.f32 0.0, %v2649
        %v2651 = vpop.f32.mrf.mxu0
        %v2652 = vadd.f32 0.0, %v2651
        %2653 = vmatmul.bf16.gmra.mxu0 %v2463
        %v2654 = vpop.f32.mrf.mxu0
        %v2655 = vadd.f32 0.0, %v2654
        %v2656 = vpop.f32.mrf.mxu0
        %v2657 = vadd.f32 0.0, %v2656
        %2658 = vdwg.mxu0
        %v2659 = vadd.f32 %v2349, %v2545
        %v2660 = vadd.f32 %v2350, %v2547
        %v2661 = vadd.f32 %v2351, %v2550
        %v2662 = vadd.f32 %v2352, %v2552
        %v2663 = vadd.f32 %v2353, %v2555
        %v2664 = vadd.f32 %v2354, %v2557
        %v2665 = vadd.f32 %v2355, %v2560
        %v2666 = vadd.f32 %v2356, %v2562
        %v2667 = vadd.f32 %v2357, %v2565
        %v2668 = vadd.f32 %v2358, %v2567
        %v2669 = vadd.f32 %v2359, %v2570
        %v2670 = vadd.f32 %v2360, %v2572
        %v2671 = vadd.f32 %v2361, %v2575
        %v2672 = vadd.f32 %v2362, %v2577
        %v2673 = vadd.f32 %v2363, %v2580
        %v2674 = vadd.f32 %v2364, %v2582
        %v2675 = vadd.f32 %v2365, %v2585
        %v2676 = vadd.f32 %v2366, %v2587
        %v2677 = vadd.f32 %v2367, %v2590
        %v2678 = vadd.f32 %v2368, %v2592
        %v2679 = vadd.f32 %v2369, %v2595
        %v2680 = vadd.f32 %v2370, %v2597
        %v2681 = vadd.f32 %v2371, %v2600
        %v2682 = vadd.f32 %v2372, %v2602
        %v2683 = vadd.f32 %v2373, %v2605
        %v2684 = vadd.f32 %v2374, %v2607
        %v2685 = vadd.f32 %v2375, %v2610
        %v2686 = vadd.f32 %v2376, %v2612
        %v2687 = vadd.f32 %v2377, %v2615
        %v2688 = vadd.f32 %v2378, %v2617
        %v2689 = vadd.f32 %v2379, %v2620
        %v2690 = vadd.f32 %v2380, %v2622
        %v2691 = vadd.f32 %v2381, %v2625
        %v2692 = vadd.f32 %v2382, %v2627
        %v2693 = vadd.f32 %v2383, %v2630
        %v2694 = vadd.f32 %v2384, %v2632
        %v2695 = vadd.f32 %v2385, %v2635
        %v2696 = vadd.f32 %v2386, %v2637
        %v2697 = vadd.f32 %v2387, %v2640
        %v2698 = vadd.f32 %v2388, %v2642
        %v2699 = vadd.f32 %v2389, %v2645
        %v2700 = vadd.f32 %v2390, %v2647
        %v2701 = vadd.f32 %v2391, %v2650
        %v2702 = vadd.f32 %v2392, %v2652
        %v2703 = vadd.f32 %v2393, %v2655
        %v2704 = vadd.f32 %v2394, %v2657
        %v2705 = vld [vmem:[%s315 + $0x14] sm:$0xf]
        %v2706 = vld [vmem:[%s315 + $0x18] sm:$0xf]
        %v2707 = vld [vmem:[%s315 + $0x1c] sm:$0xf]
        %v2708 = vld [vmem:[%s315 + $0x20] sm:$0xf]
        %v2709 = vld [vmem:[%s315 + $0x24] sm:$0xf]
        %v2710 = vld [vmem:[%s315 + $0x28] sm:$0xf]
        %v2711 = vld [vmem:[%s315 + $0x2c] sm:$0xf]
        %v2712 = vld [vmem:[%s315 + $0x30] sm:$0xf]
        %v2713 = vld [vmem:[%s315 + $0x34] sm:$0xf]
        %v2714 = vld [vmem:[%s315 + $0x38] sm:$0xf]
        %v2715 = vld [vmem:[%s315 + $0x3c] sm:$0xf]
        %v2716 = vld [vmem:[%s315 + $0x40] sm:$0xf]
        %v2717 = vld [vmem:[%s315 + $0x44] sm:$0xf]
        %v2718 = vld [vmem:[%s315 + $0x48] sm:$0xf]
        %v2719 = vld [vmem:[%s315 + $0x4c] sm:$0xf]
        %v2720 = vld [vmem:[%s315 + $0x50] sm:$0xf]
        %v2721 = vld [vmem:[%s315 + $0x54] sm:$0xf]
        %v2722 = vld [vmem:[%s315 + $0x58] sm:$0xf]
        %v2723 = vld [vmem:[%s315 + $0x5c] sm:$0xf]
        %v2724 = vld [vmem:[%s315 + $0x60] sm:$0xf]
        %v2725 = vld [vmem:[%s315 + $0x64] sm:$0xf]
        %v2726 = vld [vmem:[%s315 + $0x68] sm:$0xf]
        %v2727 = vld [vmem:[%s315 + $0x6c] sm:$0xf]
        %v2728 = vld [vmem:[%s315 + $0x70] sm:$0xf]
        %v2729 = vld [vmem:[%s315 + $0x74] sm:$0xf]
        %v2730 = vld [vmem:[%s315 + $0x78] sm:$0xf]
        %v2731 = vld [vmem:[%s315 + $0x7c] sm:$0xf]
        %v2732 = vld [vmem:[%s315 + $0x80] sm:$0xf]
        %v2733 = vld [vmem:[%s315 + $0x84] sm:$0xf]
        %v2734 = vld [vmem:[%s315 + $0x88] sm:$0xf]
        %v2735 = vld [vmem:[%s315 + $0x8c] sm:$0xf]
        %v2736 = vld [vmem:[%s315 + $0x90] sm:$0xf]
        %v2737 = vld [vmem:[%s315 + $0x94] sm:$0xf]
        %v2738 = vld [vmem:[%s315 + $0x98] sm:$0xf]
        %v2739 = vld [vmem:[%s315 + $0x9c] sm:$0xf]
        %v2740 = vld [vmem:[%s315 + $0xa0] sm:$0xf]
        %v2741 = vld [vmem:[%s315 + $0xa4] sm:$0xf]
        %v2742 = vld [vmem:[%s315 + $0xa8] sm:$0xf]
        %v2743 = vld [vmem:[%s315 + $0xac] sm:$0xf]
        %v2744 = vld [vmem:[%s315 + $0xb0] sm:$0xf]
        %v2745 = vld [vmem:[%s315 + $0xb4] sm:$0xf]
        %v2746 = vld [vmem:[%s315 + $0xb8] sm:$0xf]
        %v2747 = vld [vmem:[%s315 + $0xbc] sm:$0xf]
        %v2748 = vld [vmem:[%s315 + $0xc0] sm:$0xf]
        %v2749 = vld [vmem:[%s315 + $0xc4] sm:$0xf]
        %v2750 = vld [vmem:[%s315 + $0xc8] sm:$0xf]
        %s2751 = scalar_lea.vmem [#allocation6], 384
        %v2752 = vld [vmem:[%s2751] sm:$0xf]
        %v2753 = vld [vmem:[%s2751 + $0x4] sm:$0xf]
        %v2754 = vld [vmem:[%s2751 + $0x8] sm:$0xf]
        %v2755 = vld [vmem:[%s2751 + $0xc] sm:$0xf]
        %v2756 = vld [vmem:[%s2751 + $0x10] sm:$0xf]
        %v2757 = vld [vmem:[%s2751 + $0x14] sm:$0xf]
        %v2758 = vld [vmem:[%s2751 + $0x18] sm:$0xf]
        %v2759 = vld [vmem:[%s2751 + $0x1c] sm:$0xf]
        %v2760 = vld [vmem:[%s2751 + $0x20] sm:$0xf]
        %v2761 = vld [vmem:[%s2751 + $0x24] sm:$0xf]
        %v2762 = vld [vmem:[%s2751 + $0x28] sm:$0xf]
        %v2763 = vld [vmem:[%s2751 + $0x2c] sm:$0xf]
        %v2764 = vld [vmem:[%s2751 + $0x30] sm:$0xf]
        %v2765 = vld [vmem:[%s2751 + $0x34] sm:$0xf]
        %v2766 = vld [vmem:[%s2751 + $0x38] sm:$0xf]
        %v2767 = vld [vmem:[%s2751 + $0x3c] sm:$0xf]
        %v2814 = vunpack.c.l.b16 %v2705
        %v2815 = vunpack.c.l.b16 %v2706
        %v2816 = vunpack.c.l.b16 %v2707
        %v2817 = vunpack.c.l.b16 %v2708
        %v2818 = vunpack.c.l.b16 %v2709
        %v2819 = vunpack.c.l.b16 %v2710
        %v2820 = vunpack.c.l.b16 %v2711
        %v2821 = vunpack.c.l.b16 %v2712
        %v2822 = vunpack.c.l.b16 %v2713
        %v2823 = vunpack.c.l.b16 %v2714
        %v2824 = vunpack.c.l.b16 %v2715
        %v2825 = vunpack.c.l.b16 %v2716
        %v2826 = vunpack.c.l.b16 %v2717
        %v2827 = vunpack.c.l.b16 %v2718
        %v2828 = vunpack.c.l.b16 %v2719
        %v2829 = vunpack.c.l.b16 %v2720
        %v2830 = vunpack.c.l.b16 %v2721
        %v2831 = vunpack.c.l.b16 %v2722
        %v2832 = vunpack.c.l.b16 %v2723
        %v2833 = vunpack.c.l.b16 %v2724
        %v2834 = vunpack.c.l.b16 %v2725
        %v2835 = vunpack.c.l.b16 %v2726
        %v2836 = vunpack.c.l.b16 %v2727
        %v2837 = vunpack.c.l.b16 %v2728
        %v2838 = vunpack.c.l.b16 %v2729
        %v2839 = vunpack.c.l.b16 %v2730
        %v2840 = vunpack.c.l.b16 %v2731
        %v2841 = vunpack.c.l.b16 %v2732
        %v2842 = vunpack.c.l.b16 %v2733
        %v2843 = vunpack.c.l.b16 %v2734
        %v2844 = vunpack.c.l.b16 %v2735
        %v2845 = vunpack.c.l.b16 %v2736
        %v2846 = vunpack.c.l.b16 %v2737
        %v2847 = vunpack.c.l.b16 %v2738
        %v2848 = vunpack.c.l.b16 %v2739
        %v2849 = vunpack.c.l.b16 %v2740
        %v2850 = vunpack.c.l.b16 %v2741
        %v2851 = vunpack.c.l.b16 %v2742
        %v2852 = vunpack.c.l.b16 %v2743
        %v2853 = vunpack.c.l.b16 %v2744
        %v2854 = vunpack.c.l.b16 %v2745
        %v2855 = vunpack.c.l.b16 %v2746
        %v2856 = vunpack.c.l.b16 %v2747
        %v2857 = vunpack.c.l.b16 %v2748
        %v2858 = vunpack.c.l.b16 %v2749
        %v2859 = vunpack.c.l.b16 %v2750
        %v2860 = vpack.c.b16 %v2815, %v2814
        %v2861 = vpack.c.b16 %v2817, %v2816
        %v2862 = vpack.c.b16 %v2819, %v2818
        %v2863 = vpack.c.b16 %v2821, %v2820
        %v2864 = vpack.c.b16 %v2823, %v2822
        %v2865 = vpack.c.b16 %v2825, %v2824
        %v2866 = vpack.c.b16 %v2827, %v2826
        %v2867 = vpack.c.b16 %v2829, %v2828
        %v2868 = vpack.c.b16 %v2831, %v2830
        %v2869 = vpack.c.b16 %v2833, %v2832
        %v2870 = vpack.c.b16 %v2835, %v2834
        %v2871 = vpack.c.b16 %v2837, %v2836
        %v2872 = vpack.c.b16 %v2839, %v2838
        %v2873 = vpack.c.b16 %v2841, %v2840
        %v2874 = vpack.c.b16 %v2843, %v2842
        %v2875 = vpack.c.b16 %v2845, %v2844
        %v2876 = vpack.c.b16 %v2847, %v2846
        %v2877 = vpack.c.b16 %v2849, %v2848
        %v2878 = vpack.c.b16 %v2851, %v2850
        %v2879 = vpack.c.b16 %v2853, %v2852
        %v2880 = vpack.c.b16 %v2855, %v2854
        %v2881 = vpack.c.b16 %v2857, %v2856
        %v2882 = vpack.c.b16 %v2859, %v2858
        %v2922 = vunpack.c.l.b16 %v2752
        %v2923 = vunpack.c.l.b16 %v2753
        %v2924 = vunpack.c.l.b16 %v2754
        %v2925 = vunpack.c.l.b16 %v2755
        %v2926 = vunpack.c.l.b16 %v2756
        %v2927 = vunpack.c.l.b16 %v2757
        %v2928 = vunpack.c.l.b16 %v2758
        %v2929 = vunpack.c.l.b16 %v2759
        %v2930 = vunpack.c.l.b16 %v2760
        %v2931 = vunpack.c.l.b16 %v2761
        %v2932 = vunpack.c.l.b16 %v2762
        %v2933 = vunpack.c.l.b16 %v2763
        %v2934 = vunpack.c.l.b16 %v2764
        %v2935 = vunpack.c.l.b16 %v2765
        %v2936 = vunpack.c.l.b16 %v2766
        %v2937 = vunpack.c.l.b16 %v2767
        %v2938 = vpack.c.b16 %v2923, %v2922
        %v2939 = vpack.c.b16 %v2925, %v2924
        %v2940 = vpack.c.b16 %v2927, %v2926
        %v2941 = vpack.c.b16 %v2929, %v2928
        %v2942 = vpack.c.b16 %v2931, %v2930
        %v2943 = vpack.c.b16 %v2933, %v2932
        %v2944 = vpack.c.b16 %v2935, %v2934
        %v2945 = vpack.c.b16 %v2937, %v2936
        %2954 = vmatpush.bf16.msra.mxu0 %v2945
        %2955 = vmatpush.bf16.msra.mxu0 %v2944
        %2956 = vmatpush.bf16.msra.mxu0 %v2943
        %2957 = vmatpush.bf16.msra.mxu0 %v2942
        %2958 = vmatpush.bf16.msra.mxu0 %v2941
        %2959 = vmatpush.bf16.msra.mxu0 %v2940
        %2960 = vmatpush.bf16.msra.mxu0 %v2939
        %2961 = vmatpush.bf16.msra.mxu0 %v2938
        %2962 = vmatmul.bf16.gmra.mxu0 %v2860
        %v2963 = vpop.f32.mrf.mxu0
        %v2964 = vadd.f32 0.0, %v2963
        %v2965 = vpop.f32.mrf.mxu0
        %v2966 = vadd.f32 0.0, %v2965
        %2967 = vmatmul.bf16.gmra.mxu0 %v2861
        %v2968 = vpop.f32.mrf.mxu0
        %v2969 = vadd.f32 0.0, %v2968
        %v2970 = vpop.f32.mrf.mxu0
        %v2971 = vadd.f32 0.0, %v2970
        %2972 = vmatmul.bf16.gmra.mxu0 %v2862
        %v2973 = vpop.f32.mrf.mxu0
        %v2974 = vadd.f32 0.0, %v2973
        %v2975 = vpop.f32.mrf.mxu0
        %v2976 = vadd.f32 0.0, %v2975
        %2977 = vmatmul.bf16.gmra.mxu0 %v2863
        %v2978 = vpop.f32.mrf.mxu0
        %v2979 = vadd.f32 0.0, %v2978
        %v2980 = vpop.f32.mrf.mxu0
        %v2981 = vadd.f32 0.0, %v2980
        %2982 = vmatmul.bf16.gmra.mxu0 %v2864
        %v2983 = vpop.f32.mrf.mxu0
        %v2984 = vadd.f32 0.0, %v2983
        %v2985 = vpop.f32.mrf.mxu0
        %v2986 = vadd.f32 0.0, %v2985
        %2987 = vmatmul.bf16.gmra.mxu0 %v2865
        %v2988 = vpop.f32.mrf.mxu0
        %v2989 = vadd.f32 0.0, %v2988
        %v2990 = vpop.f32.mrf.mxu0
        %v2991 = vadd.f32 0.0, %v2990
        %2992 = vmatmul.bf16.gmra.mxu0 %v2866
        %v2993 = vpop.f32.mrf.mxu0
        %v2994 = vadd.f32 0.0, %v2993
        %v2995 = vpop.f32.mrf.mxu0
        %v2996 = vadd.f32 0.0, %v2995
        %2997 = vmatmul.bf16.gmra.mxu0 %v2867
        %v2998 = vpop.f32.mrf.mxu0
        %v2999 = vadd.f32 0.0, %v2998
        %v3000 = vpop.f32.mrf.mxu0
        %v3001 = vadd.f32 0.0, %v3000
        %3002 = vmatmul.bf16.gmra.mxu0 %v2868
        %v3003 = vpop.f32.mrf.mxu0
        %v3004 = vadd.f32 0.0, %v3003
        %v3005 = vpop.f32.mrf.mxu0
        %v3006 = vadd.f32 0.0, %v3005
        %3007 = vmatmul.bf16.gmra.mxu0 %v2869
        %v3008 = vpop.f32.mrf.mxu0
        %v3009 = vadd.f32 0.0, %v3008
        %v3010 = vpop.f32.mrf.mxu0
        %v3011 = vadd.f32 0.0, %v3010
        %3012 = vmatmul.bf16.gmra.mxu0 %v2870
        %v3013 = vpop.f32.mrf.mxu0
        %v3014 = vadd.f32 0.0, %v3013
        %v3015 = vpop.f32.mrf.mxu0
        %v3016 = vadd.f32 0.0, %v3015
        %3017 = vmatmul.bf16.gmra.mxu0 %v2871
        %v3018 = vpop.f32.mrf.mxu0
        %v3019 = vadd.f32 0.0, %v3018
        %v3020 = vpop.f32.mrf.mxu0
        %v3021 = vadd.f32 0.0, %v3020
        %3022 = vmatmul.bf16.gmra.mxu0 %v2872
        %v3023 = vpop.f32.mrf.mxu0
        %v3024 = vadd.f32 0.0, %v3023
        %v3025 = vpop.f32.mrf.mxu0
        %v3026 = vadd.f32 0.0, %v3025
        %3027 = vmatmul.bf16.gmra.mxu0 %v2873
        %v3028 = vpop.f32.mrf.mxu0
        %v3029 = vadd.f32 0.0, %v3028
        %v3030 = vpop.f32.mrf.mxu0
        %v3031 = vadd.f32 0.0, %v3030
        %3032 = vmatmul.bf16.gmra.mxu0 %v2874
        %v3033 = vpop.f32.mrf.mxu0
        %v3034 = vadd.f32 0.0, %v3033
        %v3035 = vpop.f32.mrf.mxu0
        %v3036 = vadd.f32 0.0, %v3035
        %3037 = vmatmul.bf16.gmra.mxu0 %v2875
        %v3038 = vpop.f32.mrf.mxu0
        %v3039 = vadd.f32 0.0, %v3038
        %v3040 = vpop.f32.mrf.mxu0
        %v3041 = vadd.f32 0.0, %v3040
        %3042 = vmatmul.bf16.gmra.mxu0 %v2876
        %v3043 = vpop.f32.mrf.mxu0
        %v3044 = vadd.f32 0.0, %v3043
        %v3045 = vpop.f32.mrf.mxu0
        %v3046 = vadd.f32 0.0, %v3045
        %3047 = vmatmul.bf16.gmra.mxu0 %v2877
        %v3048 = vpop.f32.mrf.mxu0
        %v3049 = vadd.f32 0.0, %v3048
        %v3050 = vpop.f32.mrf.mxu0
        %v3051 = vadd.f32 0.0, %v3050
        %3052 = vmatmul.bf16.gmra.mxu0 %v2878
        %v3053 = vpop.f32.mrf.mxu0
        %v3054 = vadd.f32 0.0, %v3053
        %v3055 = vpop.f32.mrf.mxu0
        %v3056 = vadd.f32 0.0, %v3055
        %3057 = vmatmul.bf16.gmra.mxu0 %v2879
        %v3058 = vpop.f32.mrf.mxu0
        %v3059 = vadd.f32 0.0, %v3058
        %v3060 = vpop.f32.mrf.mxu0
        %v3061 = vadd.f32 0.0, %v3060
        %3062 = vmatmul.bf16.gmra.mxu0 %v2880
        %v3063 = vpop.f32.mrf.mxu0
        %v3064 = vadd.f32 0.0, %v3063
        %v3065 = vpop.f32.mrf.mxu0
        %v3066 = vadd.f32 0.0, %v3065
        %3067 = vmatmul.bf16.gmra.mxu0 %v2881
        %v3068 = vpop.f32.mrf.mxu0
        %v3069 = vadd.f32 0.0, %v3068
        %v3070 = vpop.f32.mrf.mxu0
        %v3071 = vadd.f32 0.0, %v3070
        %3072 = vmatmul.bf16.gmra.mxu0 %v2882
        %v3073 = vpop.f32.mrf.mxu0
        %v3074 = vadd.f32 0.0, %v3073
        %v3075 = vpop.f32.mrf.mxu0
        %v3076 = vadd.f32 0.0, %v3075
        %3077 = vdwg.mxu0
        %v3078 = vadd.f32 %v2659, %v2964
        %v3079 = vadd.f32 %v2660, %v2966
        %v3080 = vadd.f32 %v2661, %v2969
        %v3081 = vadd.f32 %v2662, %v2971
        %v3082 = vadd.f32 %v2663, %v2974
        %v3083 = vadd.f32 %v2664, %v2976
        %v3084 = vadd.f32 %v2665, %v2979
        %v3085 = vadd.f32 %v2666, %v2981
        %v3086 = vadd.f32 %v2667, %v2984
        %v3087 = vadd.f32 %v2668, %v2986
        %v3088 = vadd.f32 %v2669, %v2989
        %v3089 = vadd.f32 %v2670, %v2991
        %v3090 = vadd.f32 %v2671, %v2994
        %v3091 = vadd.f32 %v2672, %v2996
        %v3092 = vadd.f32 %v2673, %v2999
        %v3093 = vadd.f32 %v2674, %v3001
        %v3094 = vadd.f32 %v2675, %v3004
        %v3095 = vadd.f32 %v2676, %v3006
        %v3096 = vadd.f32 %v2677, %v3009
        %v3097 = vadd.f32 %v2678, %v3011
        %v3098 = vadd.f32 %v2679, %v3014
        %v3099 = vadd.f32 %v2680, %v3016
        %v3100 = vadd.f32 %v2681, %v3019
        %v3101 = vadd.f32 %v2682, %v3021
        %v3102 = vadd.f32 %v2683, %v3024
        %v3103 = vadd.f32 %v2684, %v3026
        %v3104 = vadd.f32 %v2685, %v3029
        %v3105 = vadd.f32 %v2686, %v3031
        %v3106 = vadd.f32 %v2687, %v3034
        %v3107 = vadd.f32 %v2688, %v3036
        %v3108 = vadd.f32 %v2689, %v3039
        %v3109 = vadd.f32 %v2690, %v3041
        %v3110 = vadd.f32 %v2691, %v3044
        %v3111 = vadd.f32 %v2692, %v3046
        %v3112 = vadd.f32 %v2693, %v3049
        %v3113 = vadd.f32 %v2694, %v3051
        %v3114 = vadd.f32 %v2695, %v3054
        %v3115 = vadd.f32 %v2696, %v3056
        %v3116 = vadd.f32 %v2697, %v3059
        %v3117 = vadd.f32 %v2698, %v3061
        %v3118 = vadd.f32 %v2699, %v3064
        %v3119 = vadd.f32 %v2700, %v3066
        %v3120 = vadd.f32 %v2701, %v3069
        %v3121 = vadd.f32 %v2702, %v3071
        %v3122 = vadd.f32 %v2703, %v3074
        %v3123 = vadd.f32 %v2704, %v3076
        %v3124 = vld [vmem:[%s315 + $0x14] sm:$0xf]
        %v3125 = vld [vmem:[%s315 + $0x18] sm:$0xf]
        %v3126 = vld [vmem:[%s315 + $0x1c] sm:$0xf]
        %v3127 = vld [vmem:[%s315 + $0x20] sm:$0xf]
        %v3128 = vld [vmem:[%s315 + $0x24] sm:$0xf]
        %v3129 = vld [vmem:[%s315 + $0x28] sm:$0xf]
        %v3130 = vld [vmem:[%s315 + $0x2c] sm:$0xf]
        %v3131 = vld [vmem:[%s315 + $0x30] sm:$0xf]
        %v3132 = vld [vmem:[%s315 + $0x34] sm:$0xf]
        %v3133 = vld [vmem:[%s315 + $0x38] sm:$0xf]
        %v3134 = vld [vmem:[%s315 + $0x3c] sm:$0xf]
        %v3135 = vld [vmem:[%s315 + $0x40] sm:$0xf]
        %v3136 = vld [vmem:[%s315 + $0x44] sm:$0xf]
        %v3137 = vld [vmem:[%s315 + $0x48] sm:$0xf]
        %v3138 = vld [vmem:[%s315 + $0x4c] sm:$0xf]
        %v3139 = vld [vmem:[%s315 + $0x50] sm:$0xf]
        %v3140 = vld [vmem:[%s315 + $0x54] sm:$0xf]
        %v3141 = vld [vmem:[%s315 + $0x58] sm:$0xf]
        %v3142 = vld [vmem:[%s315 + $0x5c] sm:$0xf]
        %v3143 = vld [vmem:[%s315 + $0x60] sm:$0xf]
        %v3144 = vld [vmem:[%s315 + $0x64] sm:$0xf]
        %v3145 = vld [vmem:[%s315 + $0x68] sm:$0xf]
        %v3146 = vld [vmem:[%s315 + $0x6c] sm:$0xf]
        %v3147 = vld [vmem:[%s315 + $0x70] sm:$0xf]
        %v3148 = vld [vmem:[%s315 + $0x74] sm:$0xf]
        %v3149 = vld [vmem:[%s315 + $0x78] sm:$0xf]
        %v3150 = vld [vmem:[%s315 + $0x7c] sm:$0xf]
        %v3151 = vld [vmem:[%s315 + $0x80] sm:$0xf]
        %v3152 = vld [vmem:[%s315 + $0x84] sm:$0xf]
        %v3153 = vld [vmem:[%s315 + $0x88] sm:$0xf]
        %v3154 = vld [vmem:[%s315 + $0x8c] sm:$0xf]
        %v3155 = vld [vmem:[%s315 + $0x90] sm:$0xf]
        %v3156 = vld [vmem:[%s315 + $0x94] sm:$0xf]
        %v3157 = vld [vmem:[%s315 + $0x98] sm:$0xf]
        %v3158 = vld [vmem:[%s315 + $0x9c] sm:$0xf]
        %v3159 = vld [vmem:[%s315 + $0xa0] sm:$0xf]
        %v3160 = vld [vmem:[%s315 + $0xa4] sm:$0xf]
        %v3161 = vld [vmem:[%s315 + $0xa8] sm:$0xf]
        %v3162 = vld [vmem:[%s315 + $0xac] sm:$0xf]
        %v3163 = vld [vmem:[%s315 + $0xb0] sm:$0xf]
        %v3164 = vld [vmem:[%s315 + $0xb4] sm:$0xf]
        %v3165 = vld [vmem:[%s315 + $0xb8] sm:$0xf]
        %v3166 = vld [vmem:[%s315 + $0xbc] sm:$0xf]
        %v3167 = vld [vmem:[%s315 + $0xc0] sm:$0xf]
        %v3168 = vld [vmem:[%s315 + $0xc4] sm:$0xf]
        %v3169 = vld [vmem:[%s315 + $0xc8] sm:$0xf]
        %v3170 = vld [vmem:[%s315 + $0xcc] sm:$0x1]
        %s3171 = scalar_lea.vmem [#allocation6], 448
        %v3172 = vld [vmem:[%s3171] sm:$0xf]
        %v3173 = vld [vmem:[%s3171 + $0x4] sm:$0xf]
        %v3174 = vld [vmem:[%s3171 + $0x8] sm:$0xf]
        %v3175 = vld [vmem:[%s3171 + $0xc] sm:$0xf]
        %v3176 = vld [vmem:[%s3171 + $0x10] sm:$0xf]
        %v3177 = vld [vmem:[%s3171 + $0x14] sm:$0xf]
        %v3178 = vld [vmem:[%s3171 + $0x18] sm:$0xf]
        %v3179 = vld [vmem:[%s3171 + $0x1c] sm:$0xf]
        %v3180 = vld [vmem:[%s3171 + $0x20] sm:$0xf]
        %v3181 = vld [vmem:[%s3171 + $0x24] sm:$0xf]
        %v3182 = vld [vmem:[%s3171 + $0x28] sm:$0xf]
        %v3183 = vld [vmem:[%s3171 + $0x2c] sm:$0xf]
        %v3184 = vld [vmem:[%s3171 + $0x30] sm:$0xf]
        %v3185 = vld [vmem:[%s3171 + $0x34] sm:$0xf]
        %v3186 = vld [vmem:[%s3171 + $0x38] sm:$0xf]
        %v3187 = vld [vmem:[%s3171 + $0x3c] sm:$0xf]
        %v3235 = vunpack.c.l.b16 %v3124
        %v3236 = vunpack.c.l.b16 %v3125
        %v3237 = vunpack.c.l.b16 %v3126
        %v3238 = vunpack.c.l.b16 %v3127
        %v3239 = vunpack.c.l.b16 %v3128
        %v3240 = vunpack.c.l.b16 %v3129
        %v3241 = vunpack.c.l.b16 %v3130
        %v3242 = vunpack.c.l.b16 %v3131
        %v3243 = vunpack.c.l.b16 %v3132
        %v3244 = vunpack.c.l.b16 %v3133
        %v3245 = vunpack.c.l.b16 %v3134
        %v3246 = vunpack.c.l.b16 %v3135
        %v3247 = vunpack.c.l.b16 %v3136
        %v3248 = vunpack.c.l.b16 %v3137
        %v3249 = vunpack.c.l.b16 %v3138
        %v3250 = vunpack.c.l.b16 %v3139
        %v3251 = vunpack.c.l.b16 %v3140
        %v3252 = vunpack.c.l.b16 %v3141
        %v3253 = vunpack.c.l.b16 %v3142
        %v3254 = vunpack.c.l.b16 %v3143
        %v3255 = vunpack.c.l.b16 %v3144
        %v3256 = vunpack.c.l.b16 %v3145
        %v3257 = vunpack.c.l.b16 %v3146
        %v3258 = vunpack.c.l.b16 %v3147
        %v3259 = vunpack.c.l.b16 %v3148
        %v3260 = vunpack.c.l.b16 %v3149
        %v3261 = vunpack.c.l.b16 %v3150
        %v3262 = vunpack.c.l.b16 %v3151
        %v3263 = vunpack.c.l.b16 %v3152
        %v3264 = vunpack.c.l.b16 %v3153
        %v3265 = vunpack.c.l.b16 %v3154
        %v3266 = vunpack.c.l.b16 %v3155
        %v3267 = vunpack.c.l.b16 %v3156
        %v3268 = vunpack.c.l.b16 %v3157
        %v3269 = vunpack.c.l.b16 %v3158
        %v3270 = vunpack.c.l.b16 %v3159
        %v3271 = vunpack.c.l.b16 %v3160
        %v3272 = vunpack.c.l.b16 %v3161
        %v3273 = vunpack.c.l.b16 %v3162
        %v3274 = vunpack.c.l.b16 %v3163
        %v3275 = vunpack.c.l.b16 %v3164
        %v3276 = vunpack.c.l.b16 %v3165
        %v3277 = vunpack.c.l.b16 %v3166
        %v3278 = vunpack.c.l.b16 %v3167
        %v3279 = vunpack.c.l.b16 %v3168
        %v3280 = vunpack.c.l.b16 %v3169
        %v3281 = vunpack.c.l.b16 %v3170
        %v3282 = vpack.c.b16 %v3236, %v3235
        %v3283 = vpack.c.b16 %v3238, %v3237
        %v3284 = vpack.c.b16 %v3240, %v3239
        %v3285 = vpack.c.b16 %v3242, %v3241
        %v3286 = vpack.c.b16 %v3244, %v3243
        %v3287 = vpack.c.b16 %v3246, %v3245
        %v3288 = vpack.c.b16 %v3248, %v3247
        %v3289 = vpack.c.b16 %v3250, %v3249
        %v3290 = vpack.c.b16 %v3252, %v3251
        %v3291 = vpack.c.b16 %v3254, %v3253
        %v3292 = vpack.c.b16 %v3256, %v3255
        %v3293 = vpack.c.b16 %v3258, %v3257
        %v3294 = vpack.c.b16 %v3260, %v3259
        %v3295 = vpack.c.b16 %v3262, %v3261
        %v3296 = vpack.c.b16 %v3264, %v3263
        %v3297 = vpack.c.b16 %v3266, %v3265
        %v3298 = vpack.c.b16 %v3268, %v3267
        %v3299 = vpack.c.b16 %v3270, %v3269
        %v3300 = vpack.c.b16 %v3272, %v3271
        %v3301 = vpack.c.b16 %v3274, %v3273
        %v3302 = vpack.c.b16 %v3276, %v3275
        %v3303 = vpack.c.b16 %v3278, %v3277
        %v3304 = vpack.c.b16 %v3280, %v3279
        %v3305 = vpack.c.b16 %v3281, %v3281
        %v3307 = vshrl.u32 %v3282, 16
        %v3309 = vshll.u32 %v3282, 16
        %v3311 = vrot.slane %v3309, 1
        %v3312 = vor.u32 %v3307, %v3311
        %v3314 = vshll.u32 %v3283, 16
        %v3316 = vrot.slane %v3314, 1
        %v3317 = vsel %vm557, %v3312, %v3316
        %v3318 = vshrl.u32 %v3283, 16
        %v3320 = vor.u32 %v3318, %v3316
        %v3322 = vshll.u32 %v3284, 16
        %v3324 = vrot.slane %v3322, 1
        %v3325 = vsel %vm557, %v3320, %v3324
        %v3326 = vshrl.u32 %v3284, 16
        %v3328 = vor.u32 %v3326, %v3324
        %v3330 = vshll.u32 %v3285, 16
        %v3332 = vrot.slane %v3330, 1
        %v3333 = vsel %vm557, %v3328, %v3332
        %v3334 = vshrl.u32 %v3285, 16
        %v3336 = vor.u32 %v3334, %v3332
        %v3338 = vshll.u32 %v3286, 16
        %v3340 = vrot.slane %v3338, 1
        %v3341 = vsel %vm557, %v3336, %v3340
        %v3342 = vshrl.u32 %v3286, 16
        %v3344 = vor.u32 %v3342, %v3340
        %v3346 = vshll.u32 %v3287, 16
        %v3348 = vrot.slane %v3346, 1
        %v3349 = vsel %vm557, %v3344, %v3348
        %v3350 = vshrl.u32 %v3287, 16
        %v3352 = vor.u32 %v3350, %v3348
        %v3354 = vshll.u32 %v3288, 16
        %v3356 = vrot.slane %v3354, 1
        %v3357 = vsel %vm557, %v3352, %v3356
        %v3358 = vshrl.u32 %v3288, 16
        %v3360 = vor.u32 %v3358, %v3356
        %v3362 = vshll.u32 %v3289, 16
        %v3364 = vrot.slane %v3362, 1
        %v3365 = vsel %vm557, %v3360, %v3364
        %v3366 = vshrl.u32 %v3289, 16
        %v3368 = vor.u32 %v3366, %v3364
        %v3370 = vshll.u32 %v3290, 16
        %v3372 = vrot.slane %v3370, 1
        %v3373 = vsel %vm557, %v3368, %v3372
        %v3374 = vshrl.u32 %v3290, 16
        %v3376 = vor.u32 %v3374, %v3372
        %v3378 = vshll.u32 %v3291, 16
        %v3380 = vrot.slane %v3378, 1
        %v3381 = vsel %vm557, %v3376, %v3380
        %v3382 = vshrl.u32 %v3291, 16
        %v3384 = vor.u32 %v3382, %v3380
        %v3386 = vshll.u32 %v3292, 16
        %v3388 = vrot.slane %v3386, 1
        %v3389 = vsel %vm557, %v3384, %v3388
        %v3390 = vshrl.u32 %v3292, 16
        %v3392 = vor.u32 %v3390, %v3388
        %v3394 = vshll.u32 %v3293, 16
        %v3396 = vrot.slane %v3394, 1
        %v3397 = vsel %vm557, %v3392, %v3396
        %v3398 = vshrl.u32 %v3293, 16
        %v3400 = vor.u32 %v3398, %v3396
        %v3402 = vshll.u32 %v3294, 16
        %v3404 = vrot.slane %v3402, 1
        %v3405 = vsel %vm557, %v3400, %v3404
        %v3406 = vshrl.u32 %v3294, 16
        %v3408 = vor.u32 %v3406, %v3404
        %v3410 = vshll.u32 %v3295, 16
        %v3412 = vrot.slane %v3410, 1
        %v3413 = vsel %vm557, %v3408, %v3412
        %v3414 = vshrl.u32 %v3295, 16
        %v3416 = vor.u32 %v3414, %v3412
        %v3418 = vshll.u32 %v3296, 16
        %v3420 = vrot.slane %v3418, 1
        %v3421 = vsel %vm557, %v3416, %v3420
        %v3422 = vshrl.u32 %v3296, 16
        %v3424 = vor.u32 %v3422, %v3420
        %v3426 = vshll.u32 %v3297, 16
        %v3428 = vrot.slane %v3426, 1
        %v3429 = vsel %vm557, %v3424, %v3428
        %v3430 = vshrl.u32 %v3297, 16
        %v3432 = vor.u32 %v3430, %v3428
        %v3434 = vshll.u32 %v3298, 16
        %v3436 = vrot.slane %v3434, 1
        %v3437 = vsel %vm557, %v3432, %v3436
        %v3438 = vshrl.u32 %v3298, 16
        %v3440 = vor.u32 %v3438, %v3436
        %v3442 = vshll.u32 %v3299, 16
        %v3444 = vrot.slane %v3442, 1
        %v3445 = vsel %vm557, %v3440, %v3444
        %v3446 = vshrl.u32 %v3299, 16
        %v3448 = vor.u32 %v3446, %v3444
        %v3450 = vshll.u32 %v3300, 16
        %v3452 = vrot.slane %v3450, 1
        %v3453 = vsel %vm557, %v3448, %v3452
        %v3454 = vshrl.u32 %v3300, 16
        %v3456 = vor.u32 %v3454, %v3452
        %v3458 = vshll.u32 %v3301, 16
        %v3460 = vrot.slane %v3458, 1
        %v3461 = vsel %vm557, %v3456, %v3460
        %v3462 = vshrl.u32 %v3301, 16
        %v3464 = vor.u32 %v3462, %v3460
        %v3466 = vshll.u32 %v3302, 16
        %v3468 = vrot.slane %v3466, 1
        %v3469 = vsel %vm557, %v3464, %v3468
        %v3470 = vshrl.u32 %v3302, 16
        %v3472 = vor.u32 %v3470, %v3468
        %v3474 = vshll.u32 %v3303, 16
        %v3476 = vrot.slane %v3474, 1
        %v3477 = vsel %vm557, %v3472, %v3476
        %v3478 = vshrl.u32 %v3303, 16
        %v3480 = vor.u32 %v3478, %v3476
        %v3482 = vshll.u32 %v3304, 16
        %v3484 = vrot.slane %v3482, 1
        %v3485 = vsel %vm557, %v3480, %v3484
        %v3486 = vshrl.u32 %v3304, 16
        %v3488 = vor.u32 %v3486, %v3484
        %v3490 = vshll.u32 %v3305, 16
        %v3492 = vrot.slane %v3490, 1
        %v3493 = vsel %vm557, %v3488, %v3492
        %v3533 = vunpack.c.l.b16 %v3172
        %v3534 = vunpack.c.l.b16 %v3173
        %v3535 = vunpack.c.l.b16 %v3174
        %v3536 = vunpack.c.l.b16 %v3175
        %v3537 = vunpack.c.l.b16 %v3176
        %v3538 = vunpack.c.l.b16 %v3177
        %v3539 = vunpack.c.l.b16 %v3178
        %v3540 = vunpack.c.l.b16 %v3179
        %v3541 = vunpack.c.l.b16 %v3180
        %v3542 = vunpack.c.l.b16 %v3181
        %v3543 = vunpack.c.l.b16 %v3182
        %v3544 = vunpack.c.l.b16 %v3183
        %v3545 = vunpack.c.l.b16 %v3184
        %v3546 = vunpack.c.l.b16 %v3185
        %v3547 = vunpack.c.l.b16 %v3186
        %v3548 = vunpack.c.l.b16 %v3187
        %v3549 = vpack.c.b16 %v3534, %v3533
        %v3550 = vpack.c.b16 %v3536, %v3535
        %v3551 = vpack.c.b16 %v3538, %v3537
        %v3552 = vpack.c.b16 %v3540, %v3539
        %v3553 = vpack.c.b16 %v3542, %v3541
        %v3554 = vpack.c.b16 %v3544, %v3543
        %v3555 = vpack.c.b16 %v3546, %v3545
        %v3556 = vpack.c.b16 %v3548, %v3547
        %3565 = vmatpush.bf16.msra.mxu0 %v3556
        %3566 = vmatpush.bf16.msra.mxu0 %v3555
        %3567 = vmatpush.bf16.msra.mxu0 %v3554
        %3568 = vmatpush.bf16.msra.mxu0 %v3553
        %3569 = vmatpush.bf16.msra.mxu0 %v3552
        %3570 = vmatpush.bf16.msra.mxu0 %v3551
        %3571 = vmatpush.bf16.msra.mxu0 %v3550
        %3572 = vmatpush.bf16.msra.mxu0 %v3549
        %3573 = vmatmul.bf16.gmra.mxu0 %v3317
        %v3574 = vpop.f32.mrf.mxu0
        %v3575 = vadd.f32 0.0, %v3574
        %v3576 = vpop.f32.mrf.mxu0
        %v3577 = vadd.f32 0.0, %v3576
        %3578 = vmatmul.bf16.gmra.mxu0 %v3325
        %v3579 = vpop.f32.mrf.mxu0
        %v3580 = vadd.f32 0.0, %v3579
        %v3581 = vpop.f32.mrf.mxu0
        %v3582 = vadd.f32 0.0, %v3581
        %3583 = vmatmul.bf16.gmra.mxu0 %v3333
        %v3584 = vpop.f32.mrf.mxu0
        %v3585 = vadd.f32 0.0, %v3584
        %v3586 = vpop.f32.mrf.mxu0
        %v3587 = vadd.f32 0.0, %v3586
        %3588 = vmatmul.bf16.gmra.mxu0 %v3341
        %v3589 = vpop.f32.mrf.mxu0
        %v3590 = vadd.f32 0.0, %v3589
        %v3591 = vpop.f32.mrf.mxu0
        %v3592 = vadd.f32 0.0, %v3591
        %3593 = vmatmul.bf16.gmra.mxu0 %v3349
        %v3594 = vpop.f32.mrf.mxu0
        %v3595 = vadd.f32 0.0, %v3594
        %v3596 = vpop.f32.mrf.mxu0
        %v3597 = vadd.f32 0.0, %v3596
        %3598 = vmatmul.bf16.gmra.mxu0 %v3357
        %v3599 = vpop.f32.mrf.mxu0
        %v3600 = vadd.f32 0.0, %v3599
        %v3601 = vpop.f32.mrf.mxu0
        %v3602 = vadd.f32 0.0, %v3601
        %3603 = vmatmul.bf16.gmra.mxu0 %v3365
        %v3604 = vpop.f32.mrf.mxu0
        %v3605 = vadd.f32 0.0, %v3604
        %v3606 = vpop.f32.mrf.mxu0
        %v3607 = vadd.f32 0.0, %v3606
        %3608 = vmatmul.bf16.gmra.mxu0 %v3373
        %v3609 = vpop.f32.mrf.mxu0
        %v3610 = vadd.f32 0.0, %v3609
        %v3611 = vpop.f32.mrf.mxu0
        %v3612 = vadd.f32 0.0, %v3611
        %3613 = vmatmul.bf16.gmra.mxu0 %v3381
        %v3614 = vpop.f32.mrf.mxu0
        %v3615 = vadd.f32 0.0, %v3614
        %v3616 = vpop.f32.mrf.mxu0
        %v3617 = vadd.f32 0.0, %v3616
        %3618 = vmatmul.bf16.gmra.mxu0 %v3389
        %v3619 = vpop.f32.mrf.mxu0
        %v3620 = vadd.f32 0.0, %v3619
        %v3621 = vpop.f32.mrf.mxu0
        %v3622 = vadd.f32 0.0, %v3621
        %3623 = vmatmul.bf16.gmra.mxu0 %v3397
        %v3624 = vpop.f32.mrf.mxu0
        %v3625 = vadd.f32 0.0, %v3624
        %v3626 = vpop.f32.mrf.mxu0
        %v3627 = vadd.f32 0.0, %v3626
        %3628 = vmatmul.bf16.gmra.mxu0 %v3405
        %v3629 = vpop.f32.mrf.mxu0
        %v3630 = vadd.f32 0.0, %v3629
        %v3631 = vpop.f32.mrf.mxu0
        %v3632 = vadd.f32 0.0, %v3631
        %3633 = vmatmul.bf16.gmra.mxu0 %v3413
        %v3634 = vpop.f32.mrf.mxu0
        %v3635 = vadd.f32 0.0, %v3634
        %v3636 = vpop.f32.mrf.mxu0
        %v3637 = vadd.f32 0.0, %v3636
        %3638 = vmatmul.bf16.gmra.mxu0 %v3421
        %v3639 = vpop.f32.mrf.mxu0
        %v3640 = vadd.f32 0.0, %v3639
        %v3641 = vpop.f32.mrf.mxu0
        %v3642 = vadd.f32 0.0, %v3641
        %3643 = vmatmul.bf16.gmra.mxu0 %v3429
        %v3644 = vpop.f32.mrf.mxu0
        %v3645 = vadd.f32 0.0, %v3644
        %v3646 = vpop.f32.mrf.mxu0
        %v3647 = vadd.f32 0.0, %v3646
        %3648 = vmatmul.bf16.gmra.mxu0 %v3437
        %v3649 = vpop.f32.mrf.mxu0
        %v3650 = vadd.f32 0.0, %v3649
        %v3651 = vpop.f32.mrf.mxu0
        %v3652 = vadd.f32 0.0, %v3651
        %3653 = vmatmul.bf16.gmra.mxu0 %v3445
        %v3654 = vpop.f32.mrf.mxu0
        %v3655 = vadd.f32 0.0, %v3654
        %v3656 = vpop.f32.mrf.mxu0
        %v3657 = vadd.f32 0.0, %v3656
        %3658 = vmatmul.bf16.gmra.mxu0 %v3453
        %v3659 = vpop.f32.mrf.mxu0
        %v3660 = vadd.f32 0.0, %v3659
        %v3661 = vpop.f32.mrf.mxu0
        %v3662 = vadd.f32 0.0, %v3661
        %3663 = vmatmul.bf16.gmra.mxu0 %v3461
        %v3664 = vpop.f32.mrf.mxu0
        %v3665 = vadd.f32 0.0, %v3664
        %v3666 = vpop.f32.mrf.mxu0
        %v3667 = vadd.f32 0.0, %v3666
        %3668 = vmatmul.bf16.gmra.mxu0 %v3469
        %v3669 = vpop.f32.mrf.mxu0
        %v3670 = vadd.f32 0.0, %v3669
        %v3671 = vpop.f32.mrf.mxu0
        %v3672 = vadd.f32 0.0, %v3671
        %3673 = vmatmul.bf16.gmra.mxu0 %v3477
        %v3674 = vpop.f32.mrf.mxu0
        %v3675 = vadd.f32 0.0, %v3674
        %v3676 = vpop.f32.mrf.mxu0
        %v3677 = vadd.f32 0.0, %v3676
        %3678 = vmatmul.bf16.gmra.mxu0 %v3485
        %v3679 = vpop.f32.mrf.mxu0
        %v3680 = vadd.f32 0.0, %v3679
        %v3681 = vpop.f32.mrf.mxu0
        %v3682 = vadd.f32 0.0, %v3681
        %3683 = vmatmul.bf16.gmra.mxu0 %v3493
        %v3684 = vpop.f32.mrf.mxu0
        %v3685 = vadd.f32 0.0, %v3684
        %v3686 = vpop.f32.mrf.mxu0
        %v3687 = vadd.f32 0.0, %v3686
        %3688 = vdwg.mxu0
        %v3689 = vadd.f32 %v3078, %v3575
        %v3690 = vadd.f32 %v3079, %v3577
        %v3691 = vadd.f32 %v3080, %v3580
        %v3692 = vadd.f32 %v3081, %v3582
        %v3693 = vadd.f32 %v3082, %v3585
        %v3694 = vadd.f32 %v3083, %v3587
        %v3695 = vadd.f32 %v3084, %v3590
        %v3696 = vadd.f32 %v3085, %v3592
        %v3697 = vadd.f32 %v3086, %v3595
        %v3698 = vadd.f32 %v3087, %v3597
        %v3699 = vadd.f32 %v3088, %v3600
        %v3700 = vadd.f32 %v3089, %v3602
        %v3701 = vadd.f32 %v3090, %v3605
        %v3702 = vadd.f32 %v3091, %v3607
        %v3703 = vadd.f32 %v3092, %v3610
        %v3704 = vadd.f32 %v3093, %v3612
        %v3705 = vadd.f32 %v3094, %v3615
        %v3706 = vadd.f32 %v3095, %v3617
        %v3707 = vadd.f32 %v3096, %v3620
        %v3708 = vadd.f32 %v3097, %v3622
        %v3709 = vadd.f32 %v3098, %v3625
        %v3710 = vadd.f32 %v3099, %v3627
        %v3711 = vadd.f32 %v3100, %v3630
        %v3712 = vadd.f32 %v3101, %v3632
        %v3713 = vadd.f32 %v3102, %v3635
        %v3714 = vadd.f32 %v3103, %v3637
        %v3715 = vadd.f32 %v3104, %v3640
        %v3716 = vadd.f32 %v3105, %v3642
        %v3717 = vadd.f32 %v3106, %v3645
        %v3718 = vadd.f32 %v3107, %v3647
        %v3719 = vadd.f32 %v3108, %v3650
        %v3720 = vadd.f32 %v3109, %v3652
        %v3721 = vadd.f32 %v3110, %v3655
        %v3722 = vadd.f32 %v3111, %v3657
        %v3723 = vadd.f32 %v3112, %v3660
        %v3724 = vadd.f32 %v3113, %v3662
        %v3725 = vadd.f32 %v3114, %v3665
        %v3726 = vadd.f32 %v3115, %v3667
        %v3727 = vadd.f32 %v3116, %v3670
        %v3728 = vadd.f32 %v3117, %v3672
        %v3729 = vadd.f32 %v3118, %v3675
        %v3730 = vadd.f32 %v3119, %v3677
        %v3731 = vadd.f32 %v3120, %v3680
        %v3732 = vadd.f32 %v3121, %v3682
        %v3733 = vadd.f32 %v3122, %v3685
        %v3734 = vadd.f32 %v3123, %v3687
        %v3735 = vld [vmem:[%s315 + $0x14] sm:$0xe]
        %s3736 = scalar_lea.vmem [#allocation6], 512
        %v3737 = vld [vmem:[%s3736] sm:$0xf]
        %v3738 = vld [vmem:[%s3736 + $0x4] sm:$0xf]
        %v3739 = vld [vmem:[%s3736 + $0x8] sm:$0xf]
        %v3740 = vld [vmem:[%s3736 + $0xc] sm:$0xf]
        %v3741 = vld [vmem:[%s3736 + $0x10] sm:$0xf]
        %v3742 = vld [vmem:[%s3736 + $0x14] sm:$0xf]
        %v3743 = vld [vmem:[%s3736 + $0x18] sm:$0xf]
        %v3744 = vld [vmem:[%s3736 + $0x1c] sm:$0xf]
        %v3745 = vld [vmem:[%s3736 + $0x20] sm:$0xf]
        %v3746 = vld [vmem:[%s3736 + $0x24] sm:$0xf]
        %v3747 = vld [vmem:[%s3736 + $0x28] sm:$0xf]
        %v3748 = vld [vmem:[%s3736 + $0x2c] sm:$0xf]
        %v3749 = vld [vmem:[%s3736 + $0x30] sm:$0xf]
        %v3750 = vld [vmem:[%s3736 + $0x34] sm:$0xf]
        %v3751 = vld [vmem:[%s3736 + $0x38] sm:$0xf]
        %v3752 = vld [vmem:[%s3736 + $0x3c] sm:$0xf]
        %v3754 = vunpack.c.l.b16 %v3735
        %v3755 = vpack.c.b16 %v3236, %v3754
        %v3756 = vrot.slane %v3755, 1
        %v3757 = vrot.slane %v3283, 1
        %v3758 = vsel %vm1157, %v3756, %v3757
        %v3759 = vrot.slane %v3284, 1
        %v3760 = vsel %vm1157, %v3757, %v3759
        %v3761 = vrot.slane %v3285, 1
        %v3762 = vsel %vm1157, %v3759, %v3761
        %v3763 = vrot.slane %v3286, 1
        %v3764 = vsel %vm1157, %v3761, %v3763
        %v3765 = vrot.slane %v3287, 1
        %v3766 = vsel %vm1157, %v3763, %v3765
        %v3767 = vrot.slane %v3288, 1
        %v3768 = vsel %vm1157, %v3765, %v3767
        %v3769 = vrot.slane %v3289, 1
        %v3770 = vsel %vm1157, %v3767, %v3769
        %v3771 = vrot.slane %v3290, 1
        %v3772 = vsel %vm1157, %v3769, %v3771
        %v3773 = vrot.slane %v3291, 1
        %v3774 = vsel %vm1157, %v3771, %v3773
        %v3775 = vrot.slane %v3292, 1
        %v3776 = vsel %vm1157, %v3773, %v3775
        %v3777 = vrot.slane %v3293, 1
        %v3778 = vsel %vm1157, %v3775, %v3777
        %v3779 = vrot.slane %v3294, 1
        %v3780 = vsel %vm1157, %v3777, %v3779
        %v3781 = vrot.slane %v3295, 1
        %v3782 = vsel %vm1157, %v3779, %v3781
        %v3783 = vrot.slane %v3296, 1
        %v3784 = vsel %vm1157, %v3781, %v3783
        %v3785 = vrot.slane %v3297, 1
        %v3786 = vsel %vm1157, %v3783, %v3785
        %v3787 = vrot.slane %v3298, 1
        %v3788 = vsel %vm1157, %v3785, %v3787
        %v3789 = vrot.slane %v3299, 1
        %v3790 = vsel %vm1157, %v3787, %v3789
        %v3791 = vrot.slane %v3300, 1
        %v3792 = vsel %vm1157, %v3789, %v3791
        %v3793 = vrot.slane %v3301, 1
        %v3794 = vsel %vm1157, %v3791, %v3793
        %v3795 = vrot.slane %v3302, 1
        %v3796 = vsel %vm1157, %v3793, %v3795
        %v3797 = vrot.slane %v3303, 1
        %v3798 = vsel %vm1157, %v3795, %v3797
        %v3799 = vrot.slane %v3304, 1
        %v3800 = vsel %vm1157, %v3797, %v3799
        %v3801 = vrot.slane %v3305, 1
        %v3802 = vsel %vm1157, %v3799, %v3801
        %v3842 = vunpack.c.l.b16 %v3737
        %v3843 = vunpack.c.l.b16 %v3738
        %v3844 = vunpack.c.l.b16 %v3739
        %v3845 = vunpack.c.l.b16 %v3740
        %v3846 = vunpack.c.l.b16 %v3741
        %v3847 = vunpack.c.l.b16 %v3742
        %v3848 = vunpack.c.l.b16 %v3743
        %v3849 = vunpack.c.l.b16 %v3744
        %v3850 = vunpack.c.l.b16 %v3745
        %v3851 = vunpack.c.l.b16 %v3746
        %v3852 = vunpack.c.l.b16 %v3747
        %v3853 = vunpack.c.l.b16 %v3748
        %v3854 = vunpack.c.l.b16 %v3749
        %v3855 = vunpack.c.l.b16 %v3750
        %v3856 = vunpack.c.l.b16 %v3751
        %v3857 = vunpack.c.l.b16 %v3752
        %v3858 = vpack.c.b16 %v3843, %v3842
        %v3859 = vpack.c.b16 %v3845, %v3844
        %v3860 = vpack.c.b16 %v3847, %v3846
        %v3861 = vpack.c.b16 %v3849, %v3848
        %v3862 = vpack.c.b16 %v3851, %v3850
        %v3863 = vpack.c.b16 %v3853, %v3852
        %v3864 = vpack.c.b16 %v3855, %v3854
        %v3865 = vpack.c.b16 %v3857, %v3856
        %3874 = vmatpush.bf16.msra.mxu0 %v3865
        %3875 = vmatpush.bf16.msra.mxu0 %v3864
        %3876 = vmatpush.bf16.msra.mxu0 %v3863
        %3877 = vmatpush.bf16.msra.mxu0 %v3862
        %3878 = vmatpush.bf16.msra.mxu0 %v3861
        %3879 = vmatpush.bf16.msra.mxu0 %v3860
        %3880 = vmatpush.bf16.msra.mxu0 %v3859
        %3881 = vmatpush.bf16.msra.mxu0 %v3858
        %3882 = vmatmul.bf16.gmra.mxu0 %v3758
        %v3883 = vpop.f32.mrf.mxu0
        %v3884 = vadd.f32 0.0, %v3883
        %v3885 = vpop.f32.mrf.mxu0
        %v3886 = vadd.f32 0.0, %v3885
        %3887 = vmatmul.bf16.gmra.mxu0 %v3760
        %v3888 = vpop.f32.mrf.mxu0
        %v3889 = vadd.f32 0.0, %v3888
        %v3890 = vpop.f32.mrf.mxu0
        %v3891 = vadd.f32 0.0, %v3890
        %3892 = vmatmul.bf16.gmra.mxu0 %v3762
        %v3893 = vpop.f32.mrf.mxu0
        %v3894 = vadd.f32 0.0, %v3893
        %v3895 = vpop.f32.mrf.mxu0
        %v3896 = vadd.f32 0.0, %v3895
        %3897 = vmatmul.bf16.gmra.mxu0 %v3764
        %v3898 = vpop.f32.mrf.mxu0
        %v3899 = vadd.f32 0.0, %v3898
        %v3900 = vpop.f32.mrf.mxu0
        %v3901 = vadd.f32 0.0, %v3900
        %3902 = vmatmul.bf16.gmra.mxu0 %v3766
        %v3903 = vpop.f32.mrf.mxu0
        %v3904 = vadd.f32 0.0, %v3903
        %v3905 = vpop.f32.mrf.mxu0
        %v3906 = vadd.f32 0.0, %v3905
        %3907 = vmatmul.bf16.gmra.mxu0 %v3768
        %v3908 = vpop.f32.mrf.mxu0
        %v3909 = vadd.f32 0.0, %v3908
        %v3910 = vpop.f32.mrf.mxu0
        %v3911 = vadd.f32 0.0, %v3910
        %3912 = vmatmul.bf16.gmra.mxu0 %v3770
        %v3913 = vpop.f32.mrf.mxu0
        %v3914 = vadd.f32 0.0, %v3913
        %v3915 = vpop.f32.mrf.mxu0
        %v3916 = vadd.f32 0.0, %v3915
        %3917 = vmatmul.bf16.gmra.mxu0 %v3772
        %v3918 = vpop.f32.mrf.mxu0
        %v3919 = vadd.f32 0.0, %v3918
        %v3920 = vpop.f32.mrf.mxu0
        %v3921 = vadd.f32 0.0, %v3920
        %3922 = vmatmul.bf16.gmra.mxu0 %v3774
        %v3923 = vpop.f32.mrf.mxu0
        %v3924 = vadd.f32 0.0, %v3923
        %v3925 = vpop.f32.mrf.mxu0
        %v3926 = vadd.f32 0.0, %v3925
        %3927 = vmatmul.bf16.gmra.mxu0 %v3776
        %v3928 = vpop.f32.mrf.mxu0
        %v3929 = vadd.f32 0.0, %v3928
        %v3930 = vpop.f32.mrf.mxu0
        %v3931 = vadd.f32 0.0, %v3930
        %3932 = vmatmul.bf16.gmra.mxu0 %v3778
        %v3933 = vpop.f32.mrf.mxu0
        %v3934 = vadd.f32 0.0, %v3933
        %v3935 = vpop.f32.mrf.mxu0
        %v3936 = vadd.f32 0.0, %v3935
        %3937 = vmatmul.bf16.gmra.mxu0 %v3780
        %v3938 = vpop.f32.mrf.mxu0
        %v3939 = vadd.f32 0.0, %v3938
        %v3940 = vpop.f32.mrf.mxu0
        %v3941 = vadd.f32 0.0, %v3940
        %3942 = vmatmul.bf16.gmra.mxu0 %v3782
        %v3943 = vpop.f32.mrf.mxu0
        %v3944 = vadd.f32 0.0, %v3943
        %v3945 = vpop.f32.mrf.mxu0
        %v3946 = vadd.f32 0.0, %v3945
        %3947 = vmatmul.bf16.gmra.mxu0 %v3784
        %v3948 = vpop.f32.mrf.mxu0
        %v3949 = vadd.f32 0.0, %v3948
        %v3950 = vpop.f32.mrf.mxu0
        %v3951 = vadd.f32 0.0, %v3950
        %3952 = vmatmul.bf16.gmra.mxu0 %v3786
        %v3953 = vpop.f32.mrf.mxu0
        %v3954 = vadd.f32 0.0, %v3953
        %v3955 = vpop.f32.mrf.mxu0
        %v3956 = vadd.f32 0.0, %v3955
        %3957 = vmatmul.bf16.gmra.mxu0 %v3788
        %v3958 = vpop.f32.mrf.mxu0
        %v3959 = vadd.f32 0.0, %v3958
        %v3960 = vpop.f32.mrf.mxu0
        %v3961 = vadd.f32 0.0, %v3960
        %3962 = vmatmul.bf16.gmra.mxu0 %v3790
        %v3963 = vpop.f32.mrf.mxu0
        %v3964 = vadd.f32 0.0, %v3963
        %v3965 = vpop.f32.mrf.mxu0
        %v3966 = vadd.f32 0.0, %v3965
        %3967 = vmatmul.bf16.gmra.mxu0 %v3792
        %v3968 = vpop.f32.mrf.mxu0
        %v3969 = vadd.f32 0.0, %v3968
        %v3970 = vpop.f32.mrf.mxu0
        %v3971 = vadd.f32 0.0, %v3970
        %3972 = vmatmul.bf16.gmra.mxu0 %v3794
        %v3973 = vpop.f32.mrf.mxu0
        %v3974 = vadd.f32 0.0, %v3973
        %v3975 = vpop.f32.mrf.mxu0
        %v3976 = vadd.f32 0.0, %v3975
        %3977 = vmatmul.bf16.gmra.mxu0 %v3796
        %v3978 = vpop.f32.mrf.mxu0
        %v3979 = vadd.f32 0.0, %v3978
        %v3980 = vpop.f32.mrf.mxu0
        %v3981 = vadd.f32 0.0, %v3980
        %3982 = vmatmul.bf16.gmra.mxu0 %v3798
        %v3983 = vpop.f32.mrf.mxu0
        %v3984 = vadd.f32 0.0, %v3983
        %v3985 = vpop.f32.mrf.mxu0
        %v3986 = vadd.f32 0.0, %v3985
        %3987 = vmatmul.bf16.gmra.mxu0 %v3800
        %v3988 = vpop.f32.mrf.mxu0
        %v3989 = vadd.f32 0.0, %v3988
        %v3990 = vpop.f32.mrf.mxu0
        %v3991 = vadd.f32 0.0, %v3990
        %3992 = vmatmul.bf16.gmra.mxu0 %v3802
        %v3993 = vpop.f32.mrf.mxu0
        %v3994 = vadd.f32 0.0, %v3993
        %v3995 = vpop.f32.mrf.mxu0
        %v3996 = vadd.f32 0.0, %v3995
        %3997 = vdwg.mxu0
        %v3998 = vadd.f32 %v3689, %v3884
        %v3999 = vadd.f32 %v3690, %v3886
        %v4000 = vadd.f32 %v3691, %v3889
        %v4001 = vadd.f32 %v3692, %v3891
        %v4002 = vadd.f32 %v3693, %v3894
        %v4003 = vadd.f32 %v3694, %v3896
        %v4004 = vadd.f32 %v3695, %v3899
        %v4005 = vadd.f32 %v3696, %v3901
        %v4006 = vadd.f32 %v3697, %v3904
        %v4007 = vadd.f32 %v3698, %v3906
        %v4008 = vadd.f32 %v3699, %v3909
        %v4009 = vadd.f32 %v3700, %v3911
        %v4010 = vadd.f32 %v3701, %v3914
        %v4011 = vadd.f32 %v3702, %v3916
        %v4012 = vadd.f32 %v3703, %v3919
        %v4013 = vadd.f32 %v3704, %v3921
        %v4014 = vadd.f32 %v3705, %v3924
        %v4015 = vadd.f32 %v3706, %v3926
        %v4016 = vadd.f32 %v3707, %v3929
        %v4017 = vadd.f32 %v3708, %v3931
        %v4018 = vadd.f32 %v3709, %v3934
        %v4019 = vadd.f32 %v3710, %v3936
        %v4020 = vadd.f32 %v3711, %v3939
        %v4021 = vadd.f32 %v3712, %v3941
        %v4022 = vadd.f32 %v3713, %v3944
        %v4023 = vadd.f32 %v3714, %v3946
        %v4024 = vadd.f32 %v3715, %v3949
        %v4025 = vadd.f32 %v3716, %v3951
        %v4026 = vadd.f32 %v3717, %v3954
        %v4027 = vadd.f32 %v3718, %v3956
        %v4028 = vadd.f32 %v3719, %v3959
        %v4029 = vadd.f32 %v3720, %v3961
        %v4030 = vadd.f32 %v3721, %v3964
        %v4031 = vadd.f32 %v3722, %v3966
        %v4032 = vadd.f32 %v3723, %v3969
        %v4033 = vadd.f32 %v3724, %v3971
        %v4034 = vadd.f32 %v3725, %v3974
        %v4035 = vadd.f32 %v3726, %v3976
        %v4036 = vadd.f32 %v3727, %v3979
        %v4037 = vadd.f32 %v3728, %v3981
        %v4038 = vadd.f32 %v3729, %v3984
        %v4039 = vadd.f32 %v3730, %v3986
        %v4040 = vadd.f32 %v3731, %v3989
        %v4041 = vadd.f32 %v3732, %v3991
        %v4042 = vadd.f32 %v3733, %v3994
        %v4043 = vadd.f32 %v3734, %v3996
        %v4044 = vld [vmem:[%s3] sm:$0x1]
        %v4046 = vperm.slane %v4044, 0
        %v4048 = vmul.f32 %v3998, %v4046
        %v4049 = vmul.f32 %v3999, %v4046
        %v4050 = vmul.f32 %v4000, %v4046
        %v4051 = vmul.f32 %v4001, %v4046
        %v4052 = vmul.f32 %v4002, %v4046
        %v4053 = vmul.f32 %v4003, %v4046
        %v4054 = vmul.f32 %v4004, %v4046
        %v4055 = vmul.f32 %v4005, %v4046
        %v4056 = vmul.f32 %v4006, %v4046
        %v4057 = vmul.f32 %v4007, %v4046
        %v4058 = vmul.f32 %v4008, %v4046
        %v4059 = vmul.f32 %v4009, %v4046
        %v4060 = vmul.f32 %v4010, %v4046
        %v4061 = vmul.f32 %v4011, %v4046
        %v4062 = vmul.f32 %v4012, %v4046
        %v4063 = vmul.f32 %v4013, %v4046
        %v4064 = vmul.f32 %v4014, %v4046
        %v4065 = vmul.f32 %v4015, %v4046
        %v4066 = vmul.f32 %v4016, %v4046
        %v4067 = vmul.f32 %v4017, %v4046
        %v4068 = vmul.f32 %v4018, %v4046
        %v4069 = vmul.f32 %v4019, %v4046
        %v4070 = vmul.f32 %v4020, %v4046
        %v4071 = vmul.f32 %v4021, %v4046
        %v4072 = vmul.f32 %v4022, %v4046
        %v4073 = vmul.f32 %v4023, %v4046
        %v4074 = vmul.f32 %v4024, %v4046
        %v4075 = vmul.f32 %v4025, %v4046
        %v4076 = vmul.f32 %v4026, %v4046
        %v4077 = vmul.f32 %v4027, %v4046
        %v4078 = vmul.f32 %v4028, %v4046
        %v4079 = vmul.f32 %v4029, %v4046
        %v4080 = vmul.f32 %v4030, %v4046
        %v4081 = vmul.f32 %v4031, %v4046
        %v4082 = vmul.f32 %v4032, %v4046
        %v4083 = vmul.f32 %v4033, %v4046
        %v4084 = vmul.f32 %v4034, %v4046
        %v4085 = vmul.f32 %v4035, %v4046
        %v4086 = vmul.f32 %v4036, %v4046
        %v4087 = vmul.f32 %v4037, %v4046
        %v4088 = vmul.f32 %v4038, %v4046
        %v4089 = vmul.f32 %v4039, %v4046
        %v4090 = vmul.f32 %v4040, %v4046
        %v4091 = vmul.f32 %v4041, %v4046
        %v4092 = vmul.f32 %v4042, %v4046
        %v4093 = vmul.f32 %v4043, %v4046
        %v4094 = vld [vmem:[%s4] sm:$0x1]
        %v4096 = vperm.slane %v4094, 0
        %v4098 = vadd.f32 %v4048, %v4096
        %v4099 = vadd.f32 %v4049, %v4096
        %v4100 = vadd.f32 %v4050, %v4096
        %v4101 = vadd.f32 %v4051, %v4096
        %v4102 = vadd.f32 %v4052, %v4096
        %v4103 = vadd.f32 %v4053, %v4096
        %v4104 = vadd.f32 %v4054, %v4096
        %v4105 = vadd.f32 %v4055, %v4096
        %v4106 = vadd.f32 %v4056, %v4096
        %v4107 = vadd.f32 %v4057, %v4096
        %v4108 = vadd.f32 %v4058, %v4096
        %v4109 = vadd.f32 %v4059, %v4096
        %v4110 = vadd.f32 %v4060, %v4096
        %v4111 = vadd.f32 %v4061, %v4096
        %v4112 = vadd.f32 %v4062, %v4096
        %v4113 = vadd.f32 %v4063, %v4096
        %v4114 = vadd.f32 %v4064, %v4096
        %v4115 = vadd.f32 %v4065, %v4096
        %v4116 = vadd.f32 %v4066, %v4096
        %v4117 = vadd.f32 %v4067, %v4096
        %v4118 = vadd.f32 %v4068, %v4096
        %v4119 = vadd.f32 %v4069, %v4096
        %v4120 = vadd.f32 %v4070, %v4096
        %v4121 = vadd.f32 %v4071, %v4096
        %v4122 = vadd.f32 %v4072, %v4096
        %v4123 = vadd.f32 %v4073, %v4096
        %v4124 = vadd.f32 %v4074, %v4096
        %v4125 = vadd.f32 %v4075, %v4096
        %v4126 = vadd.f32 %v4076, %v4096
        %v4127 = vadd.f32 %v4077, %v4096
        %v4128 = vadd.f32 %v4078, %v4096
        %v4129 = vadd.f32 %v4079, %v4096
        %v4130 = vadd.f32 %v4080, %v4096
        %v4131 = vadd.f32 %v4081, %v4096
        %v4132 = vadd.f32 %v4082, %v4096
        %v4133 = vadd.f32 %v4083, %v4096
        %v4134 = vadd.f32 %v4084, %v4096
        %v4135 = vadd.f32 %v4085, %v4096
        %v4136 = vadd.f32 %v4086, %v4096
        %v4137 = vadd.f32 %v4087, %v4096
        %v4138 = vadd.f32 %v4088, %v4096
        %v4139 = vadd.f32 %v4089, %v4096
        %v4140 = vadd.f32 %v4090, %v4096
        %v4141 = vadd.f32 %v4091, %v4096
        %v4142 = vadd.f32 %v4092, %v4096
        %v4143 = vadd.f32 %v4093, %v4096
        %v4144 = vmax.f32 %v4098, 0.0
        %v4145 = vmax.f32 %v4099, 0.0
        %v4146 = vmax.f32 %v4100, 0.0
        %v4147 = vmax.f32 %v4101, 0.0
        %v4148 = vmax.f32 %v4102, 0.0
        %v4149 = vmax.f32 %v4103, 0.0
        %v4150 = vmax.f32 %v4104, 0.0
        %v4151 = vmax.f32 %v4105, 0.0
        %v4152 = vmax.f32 %v4106, 0.0
        %v4153 = vmax.f32 %v4107, 0.0
        %v4154 = vmax.f32 %v4108, 0.0
        %v4155 = vmax.f32 %v4109, 0.0
        %v4156 = vmax.f32 %v4110, 0.0
        %v4157 = vmax.f32 %v4111, 0.0
        %v4158 = vmax.f32 %v4112, 0.0
        %v4159 = vmax.f32 %v4113, 0.0
        %v4160 = vmax.f32 %v4114, 0.0
        %v4161 = vmax.f32 %v4115, 0.0
        %v4162 = vmax.f32 %v4116, 0.0
        %v4163 = vmax.f32 %v4117, 0.0
        %v4164 = vmax.f32 %v4118, 0.0
        %v4165 = vmax.f32 %v4119, 0.0
        %v4166 = vmax.f32 %v4120, 0.0
        %v4167 = vmax.f32 %v4121, 0.0
        %v4168 = vmax.f32 %v4122, 0.0
        %v4169 = vmax.f32 %v4123, 0.0
        %v4170 = vmax.f32 %v4124, 0.0
        %v4171 = vmax.f32 %v4125, 0.0
        %v4172 = vmax.f32 %v4126, 0.0
        %v4173 = vmax.f32 %v4127, 0.0
        %v4174 = vmax.f32 %v4128, 0.0
        %v4175 = vmax.f32 %v4129, 0.0
        %v4176 = vmax.f32 %v4130, 0.0
        %v4177 = vmax.f32 %v4131, 0.0
        %v4178 = vmax.f32 %v4132, 0.0
        %v4179 = vmax.f32 %v4133, 0.0
        %v4180 = vmax.f32 %v4134, 0.0
        %v4181 = vmax.f32 %v4135, 0.0
        %v4182 = vmax.f32 %v4136, 0.0
        %v4183 = vmax.f32 %v4137, 0.0
        %v4184 = vmax.f32 %v4138, 0.0
        %v4185 = vmax.f32 %v4139, 0.0
        %v4186 = vmax.f32 %v4140, 0.0
        %v4187 = vmax.f32 %v4141, 0.0
        %v4188 = vmax.f32 %v4142, 0.0
        %v4189 = vmax.f32 %v4143, 0.0
        %v4190 = vld [vmem:[%s0] sm:$0xff]
        %v4191 = vld [vmem:[%s0 + $0x8] sm:$0xff]
        %v4192 = vld [vmem:[%s0 + $0x10] sm:$0xff]
        %v4193 = vld [vmem:[%s0 + $0x18] sm:$0xff]
        %v4194 = vld [vmem:[%s0 + $0x20] sm:$0xff]
        %v4195 = vld [vmem:[%s0 + $0x28] sm:$0xff]
        %v4196 = vld [vmem:[%s0 + $0x30] sm:$0xff]
        %v4197 = vld [vmem:[%s0 + $0x38] sm:$0xff]
        %v4198 = vld [vmem:[%s0 + $0x40] sm:$0xff]
        %v4199 = vld [vmem:[%s0 + $0x48] sm:$0xff]
        %v4200 = vld [vmem:[%s0 + $0x50] sm:$0xff]
        %v4201 = vld [vmem:[%s0 + $0x58] sm:$0xff]
        %v4202 = vld [vmem:[%s0 + $0x60] sm:$0xff]
        %v4203 = vld [vmem:[%s0 + $0x68] sm:$0xff]
        %v4204 = vld [vmem:[%s0 + $0x70] sm:$0xff]
        %v4205 = vld [vmem:[%s0 + $0x78] sm:$0xff]
        %v4206 = vld [vmem:[%s0 + $0x80] sm:$0xff]
        %v4207 = vld [vmem:[%s0 + $0x88] sm:$0xff]
        %v4208 = vld [vmem:[%s0 + $0x90] sm:$0xff]
        %v4209 = vld [vmem:[%s0 + $0x98] sm:$0xff]
        %v4210 = vld [vmem:[%s0 + $0xa0] sm:$0xff]
        %v4211 = vld [vmem:[%s0 + $0xa8] sm:$0xff]
        %v4212 = vld [vmem:[%s0 + $0xb0] sm:$0xff]
        %v4213 = vld [vmem:[%s0 + $0xb8] sm:$0xff]
        %v4214 = vld [vmem:[%s0 + $0xc0] sm:$0xff]
        %v4215 = vld [vmem:[%s0 + $0xc8] sm:$0xff]
        %v4216 = vld [vmem:[%s0 + $0xd0] sm:$0xff]
        %v4217 = vld [vmem:[%s0 + $0xd8] sm:$0xff]
        %v4218 = vld [vmem:[%s0 + $0xe0] sm:$0xff]
        %v4219 = vld [vmem:[%s0 + $0xe8] sm:$0xff]
        %v4220 = vld [vmem:[%s0 + $0xf0] sm:$0xff]
        %v4221 = vld [vmem:[%s0 + $0xf8] sm:$0xff]
        %v4222 = vld [vmem:[%s0 + $0x100] sm:$0xff]
        %v4223 = vld [vmem:[%s0 + $0x108] sm:$0xff]
        %v4224 = vld [vmem:[%s0 + $0x110] sm:$0xff]
        %v4225 = vld [vmem:[%s0 + $0x118] sm:$0xff]
        %v4226 = vld [vmem:[%s0 + $0x120] sm:$0xff]
        %v4227 = vld [vmem:[%s0 + $0x128] sm:$0xff]
        %v4228 = vld [vmem:[%s0 + $0x130] sm:$0xff]
        %v4229 = vld [vmem:[%s0 + $0x138] sm:$0xff]
        %v4230 = vld [vmem:[%s0 + $0x140] sm:$0xff]
        %v4231 = vld [vmem:[%s0 + $0x148] sm:$0xff]
        %v4232 = vld [vmem:[%s0 + $0x150] sm:$0xff]
        %v4233 = vld [vmem:[%s0 + $0x158] sm:$0xff]
        %v4234 = vld [vmem:[%s0 + $0x160] sm:$0xff]
        %v4235 = vld [vmem:[%s0 + $0x168] sm:$0xff]
        %4237 = vset.pattern.permute.xlu0 0
        %4238 = vperm.xlu0 %4237, %v4190
        %v4239 = vpop.permute.xlu0 %4238
        %4242 = vset.pattern.permute.xlu0 0
        %4243 = vperm.xlu0 %4242, %v4191
        %v4244 = vpop.permute.xlu0 %4243
        %4247 = vset.pattern.permute.xlu0 0
        %4248 = vperm.xlu0 %4247, %v4192
        %v4249 = vpop.permute.xlu0 %4248
        %4252 = vset.pattern.permute.xlu0 0
        %4253 = vperm.xlu0 %4252, %v4193
        %v4254 = vpop.permute.xlu0 %4253
        %4257 = vset.pattern.permute.xlu0 0
        %4258 = vperm.xlu0 %4257, %v4194
        %v4259 = vpop.permute.xlu0 %4258
        %4262 = vset.pattern.permute.xlu0 0
        %4263 = vperm.xlu0 %4262, %v4195
        %v4264 = vpop.permute.xlu0 %4263
        %4267 = vset.pattern.permute.xlu0 0
        %4268 = vperm.xlu0 %4267, %v4196
        %v4269 = vpop.permute.xlu0 %4268
        %4272 = vset.pattern.permute.xlu0 0
        %4273 = vperm.xlu0 %4272, %v4197
        %v4274 = vpop.permute.xlu0 %4273
        %4277 = vset.pattern.permute.xlu0 0
        %4278 = vperm.xlu0 %4277, %v4198
        %v4279 = vpop.permute.xlu0 %4278
        %4282 = vset.pattern.permute.xlu0 0
        %4283 = vperm.xlu0 %4282, %v4199
        %v4284 = vpop.permute.xlu0 %4283
        %4287 = vset.pattern.permute.xlu0 0
        %4288 = vperm.xlu0 %4287, %v4200
        %v4289 = vpop.permute.xlu0 %4288
        %4292 = vset.pattern.permute.xlu0 0
        %4293 = vperm.xlu0 %4292, %v4201
        %v4294 = vpop.permute.xlu0 %4293
        %4297 = vset.pattern.permute.xlu0 0
        %4298 = vperm.xlu0 %4297, %v4202
        %v4299 = vpop.permute.xlu0 %4298
        %4302 = vset.pattern.permute.xlu0 0
        %4303 = vperm.xlu0 %4302, %v4203
        %v4304 = vpop.permute.xlu0 %4303
        %4307 = vset.pattern.permute.xlu0 0
        %4308 = vperm.xlu0 %4307, %v4204
        %v4309 = vpop.permute.xlu0 %4308
        %4312 = vset.pattern.permute.xlu0 0
        %4313 = vperm.xlu0 %4312, %v4205
        %v4314 = vpop.permute.xlu0 %4313
        %4317 = vset.pattern.permute.xlu0 0
        %4318 = vperm.xlu0 %4317, %v4206
        %v4319 = vpop.permute.xlu0 %4318
        %4322 = vset.pattern.permute.xlu0 0
        %4323 = vperm.xlu0 %4322, %v4207
        %v4324 = vpop.permute.xlu0 %4323
        %4327 = vset.pattern.permute.xlu0 0
        %4328 = vperm.xlu0 %4327, %v4208
        %v4329 = vpop.permute.xlu0 %4328
        %4332 = vset.pattern.permute.xlu0 0
        %4333 = vperm.xlu0 %4332, %v4209
        %v4334 = vpop.permute.xlu0 %4333
        %4337 = vset.pattern.permute.xlu0 0
        %4338 = vperm.xlu0 %4337, %v4210
        %v4339 = vpop.permute.xlu0 %4338
        %4342 = vset.pattern.permute.xlu0 0
        %4343 = vperm.xlu0 %4342, %v4211
        %v4344 = vpop.permute.xlu0 %4343
        %4347 = vset.pattern.permute.xlu0 0
        %4348 = vperm.xlu0 %4347, %v4212
        %v4349 = vpop.permute.xlu0 %4348
        %4352 = vset.pattern.permute.xlu0 0
        %4353 = vperm.xlu0 %4352, %v4213
        %v4354 = vpop.permute.xlu0 %4353
        %4357 = vset.pattern.permute.xlu0 0
        %4358 = vperm.xlu0 %4357, %v4214
        %v4359 = vpop.permute.xlu0 %4358
        %4362 = vset.pattern.permute.xlu0 0
        %4363 = vperm.xlu0 %4362, %v4215
        %v4364 = vpop.permute.xlu0 %4363
        %4367 = vset.pattern.permute.xlu0 0
        %4368 = vperm.xlu0 %4367, %v4216
        %v4369 = vpop.permute.xlu0 %4368
        %4372 = vset.pattern.permute.xlu0 0
        %4373 = vperm.xlu0 %4372, %v4217
        %v4374 = vpop.permute.xlu0 %4373
        %4377 = vset.pattern.permute.xlu0 0
        %4378 = vperm.xlu0 %4377, %v4218
        %v4379 = vpop.permute.xlu0 %4378
        %4382 = vset.pattern.permute.xlu0 0
        %4383 = vperm.xlu0 %4382, %v4219
        %v4384 = vpop.permute.xlu0 %4383
        %4387 = vset.pattern.permute.xlu0 0
        %4388 = vperm.xlu0 %4387, %v4220
        %v4389 = vpop.permute.xlu0 %4388
        %4392 = vset.pattern.permute.xlu0 0
        %4393 = vperm.xlu0 %4392, %v4221
        %v4394 = vpop.permute.xlu0 %4393
        %4397 = vset.pattern.permute.xlu0 0
        %4398 = vperm.xlu0 %4397, %v4222
        %v4399 = vpop.permute.xlu0 %4398
        %4402 = vset.pattern.permute.xlu0 0
        %4403 = vperm.xlu0 %4402, %v4223
        %v4404 = vpop.permute.xlu0 %4403
        %4407 = vset.pattern.permute.xlu0 0
        %4408 = vperm.xlu0 %4407, %v4224
        %v4409 = vpop.permute.xlu0 %4408
        %4412 = vset.pattern.permute.xlu0 0
        %4413 = vperm.xlu0 %4412, %v4225
        %v4414 = vpop.permute.xlu0 %4413
        %4417 = vset.pattern.permute.xlu0 0
        %4418 = vperm.xlu0 %4417, %v4226
        %v4419 = vpop.permute.xlu0 %4418
        %4422 = vset.pattern.permute.xlu0 0
        %4423 = vperm.xlu0 %4422, %v4227
        %v4424 = vpop.permute.xlu0 %4423
        %4427 = vset.pattern.permute.xlu0 0
        %4428 = vperm.xlu0 %4427, %v4228
        %v4429 = vpop.permute.xlu0 %4428
        %4432 = vset.pattern.permute.xlu0 0
        %4433 = vperm.xlu0 %4432, %v4229
        %v4434 = vpop.permute.xlu0 %4433
        %4437 = vset.pattern.permute.xlu0 0
        %4438 = vperm.xlu0 %4437, %v4230
        %v4439 = vpop.permute.xlu0 %4438
        %4442 = vset.pattern.permute.xlu0 0
        %4443 = vperm.xlu0 %4442, %v4231
        %v4444 = vpop.permute.xlu0 %4443
        %4447 = vset.pattern.permute.xlu0 0
        %4448 = vperm.xlu0 %4447, %v4232
        %v4449 = vpop.permute.xlu0 %4448
        %4452 = vset.pattern.permute.xlu0 0
        %4453 = vperm.xlu0 %4452, %v4233
        %v4454 = vpop.permute.xlu0 %4453
        %4457 = vset.pattern.permute.xlu0 0
        %4458 = vperm.xlu0 %4457, %v4234
        %v4459 = vpop.permute.xlu0 %4458
        %4462 = vset.pattern.permute.xlu0 0
        %4463 = vperm.xlu0 %4462, %v4235
        %v4464 = vpop.permute.xlu0 %4463
        %v4466 = vmul.f32 %v4144, %v4239
        %v4467 = vmul.f32 %v4145, %v4244
        %v4468 = vmul.f32 %v4146, %v4249
        %v4469 = vmul.f32 %v4147, %v4254
        %v4470 = vmul.f32 %v4148, %v4259
        %v4471 = vmul.f32 %v4149, %v4264
        %v4472 = vmul.f32 %v4150, %v4269
        %v4473 = vmul.f32 %v4151, %v4274
        %v4474 = vmul.f32 %v4152, %v4279
        %v4475 = vmul.f32 %v4153, %v4284
        %v4476 = vmul.f32 %v4154, %v4289
        %v4477 = vmul.f32 %v4155, %v4294
        %v4478 = vmul.f32 %v4156, %v4299
        %v4479 = vmul.f32 %v4157, %v4304
        %v4480 = vmul.f32 %v4158, %v4309
        %v4481 = vmul.f32 %v4159, %v4314
        %v4482 = vmul.f32 %v4160, %v4319
        %v4483 = vmul.f32 %v4161, %v4324
        %v4484 = vmul.f32 %v4162, %v4329
        %v4485 = vmul.f32 %v4163, %v4334
        %v4486 = vmul.f32 %v4164, %v4339
        %v4487 = vmul.f32 %v4165, %v4344
        %v4488 = vmul.f32 %v4166, %v4349
        %v4489 = vmul.f32 %v4167, %v4354
        %v4490 = vmul.f32 %v4168, %v4359
        %v4491 = vmul.f32 %v4169, %v4364
        %v4492 = vmul.f32 %v4170, %v4369
        %v4493 = vmul.f32 %v4171, %v4374
        %v4494 = vmul.f32 %v4172, %v4379
        %v4495 = vmul.f32 %v4173, %v4384
        %v4496 = vmul.f32 %v4174, %v4389
        %v4497 = vmul.f32 %v4175, %v4394
        %v4498 = vmul.f32 %v4176, %v4399
        %v4499 = vmul.f32 %v4177, %v4404
        %v4500 = vmul.f32 %v4178, %v4409
        %v4501 = vmul.f32 %v4179, %v4414
        %v4502 = vmul.f32 %v4180, %v4419
        %v4503 = vmul.f32 %v4181, %v4424
        %v4504 = vmul.f32 %v4182, %v4429
        %v4505 = vmul.f32 %v4183, %v4434
        %v4506 = vmul.f32 %v4184, %v4439
        %v4507 = vmul.f32 %v4185, %v4444
        %v4508 = vmul.f32 %v4186, %v4449
        %v4509 = vmul.f32 %v4187, %v4454
        %v4510 = vmul.f32 %v4188, %v4459
        %v4511 = vmul.f32 %v4189, %v4464
        %v4512 = vpack.c.bf16 %v4466, %v4466
        %v4513 = vpack.c.bf16 %v4467, %v4467
        %v4514 = vpack.c.bf16 %v4468, %v4468
        %v4515 = vpack.c.bf16 %v4469, %v4469
        %v4516 = vpack.c.bf16 %v4470, %v4470
        %v4517 = vpack.c.bf16 %v4471, %v4471
        %v4518 = vpack.c.bf16 %v4472, %v4472
        %v4519 = vpack.c.bf16 %v4473, %v4473
        %v4520 = vpack.c.bf16 %v4474, %v4474
        %v4521 = vpack.c.bf16 %v4475, %v4475
        %v4522 = vpack.c.bf16 %v4476, %v4476
        %v4523 = vpack.c.bf16 %v4477, %v4477
        %v4524 = vpack.c.bf16 %v4478, %v4478
        %v4525 = vpack.c.bf16 %v4479, %v4479
        %v4526 = vpack.c.bf16 %v4480, %v4480
        %v4527 = vpack.c.bf16 %v4481, %v4481
        %v4528 = vpack.c.bf16 %v4482, %v4482
        %v4529 = vpack.c.bf16 %v4483, %v4483
        %v4530 = vpack.c.bf16 %v4484, %v4484
        %v4531 = vpack.c.bf16 %v4485, %v4485
        %v4532 = vpack.c.bf16 %v4486, %v4486
        %v4533 = vpack.c.bf16 %v4487, %v4487
        %v4534 = vpack.c.bf16 %v4488, %v4488
        %v4535 = vpack.c.bf16 %v4489, %v4489
        %v4536 = vpack.c.bf16 %v4490, %v4490
        %v4537 = vpack.c.bf16 %v4491, %v4491
        %v4538 = vpack.c.bf16 %v4492, %v4492
        %v4539 = vpack.c.bf16 %v4493, %v4493
        %v4540 = vpack.c.bf16 %v4494, %v4494
        %v4541 = vpack.c.bf16 %v4495, %v4495
        %v4542 = vpack.c.bf16 %v4496, %v4496
        %v4543 = vpack.c.bf16 %v4497, %v4497
        %v4544 = vpack.c.bf16 %v4498, %v4498
        %v4545 = vpack.c.bf16 %v4499, %v4499
        %v4546 = vpack.c.bf16 %v4500, %v4500
        %v4547 = vpack.c.bf16 %v4501, %v4501
        %v4548 = vpack.c.bf16 %v4502, %v4502
        %v4549 = vpack.c.bf16 %v4503, %v4503
        %v4550 = vpack.c.bf16 %v4504, %v4504
        %v4551 = vpack.c.bf16 %v4505, %v4505
        %v4552 = vpack.c.bf16 %v4506, %v4506
        %v4553 = vpack.c.bf16 %v4507, %v4507
        %v4554 = vpack.c.bf16 %v4508, %v4508
        %v4555 = vpack.c.bf16 %v4509, %v4509
        %v4556 = vpack.c.bf16 %v4510, %v4510
        %v4557 = vpack.c.bf16 %v4511, %v4511
        %4558 = vst [vmem:[#allocation2] sm:$0xf] %v4512
        %4559 = vst [vmem:[#allocation2 + $0x4] sm:$0xf] %v4513
        %4560 = vst [vmem:[#allocation2 + $0x8] sm:$0xf] %v4514
        %4561 = vst [vmem:[#allocation2 + $0xc] sm:$0xf] %v4515
        %4562 = vst [vmem:[#allocation2 + $0x10] sm:$0xf] %v4516
        %4563 = vst [vmem:[#allocation2 + $0x14] sm:$0xf] %v4517
        %4564 = vst [vmem:[#allocation2 + $0x18] sm:$0xf] %v4518
        %4565 = vst [vmem:[#allocation2 + $0x1c] sm:$0xf] %v4519
        %4566 = vst [vmem:[#allocation2 + $0x20] sm:$0xf] %v4520
        %4567 = vst [vmem:[#allocation2 + $0x24] sm:$0xf] %v4521
        %4568 = vst [vmem:[#allocation2 + $0x28] sm:$0xf] %v4522
        %4569 = vst [vmem:[#allocation2 + $0x2c] sm:$0xf] %v4523
        %4570 = vst [vmem:[#allocation2 + $0x30] sm:$0xf] %v4524
        %4571 = vst [vmem:[#allocation2 + $0x34] sm:$0xf] %v4525
        %4572 = vst [vmem:[#allocation2 + $0x38] sm:$0xf] %v4526
        %4573 = vst [vmem:[#allocation2 + $0x3c] sm:$0xf] %v4527
        %4574 = vst [vmem:[#allocation2 + $0x40] sm:$0xf] %v4528
        %4575 = vst [vmem:[#allocation2 + $0x44] sm:$0xf] %v4529
        %4576 = vst [vmem:[#allocation2 + $0x48] sm:$0xf] %v4530
        %4577 = vst [vmem:[#allocation2 + $0x4c] sm:$0xf] %v4531
        %4578 = vst [vmem:[#allocation2 + $0x50] sm:$0xf] %v4532
        %4579 = vst [vmem:[#allocation2 + $0x54] sm:$0xf] %v4533
        %4580 = vst [vmem:[#allocation2 + $0x58] sm:$0xf] %v4534
        %4581 = vst [vmem:[#allocation2 + $0x5c] sm:$0xf] %v4535
        %4582 = vst [vmem:[#allocation2 + $0x60] sm:$0xf] %v4536
        %4583 = vst [vmem:[#allocation2 + $0x64] sm:$0xf] %v4537
        %4584 = vst [vmem:[#allocation2 + $0x68] sm:$0xf] %v4538
        %4585 = vst [vmem:[#allocation2 + $0x6c] sm:$0xf] %v4539
        %4586 = vst [vmem:[#allocation2 + $0x70] sm:$0xf] %v4540
        %4587 = vst [vmem:[#allocation2 + $0x74] sm:$0xf] %v4541
        %4588 = vst [vmem:[#allocation2 + $0x78] sm:$0xf] %v4542
        %4589 = vst [vmem:[#allocation2 + $0x7c] sm:$0xf] %v4543
        %4590 = vst [vmem:[#allocation2 + $0x80] sm:$0xf] %v4544
        %4591 = vst [vmem:[#allocation2 + $0x84] sm:$0xf] %v4545
        %4592 = vst [vmem:[#allocation2 + $0x88] sm:$0xf] %v4546
        %4593 = vst [vmem:[#allocation2 + $0x8c] sm:$0xf] %v4547
        %4594 = vst [vmem:[#allocation2 + $0x90] sm:$0xf] %v4548
        %4595 = vst [vmem:[#allocation2 + $0x94] sm:$0xf] %v4549
        %4596 = vst [vmem:[#allocation2 + $0x98] sm:$0xf] %v4550
        %4597 = vst [vmem:[#allocation2 + $0x9c] sm:$0xf] %v4551
        %4598 = vst [vmem:[#allocation2 + $0xa0] sm:$0xf] %v4552
        %4599 = vst [vmem:[#allocation2 + $0xa4] sm:$0xf] %v4553
        %4600 = vst [vmem:[#allocation2 + $0xa8] sm:$0xf] %v4554
        %4601 = vst [vmem:[#allocation2 + $0xac] sm:$0xf] %v4555
        %4602 = vst [vmem:[#allocation2 + $0xb0] sm:$0xf] %v4556
        %4603 = vst [vmem:[#allocation2 + $0xb4] sm:$0xf] %v4557
        %v4604 = vld [vmem:[#allocation2] sm:$0xf]
        %v4605 = vld [vmem:[#allocation2 + $0x4] sm:$0xf]
        %v4606 = vld [vmem:[#allocation2 + $0x8] sm:$0xf]
        %v4607 = vld [vmem:[#allocation2 + $0xc] sm:$0xf]
        %v4608 = vld [vmem:[#allocation2 + $0x10] sm:$0xf]
        %v4609 = vld [vmem:[#allocation2 + $0x14] sm:$0xf]
        %v4610 = vld [vmem:[#allocation2 + $0x18] sm:$0xf]
        %v4611 = vld [vmem:[#allocation2 + $0x1c] sm:$0xf]
        %v4612 = vld [vmem:[#allocation2 + $0x20] sm:$0xf]
        %v4613 = vld [vmem:[#allocation2 + $0x24] sm:$0xf]
        %v4614 = vld [vmem:[#allocation2 + $0x28] sm:$0xf]
        %v4615 = vld [vmem:[#allocation2 + $0x2c] sm:$0xf]
        %v4616 = vld [vmem:[#allocation2 + $0x30] sm:$0xf]
        %v4617 = vld [vmem:[#allocation2 + $0x34] sm:$0xf]
        %v4618 = vld [vmem:[#allocation2 + $0x38] sm:$0xf]
        %v4619 = vld [vmem:[#allocation2 + $0x3c] sm:$0xf]
        %v4620 = vld [vmem:[#allocation2 + $0x40] sm:$0xf]
        %v4621 = vld [vmem:[#allocation2 + $0x44] sm:$0xf]
        %v4622 = vld [vmem:[#allocation2 + $0x48] sm:$0xf]
        %v4623 = vld [vmem:[#allocation2 + $0x4c] sm:$0xf]
        %v4624 = vld [vmem:[#allocation2 + $0x50] sm:$0xf]
        %v4625 = vld [vmem:[#allocation2 + $0x54] sm:$0xf]
        %v4626 = vld [vmem:[#allocation2 + $0x58] sm:$0xf]
        %v4627 = vld [vmem:[#allocation2 + $0x5c] sm:$0xf]
        %v4628 = vld [vmem:[#allocation2 + $0x60] sm:$0xf]
        %v4629 = vld [vmem:[#allocation2 + $0x64] sm:$0xf]
        %v4630 = vld [vmem:[#allocation2 + $0x68] sm:$0xf]
        %v4631 = vld [vmem:[#allocation2 + $0x6c] sm:$0xf]
        %v4632 = vld [vmem:[#allocation2 + $0x70] sm:$0xf]
        %v4633 = vld [vmem:[#allocation2 + $0x74] sm:$0xf]
        %v4634 = vld [vmem:[#allocation2 + $0x78] sm:$0xf]
        %v4635 = vld [vmem:[#allocation2 + $0x7c] sm:$0xf]
        %v4636 = vld [vmem:[#allocation2 + $0x80] sm:$0xf]
        %v4637 = vld [vmem:[#allocation2 + $0x84] sm:$0xf]
        %v4638 = vld [vmem:[#allocation2 + $0x88] sm:$0xf]
        %v4639 = vld [vmem:[#allocation2 + $0x8c] sm:$0xf]
        %v4640 = vld [vmem:[#allocation2 + $0x90] sm:$0xf]
        %v4641 = vld [vmem:[#allocation2 + $0x94] sm:$0xf]
        %v4642 = vld [vmem:[#allocation2 + $0x98] sm:$0xf]
        %v4643 = vld [vmem:[#allocation2 + $0x9c] sm:$0xf]
        %v4644 = vld [vmem:[#allocation8] sm:$0xf]
        %v4645 = vld [vmem:[#allocation8 + $0x4] sm:$0xf]
        %v4646 = vld [vmem:[#allocation8 + $0x8] sm:$0xf]
        %v4647 = vld [vmem:[#allocation8 + $0xc] sm:$0xf]
        %v4648 = vld [vmem:[#allocation8 + $0x10] sm:$0xf]
        %v4649 = vld [vmem:[#allocation8 + $0x14] sm:$0xf]
        %v4650 = vld [vmem:[#allocation8 + $0x18] sm:$0xf]
        %v4651 = vld [vmem:[#allocation8 + $0x1c] sm:$0xf]
        %v4652 = vld [vmem:[#allocation8 + $0x20] sm:$0xf]
        %v4653 = vld [vmem:[#allocation8 + $0x24] sm:$0xf]
        %v4654 = vld [vmem:[#allocation8 + $0x28] sm:$0xf]
        %v4655 = vld [vmem:[#allocation8 + $0x2c] sm:$0xf]
        %v4656 = vld [vmem:[#allocation8 + $0x30] sm:$0xf]
        %v4657 = vld [vmem:[#allocation8 + $0x34] sm:$0xf]
        %v4658 = vld [vmem:[#allocation8 + $0x38] sm:$0xf]
        %v4659 = vld [vmem:[#allocation8 + $0x3c] sm:$0xf]
        %v4660 = vld [vmem:[#allocation2 + $0xa0] sm:$0x1]
        %s4661 = scalar_lea.vmem [#allocation8], 64
        %v4662 = vld [vmem:[%s4661] sm:$0xf]
        %v4663 = vld [vmem:[%s4661 + $0x4] sm:$0xf]
        %v4664 = vld [vmem:[%s4661 + $0x8] sm:$0xf]
        %v4665 = vld [vmem:[%s4661 + $0xc] sm:$0xf]
        %v4666 = vld [vmem:[%s4661 + $0x10] sm:$0xf]
        %v4667 = vld [vmem:[%s4661 + $0x14] sm:$0xf]
        %v4668 = vld [vmem:[%s4661 + $0x18] sm:$0xf]
        %v4669 = vld [vmem:[%s4661 + $0x1c] sm:$0xf]
        %v4670 = vld [vmem:[%s4661 + $0x20] sm:$0xf]
        %v4671 = vld [vmem:[%s4661 + $0x24] sm:$0xf]
        %v4672 = vld [vmem:[%s4661 + $0x28] sm:$0xf]
        %v4673 = vld [vmem:[%s4661 + $0x2c] sm:$0xf]
        %v4674 = vld [vmem:[%s4661 + $0x30] sm:$0xf]
        %v4675 = vld [vmem:[%s4661 + $0x34] sm:$0xf]
        %v4676 = vld [vmem:[%s4661 + $0x38] sm:$0xf]
        %v4677 = vld [vmem:[%s4661 + $0x3c] sm:$0xf]
        %v4719 = vunpack.c.l.b16 %v4604
        %v4720 = vunpack.c.l.b16 %v4605
        %v4721 = vunpack.c.l.b16 %v4606
        %v4722 = vunpack.c.l.b16 %v4607
        %v4723 = vunpack.c.l.b16 %v4608
        %v4724 = vunpack.c.l.b16 %v4609
        %v4725 = vunpack.c.l.b16 %v4610
        %v4726 = vunpack.c.l.b16 %v4611
        %v4727 = vunpack.c.l.b16 %v4612
        %v4728 = vunpack.c.l.b16 %v4613
        %v4729 = vunpack.c.l.b16 %v4614
        %v4730 = vunpack.c.l.b16 %v4615
        %v4731 = vunpack.c.l.b16 %v4616
        %v4732 = vunpack.c.l.b16 %v4617
        %v4733 = vunpack.c.l.b16 %v4618
        %v4734 = vunpack.c.l.b16 %v4619
        %v4735 = vunpack.c.l.b16 %v4620
        %v4736 = vunpack.c.l.b16 %v4621
        %v4737 = vunpack.c.l.b16 %v4622
        %v4738 = vunpack.c.l.b16 %v4623
        %v4739 = vunpack.c.l.b16 %v4624
        %v4740 = vunpack.c.l.b16 %v4625
        %v4741 = vunpack.c.l.b16 %v4626
        %v4742 = vunpack.c.l.b16 %v4627
        %v4743 = vunpack.c.l.b16 %v4628
        %v4744 = vunpack.c.l.b16 %v4629
        %v4745 = vunpack.c.l.b16 %v4630
        %v4746 = vunpack.c.l.b16 %v4631
        %v4747 = vunpack.c.l.b16 %v4632
        %v4748 = vunpack.c.l.b16 %v4633
        %v4749 = vunpack.c.l.b16 %v4634
        %v4750 = vunpack.c.l.b16 %v4635
        %v4751 = vunpack.c.l.b16 %v4636
        %v4752 = vunpack.c.l.b16 %v4637
        %v4753 = vunpack.c.l.b16 %v4638
        %v4754 = vunpack.c.l.b16 %v4639
        %v4755 = vunpack.c.l.b16 %v4640
        %v4756 = vunpack.c.l.b16 %v4641
        %v4757 = vunpack.c.l.b16 %v4642
        %v4758 = vunpack.c.l.b16 %v4643
        %v4759 = vunpack.c.l.b16 %v4660
        %v4760 = vpack.c.b16 %v4720, %v4719
        %v4761 = vpack.c.b16 %v4722, %v4721
        %v4762 = vpack.c.b16 %v4724, %v4723
        %v4763 = vpack.c.b16 %v4726, %v4725
        %v4764 = vpack.c.b16 %v4728, %v4727
        %v4765 = vpack.c.b16 %v4730, %v4729
        %v4766 = vpack.c.b16 %v4732, %v4731
        %v4767 = vpack.c.b16 %v4734, %v4733
        %v4768 = vpack.c.b16 %v4736, %v4735
        %v4769 = vpack.c.b16 %v4738, %v4737
        %v4770 = vpack.c.b16 %v4740, %v4739
        %v4771 = vpack.c.b16 %v4742, %v4741
        %v4772 = vpack.c.b16 %v4744, %v4743
        %v4773 = vpack.c.b16 %v4746, %v4745
        %v4774 = vpack.c.b16 %v4748, %v4747
        %v4775 = vpack.c.b16 %v4750, %v4749
        %v4776 = vpack.c.b16 %v4752, %v4751
        %v4777 = vpack.c.b16 %v4754, %v4753
        %v4778 = vpack.c.b16 %v4756, %v4755
        %v4779 = vpack.c.b16 %v4758, %v4757
        %v4780 = vpack.c.b16 %v4759, %v4759
        %v4782 = vshrl.u32 %v4760, 16
        %v4784 = vshll.u32 %v4760, 16
        %v4786 = vrot.slane %v4784, 1
        %v4787 = vor.u32 %v4782, %v4786
        %v4789 = vshll.u32 %v4761, 16
        %v4791 = vrot.slane %v4789, 1
        %v4792 = vsel %vm557, %v4787, %v4791
        %v4793 = vshrl.u32 %v4761, 16
        %v4795 = vor.u32 %v4793, %v4791
        %v4797 = vshll.u32 %v4762, 16
        %v4799 = vrot.slane %v4797, 1
        %v4800 = vsel %vm557, %v4795, %v4799
        %v4801 = vshrl.u32 %v4762, 16
        %v4803 = vor.u32 %v4801, %v4799
        %v4805 = vshll.u32 %v4763, 16
        %v4807 = vrot.slane %v4805, 1
        %v4808 = vsel %vm557, %v4803, %v4807
        %v4809 = vshrl.u32 %v4763, 16
        %v4811 = vor.u32 %v4809, %v4807
        %v4813 = vshll.u32 %v4764, 16
        %v4815 = vrot.slane %v4813, 1
        %v4816 = vsel %vm557, %v4811, %v4815
        %v4817 = vshrl.u32 %v4764, 16
        %v4819 = vor.u32 %v4817, %v4815
        %v4821 = vshll.u32 %v4765, 16
        %v4823 = vrot.slane %v4821, 1
        %v4824 = vsel %vm557, %v4819, %v4823
        %v4825 = vshrl.u32 %v4765, 16
        %v4827 = vor.u32 %v4825, %v4823
        %v4829 = vshll.u32 %v4766, 16
        %v4831 = vrot.slane %v4829, 1
        %v4832 = vsel %vm557, %v4827, %v4831
        %v4833 = vshrl.u32 %v4766, 16
        %v4835 = vor.u32 %v4833, %v4831
        %v4837 = vshll.u32 %v4767, 16
        %v4839 = vrot.slane %v4837, 1
        %v4840 = vsel %vm557, %v4835, %v4839
        %v4841 = vshrl.u32 %v4767, 16
        %v4843 = vor.u32 %v4841, %v4839
        %v4845 = vshll.u32 %v4768, 16
        %v4847 = vrot.slane %v4845, 1
        %v4848 = vsel %vm557, %v4843, %v4847
        %v4849 = vshrl.u32 %v4768, 16
        %v4851 = vor.u32 %v4849, %v4847
        %v4853 = vshll.u32 %v4769, 16
        %v4855 = vrot.slane %v4853, 1
        %v4856 = vsel %vm557, %v4851, %v4855
        %v4857 = vshrl.u32 %v4769, 16
        %v4859 = vor.u32 %v4857, %v4855
        %v4861 = vshll.u32 %v4770, 16
        %v4863 = vrot.slane %v4861, 1
        %v4864 = vsel %vm557, %v4859, %v4863
        %v4865 = vshrl.u32 %v4770, 16
        %v4867 = vor.u32 %v4865, %v4863
        %v4869 = vshll.u32 %v4771, 16
        %v4871 = vrot.slane %v4869, 1
        %v4872 = vsel %vm557, %v4867, %v4871
        %v4873 = vshrl.u32 %v4771, 16
        %v4875 = vor.u32 %v4873, %v4871
        %v4877 = vshll.u32 %v4772, 16
        %v4879 = vrot.slane %v4877, 1
        %v4880 = vsel %vm557, %v4875, %v4879
        %v4881 = vshrl.u32 %v4772, 16
        %v4883 = vor.u32 %v4881, %v4879
        %v4885 = vshll.u32 %v4773, 16
        %v4887 = vrot.slane %v4885, 1
        %v4888 = vsel %vm557, %v4883, %v4887
        %v4889 = vshrl.u32 %v4773, 16
        %v4891 = vor.u32 %v4889, %v4887
        %v4893 = vshll.u32 %v4774, 16
        %v4895 = vrot.slane %v4893, 1
        %v4896 = vsel %vm557, %v4891, %v4895
        %v4897 = vshrl.u32 %v4774, 16
        %v4899 = vor.u32 %v4897, %v4895
        %v4901 = vshll.u32 %v4775, 16
        %v4903 = vrot.slane %v4901, 1
        %v4904 = vsel %vm557, %v4899, %v4903
        %v4905 = vshrl.u32 %v4775, 16
        %v4907 = vor.u32 %v4905, %v4903
        %v4909 = vshll.u32 %v4776, 16
        %v4911 = vrot.slane %v4909, 1
        %v4912 = vsel %vm557, %v4907, %v4911
        %v4913 = vshrl.u32 %v4776, 16
        %v4915 = vor.u32 %v4913, %v4911
        %v4917 = vshll.u32 %v4777, 16
        %v4919 = vrot.slane %v4917, 1
        %v4920 = vsel %vm557, %v4915, %v4919
        %v4921 = vshrl.u32 %v4777, 16
        %v4923 = vor.u32 %v4921, %v4919
        %v4925 = vshll.u32 %v4778, 16
        %v4927 = vrot.slane %v4925, 1
        %v4928 = vsel %vm557, %v4923, %v4927
        %v4929 = vshrl.u32 %v4778, 16
        %v4931 = vor.u32 %v4929, %v4927
        %v4933 = vshll.u32 %v4779, 16
        %v4935 = vrot.slane %v4933, 1
        %v4936 = vsel %vm557, %v4931, %v4935
        %v4937 = vshrl.u32 %v4779, 16
        %v4939 = vor.u32 %v4937, %v4935
        %v4941 = vshll.u32 %v4780, 16
        %v4943 = vrot.slane %v4941, 1
        %v4944 = vsel %vm557, %v4939, %v4943
        %v4981 = vunpack.c.l.b16 %v4662
        %v4982 = vunpack.c.l.b16 %v4663
        %v4983 = vunpack.c.l.b16 %v4664
        %v4984 = vunpack.c.l.b16 %v4665
        %v4985 = vunpack.c.l.b16 %v4666
        %v4986 = vunpack.c.l.b16 %v4667
        %v4987 = vunpack.c.l.b16 %v4668
        %v4988 = vunpack.c.l.b16 %v4669
        %v4989 = vunpack.c.l.b16 %v4670
        %v4990 = vunpack.c.l.b16 %v4671
        %v4991 = vunpack.c.l.b16 %v4672
        %v4992 = vunpack.c.l.b16 %v4673
        %v4993 = vunpack.c.l.b16 %v4674
        %v4994 = vunpack.c.l.b16 %v4675
        %v4995 = vunpack.c.l.b16 %v4676
        %v4996 = vunpack.c.l.b16 %v4677
        %v4997 = vpack.c.b16 %v4982, %v4981
        %v4998 = vpack.c.b16 %v4984, %v4983
        %v4999 = vpack.c.b16 %v4986, %v4985
        %v5000 = vpack.c.b16 %v4988, %v4987
        %v5001 = vpack.c.b16 %v4990, %v4989
        %v5002 = vpack.c.b16 %v4992, %v4991
        %v5003 = vpack.c.b16 %v4994, %v4993
        %v5004 = vpack.c.b16 %v4996, %v4995
        %5013 = vmatpush.bf16.msra.mxu0 %v5004
        %5014 = vmatpush.bf16.msra.mxu0 %v5003
        %5015 = vmatpush.bf16.msra.mxu0 %v5002
        %5016 = vmatpush.bf16.msra.mxu0 %v5001
        %5017 = vmatpush.bf16.msra.mxu0 %v5000
        %5018 = vmatpush.bf16.msra.mxu0 %v4999
        %5019 = vmatpush.bf16.msra.mxu0 %v4998
        %5020 = vmatpush.bf16.msra.mxu0 %v4997
        %5021 = vmatmul.bf16.gmra.mxu0 %v4792
        %v5022 = vpop.f32.mrf.mxu0
        %v5023 = vadd.f32 0.0, %v5022
        %v5024 = vpop.f32.mrf.mxu0
        %v5025 = vadd.f32 0.0, %v5024
        %5026 = vmatmul.bf16.gmra.mxu0 %v4800
        %v5027 = vpop.f32.mrf.mxu0
        %v5028 = vadd.f32 0.0, %v5027
        %v5029 = vpop.f32.mrf.mxu0
        %v5030 = vadd.f32 0.0, %v5029
        %5031 = vmatmul.bf16.gmra.mxu0 %v4808
        %v5032 = vpop.f32.mrf.mxu0
        %v5033 = vadd.f32 0.0, %v5032
        %v5034 = vpop.f32.mrf.mxu0
        %v5035 = vadd.f32 0.0, %v5034
        %5036 = vmatmul.bf16.gmra.mxu0 %v4816
        %v5037 = vpop.f32.mrf.mxu0
        %v5038 = vadd.f32 0.0, %v5037
        %v5039 = vpop.f32.mrf.mxu0
        %v5040 = vadd.f32 0.0, %v5039
        %5041 = vmatmul.bf16.gmra.mxu0 %v4824
        %v5042 = vpop.f32.mrf.mxu0
        %v5043 = vadd.f32 0.0, %v5042
        %v5044 = vpop.f32.mrf.mxu0
        %v5045 = vadd.f32 0.0, %v5044
        %5046 = vmatmul.bf16.gmra.mxu0 %v4832
        %v5047 = vpop.f32.mrf.mxu0
        %v5048 = vadd.f32 0.0, %v5047
        %v5049 = vpop.f32.mrf.mxu0
        %v5050 = vadd.f32 0.0, %v5049
        %5051 = vmatmul.bf16.gmra.mxu0 %v4840
        %v5052 = vpop.f32.mrf.mxu0
        %v5053 = vadd.f32 0.0, %v5052
        %v5054 = vpop.f32.mrf.mxu0
        %v5055 = vadd.f32 0.0, %v5054
        %5056 = vmatmul.bf16.gmra.mxu0 %v4848
        %v5057 = vpop.f32.mrf.mxu0
        %v5058 = vadd.f32 0.0, %v5057
        %v5059 = vpop.f32.mrf.mxu0
        %v5060 = vadd.f32 0.0, %v5059
        %5061 = vmatmul.bf16.gmra.mxu0 %v4856
        %v5062 = vpop.f32.mrf.mxu0
        %v5063 = vadd.f32 0.0, %v5062
        %v5064 = vpop.f32.mrf.mxu0
        %v5065 = vadd.f32 0.0, %v5064
        %5066 = vmatmul.bf16.gmra.mxu0 %v4864
        %v5067 = vpop.f32.mrf.mxu0
        %v5068 = vadd.f32 0.0, %v5067
        %v5069 = vpop.f32.mrf.mxu0
        %v5070 = vadd.f32 0.0, %v5069
        %5071 = vmatmul.bf16.gmra.mxu0 %v4872
        %v5072 = vpop.f32.mrf.mxu0
        %v5073 = vadd.f32 0.0, %v5072
        %v5074 = vpop.f32.mrf.mxu0
        %v5075 = vadd.f32 0.0, %v5074
        %5076 = vmatmul.bf16.gmra.mxu0 %v4880
        %v5077 = vpop.f32.mrf.mxu0
        %v5078 = vadd.f32 0.0, %v5077
        %v5079 = vpop.f32.mrf.mxu0
        %v5080 = vadd.f32 0.0, %v5079
        %5081 = vmatmul.bf16.gmra.mxu0 %v4888
        %v5082 = vpop.f32.mrf.mxu0
        %v5083 = vadd.f32 0.0, %v5082
        %v5084 = vpop.f32.mrf.mxu0
        %v5085 = vadd.f32 0.0, %v5084
        %5086 = vmatmul.bf16.gmra.mxu0 %v4896
        %v5087 = vpop.f32.mrf.mxu0
        %v5088 = vadd.f32 0.0, %v5087
        %v5089 = vpop.f32.mrf.mxu0
        %v5090 = vadd.f32 0.0, %v5089
        %5091 = vmatmul.bf16.gmra.mxu0 %v4904
        %v5092 = vpop.f32.mrf.mxu0
        %v5093 = vadd.f32 0.0, %v5092
        %v5094 = vpop.f32.mrf.mxu0
        %v5095 = vadd.f32 0.0, %v5094
        %5096 = vmatmul.bf16.gmra.mxu0 %v4912
        %v5097 = vpop.f32.mrf.mxu0
        %v5098 = vadd.f32 0.0, %v5097
        %v5099 = vpop.f32.mrf.mxu0
        %v5100 = vadd.f32 0.0, %v5099
        %5101 = vmatmul.bf16.gmra.mxu0 %v4920
        %v5102 = vpop.f32.mrf.mxu0
        %v5103 = vadd.f32 0.0, %v5102
        %v5104 = vpop.f32.mrf.mxu0
        %v5105 = vadd.f32 0.0, %v5104
        %5106 = vmatmul.bf16.gmra.mxu0 %v4928
        %v5107 = vpop.f32.mrf.mxu0
        %v5108 = vadd.f32 0.0, %v5107
        %v5109 = vpop.f32.mrf.mxu0
        %v5110 = vadd.f32 0.0, %v5109
        %5111 = vmatmul.bf16.gmra.mxu0 %v4936
        %v5112 = vpop.f32.mrf.mxu0
        %v5113 = vadd.f32 0.0, %v5112
        %v5114 = vpop.f32.mrf.mxu0
        %v5115 = vadd.f32 0.0, %v5114
        %5116 = vmatmul.bf16.gmra.mxu0 %v4944
        %v5117 = vpop.f32.mrf.mxu0
        %v5118 = vadd.f32 0.0, %v5117
        %v5119 = vpop.f32.mrf.mxu0
        %v5120 = vadd.f32 0.0, %v5119
        %5121 = vdwg.mxu0
        %v5158 = vunpack.c.l.b16 %v4644
        %v5159 = vunpack.c.l.b16 %v4645
        %v5160 = vunpack.c.l.b16 %v4646
        %v5161 = vunpack.c.l.b16 %v4647
        %v5162 = vunpack.c.l.b16 %v4648
        %v5163 = vunpack.c.l.b16 %v4649
        %v5164 = vunpack.c.l.b16 %v4650
        %v5165 = vunpack.c.l.b16 %v4651
        %v5166 = vunpack.c.l.b16 %v4652
        %v5167 = vunpack.c.l.b16 %v4653
        %v5168 = vunpack.c.l.b16 %v4654
        %v5169 = vunpack.c.l.b16 %v4655
        %v5170 = vunpack.c.l.b16 %v4656
        %v5171 = vunpack.c.l.b16 %v4657
        %v5172 = vunpack.c.l.b16 %v4658
        %v5173 = vunpack.c.l.b16 %v4659
        %v5174 = vpack.c.b16 %v5159, %v5158
        %v5175 = vpack.c.b16 %v5161, %v5160
        %v5176 = vpack.c.b16 %v5163, %v5162
        %v5177 = vpack.c.b16 %v5165, %v5164
        %v5178 = vpack.c.b16 %v5167, %v5166
        %v5179 = vpack.c.b16 %v5169, %v5168
        %v5180 = vpack.c.b16 %v5171, %v5170
        %v5181 = vpack.c.b16 %v5173, %v5172
        %5190 = vmatpush.bf16.msra.mxu0 %v5181
        %5191 = vmatpush.bf16.msra.mxu0 %v5180
        %5192 = vmatpush.bf16.msra.mxu0 %v5179
        %5193 = vmatpush.bf16.msra.mxu0 %v5178
        %5194 = vmatpush.bf16.msra.mxu0 %v5177
        %5195 = vmatpush.bf16.msra.mxu0 %v5176
        %5196 = vmatpush.bf16.msra.mxu0 %v5175
        %5197 = vmatpush.bf16.msra.mxu0 %v5174
        %5198 = vmatmul.bf16.gmra.mxu0 %v4760
        %v5199 = vpop.f32.mrf.mxu0
        %v5200 = vadd.f32 %v5023, %v5199
        %v5201 = vpop.f32.mrf.mxu0
        %v5202 = vadd.f32 %v5025, %v5201
        %5203 = vmatmul.bf16.gmra.mxu0 %v4761
        %v5204 = vpop.f32.mrf.mxu0
        %v5205 = vadd.f32 %v5028, %v5204
        %v5206 = vpop.f32.mrf.mxu0
        %v5207 = vadd.f32 %v5030, %v5206
        %5208 = vmatmul.bf16.gmra.mxu0 %v4762
        %v5209 = vpop.f32.mrf.mxu0
        %v5210 = vadd.f32 %v5033, %v5209
        %v5211 = vpop.f32.mrf.mxu0
        %v5212 = vadd.f32 %v5035, %v5211
        %5213 = vmatmul.bf16.gmra.mxu0 %v4763
        %v5214 = vpop.f32.mrf.mxu0
        %v5215 = vadd.f32 %v5038, %v5214
        %v5216 = vpop.f32.mrf.mxu0
        %v5217 = vadd.f32 %v5040, %v5216
        %5218 = vmatmul.bf16.gmra.mxu0 %v4764
        %v5219 = vpop.f32.mrf.mxu0
        %v5220 = vadd.f32 %v5043, %v5219
        %v5221 = vpop.f32.mrf.mxu0
        %v5222 = vadd.f32 %v5045, %v5221
        %5223 = vmatmul.bf16.gmra.mxu0 %v4765
        %v5224 = vpop.f32.mrf.mxu0
        %v5225 = vadd.f32 %v5048, %v5224
        %v5226 = vpop.f32.mrf.mxu0
        %v5227 = vadd.f32 %v5050, %v5226
        %5228 = vmatmul.bf16.gmra.mxu0 %v4766
        %v5229 = vpop.f32.mrf.mxu0
        %v5230 = vadd.f32 %v5053, %v5229
        %v5231 = vpop.f32.mrf.mxu0
        %v5232 = vadd.f32 %v5055, %v5231
        %5233 = vmatmul.bf16.gmra.mxu0 %v4767
        %v5234 = vpop.f32.mrf.mxu0
        %v5235 = vadd.f32 %v5058, %v5234
        %v5236 = vpop.f32.mrf.mxu0
        %v5237 = vadd.f32 %v5060, %v5236
        %5238 = vmatmul.bf16.gmra.mxu0 %v4768
        %v5239 = vpop.f32.mrf.mxu0
        %v5240 = vadd.f32 %v5063, %v5239
        %v5241 = vpop.f32.mrf.mxu0
        %v5242 = vadd.f32 %v5065, %v5241
        %5243 = vmatmul.bf16.gmra.mxu0 %v4769
        %v5244 = vpop.f32.mrf.mxu0
        %v5245 = vadd.f32 %v5068, %v5244
        %v5246 = vpop.f32.mrf.mxu0
        %v5247 = vadd.f32 %v5070, %v5246
        %5248 = vmatmul.bf16.gmra.mxu0 %v4770
        %v5249 = vpop.f32.mrf.mxu0
        %v5250 = vadd.f32 %v5073, %v5249
        %v5251 = vpop.f32.mrf.mxu0
        %v5252 = vadd.f32 %v5075, %v5251
        %5253 = vmatmul.bf16.gmra.mxu0 %v4771
        %v5254 = vpop.f32.mrf.mxu0
        %v5255 = vadd.f32 %v5078, %v5254
        %v5256 = vpop.f32.mrf.mxu0
        %v5257 = vadd.f32 %v5080, %v5256
        %5258 = vmatmul.bf16.gmra.mxu0 %v4772
        %v5259 = vpop.f32.mrf.mxu0
        %v5260 = vadd.f32 %v5083, %v5259
        %v5261 = vpop.f32.mrf.mxu0
        %v5262 = vadd.f32 %v5085, %v5261
        %5263 = vmatmul.bf16.gmra.mxu0 %v4773
        %v5264 = vpop.f32.mrf.mxu0
        %v5265 = vadd.f32 %v5088, %v5264
        %v5266 = vpop.f32.mrf.mxu0
        %v5267 = vadd.f32 %v5090, %v5266
        %5268 = vmatmul.bf16.gmra.mxu0 %v4774
        %v5269 = vpop.f32.mrf.mxu0
        %v5270 = vadd.f32 %v5093, %v5269
        %v5271 = vpop.f32.mrf.mxu0
        %v5272 = vadd.f32 %v5095, %v5271
        %5273 = vmatmul.bf16.gmra.mxu0 %v4775
        %v5274 = vpop.f32.mrf.mxu0
        %v5275 = vadd.f32 %v5098, %v5274
        %v5276 = vpop.f32.mrf.mxu0
        %v5277 = vadd.f32 %v5100, %v5276
        %5278 = vmatmul.bf16.gmra.mxu0 %v4776
        %v5279 = vpop.f32.mrf.mxu0
        %v5280 = vadd.f32 %v5103, %v5279
        %v5281 = vpop.f32.mrf.mxu0
        %v5282 = vadd.f32 %v5105, %v5281
        %5283 = vmatmul.bf16.gmra.mxu0 %v4777
        %v5284 = vpop.f32.mrf.mxu0
        %v5285 = vadd.f32 %v5108, %v5284
        %v5286 = vpop.f32.mrf.mxu0
        %v5287 = vadd.f32 %v5110, %v5286
        %5288 = vmatmul.bf16.gmra.mxu0 %v4778
        %v5289 = vpop.f32.mrf.mxu0
        %v5290 = vadd.f32 %v5113, %v5289
        %v5291 = vpop.f32.mrf.mxu0
        %v5292 = vadd.f32 %v5115, %v5291
        %5293 = vmatmul.bf16.gmra.mxu0 %v4779
        %v5294 = vpop.f32.mrf.mxu0
        %v5295 = vadd.f32 %v5118, %v5294
        %v5296 = vpop.f32.mrf.mxu0
        %v5297 = vadd.f32 %v5120, %v5296
        %5298 = vdwg.mxu0
        %v5299 = vld [vmem:[#allocation2] sm:$0xe]
        %s5300 = scalar_lea.vmem [#allocation8], 128
        %v5301 = vld [vmem:[%s5300] sm:$0xf]
        %v5302 = vld [vmem:[%s5300 + $0x4] sm:$0xf]
        %v5303 = vld [vmem:[%s5300 + $0x8] sm:$0xf]
        %v5304 = vld [vmem:[%s5300 + $0xc] sm:$0xf]
        %v5305 = vld [vmem:[%s5300 + $0x10] sm:$0xf]
        %v5306 = vld [vmem:[%s5300 + $0x14] sm:$0xf]
        %v5307 = vld [vmem:[%s5300 + $0x18] sm:$0xf]
        %v5308 = vld [vmem:[%s5300 + $0x1c] sm:$0xf]
        %v5309 = vld [vmem:[%s5300 + $0x20] sm:$0xf]
        %v5310 = vld [vmem:[%s5300 + $0x24] sm:$0xf]
        %v5311 = vld [vmem:[%s5300 + $0x28] sm:$0xf]
        %v5312 = vld [vmem:[%s5300 + $0x2c] sm:$0xf]
        %v5313 = vld [vmem:[%s5300 + $0x30] sm:$0xf]
        %v5314 = vld [vmem:[%s5300 + $0x34] sm:$0xf]
        %v5315 = vld [vmem:[%s5300 + $0x38] sm:$0xf]
        %v5316 = vld [vmem:[%s5300 + $0x3c] sm:$0xf]
        %v5318 = vunpack.c.l.b16 %v5299
        %v5319 = vpack.c.b16 %v4720, %v5318
        %v5320 = vrot.slane %v5319, 1
        %v5321 = vrot.slane %v4761, 1
        %v5322 = vsel %vm1157, %v5320, %v5321
        %v5323 = vrot.slane %v4762, 1
        %v5324 = vsel %vm1157, %v5321, %v5323
        %v5325 = vrot.slane %v4763, 1
        %v5326 = vsel %vm1157, %v5323, %v5325
        %v5327 = vrot.slane %v4764, 1
        %v5328 = vsel %vm1157, %v5325, %v5327
        %v5329 = vrot.slane %v4765, 1
        %v5330 = vsel %vm1157, %v5327, %v5329
        %v5331 = vrot.slane %v4766, 1
        %v5332 = vsel %vm1157, %v5329, %v5331
        %v5333 = vrot.slane %v4767, 1
        %v5334 = vsel %vm1157, %v5331, %v5333
        %v5335 = vrot.slane %v4768, 1
        %v5336 = vsel %vm1157, %v5333, %v5335
        %v5337 = vrot.slane %v4769, 1
        %v5338 = vsel %vm1157, %v5335, %v5337
        %v5339 = vrot.slane %v4770, 1
        %v5340 = vsel %vm1157, %v5337, %v5339
        %v5341 = vrot.slane %v4771, 1
        %v5342 = vsel %vm1157, %v5339, %v5341
        %v5343 = vrot.slane %v4772, 1
        %v5344 = vsel %vm1157, %v5341, %v5343
        %v5345 = vrot.slane %v4773, 1
        %v5346 = vsel %vm1157, %v5343, %v5345
        %v5347 = vrot.slane %v4774, 1
        %v5348 = vsel %vm1157, %v5345, %v5347
        %v5349 = vrot.slane %v4775, 1
        %v5350 = vsel %vm1157, %v5347, %v5349
        %v5351 = vrot.slane %v4776, 1
        %v5352 = vsel %vm1157, %v5349, %v5351
        %v5353 = vrot.slane %v4777, 1
        %v5354 = vsel %vm1157, %v5351, %v5353
        %v5355 = vrot.slane %v4778, 1
        %v5356 = vsel %vm1157, %v5353, %v5355
        %v5357 = vrot.slane %v4779, 1
        %v5358 = vsel %vm1157, %v5355, %v5357
        %v5359 = vrot.slane %v4780, 1
        %v5360 = vsel %vm1157, %v5357, %v5359
        %v5397 = vunpack.c.l.b16 %v5301
        %v5398 = vunpack.c.l.b16 %v5302
        %v5399 = vunpack.c.l.b16 %v5303
        %v5400 = vunpack.c.l.b16 %v5304
        %v5401 = vunpack.c.l.b16 %v5305
        %v5402 = vunpack.c.l.b16 %v5306
        %v5403 = vunpack.c.l.b16 %v5307
        %v5404 = vunpack.c.l.b16 %v5308
        %v5405 = vunpack.c.l.b16 %v5309
        %v5406 = vunpack.c.l.b16 %v5310
        %v5407 = vunpack.c.l.b16 %v5311
        %v5408 = vunpack.c.l.b16 %v5312
        %v5409 = vunpack.c.l.b16 %v5313
        %v5410 = vunpack.c.l.b16 %v5314
        %v5411 = vunpack.c.l.b16 %v5315
        %v5412 = vunpack.c.l.b16 %v5316
        %v5413 = vpack.c.b16 %v5398, %v5397
        %v5414 = vpack.c.b16 %v5400, %v5399
        %v5415 = vpack.c.b16 %v5402, %v5401
        %v5416 = vpack.c.b16 %v5404, %v5403
        %v5417 = vpack.c.b16 %v5406, %v5405
        %v5418 = vpack.c.b16 %v5408, %v5407
        %v5419 = vpack.c.b16 %v5410, %v5409
        %v5420 = vpack.c.b16 %v5412, %v5411
        %5429 = vmatpush.bf16.msra.mxu0 %v5420
        %5430 = vmatpush.bf16.msra.mxu0 %v5419
        %5431 = vmatpush.bf16.msra.mxu0 %v5418
        %5432 = vmatpush.bf16.msra.mxu0 %v5417
        %5433 = vmatpush.bf16.msra.mxu0 %v5416
        %5434 = vmatpush.bf16.msra.mxu0 %v5415
        %5435 = vmatpush.bf16.msra.mxu0 %v5414
        %5436 = vmatpush.bf16.msra.mxu0 %v5413
        %5437 = vmatmul.bf16.gmra.mxu0 %v5322
        %v5438 = vpop.f32.mrf.mxu0
        %v5439 = vadd.f32 0.0, %v5438
        %v5440 = vpop.f32.mrf.mxu0
        %v5441 = vadd.f32 0.0, %v5440
        %5442 = vmatmul.bf16.gmra.mxu0 %v5324
        %v5443 = vpop.f32.mrf.mxu0
        %v5444 = vadd.f32 0.0, %v5443
        %v5445 = vpop.f32.mrf.mxu0
        %v5446 = vadd.f32 0.0, %v5445
        %5447 = vmatmul.bf16.gmra.mxu0 %v5326
        %v5448 = vpop.f32.mrf.mxu0
        %v5449 = vadd.f32 0.0, %v5448
        %v5450 = vpop.f32.mrf.mxu0
        %v5451 = vadd.f32 0.0, %v5450
        %5452 = vmatmul.bf16.gmra.mxu0 %v5328
        %v5453 = vpop.f32.mrf.mxu0
        %v5454 = vadd.f32 0.0, %v5453
        %v5455 = vpop.f32.mrf.mxu0
        %v5456 = vadd.f32 0.0, %v5455
        %5457 = vmatmul.bf16.gmra.mxu0 %v5330
        %v5458 = vpop.f32.mrf.mxu0
        %v5459 = vadd.f32 0.0, %v5458
        %v5460 = vpop.f32.mrf.mxu0
        %v5461 = vadd.f32 0.0, %v5460
        %5462 = vmatmul.bf16.gmra.mxu0 %v5332
        %v5463 = vpop.f32.mrf.mxu0
        %v5464 = vadd.f32 0.0, %v5463
        %v5465 = vpop.f32.mrf.mxu0
        %v5466 = vadd.f32 0.0, %v5465
        %5467 = vmatmul.bf16.gmra.mxu0 %v5334
        %v5468 = vpop.f32.mrf.mxu0
        %v5469 = vadd.f32 0.0, %v5468
        %v5470 = vpop.f32.mrf.mxu0
        %v5471 = vadd.f32 0.0, %v5470
        %5472 = vmatmul.bf16.gmra.mxu0 %v5336
        %v5473 = vpop.f32.mrf.mxu0
        %v5474 = vadd.f32 0.0, %v5473
        %v5475 = vpop.f32.mrf.mxu0
        %v5476 = vadd.f32 0.0, %v5475
        %5477 = vmatmul.bf16.gmra.mxu0 %v5338
        %v5478 = vpop.f32.mrf.mxu0
        %v5479 = vadd.f32 0.0, %v5478
        %v5480 = vpop.f32.mrf.mxu0
        %v5481 = vadd.f32 0.0, %v5480
        %5482 = vmatmul.bf16.gmra.mxu0 %v5340
        %v5483 = vpop.f32.mrf.mxu0
        %v5484 = vadd.f32 0.0, %v5483
        %v5485 = vpop.f32.mrf.mxu0
        %v5486 = vadd.f32 0.0, %v5485
        %5487 = vmatmul.bf16.gmra.mxu0 %v5342
        %v5488 = vpop.f32.mrf.mxu0
        %v5489 = vadd.f32 0.0, %v5488
        %v5490 = vpop.f32.mrf.mxu0
        %v5491 = vadd.f32 0.0, %v5490
        %5492 = vmatmul.bf16.gmra.mxu0 %v5344
        %v5493 = vpop.f32.mrf.mxu0
        %v5494 = vadd.f32 0.0, %v5493
        %v5495 = vpop.f32.mrf.mxu0
        %v5496 = vadd.f32 0.0, %v5495
        %5497 = vmatmul.bf16.gmra.mxu0 %v5346
        %v5498 = vpop.f32.mrf.mxu0
        %v5499 = vadd.f32 0.0, %v5498
        %v5500 = vpop.f32.mrf.mxu0
        %v5501 = vadd.f32 0.0, %v5500
        %5502 = vmatmul.bf16.gmra.mxu0 %v5348
        %v5503 = vpop.f32.mrf.mxu0
        %v5504 = vadd.f32 0.0, %v5503
        %v5505 = vpop.f32.mrf.mxu0
        %v5506 = vadd.f32 0.0, %v5505
        %5507 = vmatmul.bf16.gmra.mxu0 %v5350
        %v5508 = vpop.f32.mrf.mxu0
        %v5509 = vadd.f32 0.0, %v5508
        %v5510 = vpop.f32.mrf.mxu0
        %v5511 = vadd.f32 0.0, %v5510
        %5512 = vmatmul.bf16.gmra.mxu0 %v5352
        %v5513 = vpop.f32.mrf.mxu0
        %v5514 = vadd.f32 0.0, %v5513
        %v5515 = vpop.f32.mrf.mxu0
        %v5516 = vadd.f32 0.0, %v5515
        %5517 = vmatmul.bf16.gmra.mxu0 %v5354
        %v5518 = vpop.f32.mrf.mxu0
        %v5519 = vadd.f32 0.0, %v5518
        %v5520 = vpop.f32.mrf.mxu0
        %v5521 = vadd.f32 0.0, %v5520
        %5522 = vmatmul.bf16.gmra.mxu0 %v5356
        %v5523 = vpop.f32.mrf.mxu0
        %v5524 = vadd.f32 0.0, %v5523
        %v5525 = vpop.f32.mrf.mxu0
        %v5526 = vadd.f32 0.0, %v5525
        %5527 = vmatmul.bf16.gmra.mxu0 %v5358
        %v5528 = vpop.f32.mrf.mxu0
        %v5529 = vadd.f32 0.0, %v5528
        %v5530 = vpop.f32.mrf.mxu0
        %v5531 = vadd.f32 0.0, %v5530
        %5532 = vmatmul.bf16.gmra.mxu0 %v5360
        %v5533 = vpop.f32.mrf.mxu0
        %v5534 = vadd.f32 0.0, %v5533
        %v5535 = vpop.f32.mrf.mxu0
        %v5536 = vadd.f32 0.0, %v5535
        %5537 = vdwg.mxu0
        %v5538 = vadd.f32 %v5200, %v5439
        %v5539 = vadd.f32 %v5202, %v5441
        %v5540 = vadd.f32 %v5205, %v5444
        %v5541 = vadd.f32 %v5207, %v5446
        %v5542 = vadd.f32 %v5210, %v5449
        %v5543 = vadd.f32 %v5212, %v5451
        %v5544 = vadd.f32 %v5215, %v5454
        %v5545 = vadd.f32 %v5217, %v5456
        %v5546 = vadd.f32 %v5220, %v5459
        %v5547 = vadd.f32 %v5222, %v5461
        %v5548 = vadd.f32 %v5225, %v5464
        %v5549 = vadd.f32 %v5227, %v5466
        %v5550 = vadd.f32 %v5230, %v5469
        %v5551 = vadd.f32 %v5232, %v5471
        %v5552 = vadd.f32 %v5235, %v5474
        %v5553 = vadd.f32 %v5237, %v5476
        %v5554 = vadd.f32 %v5240, %v5479
        %v5555 = vadd.f32 %v5242, %v5481
        %v5556 = vadd.f32 %v5245, %v5484
        %v5557 = vadd.f32 %v5247, %v5486
        %v5558 = vadd.f32 %v5250, %v5489
        %v5559 = vadd.f32 %v5252, %v5491
        %v5560 = vadd.f32 %v5255, %v5494
        %v5561 = vadd.f32 %v5257, %v5496
        %v5562 = vadd.f32 %v5260, %v5499
        %v5563 = vadd.f32 %v5262, %v5501
        %v5564 = vadd.f32 %v5265, %v5504
        %v5565 = vadd.f32 %v5267, %v5506
        %v5566 = vadd.f32 %v5270, %v5509
        %v5567 = vadd.f32 %v5272, %v5511
        %v5568 = vadd.f32 %v5275, %v5514
        %v5569 = vadd.f32 %v5277, %v5516
        %v5570 = vadd.f32 %v5280, %v5519
        %v5571 = vadd.f32 %v5282, %v5521
        %v5572 = vadd.f32 %v5285, %v5524
        %v5573 = vadd.f32 %v5287, %v5526
        %v5574 = vadd.f32 %v5290, %v5529
        %v5575 = vadd.f32 %v5292, %v5531
        %v5576 = vadd.f32 %v5295, %v5534
        %v5577 = vadd.f32 %v5297, %v5536
        %v5578 = vld [vmem:[#allocation2 + $0x8] sm:$0xc]
        %v5579 = vld [vmem:[#allocation2 + $0xc] sm:$0xf]
        %v5580 = vld [vmem:[#allocation2 + $0x10] sm:$0xf]
        %v5581 = vld [vmem:[#allocation2 + $0x14] sm:$0xf]
        %v5582 = vld [vmem:[#allocation2 + $0x18] sm:$0xf]
        %v5583 = vld [vmem:[#allocation2 + $0x1c] sm:$0xf]
        %v5584 = vld [vmem:[#allocation2 + $0x20] sm:$0xf]
        %v5585 = vld [vmem:[#allocation2 + $0x24] sm:$0xf]
        %v5586 = vld [vmem:[#allocation2 + $0x28] sm:$0xf]
        %v5587 = vld [vmem:[#allocation2 + $0x2c] sm:$0xf]
        %v5588 = vld [vmem:[#allocation2 + $0x30] sm:$0xf]
        %v5589 = vld [vmem:[#allocation2 + $0x34] sm:$0xf]
        %v5590 = vld [vmem:[#allocation2 + $0x38] sm:$0xf]
        %v5591 = vld [vmem:[#allocation2 + $0x3c] sm:$0xf]
        %v5592 = vld [vmem:[#allocation2 + $0x40] sm:$0xf]
        %v5593 = vld [vmem:[#allocation2 + $0x44] sm:$0xf]
        %v5594 = vld [vmem:[#allocation2 + $0x48] sm:$0xf]
        %v5595 = vld [vmem:[#allocation2 + $0x4c] sm:$0xf]
        %v5596 = vld [vmem:[#allocation2 + $0x50] sm:$0xf]
        %v5597 = vld [vmem:[#allocation2 + $0x54] sm:$0xf]
        %v5598 = vld [vmem:[#allocation2 + $0x58] sm:$0xf]
        %v5599 = vld [vmem:[#allocation2 + $0x5c] sm:$0xf]
        %v5600 = vld [vmem:[#allocation2 + $0x60] sm:$0xf]
        %v5601 = vld [vmem:[#allocation2 + $0x64] sm:$0xf]
        %v5602 = vld [vmem:[#allocation2 + $0x68] sm:$0xf]
        %v5603 = vld [vmem:[#allocation2 + $0x6c] sm:$0xf]
        %v5604 = vld [vmem:[#allocation2 + $0x70] sm:$0xf]
        %v5605 = vld [vmem:[#allocation2 + $0x74] sm:$0xf]
        %v5606 = vld [vmem:[#allocation2 + $0x78] sm:$0xf]
        %v5607 = vld [vmem:[#allocation2 + $0x7c] sm:$0xf]
        %v5608 = vld [vmem:[#allocation2 + $0x80] sm:$0xf]
        %v5609 = vld [vmem:[#allocation2 + $0x84] sm:$0xf]
        %v5610 = vld [vmem:[#allocation2 + $0x88] sm:$0xf]
        %v5611 = vld [vmem:[#allocation2 + $0x8c] sm:$0xf]
        %v5612 = vld [vmem:[#allocation2 + $0x90] sm:$0xf]
        %v5613 = vld [vmem:[#allocation2 + $0x94] sm:$0xf]
        %v5614 = vld [vmem:[#allocation2 + $0x98] sm:$0xf]
        %v5615 = vld [vmem:[#allocation2 + $0x9c] sm:$0xf]
        %v5616 = vld [vmem:[#allocation2 + $0xa0] sm:$0xf]
        %v5617 = vld [vmem:[#allocation2 + $0xa4] sm:$0xf]
        %v5618 = vld [vmem:[#allocation2 + $0xa8] sm:$0x3]
        %s5619 = scalar_lea.vmem [#allocation8], 192
        %v5620 = vld [vmem:[%s5619] sm:$0xf]
        %v5621 = vld [vmem:[%s5619 + $0x4] sm:$0xf]
        %v5622 = vld [vmem:[%s5619 + $0x8] sm:$0xf]
        %v5623 = vld [vmem:[%s5619 + $0xc] sm:$0xf]
        %v5624 = vld [vmem:[%s5619 + $0x10] sm:$0xf]
        %v5625 = vld [vmem:[%s5619 + $0x14] sm:$0xf]
        %v5626 = vld [vmem:[%s5619 + $0x18] sm:$0xf]
        %v5627 = vld [vmem:[%s5619 + $0x1c] sm:$0xf]
        %v5628 = vld [vmem:[%s5619 + $0x20] sm:$0xf]
        %v5629 = vld [vmem:[%s5619 + $0x24] sm:$0xf]
        %v5630 = vld [vmem:[%s5619 + $0x28] sm:$0xf]
        %v5631 = vld [vmem:[%s5619 + $0x2c] sm:$0xf]
        %v5632 = vld [vmem:[%s5619 + $0x30] sm:$0xf]
        %v5633 = vld [vmem:[%s5619 + $0x34] sm:$0xf]
        %v5634 = vld [vmem:[%s5619 + $0x38] sm:$0xf]
        %v5635 = vld [vmem:[%s5619 + $0x3c] sm:$0xf]
        %v5677 = vunpack.c.l.b16 %v5578
        %v5678 = vunpack.c.l.b16 %v5579
        %v5679 = vunpack.c.l.b16 %v5580
        %v5680 = vunpack.c.l.b16 %v5581
        %v5681 = vunpack.c.l.b16 %v5582
        %v5682 = vunpack.c.l.b16 %v5583
        %v5683 = vunpack.c.l.b16 %v5584
        %v5684 = vunpack.c.l.b16 %v5585
        %v5685 = vunpack.c.l.b16 %v5586
        %v5686 = vunpack.c.l.b16 %v5587
        %v5687 = vunpack.c.l.b16 %v5588
        %v5688 = vunpack.c.l.b16 %v5589
        %v5689 = vunpack.c.l.b16 %v5590
        %v5690 = vunpack.c.l.b16 %v5591
        %v5691 = vunpack.c.l.b16 %v5592
        %v5692 = vunpack.c.l.b16 %v5593
        %v5693 = vunpack.c.l.b16 %v5594
        %v5694 = vunpack.c.l.b16 %v5595
        %v5695 = vunpack.c.l.b16 %v5596
        %v5696 = vunpack.c.l.b16 %v5597
        %v5697 = vunpack.c.l.b16 %v5598
        %v5698 = vunpack.c.l.b16 %v5599
        %v5699 = vunpack.c.l.b16 %v5600
        %v5700 = vunpack.c.l.b16 %v5601
        %v5701 = vunpack.c.l.b16 %v5602
        %v5702 = vunpack.c.l.b16 %v5603
        %v5703 = vunpack.c.l.b16 %v5604
        %v5704 = vunpack.c.l.b16 %v5605
        %v5705 = vunpack.c.l.b16 %v5606
        %v5706 = vunpack.c.l.b16 %v5607
        %v5707 = vunpack.c.l.b16 %v5608
        %v5708 = vunpack.c.l.b16 %v5609
        %v5709 = vunpack.c.l.b16 %v5610
        %v5710 = vunpack.c.l.b16 %v5611
        %v5711 = vunpack.c.l.b16 %v5612
        %v5712 = vunpack.c.l.b16 %v5613
        %v5713 = vunpack.c.l.b16 %v5614
        %v5714 = vunpack.c.l.b16 %v5615
        %v5715 = vunpack.c.l.b16 %v5616
        %v5716 = vunpack.c.l.b16 %v5617
        %v5717 = vunpack.c.l.b16 %v5618
        %v5718 = vpack.c.b16 %v5678, %v5677
        %v5719 = vpack.c.b16 %v5680, %v5679
        %v5720 = vpack.c.b16 %v5682, %v5681
        %v5721 = vpack.c.b16 %v5684, %v5683
        %v5722 = vpack.c.b16 %v5686, %v5685
        %v5723 = vpack.c.b16 %v5688, %v5687
        %v5724 = vpack.c.b16 %v5690, %v5689
        %v5725 = vpack.c.b16 %v5692, %v5691
        %v5726 = vpack.c.b16 %v5694, %v5693
        %v5727 = vpack.c.b16 %v5696, %v5695
        %v5728 = vpack.c.b16 %v5698, %v5697
        %v5729 = vpack.c.b16 %v5700, %v5699
        %v5730 = vpack.c.b16 %v5702, %v5701
        %v5731 = vpack.c.b16 %v5704, %v5703
        %v5732 = vpack.c.b16 %v5706, %v5705
        %v5733 = vpack.c.b16 %v5708, %v5707
        %v5734 = vpack.c.b16 %v5710, %v5709
        %v5735 = vpack.c.b16 %v5712, %v5711
        %v5736 = vpack.c.b16 %v5714, %v5713
        %v5737 = vpack.c.b16 %v5716, %v5715
        %v5738 = vpack.c.b16 %v5717, %v5717
        %v5739 = vrot.slane %v5718, 2
        %v5740 = vrot.slane %v5719, 2
        %v5741 = vsel %vm1628, %v5739, %v5740
        %v5742 = vrot.slane %v5720, 2
        %v5743 = vsel %vm1628, %v5740, %v5742
        %v5744 = vrot.slane %v5721, 2
        %v5745 = vsel %vm1628, %v5742, %v5744
        %v5746 = vrot.slane %v5722, 2
        %v5747 = vsel %vm1628, %v5744, %v5746
        %v5748 = vrot.slane %v5723, 2
        %v5749 = vsel %vm1628, %v5746, %v5748
        %v5750 = vrot.slane %v5724, 2
        %v5751 = vsel %vm1628, %v5748, %v5750
        %v5752 = vrot.slane %v5725, 2
        %v5753 = vsel %vm1628, %v5750, %v5752
        %v5754 = vrot.slane %v5726, 2
        %v5755 = vsel %vm1628, %v5752, %v5754
        %v5756 = vrot.slane %v5727, 2
        %v5757 = vsel %vm1628, %v5754, %v5756
        %v5758 = vrot.slane %v5728, 2
        %v5759 = vsel %vm1628, %v5756, %v5758
        %v5760 = vrot.slane %v5729, 2
        %v5761 = vsel %vm1628, %v5758, %v5760
        %v5762 = vrot.slane %v5730, 2
        %v5763 = vsel %vm1628, %v5760, %v5762
        %v5764 = vrot.slane %v5731, 2
        %v5765 = vsel %vm1628, %v5762, %v5764
        %v5766 = vrot.slane %v5732, 2
        %v5767 = vsel %vm1628, %v5764, %v5766
        %v5768 = vrot.slane %v5733, 2
        %v5769 = vsel %vm1628, %v5766, %v5768
        %v5770 = vrot.slane %v5734, 2
        %v5771 = vsel %vm1628, %v5768, %v5770
        %v5772 = vrot.slane %v5735, 2
        %v5773 = vsel %vm1628, %v5770, %v5772
        %v5774 = vrot.slane %v5736, 2
        %v5775 = vsel %vm1628, %v5772, %v5774
        %v5776 = vrot.slane %v5737, 2
        %v5777 = vsel %vm1628, %v5774, %v5776
        %v5778 = vrot.slane %v5738, 2
        %v5779 = vsel %vm1628, %v5776, %v5778
        %v5816 = vunpack.c.l.b16 %v5620
        %v5817 = vunpack.c.l.b16 %v5621
        %v5818 = vunpack.c.l.b16 %v5622
        %v5819 = vunpack.c.l.b16 %v5623
        %v5820 = vunpack.c.l.b16 %v5624
        %v5821 = vunpack.c.l.b16 %v5625
        %v5822 = vunpack.c.l.b16 %v5626
        %v5823 = vunpack.c.l.b16 %v5627
        %v5824 = vunpack.c.l.b16 %v5628
        %v5825 = vunpack.c.l.b16 %v5629
        %v5826 = vunpack.c.l.b16 %v5630
        %v5827 = vunpack.c.l.b16 %v5631
        %v5828 = vunpack.c.l.b16 %v5632
        %v5829 = vunpack.c.l.b16 %v5633
        %v5830 = vunpack.c.l.b16 %v5634
        %v5831 = vunpack.c.l.b16 %v5635
        %v5832 = vpack.c.b16 %v5817, %v5816
        %v5833 = vpack.c.b16 %v5819, %v5818
        %v5834 = vpack.c.b16 %v5821, %v5820
        %v5835 = vpack.c.b16 %v5823, %v5822
        %v5836 = vpack.c.b16 %v5825, %v5824
        %v5837 = vpack.c.b16 %v5827, %v5826
        %v5838 = vpack.c.b16 %v5829, %v5828
        %v5839 = vpack.c.b16 %v5831, %v5830
        %5848 = vmatpush.bf16.msra.mxu0 %v5839
        %5849 = vmatpush.bf16.msra.mxu0 %v5838
        %5850 = vmatpush.bf16.msra.mxu0 %v5837
        %5851 = vmatpush.bf16.msra.mxu0 %v5836
        %5852 = vmatpush.bf16.msra.mxu0 %v5835
        %5853 = vmatpush.bf16.msra.mxu0 %v5834
        %5854 = vmatpush.bf16.msra.mxu0 %v5833
        %5855 = vmatpush.bf16.msra.mxu0 %v5832
        %5856 = vmatmul.bf16.gmra.mxu0 %v5741
        %v5857 = vpop.f32.mrf.mxu0
        %v5858 = vadd.f32 0.0, %v5857
        %v5859 = vpop.f32.mrf.mxu0
        %v5860 = vadd.f32 0.0, %v5859
        %5861 = vmatmul.bf16.gmra.mxu0 %v5743
        %v5862 = vpop.f32.mrf.mxu0
        %v5863 = vadd.f32 0.0, %v5862
        %v5864 = vpop.f32.mrf.mxu0
        %v5865 = vadd.f32 0.0, %v5864
        %5866 = vmatmul.bf16.gmra.mxu0 %v5745
        %v5867 = vpop.f32.mrf.mxu0
        %v5868 = vadd.f32 0.0, %v5867
        %v5869 = vpop.f32.mrf.mxu0
        %v5870 = vadd.f32 0.0, %v5869
        %5871 = vmatmul.bf16.gmra.mxu0 %v5747
        %v5872 = vpop.f32.mrf.mxu0
        %v5873 = vadd.f32 0.0, %v5872
        %v5874 = vpop.f32.mrf.mxu0
        %v5875 = vadd.f32 0.0, %v5874
        %5876 = vmatmul.bf16.gmra.mxu0 %v5749
        %v5877 = vpop.f32.mrf.mxu0
        %v5878 = vadd.f32 0.0, %v5877
        %v5879 = vpop.f32.mrf.mxu0
        %v5880 = vadd.f32 0.0, %v5879
        %5881 = vmatmul.bf16.gmra.mxu0 %v5751
        %v5882 = vpop.f32.mrf.mxu0
        %v5883 = vadd.f32 0.0, %v5882
        %v5884 = vpop.f32.mrf.mxu0
        %v5885 = vadd.f32 0.0, %v5884
        %5886 = vmatmul.bf16.gmra.mxu0 %v5753
        %v5887 = vpop.f32.mrf.mxu0
        %v5888 = vadd.f32 0.0, %v5887
        %v5889 = vpop.f32.mrf.mxu0
        %v5890 = vadd.f32 0.0, %v5889
        %5891 = vmatmul.bf16.gmra.mxu0 %v5755
        %v5892 = vpop.f32.mrf.mxu0
        %v5893 = vadd.f32 0.0, %v5892
        %v5894 = vpop.f32.mrf.mxu0
        %v5895 = vadd.f32 0.0, %v5894
        %5896 = vmatmul.bf16.gmra.mxu0 %v5757
        %v5897 = vpop.f32.mrf.mxu0
        %v5898 = vadd.f32 0.0, %v5897
        %v5899 = vpop.f32.mrf.mxu0
        %v5900 = vadd.f32 0.0, %v5899
        %5901 = vmatmul.bf16.gmra.mxu0 %v5759
        %v5902 = vpop.f32.mrf.mxu0
        %v5903 = vadd.f32 0.0, %v5902
        %v5904 = vpop.f32.mrf.mxu0
        %v5905 = vadd.f32 0.0, %v5904
        %5906 = vmatmul.bf16.gmra.mxu0 %v5761
        %v5907 = vpop.f32.mrf.mxu0
        %v5908 = vadd.f32 0.0, %v5907
        %v5909 = vpop.f32.mrf.mxu0
        %v5910 = vadd.f32 0.0, %v5909
        %5911 = vmatmul.bf16.gmra.mxu0 %v5763
        %v5912 = vpop.f32.mrf.mxu0
        %v5913 = vadd.f32 0.0, %v5912
        %v5914 = vpop.f32.mrf.mxu0
        %v5915 = vadd.f32 0.0, %v5914
        %5916 = vmatmul.bf16.gmra.mxu0 %v5765
        %v5917 = vpop.f32.mrf.mxu0
        %v5918 = vadd.f32 0.0, %v5917
        %v5919 = vpop.f32.mrf.mxu0
        %v5920 = vadd.f32 0.0, %v5919
        %5921 = vmatmul.bf16.gmra.mxu0 %v5767
        %v5922 = vpop.f32.mrf.mxu0
        %v5923 = vadd.f32 0.0, %v5922
        %v5924 = vpop.f32.mrf.mxu0
        %v5925 = vadd.f32 0.0, %v5924
        %5926 = vmatmul.bf16.gmra.mxu0 %v5769
        %v5927 = vpop.f32.mrf.mxu0
        %v5928 = vadd.f32 0.0, %v5927
        %v5929 = vpop.f32.mrf.mxu0
        %v5930 = vadd.f32 0.0, %v5929
        %5931 = vmatmul.bf16.gmra.mxu0 %v5771
        %v5932 = vpop.f32.mrf.mxu0
        %v5933 = vadd.f32 0.0, %v5932
        %v5934 = vpop.f32.mrf.mxu0
        %v5935 = vadd.f32 0.0, %v5934
        %5936 = vmatmul.bf16.gmra.mxu0 %v5773
        %v5937 = vpop.f32.mrf.mxu0
        %v5938 = vadd.f32 0.0, %v5937
        %v5939 = vpop.f32.mrf.mxu0
        %v5940 = vadd.f32 0.0, %v5939
        %5941 = vmatmul.bf16.gmra.mxu0 %v5775
        %v5942 = vpop.f32.mrf.mxu0
        %v5943 = vadd.f32 0.0, %v5942
        %v5944 = vpop.f32.mrf.mxu0
        %v5945 = vadd.f32 0.0, %v5944
        %5946 = vmatmul.bf16.gmra.mxu0 %v5777
        %v5947 = vpop.f32.mrf.mxu0
        %v5948 = vadd.f32 0.0, %v5947
        %v5949 = vpop.f32.mrf.mxu0
        %v5950 = vadd.f32 0.0, %v5949
        %5951 = vmatmul.bf16.gmra.mxu0 %v5779
        %v5952 = vpop.f32.mrf.mxu0
        %v5953 = vadd.f32 0.0, %v5952
        %v5954 = vpop.f32.mrf.mxu0
        %v5955 = vadd.f32 0.0, %v5954
        %5956 = vdwg.mxu0
        %v5957 = vadd.f32 %v5538, %v5858
        %v5958 = vadd.f32 %v5539, %v5860
        %v5959 = vadd.f32 %v5540, %v5863
        %v5960 = vadd.f32 %v5541, %v5865
        %v5961 = vadd.f32 %v5542, %v5868
        %v5962 = vadd.f32 %v5543, %v5870
        %v5963 = vadd.f32 %v5544, %v5873
        %v5964 = vadd.f32 %v5545, %v5875
        %v5965 = vadd.f32 %v5546, %v5878
        %v5966 = vadd.f32 %v5547, %v5880
        %v5967 = vadd.f32 %v5548, %v5883
        %v5968 = vadd.f32 %v5549, %v5885
        %v5969 = vadd.f32 %v5550, %v5888
        %v5970 = vadd.f32 %v5551, %v5890
        %v5971 = vadd.f32 %v5552, %v5893
        %v5972 = vadd.f32 %v5553, %v5895
        %v5973 = vadd.f32 %v5554, %v5898
        %v5974 = vadd.f32 %v5555, %v5900
        %v5975 = vadd.f32 %v5556, %v5903
        %v5976 = vadd.f32 %v5557, %v5905
        %v5977 = vadd.f32 %v5558, %v5908
        %v5978 = vadd.f32 %v5559, %v5910
        %v5979 = vadd.f32 %v5560, %v5913
        %v5980 = vadd.f32 %v5561, %v5915
        %v5981 = vadd.f32 %v5562, %v5918
        %v5982 = vadd.f32 %v5563, %v5920
        %v5983 = vadd.f32 %v5564, %v5923
        %v5984 = vadd.f32 %v5565, %v5925
        %v5985 = vadd.f32 %v5566, %v5928
        %v5986 = vadd.f32 %v5567, %v5930
        %v5987 = vadd.f32 %v5568, %v5933
        %v5988 = vadd.f32 %v5569, %v5935
        %v5989 = vadd.f32 %v5570, %v5938
        %v5990 = vadd.f32 %v5571, %v5940
        %v5991 = vadd.f32 %v5572, %v5943
        %v5992 = vadd.f32 %v5573, %v5945
        %v5993 = vadd.f32 %v5574, %v5948
        %v5994 = vadd.f32 %v5575, %v5950
        %v5995 = vadd.f32 %v5576, %v5953
        %v5996 = vadd.f32 %v5577, %v5955
        %v5997 = vld [vmem:[#allocation2 + $0xa8] sm:$0x7]
        %s5998 = scalar_lea.vmem [#allocation8], 256
        %v5999 = vld [vmem:[%s5998] sm:$0xf]
        %v6000 = vld [vmem:[%s5998 + $0x4] sm:$0xf]
        %v6001 = vld [vmem:[%s5998 + $0x8] sm:$0xf]
        %v6002 = vld [vmem:[%s5998 + $0xc] sm:$0xf]
        %v6003 = vld [vmem:[%s5998 + $0x10] sm:$0xf]
        %v6004 = vld [vmem:[%s5998 + $0x14] sm:$0xf]
        %v6005 = vld [vmem:[%s5998 + $0x18] sm:$0xf]
        %v6006 = vld [vmem:[%s5998 + $0x1c] sm:$0xf]
        %v6007 = vld [vmem:[%s5998 + $0x20] sm:$0xf]
        %v6008 = vld [vmem:[%s5998 + $0x24] sm:$0xf]
        %v6009 = vld [vmem:[%s5998 + $0x28] sm:$0xf]
        %v6010 = vld [vmem:[%s5998 + $0x2c] sm:$0xf]
        %v6011 = vld [vmem:[%s5998 + $0x30] sm:$0xf]
        %v6012 = vld [vmem:[%s5998 + $0x34] sm:$0xf]
        %v6013 = vld [vmem:[%s5998 + $0x38] sm:$0xf]
        %v6014 = vld [vmem:[%s5998 + $0x3c] sm:$0xf]
        %v6016 = vunpack.c.l.b16 %v5997
        %v6017 = vpack.c.b16 %v6016, %v6016
        %v6019 = vshrl.u32 %v5718, 16
        %v6021 = vrot.slane %v6019, 2
        %v6022 = vshll.u32 %v5718, 16
        %v6024 = vrot.slane %v6022, 3
        %v6025 = vor.u32 %v6021, %v6024
        %v6027 = vshrl.u32 %v5719, 16
        %v6029 = vrot.slane %v6027, 2
        %v6030 = vshll.u32 %v5719, 16
        %v6032 = vrot.slane %v6030, 3
        %v6033 = vor.u32 %v6029, %v6032
        %v6034 = vsel %vm1938, %v6025, %v6033
        %v6036 = vshrl.u32 %v5720, 16
        %v6038 = vrot.slane %v6036, 2
        %v6039 = vshll.u32 %v5720, 16
        %v6041 = vrot.slane %v6039, 3
        %v6042 = vor.u32 %v6038, %v6041
        %v6043 = vsel %vm1938, %v6033, %v6042
        %v6045 = vshrl.u32 %v5721, 16
        %v6047 = vrot.slane %v6045, 2
        %v6048 = vshll.u32 %v5721, 16
        %v6050 = vrot.slane %v6048, 3
        %v6051 = vor.u32 %v6047, %v6050
        %v6052 = vsel %vm1938, %v6042, %v6051
        %v6054 = vshrl.u32 %v5722, 16
        %v6056 = vrot.slane %v6054, 2
        %v6057 = vshll.u32 %v5722, 16
        %v6059 = vrot.slane %v6057, 3
        %v6060 = vor.u32 %v6056, %v6059
        %v6061 = vsel %vm1938, %v6051, %v6060
        %v6063 = vshrl.u32 %v5723, 16
        %v6065 = vrot.slane %v6063, 2
        %v6066 = vshll.u32 %v5723, 16
        %v6068 = vrot.slane %v6066, 3
        %v6069 = vor.u32 %v6065, %v6068
        %v6070 = vsel %vm1938, %v6060, %v6069
        %v6072 = vshrl.u32 %v5724, 16
        %v6074 = vrot.slane %v6072, 2
        %v6075 = vshll.u32 %v5724, 16
        %v6077 = vrot.slane %v6075, 3
        %v6078 = vor.u32 %v6074, %v6077
        %v6079 = vsel %vm1938, %v6069, %v6078
        %v6081 = vshrl.u32 %v5725, 16
        %v6083 = vrot.slane %v6081, 2
        %v6084 = vshll.u32 %v5725, 16
        %v6086 = vrot.slane %v6084, 3
        %v6087 = vor.u32 %v6083, %v6086
        %v6088 = vsel %vm1938, %v6078, %v6087
        %v6090 = vshrl.u32 %v5726, 16
        %v6092 = vrot.slane %v6090, 2
        %v6093 = vshll.u32 %v5726, 16
        %v6095 = vrot.slane %v6093, 3
        %v6096 = vor.u32 %v6092, %v6095
        %v6097 = vsel %vm1938, %v6087, %v6096
        %v6099 = vshrl.u32 %v5727, 16
        %v6101 = vrot.slane %v6099, 2
        %v6102 = vshll.u32 %v5727, 16
        %v6104 = vrot.slane %v6102, 3
        %v6105 = vor.u32 %v6101, %v6104
        %v6106 = vsel %vm1938, %v6096, %v6105
        %v6108 = vshrl.u32 %v5728, 16
        %v6110 = vrot.slane %v6108, 2
        %v6111 = vshll.u32 %v5728, 16
        %v6113 = vrot.slane %v6111, 3
        %v6114 = vor.u32 %v6110, %v6113
        %v6115 = vsel %vm1938, %v6105, %v6114
        %v6117 = vshrl.u32 %v5729, 16
        %v6119 = vrot.slane %v6117, 2
        %v6120 = vshll.u32 %v5729, 16
        %v6122 = vrot.slane %v6120, 3
        %v6123 = vor.u32 %v6119, %v6122
        %v6124 = vsel %vm1938, %v6114, %v6123
        %v6126 = vshrl.u32 %v5730, 16
        %v6128 = vrot.slane %v6126, 2
        %v6129 = vshll.u32 %v5730, 16
        %v6131 = vrot.slane %v6129, 3
        %v6132 = vor.u32 %v6128, %v6131
        %v6133 = vsel %vm1938, %v6123, %v6132
        %v6135 = vshrl.u32 %v5731, 16
        %v6137 = vrot.slane %v6135, 2
        %v6138 = vshll.u32 %v5731, 16
        %v6140 = vrot.slane %v6138, 3
        %v6141 = vor.u32 %v6137, %v6140
        %v6142 = vsel %vm1938, %v6132, %v6141
        %v6144 = vshrl.u32 %v5732, 16
        %v6146 = vrot.slane %v6144, 2
        %v6147 = vshll.u32 %v5732, 16
        %v6149 = vrot.slane %v6147, 3
        %v6150 = vor.u32 %v6146, %v6149
        %v6151 = vsel %vm1938, %v6141, %v6150
        %v6153 = vshrl.u32 %v5733, 16
        %v6155 = vrot.slane %v6153, 2
        %v6156 = vshll.u32 %v5733, 16
        %v6158 = vrot.slane %v6156, 3
        %v6159 = vor.u32 %v6155, %v6158
        %v6160 = vsel %vm1938, %v6150, %v6159
        %v6162 = vshrl.u32 %v5734, 16
        %v6164 = vrot.slane %v6162, 2
        %v6165 = vshll.u32 %v5734, 16
        %v6167 = vrot.slane %v6165, 3
        %v6168 = vor.u32 %v6164, %v6167
        %v6169 = vsel %vm1938, %v6159, %v6168
        %v6171 = vshrl.u32 %v5735, 16
        %v6173 = vrot.slane %v6171, 2
        %v6174 = vshll.u32 %v5735, 16
        %v6176 = vrot.slane %v6174, 3
        %v6177 = vor.u32 %v6173, %v6176
        %v6178 = vsel %vm1938, %v6168, %v6177
        %v6180 = vshrl.u32 %v5736, 16
        %v6182 = vrot.slane %v6180, 2
        %v6183 = vshll.u32 %v5736, 16
        %v6185 = vrot.slane %v6183, 3
        %v6186 = vor.u32 %v6182, %v6185
        %v6187 = vsel %vm1938, %v6177, %v6186
        %v6189 = vshrl.u32 %v5737, 16
        %v6191 = vrot.slane %v6189, 2
        %v6192 = vshll.u32 %v5737, 16
        %v6194 = vrot.slane %v6192, 3
        %v6195 = vor.u32 %v6191, %v6194
        %v6196 = vsel %vm1938, %v6186, %v6195
        %v6198 = vshrl.u32 %v6017, 16
        %v6200 = vrot.slane %v6198, 2
        %v6201 = vshll.u32 %v6017, 16
        %v6203 = vrot.slane %v6201, 3
        %v6204 = vor.u32 %v6200, %v6203
        %v6205 = vsel %vm1938, %v6195, %v6204
        %v6242 = vunpack.c.l.b16 %v5999
        %v6243 = vunpack.c.l.b16 %v6000
        %v6244 = vunpack.c.l.b16 %v6001
        %v6245 = vunpack.c.l.b16 %v6002
        %v6246 = vunpack.c.l.b16 %v6003
        %v6247 = vunpack.c.l.b16 %v6004
        %v6248 = vunpack.c.l.b16 %v6005
        %v6249 = vunpack.c.l.b16 %v6006
        %v6250 = vunpack.c.l.b16 %v6007
        %v6251 = vunpack.c.l.b16 %v6008
        %v6252 = vunpack.c.l.b16 %v6009
        %v6253 = vunpack.c.l.b16 %v6010
        %v6254 = vunpack.c.l.b16 %v6011
        %v6255 = vunpack.c.l.b16 %v6012
        %v6256 = vunpack.c.l.b16 %v6013
        %v6257 = vunpack.c.l.b16 %v6014
        %v6258 = vpack.c.b16 %v6243, %v6242
        %v6259 = vpack.c.b16 %v6245, %v6244
        %v6260 = vpack.c.b16 %v6247, %v6246
        %v6261 = vpack.c.b16 %v6249, %v6248
        %v6262 = vpack.c.b16 %v6251, %v6250
        %v6263 = vpack.c.b16 %v6253, %v6252
        %v6264 = vpack.c.b16 %v6255, %v6254
        %v6265 = vpack.c.b16 %v6257, %v6256
        %6274 = vmatpush.bf16.msra.mxu0 %v6265
        %6275 = vmatpush.bf16.msra.mxu0 %v6264
        %6276 = vmatpush.bf16.msra.mxu0 %v6263
        %6277 = vmatpush.bf16.msra.mxu0 %v6262
        %6278 = vmatpush.bf16.msra.mxu0 %v6261
        %6279 = vmatpush.bf16.msra.mxu0 %v6260
        %6280 = vmatpush.bf16.msra.mxu0 %v6259
        %6281 = vmatpush.bf16.msra.mxu0 %v6258
        %6282 = vmatmul.bf16.gmra.mxu0 %v6034
        %v6283 = vpop.f32.mrf.mxu0
        %v6284 = vadd.f32 0.0, %v6283
        %v6285 = vpop.f32.mrf.mxu0
        %v6286 = vadd.f32 0.0, %v6285
        %6287 = vmatmul.bf16.gmra.mxu0 %v6043
        %v6288 = vpop.f32.mrf.mxu0
        %v6289 = vadd.f32 0.0, %v6288
        %v6290 = vpop.f32.mrf.mxu0
        %v6291 = vadd.f32 0.0, %v6290
        %6292 = vmatmul.bf16.gmra.mxu0 %v6052
        %v6293 = vpop.f32.mrf.mxu0
        %v6294 = vadd.f32 0.0, %v6293
        %v6295 = vpop.f32.mrf.mxu0
        %v6296 = vadd.f32 0.0, %v6295
        %6297 = vmatmul.bf16.gmra.mxu0 %v6061
        %v6298 = vpop.f32.mrf.mxu0
        %v6299 = vadd.f32 0.0, %v6298
        %v6300 = vpop.f32.mrf.mxu0
        %v6301 = vadd.f32 0.0, %v6300
        %6302 = vmatmul.bf16.gmra.mxu0 %v6070
        %v6303 = vpop.f32.mrf.mxu0
        %v6304 = vadd.f32 0.0, %v6303
        %v6305 = vpop.f32.mrf.mxu0
        %v6306 = vadd.f32 0.0, %v6305
        %6307 = vmatmul.bf16.gmra.mxu0 %v6079
        %v6308 = vpop.f32.mrf.mxu0
        %v6309 = vadd.f32 0.0, %v6308
        %v6310 = vpop.f32.mrf.mxu0
        %v6311 = vadd.f32 0.0, %v6310
        %6312 = vmatmul.bf16.gmra.mxu0 %v6088
        %v6313 = vpop.f32.mrf.mxu0
        %v6314 = vadd.f32 0.0, %v6313
        %v6315 = vpop.f32.mrf.mxu0
        %v6316 = vadd.f32 0.0, %v6315
        %6317 = vmatmul.bf16.gmra.mxu0 %v6097
        %v6318 = vpop.f32.mrf.mxu0
        %v6319 = vadd.f32 0.0, %v6318
        %v6320 = vpop.f32.mrf.mxu0
        %v6321 = vadd.f32 0.0, %v6320
        %6322 = vmatmul.bf16.gmra.mxu0 %v6106
        %v6323 = vpop.f32.mrf.mxu0
        %v6324 = vadd.f32 0.0, %v6323
        %v6325 = vpop.f32.mrf.mxu0
        %v6326 = vadd.f32 0.0, %v6325
        %6327 = vmatmul.bf16.gmra.mxu0 %v6115
        %v6328 = vpop.f32.mrf.mxu0
        %v6329 = vadd.f32 0.0, %v6328
        %v6330 = vpop.f32.mrf.mxu0
        %v6331 = vadd.f32 0.0, %v6330
        %6332 = vmatmul.bf16.gmra.mxu0 %v6124
        %v6333 = vpop.f32.mrf.mxu0
        %v6334 = vadd.f32 0.0, %v6333
        %v6335 = vpop.f32.mrf.mxu0
        %v6336 = vadd.f32 0.0, %v6335
        %6337 = vmatmul.bf16.gmra.mxu0 %v6133
        %v6338 = vpop.f32.mrf.mxu0
        %v6339 = vadd.f32 0.0, %v6338
        %v6340 = vpop.f32.mrf.mxu0
        %v6341 = vadd.f32 0.0, %v6340
        %6342 = vmatmul.bf16.gmra.mxu0 %v6142
        %v6343 = vpop.f32.mrf.mxu0
        %v6344 = vadd.f32 0.0, %v6343
        %v6345 = vpop.f32.mrf.mxu0
        %v6346 = vadd.f32 0.0, %v6345
        %6347 = vmatmul.bf16.gmra.mxu0 %v6151
        %v6348 = vpop.f32.mrf.mxu0
        %v6349 = vadd.f32 0.0, %v6348
        %v6350 = vpop.f32.mrf.mxu0
        %v6351 = vadd.f32 0.0, %v6350
        %6352 = vmatmul.bf16.gmra.mxu0 %v6160
        %v6353 = vpop.f32.mrf.mxu0
        %v6354 = vadd.f32 0.0, %v6353
        %v6355 = vpop.f32.mrf.mxu0
        %v6356 = vadd.f32 0.0, %v6355
        %6357 = vmatmul.bf16.gmra.mxu0 %v6169
        %v6358 = vpop.f32.mrf.mxu0
        %v6359 = vadd.f32 0.0, %v6358
        %v6360 = vpop.f32.mrf.mxu0
        %v6361 = vadd.f32 0.0, %v6360
        %6362 = vmatmul.bf16.gmra.mxu0 %v6178
        %v6363 = vpop.f32.mrf.mxu0
        %v6364 = vadd.f32 0.0, %v6363
        %v6365 = vpop.f32.mrf.mxu0
        %v6366 = vadd.f32 0.0, %v6365
        %6367 = vmatmul.bf16.gmra.mxu0 %v6187
        %v6368 = vpop.f32.mrf.mxu0
        %v6369 = vadd.f32 0.0, %v6368
        %v6370 = vpop.f32.mrf.mxu0
        %v6371 = vadd.f32 0.0, %v6370
        %6372 = vmatmul.bf16.gmra.mxu0 %v6196
        %v6373 = vpop.f32.mrf.mxu0
        %v6374 = vadd.f32 0.0, %v6373
        %v6375 = vpop.f32.mrf.mxu0
        %v6376 = vadd.f32 0.0, %v6375
        %6377 = vmatmul.bf16.gmra.mxu0 %v6205
        %v6378 = vpop.f32.mrf.mxu0
        %v6379 = vadd.f32 0.0, %v6378
        %v6380 = vpop.f32.mrf.mxu0
        %v6381 = vadd.f32 0.0, %v6380
        %6382 = vdwg.mxu0
        %v6383 = vadd.f32 %v5957, %v6284
        %v6384 = vadd.f32 %v5958, %v6286
        %v6385 = vadd.f32 %v5959, %v6289
        %v6386 = vadd.f32 %v5960, %v6291
        %v6387 = vadd.f32 %v5961, %v6294
        %v6388 = vadd.f32 %v5962, %v6296
        %v6389 = vadd.f32 %v5963, %v6299
        %v6390 = vadd.f32 %v5964, %v6301
        %v6391 = vadd.f32 %v5965, %v6304
        %v6392 = vadd.f32 %v5966, %v6306
        %v6393 = vadd.f32 %v5967, %v6309
        %v6394 = vadd.f32 %v5968, %v6311
        %v6395 = vadd.f32 %v5969, %v6314
        %v6396 = vadd.f32 %v5970, %v6316
        %v6397 = vadd.f32 %v5971, %v6319
        %v6398 = vadd.f32 %v5972, %v6321
        %v6399 = vadd.f32 %v5973, %v6324
        %v6400 = vadd.f32 %v5974, %v6326
        %v6401 = vadd.f32 %v5975, %v6329
        %v6402 = vadd.f32 %v5976, %v6331
        %v6403 = vadd.f32 %v5977, %v6334
        %v6404 = vadd.f32 %v5978, %v6336
        %v6405 = vadd.f32 %v5979, %v6339
        %v6406 = vadd.f32 %v5980, %v6341
        %v6407 = vadd.f32 %v5981, %v6344
        %v6408 = vadd.f32 %v5982, %v6346
        %v6409 = vadd.f32 %v5983, %v6349
        %v6410 = vadd.f32 %v5984, %v6351
        %v6411 = vadd.f32 %v5985, %v6354
        %v6412 = vadd.f32 %v5986, %v6356
        %v6413 = vadd.f32 %v5987, %v6359
        %v6414 = vadd.f32 %v5988, %v6361
        %v6415 = vadd.f32 %v5989, %v6364
        %v6416 = vadd.f32 %v5990, %v6366
        %v6417 = vadd.f32 %v5991, %v6369
        %v6418 = vadd.f32 %v5992, %v6371
        %v6419 = vadd.f32 %v5993, %v6374
        %v6420 = vadd.f32 %v5994, %v6376
        %v6421 = vadd.f32 %v5995, %v6379
        %v6422 = vadd.f32 %v5996, %v6381
        %v6423 = vld [vmem:[#allocation2 + $0x8] sm:$0x8]
        %s6424 = scalar_lea.vmem [#allocation8], 320
        %v6425 = vld [vmem:[%s6424] sm:$0xf]
        %v6426 = vld [vmem:[%s6424 + $0x4] sm:$0xf]
        %v6427 = vld [vmem:[%s6424 + $0x8] sm:$0xf]
        %v6428 = vld [vmem:[%s6424 + $0xc] sm:$0xf]
        %v6429 = vld [vmem:[%s6424 + $0x10] sm:$0xf]
        %v6430 = vld [vmem:[%s6424 + $0x14] sm:$0xf]
        %v6431 = vld [vmem:[%s6424 + $0x18] sm:$0xf]
        %v6432 = vld [vmem:[%s6424 + $0x1c] sm:$0xf]
        %v6433 = vld [vmem:[%s6424 + $0x20] sm:$0xf]
        %v6434 = vld [vmem:[%s6424 + $0x24] sm:$0xf]
        %v6435 = vld [vmem:[%s6424 + $0x28] sm:$0xf]
        %v6436 = vld [vmem:[%s6424 + $0x2c] sm:$0xf]
        %v6437 = vld [vmem:[%s6424 + $0x30] sm:$0xf]
        %v6438 = vld [vmem:[%s6424 + $0x34] sm:$0xf]
        %v6439 = vld [vmem:[%s6424 + $0x38] sm:$0xf]
        %v6440 = vld [vmem:[%s6424 + $0x3c] sm:$0xf]
        %v6442 = vunpack.c.l.b16 %v6423
        %v6443 = vpack.c.b16 %v5678, %v6442
        %v6444 = vrot.slane %v6443, 3
        %v6445 = vrot.slane %v5719, 3
        %v6446 = vsel %vm2416, %v6444, %v6445
        %v6447 = vrot.slane %v5720, 3
        %v6448 = vsel %vm2416, %v6445, %v6447
        %v6449 = vrot.slane %v5721, 3
        %v6450 = vsel %vm2416, %v6447, %v6449
        %v6451 = vrot.slane %v5722, 3
        %v6452 = vsel %vm2416, %v6449, %v6451
        %v6453 = vrot.slane %v5723, 3
        %v6454 = vsel %vm2416, %v6451, %v6453
        %v6455 = vrot.slane %v5724, 3
        %v6456 = vsel %vm2416, %v6453, %v6455
        %v6457 = vrot.slane %v5725, 3
        %v6458 = vsel %vm2416, %v6455, %v6457
        %v6459 = vrot.slane %v5726, 3
        %v6460 = vsel %vm2416, %v6457, %v6459
        %v6461 = vrot.slane %v5727, 3
        %v6462 = vsel %vm2416, %v6459, %v6461
        %v6463 = vrot.slane %v5728, 3
        %v6464 = vsel %vm2416, %v6461, %v6463
        %v6465 = vrot.slane %v5729, 3
        %v6466 = vsel %vm2416, %v6463, %v6465
        %v6467 = vrot.slane %v5730, 3
        %v6468 = vsel %vm2416, %v6465, %v6467
        %v6469 = vrot.slane %v5731, 3
        %v6470 = vsel %vm2416, %v6467, %v6469
        %v6471 = vrot.slane %v5732, 3
        %v6472 = vsel %vm2416, %v6469, %v6471
        %v6473 = vrot.slane %v5733, 3
        %v6474 = vsel %vm2416, %v6471, %v6473
        %v6475 = vrot.slane %v5734, 3
        %v6476 = vsel %vm2416, %v6473, %v6475
        %v6477 = vrot.slane %v5735, 3
        %v6478 = vsel %vm2416, %v6475, %v6477
        %v6479 = vrot.slane %v5736, 3
        %v6480 = vsel %vm2416, %v6477, %v6479
        %v6481 = vrot.slane %v5737, 3
        %v6482 = vsel %vm2416, %v6479, %v6481
        %v6483 = vrot.slane %v6017, 3
        %v6484 = vsel %vm2416, %v6481, %v6483
        %v6521 = vunpack.c.l.b16 %v6425
        %v6522 = vunpack.c.l.b16 %v6426
        %v6523 = vunpack.c.l.b16 %v6427
        %v6524 = vunpack.c.l.b16 %v6428
        %v6525 = vunpack.c.l.b16 %v6429
        %v6526 = vunpack.c.l.b16 %v6430
        %v6527 = vunpack.c.l.b16 %v6431
        %v6528 = vunpack.c.l.b16 %v6432
        %v6529 = vunpack.c.l.b16 %v6433
        %v6530 = vunpack.c.l.b16 %v6434
        %v6531 = vunpack.c.l.b16 %v6435
        %v6532 = vunpack.c.l.b16 %v6436
        %v6533 = vunpack.c.l.b16 %v6437
        %v6534 = vunpack.c.l.b16 %v6438
        %v6535 = vunpack.c.l.b16 %v6439
        %v6536 = vunpack.c.l.b16 %v6440
        %v6537 = vpack.c.b16 %v6522, %v6521
        %v6538 = vpack.c.b16 %v6524, %v6523
        %v6539 = vpack.c.b16 %v6526, %v6525
        %v6540 = vpack.c.b16 %v6528, %v6527
        %v6541 = vpack.c.b16 %v6530, %v6529
        %v6542 = vpack.c.b16 %v6532, %v6531
        %v6543 = vpack.c.b16 %v6534, %v6533
        %v6544 = vpack.c.b16 %v6536, %v6535
        %6553 = vmatpush.bf16.msra.mxu0 %v6544
        %6554 = vmatpush.bf16.msra.mxu0 %v6543
        %6555 = vmatpush.bf16.msra.mxu0 %v6542
        %6556 = vmatpush.bf16.msra.mxu0 %v6541
        %6557 = vmatpush.bf16.msra.mxu0 %v6540
        %6558 = vmatpush.bf16.msra.mxu0 %v6539
        %6559 = vmatpush.bf16.msra.mxu0 %v6538
        %6560 = vmatpush.bf16.msra.mxu0 %v6537
        %6561 = vmatmul.bf16.gmra.mxu0 %v6446
        %v6562 = vpop.f32.mrf.mxu0
        %v6563 = vadd.f32 0.0, %v6562
        %v6564 = vpop.f32.mrf.mxu0
        %v6565 = vadd.f32 0.0, %v6564
        %6566 = vmatmul.bf16.gmra.mxu0 %v6448
        %v6567 = vpop.f32.mrf.mxu0
        %v6568 = vadd.f32 0.0, %v6567
        %v6569 = vpop.f32.mrf.mxu0
        %v6570 = vadd.f32 0.0, %v6569
        %6571 = vmatmul.bf16.gmra.mxu0 %v6450
        %v6572 = vpop.f32.mrf.mxu0
        %v6573 = vadd.f32 0.0, %v6572
        %v6574 = vpop.f32.mrf.mxu0
        %v6575 = vadd.f32 0.0, %v6574
        %6576 = vmatmul.bf16.gmra.mxu0 %v6452
        %v6577 = vpop.f32.mrf.mxu0
        %v6578 = vadd.f32 0.0, %v6577
        %v6579 = vpop.f32.mrf.mxu0
        %v6580 = vadd.f32 0.0, %v6579
        %6581 = vmatmul.bf16.gmra.mxu0 %v6454
        %v6582 = vpop.f32.mrf.mxu0
        %v6583 = vadd.f32 0.0, %v6582
        %v6584 = vpop.f32.mrf.mxu0
        %v6585 = vadd.f32 0.0, %v6584
        %6586 = vmatmul.bf16.gmra.mxu0 %v6456
        %v6587 = vpop.f32.mrf.mxu0
        %v6588 = vadd.f32 0.0, %v6587
        %v6589 = vpop.f32.mrf.mxu0
        %v6590 = vadd.f32 0.0, %v6589
        %6591 = vmatmul.bf16.gmra.mxu0 %v6458
        %v6592 = vpop.f32.mrf.mxu0
        %v6593 = vadd.f32 0.0, %v6592
        %v6594 = vpop.f32.mrf.mxu0
        %v6595 = vadd.f32 0.0, %v6594
        %6596 = vmatmul.bf16.gmra.mxu0 %v6460
        %v6597 = vpop.f32.mrf.mxu0
        %v6598 = vadd.f32 0.0, %v6597
        %v6599 = vpop.f32.mrf.mxu0
        %v6600 = vadd.f32 0.0, %v6599
        %6601 = vmatmul.bf16.gmra.mxu0 %v6462
        %v6602 = vpop.f32.mrf.mxu0
        %v6603 = vadd.f32 0.0, %v6602
        %v6604 = vpop.f32.mrf.mxu0
        %v6605 = vadd.f32 0.0, %v6604
        %6606 = vmatmul.bf16.gmra.mxu0 %v6464
        %v6607 = vpop.f32.mrf.mxu0
        %v6608 = vadd.f32 0.0, %v6607
        %v6609 = vpop.f32.mrf.mxu0
        %v6610 = vadd.f32 0.0, %v6609
        %6611 = vmatmul.bf16.gmra.mxu0 %v6466
        %v6612 = vpop.f32.mrf.mxu0
        %v6613 = vadd.f32 0.0, %v6612
        %v6614 = vpop.f32.mrf.mxu0
        %v6615 = vadd.f32 0.0, %v6614
        %6616 = vmatmul.bf16.gmra.mxu0 %v6468
        %v6617 = vpop.f32.mrf.mxu0
        %v6618 = vadd.f32 0.0, %v6617
        %v6619 = vpop.f32.mrf.mxu0
        %v6620 = vadd.f32 0.0, %v6619
        %6621 = vmatmul.bf16.gmra.mxu0 %v6470
        %v6622 = vpop.f32.mrf.mxu0
        %v6623 = vadd.f32 0.0, %v6622
        %v6624 = vpop.f32.mrf.mxu0
        %v6625 = vadd.f32 0.0, %v6624
        %6626 = vmatmul.bf16.gmra.mxu0 %v6472
        %v6627 = vpop.f32.mrf.mxu0
        %v6628 = vadd.f32 0.0, %v6627
        %v6629 = vpop.f32.mrf.mxu0
        %v6630 = vadd.f32 0.0, %v6629
        %6631 = vmatmul.bf16.gmra.mxu0 %v6474
        %v6632 = vpop.f32.mrf.mxu0
        %v6633 = vadd.f32 0.0, %v6632
        %v6634 = vpop.f32.mrf.mxu0
        %v6635 = vadd.f32 0.0, %v6634
        %6636 = vmatmul.bf16.gmra.mxu0 %v6476
        %v6637 = vpop.f32.mrf.mxu0
        %v6638 = vadd.f32 0.0, %v6637
        %v6639 = vpop.f32.mrf.mxu0
        %v6640 = vadd.f32 0.0, %v6639
        %6641 = vmatmul.bf16.gmra.mxu0 %v6478
        %v6642 = vpop.f32.mrf.mxu0
        %v6643 = vadd.f32 0.0, %v6642
        %v6644 = vpop.f32.mrf.mxu0
        %v6645 = vadd.f32 0.0, %v6644
        %6646 = vmatmul.bf16.gmra.mxu0 %v6480
        %v6647 = vpop.f32.mrf.mxu0
        %v6648 = vadd.f32 0.0, %v6647
        %v6649 = vpop.f32.mrf.mxu0
        %v6650 = vadd.f32 0.0, %v6649
        %6651 = vmatmul.bf16.gmra.mxu0 %v6482
        %v6652 = vpop.f32.mrf.mxu0
        %v6653 = vadd.f32 0.0, %v6652
        %v6654 = vpop.f32.mrf.mxu0
        %v6655 = vadd.f32 0.0, %v6654
        %6656 = vmatmul.bf16.gmra.mxu0 %v6484
        %v6657 = vpop.f32.mrf.mxu0
        %v6658 = vadd.f32 0.0, %v6657
        %v6659 = vpop.f32.mrf.mxu0
        %v6660 = vadd.f32 0.0, %v6659
        %6661 = vdwg.mxu0
        %v6662 = vadd.f32 %v6383, %v6563
        %v6663 = vadd.f32 %v6384, %v6565
        %v6664 = vadd.f32 %v6385, %v6568
        %v6665 = vadd.f32 %v6386, %v6570
        %v6666 = vadd.f32 %v6387, %v6573
        %v6667 = vadd.f32 %v6388, %v6575
        %v6668 = vadd.f32 %v6389, %v6578
        %v6669 = vadd.f32 %v6390, %v6580
        %v6670 = vadd.f32 %v6391, %v6583
        %v6671 = vadd.f32 %v6392, %v6585
        %v6672 = vadd.f32 %v6393, %v6588
        %v6673 = vadd.f32 %v6394, %v6590
        %v6674 = vadd.f32 %v6395, %v6593
        %v6675 = vadd.f32 %v6396, %v6595
        %v6676 = vadd.f32 %v6397, %v6598
        %v6677 = vadd.f32 %v6398, %v6600
        %v6678 = vadd.f32 %v6399, %v6603
        %v6679 = vadd.f32 %v6400, %v6605
        %v6680 = vadd.f32 %v6401, %v6608
        %v6681 = vadd.f32 %v6402, %v6610
        %v6682 = vadd.f32 %v6403, %v6613
        %v6683 = vadd.f32 %v6404, %v6615
        %v6684 = vadd.f32 %v6405, %v6618
        %v6685 = vadd.f32 %v6406, %v6620
        %v6686 = vadd.f32 %v6407, %v6623
        %v6687 = vadd.f32 %v6408, %v6625
        %v6688 = vadd.f32 %v6409, %v6628
        %v6689 = vadd.f32 %v6410, %v6630
        %v6690 = vadd.f32 %v6411, %v6633
        %v6691 = vadd.f32 %v6412, %v6635
        %v6692 = vadd.f32 %v6413, %v6638
        %v6693 = vadd.f32 %v6414, %v6640
        %v6694 = vadd.f32 %v6415, %v6643
        %v6695 = vadd.f32 %v6416, %v6645
        %v6696 = vadd.f32 %v6417, %v6648
        %v6697 = vadd.f32 %v6418, %v6650
        %v6698 = vadd.f32 %v6419, %v6653
        %v6699 = vadd.f32 %v6420, %v6655
        %v6700 = vadd.f32 %v6421, %v6658
        %v6701 = vadd.f32 %v6422, %v6660
        %v6702 = vld [vmem:[#allocation2 + $0x14] sm:$0xf]
        %v6703 = vld [vmem:[#allocation2 + $0x18] sm:$0xf]
        %v6704 = vld [vmem:[#allocation2 + $0x1c] sm:$0xf]
        %v6705 = vld [vmem:[#allocation2 + $0x20] sm:$0xf]
        %v6706 = vld [vmem:[#allocation2 + $0x24] sm:$0xf]
        %v6707 = vld [vmem:[#allocation2 + $0x28] sm:$0xf]
        %v6708 = vld [vmem:[#allocation2 + $0x2c] sm:$0xf]
        %v6709 = vld [vmem:[#allocation2 + $0x30] sm:$0xf]
        %v6710 = vld [vmem:[#allocation2 + $0x34] sm:$0xf]
        %v6711 = vld [vmem:[#allocation2 + $0x38] sm:$0xf]
        %v6712 = vld [vmem:[#allocation2 + $0x3c] sm:$0xf]
        %v6713 = vld [vmem:[#allocation2 + $0x40] sm:$0xf]
        %v6714 = vld [vmem:[#allocation2 + $0x44] sm:$0xf]
        %v6715 = vld [vmem:[#allocation2 + $0x48] sm:$0xf]
        %v6716 = vld [vmem:[#allocation2 + $0x4c] sm:$0xf]
        %v6717 = vld [vmem:[#allocation2 + $0x50] sm:$0xf]
        %v6718 = vld [vmem:[#allocation2 + $0x54] sm:$0xf]
        %v6719 = vld [vmem:[#allocation2 + $0x58] sm:$0xf]
        %v6720 = vld [vmem:[#allocation2 + $0x5c] sm:$0xf]
        %v6721 = vld [vmem:[#allocation2 + $0x60] sm:$0xf]
        %v6722 = vld [vmem:[#allocation2 + $0x64] sm:$0xf]
        %v6723 = vld [vmem:[#allocation2 + $0x68] sm:$0xf]
        %v6724 = vld [vmem:[#allocation2 + $0x6c] sm:$0xf]
        %v6725 = vld [vmem:[#allocation2 + $0x70] sm:$0xf]
        %v6726 = vld [vmem:[#allocation2 + $0x74] sm:$0xf]
        %v6727 = vld [vmem:[#allocation2 + $0x78] sm:$0xf]
        %v6728 = vld [vmem:[#allocation2 + $0x7c] sm:$0xf]
        %v6729 = vld [vmem:[#allocation2 + $0x80] sm:$0xf]
        %v6730 = vld [vmem:[#allocation2 + $0x84] sm:$0xf]
        %v6731 = vld [vmem:[#allocation2 + $0x88] sm:$0xf]
        %v6732 = vld [vmem:[#allocation2 + $0x8c] sm:$0xf]
        %v6733 = vld [vmem:[#allocation2 + $0x90] sm:$0xf]
        %v6734 = vld [vmem:[#allocation2 + $0x94] sm:$0xf]
        %v6735 = vld [vmem:[#allocation2 + $0x98] sm:$0xf]
        %v6736 = vld [vmem:[#allocation2 + $0x9c] sm:$0xf]
        %v6737 = vld [vmem:[#allocation2 + $0xa0] sm:$0xf]
        %v6738 = vld [vmem:[#allocation2 + $0xa4] sm:$0xf]
        %v6739 = vld [vmem:[#allocation2 + $0xa8] sm:$0xf]
        %v6740 = vld [vmem:[#allocation2 + $0xac] sm:$0xf]
        %v6741 = vld [vmem:[#allocation2 + $0xb0] sm:$0xf]
        %s6742 = scalar_lea.vmem [#allocation8], 384
        %v6743 = vld [vmem:[%s6742] sm:$0xf]
        %v6744 = vld [vmem:[%s6742 + $0x4] sm:$0xf]
        %v6745 = vld [vmem:[%s6742 + $0x8] sm:$0xf]
        %v6746 = vld [vmem:[%s6742 + $0xc] sm:$0xf]
        %v6747 = vld [vmem:[%s6742 + $0x10] sm:$0xf]
        %v6748 = vld [vmem:[%s6742 + $0x14] sm:$0xf]
        %v6749 = vld [vmem:[%s6742 + $0x18] sm:$0xf]
        %v6750 = vld [vmem:[%s6742 + $0x1c] sm:$0xf]
        %v6751 = vld [vmem:[%s6742 + $0x20] sm:$0xf]
        %v6752 = vld [vmem:[%s6742 + $0x24] sm:$0xf]
        %v6753 = vld [vmem:[%s6742 + $0x28] sm:$0xf]
        %v6754 = vld [vmem:[%s6742 + $0x2c] sm:$0xf]
        %v6755 = vld [vmem:[%s6742 + $0x30] sm:$0xf]
        %v6756 = vld [vmem:[%s6742 + $0x34] sm:$0xf]
        %v6757 = vld [vmem:[%s6742 + $0x38] sm:$0xf]
        %v6758 = vld [vmem:[%s6742 + $0x3c] sm:$0xf]
        %v6799 = vunpack.c.l.b16 %v6702
        %v6800 = vunpack.c.l.b16 %v6703
        %v6801 = vunpack.c.l.b16 %v6704
        %v6802 = vunpack.c.l.b16 %v6705
        %v6803 = vunpack.c.l.b16 %v6706
        %v6804 = vunpack.c.l.b16 %v6707
        %v6805 = vunpack.c.l.b16 %v6708
        %v6806 = vunpack.c.l.b16 %v6709
        %v6807 = vunpack.c.l.b16 %v6710
        %v6808 = vunpack.c.l.b16 %v6711
        %v6809 = vunpack.c.l.b16 %v6712
        %v6810 = vunpack.c.l.b16 %v6713
        %v6811 = vunpack.c.l.b16 %v6714
        %v6812 = vunpack.c.l.b16 %v6715
        %v6813 = vunpack.c.l.b16 %v6716
        %v6814 = vunpack.c.l.b16 %v6717
        %v6815 = vunpack.c.l.b16 %v6718
        %v6816 = vunpack.c.l.b16 %v6719
        %v6817 = vunpack.c.l.b16 %v6720
        %v6818 = vunpack.c.l.b16 %v6721
        %v6819 = vunpack.c.l.b16 %v6722
        %v6820 = vunpack.c.l.b16 %v6723
        %v6821 = vunpack.c.l.b16 %v6724
        %v6822 = vunpack.c.l.b16 %v6725
        %v6823 = vunpack.c.l.b16 %v6726
        %v6824 = vunpack.c.l.b16 %v6727
        %v6825 = vunpack.c.l.b16 %v6728
        %v6826 = vunpack.c.l.b16 %v6729
        %v6827 = vunpack.c.l.b16 %v6730
        %v6828 = vunpack.c.l.b16 %v6731
        %v6829 = vunpack.c.l.b16 %v6732
        %v6830 = vunpack.c.l.b16 %v6733
        %v6831 = vunpack.c.l.b16 %v6734
        %v6832 = vunpack.c.l.b16 %v6735
        %v6833 = vunpack.c.l.b16 %v6736
        %v6834 = vunpack.c.l.b16 %v6737
        %v6835 = vunpack.c.l.b16 %v6738
        %v6836 = vunpack.c.l.b16 %v6739
        %v6837 = vunpack.c.l.b16 %v6740
        %v6838 = vunpack.c.l.b16 %v6741
        %v6839 = vpack.c.b16 %v6800, %v6799
        %v6840 = vpack.c.b16 %v6802, %v6801
        %v6841 = vpack.c.b16 %v6804, %v6803
        %v6842 = vpack.c.b16 %v6806, %v6805
        %v6843 = vpack.c.b16 %v6808, %v6807
        %v6844 = vpack.c.b16 %v6810, %v6809
        %v6845 = vpack.c.b16 %v6812, %v6811
        %v6846 = vpack.c.b16 %v6814, %v6813
        %v6847 = vpack.c.b16 %v6816, %v6815
        %v6848 = vpack.c.b16 %v6818, %v6817
        %v6849 = vpack.c.b16 %v6820, %v6819
        %v6850 = vpack.c.b16 %v6822, %v6821
        %v6851 = vpack.c.b16 %v6824, %v6823
        %v6852 = vpack.c.b16 %v6826, %v6825
        %v6853 = vpack.c.b16 %v6828, %v6827
        %v6854 = vpack.c.b16 %v6830, %v6829
        %v6855 = vpack.c.b16 %v6832, %v6831
        %v6856 = vpack.c.b16 %v6834, %v6833
        %v6857 = vpack.c.b16 %v6836, %v6835
        %v6858 = vpack.c.b16 %v6838, %v6837
        %v6895 = vunpack.c.l.b16 %v6743
        %v6896 = vunpack.c.l.b16 %v6744
        %v6897 = vunpack.c.l.b16 %v6745
        %v6898 = vunpack.c.l.b16 %v6746
        %v6899 = vunpack.c.l.b16 %v6747
        %v6900 = vunpack.c.l.b16 %v6748
        %v6901 = vunpack.c.l.b16 %v6749
        %v6902 = vunpack.c.l.b16 %v6750
        %v6903 = vunpack.c.l.b16 %v6751
        %v6904 = vunpack.c.l.b16 %v6752
        %v6905 = vunpack.c.l.b16 %v6753
        %v6906 = vunpack.c.l.b16 %v6754
        %v6907 = vunpack.c.l.b16 %v6755
        %v6908 = vunpack.c.l.b16 %v6756
        %v6909 = vunpack.c.l.b16 %v6757
        %v6910 = vunpack.c.l.b16 %v6758
        %v6911 = vpack.c.b16 %v6896, %v6895
        %v6912 = vpack.c.b16 %v6898, %v6897
        %v6913 = vpack.c.b16 %v6900, %v6899
        %v6914 = vpack.c.b16 %v6902, %v6901
        %v6915 = vpack.c.b16 %v6904, %v6903
        %v6916 = vpack.c.b16 %v6906, %v6905
        %v6917 = vpack.c.b16 %v6908, %v6907
        %v6918 = vpack.c.b16 %v6910, %v6909
        %6927 = vmatpush.bf16.msra.mxu0 %v6918
        %6928 = vmatpush.bf16.msra.mxu0 %v6917
        %6929 = vmatpush.bf16.msra.mxu0 %v6916
        %6930 = vmatpush.bf16.msra.mxu0 %v6915
        %6931 = vmatpush.bf16.msra.mxu0 %v6914
        %6932 = vmatpush.bf16.msra.mxu0 %v6913
        %6933 = vmatpush.bf16.msra.mxu0 %v6912
        %6934 = vmatpush.bf16.msra.mxu0 %v6911
        %6935 = vmatmul.bf16.gmra.mxu0 %v6839
        %v6936 = vpop.f32.mrf.mxu0
        %v6937 = vadd.f32 0.0, %v6936
        %v6938 = vpop.f32.mrf.mxu0
        %v6939 = vadd.f32 0.0, %v6938
        %6940 = vmatmul.bf16.gmra.mxu0 %v6840
        %v6941 = vpop.f32.mrf.mxu0
        %v6942 = vadd.f32 0.0, %v6941
        %v6943 = vpop.f32.mrf.mxu0
        %v6944 = vadd.f32 0.0, %v6943
        %6945 = vmatmul.bf16.gmra.mxu0 %v6841
        %v6946 = vpop.f32.mrf.mxu0
        %v6947 = vadd.f32 0.0, %v6946
        %v6948 = vpop.f32.mrf.mxu0
        %v6949 = vadd.f32 0.0, %v6948
        %6950 = vmatmul.bf16.gmra.mxu0 %v6842
        %v6951 = vpop.f32.mrf.mxu0
        %v6952 = vadd.f32 0.0, %v6951
        %v6953 = vpop.f32.mrf.mxu0
        %v6954 = vadd.f32 0.0, %v6953
        %6955 = vmatmul.bf16.gmra.mxu0 %v6843
        %v6956 = vpop.f32.mrf.mxu0
        %v6957 = vadd.f32 0.0, %v6956
        %v6958 = vpop.f32.mrf.mxu0
        %v6959 = vadd.f32 0.0, %v6958
        %6960 = vmatmul.bf16.gmra.mxu0 %v6844
        %v6961 = vpop.f32.mrf.mxu0
        %v6962 = vadd.f32 0.0, %v6961
        %v6963 = vpop.f32.mrf.mxu0
        %v6964 = vadd.f32 0.0, %v6963
        %6965 = vmatmul.bf16.gmra.mxu0 %v6845
        %v6966 = vpop.f32.mrf.mxu0
        %v6967 = vadd.f32 0.0, %v6966
        %v6968 = vpop.f32.mrf.mxu0
        %v6969 = vadd.f32 0.0, %v6968
        %6970 = vmatmul.bf16.gmra.mxu0 %v6846
        %v6971 = vpop.f32.mrf.mxu0
        %v6972 = vadd.f32 0.0, %v6971
        %v6973 = vpop.f32.mrf.mxu0
        %v6974 = vadd.f32 0.0, %v6973
        %6975 = vmatmul.bf16.gmra.mxu0 %v6847
        %v6976 = vpop.f32.mrf.mxu0
        %v6977 = vadd.f32 0.0, %v6976
        %v6978 = vpop.f32.mrf.mxu0
        %v6979 = vadd.f32 0.0, %v6978
        %6980 = vmatmul.bf16.gmra.mxu0 %v6848
        %v6981 = vpop.f32.mrf.mxu0
        %v6982 = vadd.f32 0.0, %v6981
        %v6983 = vpop.f32.mrf.mxu0
        %v6984 = vadd.f32 0.0, %v6983
        %6985 = vmatmul.bf16.gmra.mxu0 %v6849
        %v6986 = vpop.f32.mrf.mxu0
        %v6987 = vadd.f32 0.0, %v6986
        %v6988 = vpop.f32.mrf.mxu0
        %v6989 = vadd.f32 0.0, %v6988
        %6990 = vmatmul.bf16.gmra.mxu0 %v6850
        %v6991 = vpop.f32.mrf.mxu0
        %v6992 = vadd.f32 0.0, %v6991
        %v6993 = vpop.f32.mrf.mxu0
        %v6994 = vadd.f32 0.0, %v6993
        %6995 = vmatmul.bf16.gmra.mxu0 %v6851
        %v6996 = vpop.f32.mrf.mxu0
        %v6997 = vadd.f32 0.0, %v6996
        %v6998 = vpop.f32.mrf.mxu0
        %v6999 = vadd.f32 0.0, %v6998
        %7000 = vmatmul.bf16.gmra.mxu0 %v6852
        %v7001 = vpop.f32.mrf.mxu0
        %v7002 = vadd.f32 0.0, %v7001
        %v7003 = vpop.f32.mrf.mxu0
        %v7004 = vadd.f32 0.0, %v7003
        %7005 = vmatmul.bf16.gmra.mxu0 %v6853
        %v7006 = vpop.f32.mrf.mxu0
        %v7007 = vadd.f32 0.0, %v7006
        %v7008 = vpop.f32.mrf.mxu0
        %v7009 = vadd.f32 0.0, %v7008
        %7010 = vmatmul.bf16.gmra.mxu0 %v6854
        %v7011 = vpop.f32.mrf.mxu0
        %v7012 = vadd.f32 0.0, %v7011
        %v7013 = vpop.f32.mrf.mxu0
        %v7014 = vadd.f32 0.0, %v7013
        %7015 = vmatmul.bf16.gmra.mxu0 %v6855
        %v7016 = vpop.f32.mrf.mxu0
        %v7017 = vadd.f32 0.0, %v7016
        %v7018 = vpop.f32.mrf.mxu0
        %v7019 = vadd.f32 0.0, %v7018
        %7020 = vmatmul.bf16.gmra.mxu0 %v6856
        %v7021 = vpop.f32.mrf.mxu0
        %v7022 = vadd.f32 0.0, %v7021
        %v7023 = vpop.f32.mrf.mxu0
        %v7024 = vadd.f32 0.0, %v7023
        %7025 = vmatmul.bf16.gmra.mxu0 %v6857
        %v7026 = vpop.f32.mrf.mxu0
        %v7027 = vadd.f32 0.0, %v7026
        %v7028 = vpop.f32.mrf.mxu0
        %v7029 = vadd.f32 0.0, %v7028
        %7030 = vmatmul.bf16.gmra.mxu0 %v6858
        %v7031 = vpop.f32.mrf.mxu0
        %v7032 = vadd.f32 0.0, %v7031
        %v7033 = vpop.f32.mrf.mxu0
        %v7034 = vadd.f32 0.0, %v7033
        %7035 = vdwg.mxu0
        %v7036 = vadd.f32 %v6662, %v6937
        %v7037 = vadd.f32 %v6663, %v6939
        %v7038 = vadd.f32 %v6664, %v6942
        %v7039 = vadd.f32 %v6665, %v6944
        %v7040 = vadd.f32 %v6666, %v6947
        %v7041 = vadd.f32 %v6667, %v6949
        %v7042 = vadd.f32 %v6668, %v6952
        %v7043 = vadd.f32 %v6669, %v6954
        %v7044 = vadd.f32 %v6670, %v6957
        %v7045 = vadd.f32 %v6671, %v6959
        %v7046 = vadd.f32 %v6672, %v6962
        %v7047 = vadd.f32 %v6673, %v6964
        %v7048 = vadd.f32 %v6674, %v6967
        %v7049 = vadd.f32 %v6675, %v6969
        %v7050 = vadd.f32 %v6676, %v6972
        %v7051 = vadd.f32 %v6677, %v6974
        %v7052 = vadd.f32 %v6678, %v6977
        %v7053 = vadd.f32 %v6679, %v6979
        %v7054 = vadd.f32 %v6680, %v6982
        %v7055 = vadd.f32 %v6681, %v6984
        %v7056 = vadd.f32 %v6682, %v6987
        %v7057 = vadd.f32 %v6683, %v6989
        %v7058 = vadd.f32 %v6684, %v6992
        %v7059 = vadd.f32 %v6685, %v6994
        %v7060 = vadd.f32 %v6686, %v6997
        %v7061 = vadd.f32 %v6687, %v6999
        %v7062 = vadd.f32 %v6688, %v7002
        %v7063 = vadd.f32 %v6689, %v7004
        %v7064 = vadd.f32 %v6690, %v7007
        %v7065 = vadd.f32 %v6691, %v7009
        %v7066 = vadd.f32 %v6692, %v7012
        %v7067 = vadd.f32 %v6693, %v7014
        %v7068 = vadd.f32 %v6694, %v7017
        %v7069 = vadd.f32 %v6695, %v7019
        %v7070 = vadd.f32 %v6696, %v7022
        %v7071 = vadd.f32 %v6697, %v7024
        %v7072 = vadd.f32 %v6698, %v7027
        %v7073 = vadd.f32 %v6699, %v7029
        %v7074 = vadd.f32 %v6700, %v7032
        %v7075 = vadd.f32 %v6701, %v7034
        %v7076 = vld [vmem:[#allocation2 + $0x14] sm:$0xf]
        %v7077 = vld [vmem:[#allocation2 + $0x18] sm:$0xf]
        %v7078 = vld [vmem:[#allocation2 + $0x1c] sm:$0xf]
        %v7079 = vld [vmem:[#allocation2 + $0x20] sm:$0xf]
        %v7080 = vld [vmem:[#allocation2 + $0x24] sm:$0xf]
        %v7081 = vld [vmem:[#allocation2 + $0x28] sm:$0xf]
        %v7082 = vld [vmem:[#allocation2 + $0x2c] sm:$0xf]
        %v7083 = vld [vmem:[#allocation2 + $0x30] sm:$0xf]
        %v7084 = vld [vmem:[#allocation2 + $0x34] sm:$0xf]
        %v7085 = vld [vmem:[#allocation2 + $0x38] sm:$0xf]
        %v7086 = vld [vmem:[#allocation2 + $0x3c] sm:$0xf]
        %v7087 = vld [vmem:[#allocation2 + $0x40] sm:$0xf]
        %v7088 = vld [vmem:[#allocation2 + $0x44] sm:$0xf]
        %v7089 = vld [vmem:[#allocation2 + $0x48] sm:$0xf]
        %v7090 = vld [vmem:[#allocation2 + $0x4c] sm:$0xf]
        %v7091 = vld [vmem:[#allocation2 + $0x50] sm:$0xf]
        %v7092 = vld [vmem:[#allocation2 + $0x54] sm:$0xf]
        %v7093 = vld [vmem:[#allocation2 + $0x58] sm:$0xf]
        %v7094 = vld [vmem:[#allocation2 + $0x5c] sm:$0xf]
        %v7095 = vld [vmem:[#allocation2 + $0x60] sm:$0xf]
        %v7096 = vld [vmem:[#allocation2 + $0x64] sm:$0xf]
        %v7097 = vld [vmem:[#allocation2 + $0x68] sm:$0xf]
        %v7098 = vld [vmem:[#allocation2 + $0x6c] sm:$0xf]
        %v7099 = vld [vmem:[#allocation2 + $0x70] sm:$0xf]
        %v7100 = vld [vmem:[#allocation2 + $0x74] sm:$0xf]
        %v7101 = vld [vmem:[#allocation2 + $0x78] sm:$0xf]
        %v7102 = vld [vmem:[#allocation2 + $0x7c] sm:$0xf]
        %v7103 = vld [vmem:[#allocation2 + $0x80] sm:$0xf]
        %v7104 = vld [vmem:[#allocation2 + $0x84] sm:$0xf]
        %v7105 = vld [vmem:[#allocation2 + $0x88] sm:$0xf]
        %v7106 = vld [vmem:[#allocation2 + $0x8c] sm:$0xf]
        %v7107 = vld [vmem:[#allocation2 + $0x90] sm:$0xf]
        %v7108 = vld [vmem:[#allocation2 + $0x94] sm:$0xf]
        %v7109 = vld [vmem:[#allocation2 + $0x98] sm:$0xf]
        %v7110 = vld [vmem:[#allocation2 + $0x9c] sm:$0xf]
        %v7111 = vld [vmem:[#allocation2 + $0xa0] sm:$0xf]
        %v7112 = vld [vmem:[#allocation2 + $0xa4] sm:$0xf]
        %v7113 = vld [vmem:[#allocation2 + $0xa8] sm:$0xf]
        %v7114 = vld [vmem:[#allocation2 + $0xac] sm:$0xf]
        %v7115 = vld [vmem:[#allocation2 + $0xb0] sm:$0xf]
        %v7116 = vld [vmem:[#allocation2 + $0xb4] sm:$0x1]
        %s7117 = scalar_lea.vmem [#allocation8], 448
        %v7118 = vld [vmem:[%s7117] sm:$0xf]
        %v7119 = vld [vmem:[%s7117 + $0x4] sm:$0xf]
        %v7120 = vld [vmem:[%s7117 + $0x8] sm:$0xf]
        %v7121 = vld [vmem:[%s7117 + $0xc] sm:$0xf]
        %v7122 = vld [vmem:[%s7117 + $0x10] sm:$0xf]
        %v7123 = vld [vmem:[%s7117 + $0x14] sm:$0xf]
        %v7124 = vld [vmem:[%s7117 + $0x18] sm:$0xf]
        %v7125 = vld [vmem:[%s7117 + $0x1c] sm:$0xf]
        %v7126 = vld [vmem:[%s7117 + $0x20] sm:$0xf]
        %v7127 = vld [vmem:[%s7117 + $0x24] sm:$0xf]
        %v7128 = vld [vmem:[%s7117 + $0x28] sm:$0xf]
        %v7129 = vld [vmem:[%s7117 + $0x2c] sm:$0xf]
        %v7130 = vld [vmem:[%s7117 + $0x30] sm:$0xf]
        %v7131 = vld [vmem:[%s7117 + $0x34] sm:$0xf]
        %v7132 = vld [vmem:[%s7117 + $0x38] sm:$0xf]
        %v7133 = vld [vmem:[%s7117 + $0x3c] sm:$0xf]
        %v7175 = vunpack.c.l.b16 %v7076
        %v7176 = vunpack.c.l.b16 %v7077
        %v7177 = vunpack.c.l.b16 %v7078
        %v7178 = vunpack.c.l.b16 %v7079
        %v7179 = vunpack.c.l.b16 %v7080
        %v7180 = vunpack.c.l.b16 %v7081
        %v7181 = vunpack.c.l.b16 %v7082
        %v7182 = vunpack.c.l.b16 %v7083
        %v7183 = vunpack.c.l.b16 %v7084
        %v7184 = vunpack.c.l.b16 %v7085
        %v7185 = vunpack.c.l.b16 %v7086
        %v7186 = vunpack.c.l.b16 %v7087
        %v7187 = vunpack.c.l.b16 %v7088
        %v7188 = vunpack.c.l.b16 %v7089
        %v7189 = vunpack.c.l.b16 %v7090
        %v7190 = vunpack.c.l.b16 %v7091
        %v7191 = vunpack.c.l.b16 %v7092
        %v7192 = vunpack.c.l.b16 %v7093
        %v7193 = vunpack.c.l.b16 %v7094
        %v7194 = vunpack.c.l.b16 %v7095
        %v7195 = vunpack.c.l.b16 %v7096
        %v7196 = vunpack.c.l.b16 %v7097
        %v7197 = vunpack.c.l.b16 %v7098
        %v7198 = vunpack.c.l.b16 %v7099
        %v7199 = vunpack.c.l.b16 %v7100
        %v7200 = vunpack.c.l.b16 %v7101
        %v7201 = vunpack.c.l.b16 %v7102
        %v7202 = vunpack.c.l.b16 %v7103
        %v7203 = vunpack.c.l.b16 %v7104
        %v7204 = vunpack.c.l.b16 %v7105
        %v7205 = vunpack.c.l.b16 %v7106
        %v7206 = vunpack.c.l.b16 %v7107
        %v7207 = vunpack.c.l.b16 %v7108
        %v7208 = vunpack.c.l.b16 %v7109
        %v7209 = vunpack.c.l.b16 %v7110
        %v7210 = vunpack.c.l.b16 %v7111
        %v7211 = vunpack.c.l.b16 %v7112
        %v7212 = vunpack.c.l.b16 %v7113
        %v7213 = vunpack.c.l.b16 %v7114
        %v7214 = vunpack.c.l.b16 %v7115
        %v7215 = vunpack.c.l.b16 %v7116
        %v7216 = vpack.c.b16 %v7176, %v7175
        %v7217 = vpack.c.b16 %v7178, %v7177
        %v7218 = vpack.c.b16 %v7180, %v7179
        %v7219 = vpack.c.b16 %v7182, %v7181
        %v7220 = vpack.c.b16 %v7184, %v7183
        %v7221 = vpack.c.b16 %v7186, %v7185
        %v7222 = vpack.c.b16 %v7188, %v7187
        %v7223 = vpack.c.b16 %v7190, %v7189
        %v7224 = vpack.c.b16 %v7192, %v7191
        %v7225 = vpack.c.b16 %v7194, %v7193
        %v7226 = vpack.c.b16 %v7196, %v7195
        %v7227 = vpack.c.b16 %v7198, %v7197
        %v7228 = vpack.c.b16 %v7200, %v7199
        %v7229 = vpack.c.b16 %v7202, %v7201
        %v7230 = vpack.c.b16 %v7204, %v7203
        %v7231 = vpack.c.b16 %v7206, %v7205
        %v7232 = vpack.c.b16 %v7208, %v7207
        %v7233 = vpack.c.b16 %v7210, %v7209
        %v7234 = vpack.c.b16 %v7212, %v7211
        %v7235 = vpack.c.b16 %v7214, %v7213
        %v7236 = vpack.c.b16 %v7215, %v7215
        %v7238 = vshrl.u32 %v7216, 16
        %v7240 = vshll.u32 %v7216, 16
        %v7242 = vrot.slane %v7240, 1
        %v7243 = vor.u32 %v7238, %v7242
        %v7245 = vshll.u32 %v7217, 16
        %v7247 = vrot.slane %v7245, 1
        %v7248 = vsel %vm557, %v7243, %v7247
        %v7249 = vshrl.u32 %v7217, 16
        %v7251 = vor.u32 %v7249, %v7247
        %v7253 = vshll.u32 %v7218, 16
        %v7255 = vrot.slane %v7253, 1
        %v7256 = vsel %vm557, %v7251, %v7255
        %v7257 = vshrl.u32 %v7218, 16
        %v7259 = vor.u32 %v7257, %v7255
        %v7261 = vshll.u32 %v7219, 16
        %v7263 = vrot.slane %v7261, 1
        %v7264 = vsel %vm557, %v7259, %v7263
        %v7265 = vshrl.u32 %v7219, 16
        %v7267 = vor.u32 %v7265, %v7263
        %v7269 = vshll.u32 %v7220, 16
        %v7271 = vrot.slane %v7269, 1
        %v7272 = vsel %vm557, %v7267, %v7271
        %v7273 = vshrl.u32 %v7220, 16
        %v7275 = vor.u32 %v7273, %v7271
        %v7277 = vshll.u32 %v7221, 16
        %v7279 = vrot.slane %v7277, 1
        %v7280 = vsel %vm557, %v7275, %v7279
        %v7281 = vshrl.u32 %v7221, 16
        %v7283 = vor.u32 %v7281, %v7279
        %v7285 = vshll.u32 %v7222, 16
        %v7287 = vrot.slane %v7285, 1
        %v7288 = vsel %vm557, %v7283, %v7287
        %v7289 = vshrl.u32 %v7222, 16
        %v7291 = vor.u32 %v7289, %v7287
        %v7293 = vshll.u32 %v7223, 16
        %v7295 = vrot.slane %v7293, 1
        %v7296 = vsel %vm557, %v7291, %v7295
        %v7297 = vshrl.u32 %v7223, 16
        %v7299 = vor.u32 %v7297, %v7295
        %v7301 = vshll.u32 %v7224, 16
        %v7303 = vrot.slane %v7301, 1
        %v7304 = vsel %vm557, %v7299, %v7303
        %v7305 = vshrl.u32 %v7224, 16
        %v7307 = vor.u32 %v7305, %v7303
        %v7309 = vshll.u32 %v7225, 16
        %v7311 = vrot.slane %v7309, 1
        %v7312 = vsel %vm557, %v7307, %v7311
        %v7313 = vshrl.u32 %v7225, 16
        %v7315 = vor.u32 %v7313, %v7311
        %v7317 = vshll.u32 %v7226, 16
        %v7319 = vrot.slane %v7317, 1
        %v7320 = vsel %vm557, %v7315, %v7319
        %v7321 = vshrl.u32 %v7226, 16
        %v7323 = vor.u32 %v7321, %v7319
        %v7325 = vshll.u32 %v7227, 16
        %v7327 = vrot.slane %v7325, 1
        %v7328 = vsel %vm557, %v7323, %v7327
        %v7329 = vshrl.u32 %v7227, 16
        %v7331 = vor.u32 %v7329, %v7327
        %v7333 = vshll.u32 %v7228, 16
        %v7335 = vrot.slane %v7333, 1
        %v7336 = vsel %vm557, %v7331, %v7335
        %v7337 = vshrl.u32 %v7228, 16
        %v7339 = vor.u32 %v7337, %v7335
        %v7341 = vshll.u32 %v7229, 16
        %v7343 = vrot.slane %v7341, 1
        %v7344 = vsel %vm557, %v7339, %v7343
        %v7345 = vshrl.u32 %v7229, 16
        %v7347 = vor.u32 %v7345, %v7343
        %v7349 = vshll.u32 %v7230, 16
        %v7351 = vrot.slane %v7349, 1
        %v7352 = vsel %vm557, %v7347, %v7351
        %v7353 = vshrl.u32 %v7230, 16
        %v7355 = vor.u32 %v7353, %v7351
        %v7357 = vshll.u32 %v7231, 16
        %v7359 = vrot.slane %v7357, 1
        %v7360 = vsel %vm557, %v7355, %v7359
        %v7361 = vshrl.u32 %v7231, 16
        %v7363 = vor.u32 %v7361, %v7359
        %v7365 = vshll.u32 %v7232, 16
        %v7367 = vrot.slane %v7365, 1
        %v7368 = vsel %vm557, %v7363, %v7367
        %v7369 = vshrl.u32 %v7232, 16
        %v7371 = vor.u32 %v7369, %v7367
        %v7373 = vshll.u32 %v7233, 16
        %v7375 = vrot.slane %v7373, 1
        %v7376 = vsel %vm557, %v7371, %v7375
        %v7377 = vshrl.u32 %v7233, 16
        %v7379 = vor.u32 %v7377, %v7375
        %v7381 = vshll.u32 %v7234, 16
        %v7383 = vrot.slane %v7381, 1
        %v7384 = vsel %vm557, %v7379, %v7383
        %v7385 = vshrl.u32 %v7234, 16
        %v7387 = vor.u32 %v7385, %v7383
        %v7389 = vshll.u32 %v7235, 16
        %v7391 = vrot.slane %v7389, 1
        %v7392 = vsel %vm557, %v7387, %v7391
        %v7393 = vshrl.u32 %v7235, 16
        %v7395 = vor.u32 %v7393, %v7391
        %v7397 = vshll.u32 %v7236, 16
        %v7399 = vrot.slane %v7397, 1
        %v7400 = vsel %vm557, %v7395, %v7399
        %v7437 = vunpack.c.l.b16 %v7118
        %v7438 = vunpack.c.l.b16 %v7119
        %v7439 = vunpack.c.l.b16 %v7120
        %v7440 = vunpack.c.l.b16 %v7121
        %v7441 = vunpack.c.l.b16 %v7122
        %v7442 = vunpack.c.l.b16 %v7123
        %v7443 = vunpack.c.l.b16 %v7124
        %v7444 = vunpack.c.l.b16 %v7125
        %v7445 = vunpack.c.l.b16 %v7126
        %v7446 = vunpack.c.l.b16 %v7127
        %v7447 = vunpack.c.l.b16 %v7128
        %v7448 = vunpack.c.l.b16 %v7129
        %v7449 = vunpack.c.l.b16 %v7130
        %v7450 = vunpack.c.l.b16 %v7131
        %v7451 = vunpack.c.l.b16 %v7132
        %v7452 = vunpack.c.l.b16 %v7133
        %v7453 = vpack.c.b16 %v7438, %v7437
        %v7454 = vpack.c.b16 %v7440, %v7439
        %v7455 = vpack.c.b16 %v7442, %v7441
        %v7456 = vpack.c.b16 %v7444, %v7443
        %v7457 = vpack.c.b16 %v7446, %v7445
        %v7458 = vpack.c.b16 %v7448, %v7447
        %v7459 = vpack.c.b16 %v7450, %v7449
        %v7460 = vpack.c.b16 %v7452, %v7451
        %7469 = vmatpush.bf16.msra.mxu0 %v7460
        %7470 = vmatpush.bf16.msra.mxu0 %v7459
        %7471 = vmatpush.bf16.msra.mxu0 %v7458
        %7472 = vmatpush.bf16.msra.mxu0 %v7457
        %7473 = vmatpush.bf16.msra.mxu0 %v7456
        %7474 = vmatpush.bf16.msra.mxu0 %v7455
        %7475 = vmatpush.bf16.msra.mxu0 %v7454
        %7476 = vmatpush.bf16.msra.mxu0 %v7453
        %7477 = vmatmul.bf16.gmra.mxu0 %v7248
        %v7478 = vpop.f32.mrf.mxu0
        %v7479 = vadd.f32 0.0, %v7478
        %v7480 = vpop.f32.mrf.mxu0
        %v7481 = vadd.f32 0.0, %v7480
        %7482 = vmatmul.bf16.gmra.mxu0 %v7256
        %v7483 = vpop.f32.mrf.mxu0
        %v7484 = vadd.f32 0.0, %v7483
        %v7485 = vpop.f32.mrf.mxu0
        %v7486 = vadd.f32 0.0, %v7485
        %7487 = vmatmul.bf16.gmra.mxu0 %v7264
        %v7488 = vpop.f32.mrf.mxu0
        %v7489 = vadd.f32 0.0, %v7488
        %v7490 = vpop.f32.mrf.mxu0
        %v7491 = vadd.f32 0.0, %v7490
        %7492 = vmatmul.bf16.gmra.mxu0 %v7272
        %v7493 = vpop.f32.mrf.mxu0
        %v7494 = vadd.f32 0.0, %v7493
        %v7495 = vpop.f32.mrf.mxu0
        %v7496 = vadd.f32 0.0, %v7495
        %7497 = vmatmul.bf16.gmra.mxu0 %v7280
        %v7498 = vpop.f32.mrf.mxu0
        %v7499 = vadd.f32 0.0, %v7498
        %v7500 = vpop.f32.mrf.mxu0
        %v7501 = vadd.f32 0.0, %v7500
        %7502 = vmatmul.bf16.gmra.mxu0 %v7288
        %v7503 = vpop.f32.mrf.mxu0
        %v7504 = vadd.f32 0.0, %v7503
        %v7505 = vpop.f32.mrf.mxu0
        %v7506 = vadd.f32 0.0, %v7505
        %7507 = vmatmul.bf16.gmra.mxu0 %v7296
        %v7508 = vpop.f32.mrf.mxu0
        %v7509 = vadd.f32 0.0, %v7508
        %v7510 = vpop.f32.mrf.mxu0
        %v7511 = vadd.f32 0.0, %v7510
        %7512 = vmatmul.bf16.gmra.mxu0 %v7304
        %v7513 = vpop.f32.mrf.mxu0
        %v7514 = vadd.f32 0.0, %v7513
        %v7515 = vpop.f32.mrf.mxu0
        %v7516 = vadd.f32 0.0, %v7515
        %7517 = vmatmul.bf16.gmra.mxu0 %v7312
        %v7518 = vpop.f32.mrf.mxu0
        %v7519 = vadd.f32 0.0, %v7518
        %v7520 = vpop.f32.mrf.mxu0
        %v7521 = vadd.f32 0.0, %v7520
        %7522 = vmatmul.bf16.gmra.mxu0 %v7320
        %v7523 = vpop.f32.mrf.mxu0
        %v7524 = vadd.f32 0.0, %v7523
        %v7525 = vpop.f32.mrf.mxu0
        %v7526 = vadd.f32 0.0, %v7525
        %7527 = vmatmul.bf16.gmra.mxu0 %v7328
        %v7528 = vpop.f32.mrf.mxu0
        %v7529 = vadd.f32 0.0, %v7528
        %v7530 = vpop.f32.mrf.mxu0
        %v7531 = vadd.f32 0.0, %v7530
        %7532 = vmatmul.bf16.gmra.mxu0 %v7336
        %v7533 = vpop.f32.mrf.mxu0
        %v7534 = vadd.f32 0.0, %v7533
        %v7535 = vpop.f32.mrf.mxu0
        %v7536 = vadd.f32 0.0, %v7535
        %7537 = vmatmul.bf16.gmra.mxu0 %v7344
        %v7538 = vpop.f32.mrf.mxu0
        %v7539 = vadd.f32 0.0, %v7538
        %v7540 = vpop.f32.mrf.mxu0
        %v7541 = vadd.f32 0.0, %v7540
        %7542 = vmatmul.bf16.gmra.mxu0 %v7352
        %v7543 = vpop.f32.mrf.mxu0
        %v7544 = vadd.f32 0.0, %v7543
        %v7545 = vpop.f32.mrf.mxu0
        %v7546 = vadd.f32 0.0, %v7545
        %7547 = vmatmul.bf16.gmra.mxu0 %v7360
        %v7548 = vpop.f32.mrf.mxu0
        %v7549 = vadd.f32 0.0, %v7548
        %v7550 = vpop.f32.mrf.mxu0
        %v7551 = vadd.f32 0.0, %v7550
        %7552 = vmatmul.bf16.gmra.mxu0 %v7368
        %v7553 = vpop.f32.mrf.mxu0
        %v7554 = vadd.f32 0.0, %v7553
        %v7555 = vpop.f32.mrf.mxu0
        %v7556 = vadd.f32 0.0, %v7555
        %7557 = vmatmul.bf16.gmra.mxu0 %v7376
        %v7558 = vpop.f32.mrf.mxu0
        %v7559 = vadd.f32 0.0, %v7558
        %v7560 = vpop.f32.mrf.mxu0
        %v7561 = vadd.f32 0.0, %v7560
        %7562 = vmatmul.bf16.gmra.mxu0 %v7384
        %v7563 = vpop.f32.mrf.mxu0
        %v7564 = vadd.f32 0.0, %v7563
        %v7565 = vpop.f32.mrf.mxu0
        %v7566 = vadd.f32 0.0, %v7565
        %7567 = vmatmul.bf16.gmra.mxu0 %v7392
        %v7568 = vpop.f32.mrf.mxu0
        %v7569 = vadd.f32 0.0, %v7568
        %v7570 = vpop.f32.mrf.mxu0
        %v7571 = vadd.f32 0.0, %v7570
        %7572 = vmatmul.bf16.gmra.mxu0 %v7400
        %v7573 = vpop.f32.mrf.mxu0
        %v7574 = vadd.f32 0.0, %v7573
        %v7575 = vpop.f32.mrf.mxu0
        %v7576 = vadd.f32 0.0, %v7575
        %7577 = vdwg.mxu0
        %v7578 = vadd.f32 %v7036, %v7479
        %v7579 = vadd.f32 %v7037, %v7481
        %v7580 = vadd.f32 %v7038, %v7484
        %v7581 = vadd.f32 %v7039, %v7486
        %v7582 = vadd.f32 %v7040, %v7489
        %v7583 = vadd.f32 %v7041, %v7491
        %v7584 = vadd.f32 %v7042, %v7494
        %v7585 = vadd.f32 %v7043, %v7496
        %v7586 = vadd.f32 %v7044, %v7499
        %v7587 = vadd.f32 %v7045, %v7501
        %v7588 = vadd.f32 %v7046, %v7504
        %v7589 = vadd.f32 %v7047, %v7506
        %v7590 = vadd.f32 %v7048, %v7509
        %v7591 = vadd.f32 %v7049, %v7511
        %v7592 = vadd.f32 %v7050, %v7514
        %v7593 = vadd.f32 %v7051, %v7516
        %v7594 = vadd.f32 %v7052, %v7519
        %v7595 = vadd.f32 %v7053, %v7521
        %v7596 = vadd.f32 %v7054, %v7524
        %v7597 = vadd.f32 %v7055, %v7526
        %v7598 = vadd.f32 %v7056, %v7529
        %v7599 = vadd.f32 %v7057, %v7531
        %v7600 = vadd.f32 %v7058, %v7534
        %v7601 = vadd.f32 %v7059, %v7536
        %v7602 = vadd.f32 %v7060, %v7539
        %v7603 = vadd.f32 %v7061, %v7541
        %v7604 = vadd.f32 %v7062, %v7544
        %v7605 = vadd.f32 %v7063, %v7546
        %v7606 = vadd.f32 %v7064, %v7549
        %v7607 = vadd.f32 %v7065, %v7551
        %v7608 = vadd.f32 %v7066, %v7554
        %v7609 = vadd.f32 %v7067, %v7556
        %v7610 = vadd.f32 %v7068, %v7559
        %v7611 = vadd.f32 %v7069, %v7561
        %v7612 = vadd.f32 %v7070, %v7564
        %v7613 = vadd.f32 %v7071, %v7566
        %v7614 = vadd.f32 %v7072, %v7569
        %v7615 = vadd.f32 %v7073, %v7571
        %v7616 = vadd.f32 %v7074, %v7574
        %v7617 = vadd.f32 %v7075, %v7576
        %v7618 = vld [vmem:[#allocation2 + $0x14] sm:$0xe]
        %s7619 = scalar_lea.vmem [#allocation8], 512
        %v7620 = vld [vmem:[%s7619] sm:$0xf]
        %v7621 = vld [vmem:[%s7619 + $0x4] sm:$0xf]
        %v7622 = vld [vmem:[%s7619 + $0x8] sm:$0xf]
        %v7623 = vld [vmem:[%s7619 + $0xc] sm:$0xf]
        %v7624 = vld [vmem:[%s7619 + $0x10] sm:$0xf]
        %v7625 = vld [vmem:[%s7619 + $0x14] sm:$0xf]
        %v7626 = vld [vmem:[%s7619 + $0x18] sm:$0xf]
        %v7627 = vld [vmem:[%s7619 + $0x1c] sm:$0xf]
        %v7628 = vld [vmem:[%s7619 + $0x20] sm:$0xf]
        %v7629 = vld [vmem:[%s7619 + $0x24] sm:$0xf]
        %v7630 = vld [vmem:[%s7619 + $0x28] sm:$0xf]
        %v7631 = vld [vmem:[%s7619 + $0x2c] sm:$0xf]
        %v7632 = vld [vmem:[%s7619 + $0x30] sm:$0xf]
        %v7633 = vld [vmem:[%s7619 + $0x34] sm:$0xf]
        %v7634 = vld [vmem:[%s7619 + $0x38] sm:$0xf]
        %v7635 = vld [vmem:[%s7619 + $0x3c] sm:$0xf]
        %v7637 = vunpack.c.l.b16 %v7618
        %v7638 = vpack.c.b16 %v7176, %v7637
        %v7639 = vrot.slane %v7638, 1
        %v7640 = vrot.slane %v7217, 1
        %v7641 = vsel %vm1157, %v7639, %v7640
        %v7642 = vrot.slane %v7218, 1
        %v7643 = vsel %vm1157, %v7640, %v7642
        %v7644 = vrot.slane %v7219, 1
        %v7645 = vsel %vm1157, %v7642, %v7644
        %v7646 = vrot.slane %v7220, 1
        %v7647 = vsel %vm1157, %v7644, %v7646
        %v7648 = vrot.slane %v7221, 1
        %v7649 = vsel %vm1157, %v7646, %v7648
        %v7650 = vrot.slane %v7222, 1
        %v7651 = vsel %vm1157, %v7648, %v7650
        %v7652 = vrot.slane %v7223, 1
        %v7653 = vsel %vm1157, %v7650, %v7652
        %v7654 = vrot.slane %v7224, 1
        %v7655 = vsel %vm1157, %v7652, %v7654
        %v7656 = vrot.slane %v7225, 1
        %v7657 = vsel %vm1157, %v7654, %v7656
        %v7658 = vrot.slane %v7226, 1
        %v7659 = vsel %vm1157, %v7656, %v7658
        %v7660 = vrot.slane %v7227, 1
        %v7661 = vsel %vm1157, %v7658, %v7660
        %v7662 = vrot.slane %v7228, 1
        %v7663 = vsel %vm1157, %v7660, %v7662
        %v7664 = vrot.slane %v7229, 1
        %v7665 = vsel %vm1157, %v7662, %v7664
        %v7666 = vrot.slane %v7230, 1
        %v7667 = vsel %vm1157, %v7664, %v7666
        %v7668 = vrot.slane %v7231, 1
        %v7669 = vsel %vm1157, %v7666, %v7668
        %v7670 = vrot.slane %v7232, 1
        %v7671 = vsel %vm1157, %v7668, %v7670
        %v7672 = vrot.slane %v7233, 1
        %v7673 = vsel %vm1157, %v7670, %v7672
        %v7674 = vrot.slane %v7234, 1
        %v7675 = vsel %vm1157, %v7672, %v7674
        %v7676 = vrot.slane %v7235, 1
        %v7677 = vsel %vm1157, %v7674, %v7676
        %v7678 = vrot.slane %v7236, 1
        %v7679 = vsel %vm1157, %v7676, %v7678
        %v7716 = vunpack.c.l.b16 %v7620
        %v7717 = vunpack.c.l.b16 %v7621
        %v7718 = vunpack.c.l.b16 %v7622
        %v7719 = vunpack.c.l.b16 %v7623
        %v7720 = vunpack.c.l.b16 %v7624
        %v7721 = vunpack.c.l.b16 %v7625
        %v7722 = vunpack.c.l.b16 %v7626
        %v7723 = vunpack.c.l.b16 %v7627
        %v7724 = vunpack.c.l.b16 %v7628
        %v7725 = vunpack.c.l.b16 %v7629
        %v7726 = vunpack.c.l.b16 %v7630
        %v7727 = vunpack.c.l.b16 %v7631
        %v7728 = vunpack.c.l.b16 %v7632
        %v7729 = vunpack.c.l.b16 %v7633
        %v7730 = vunpack.c.l.b16 %v7634
        %v7731 = vunpack.c.l.b16 %v7635
        %v7732 = vpack.c.b16 %v7717, %v7716
        %v7733 = vpack.c.b16 %v7719, %v7718
        %v7734 = vpack.c.b16 %v7721, %v7720
        %v7735 = vpack.c.b16 %v7723, %v7722
        %v7736 = vpack.c.b16 %v7725, %v7724
        %v7737 = vpack.c.b16 %v7727, %v7726
        %v7738 = vpack.c.b16 %v7729, %v7728
        %v7739 = vpack.c.b16 %v7731, %v7730
        %7748 = vmatpush.bf16.msra.mxu0 %v7739
        %7749 = vmatpush.bf16.msra.mxu0 %v7738
        %7750 = vmatpush.bf16.msra.mxu0 %v7737
        %7751 = vmatpush.bf16.msra.mxu0 %v7736
        %7752 = vmatpush.bf16.msra.mxu0 %v7735
        %7753 = vmatpush.bf16.msra.mxu0 %v7734
        %7754 = vmatpush.bf16.msra.mxu0 %v7733
        %7755 = vmatpush.bf16.msra.mxu0 %v7732
        %7756 = vmatmul.bf16.gmra.mxu0 %v7641
        %v7757 = vpop.f32.mrf.mxu0
        %v7758 = vadd.f32 0.0, %v7757
        %v7759 = vpop.f32.mrf.mxu0
        %v7760 = vadd.f32 0.0, %v7759
        %7761 = vmatmul.bf16.gmra.mxu0 %v7643
        %v7762 = vpop.f32.mrf.mxu0
        %v7763 = vadd.f32 0.0, %v7762
        %v7764 = vpop.f32.mrf.mxu0
        %v7765 = vadd.f32 0.0, %v7764
        %7766 = vmatmul.bf16.gmra.mxu0 %v7645
        %v7767 = vpop.f32.mrf.mxu0
        %v7768 = vadd.f32 0.0, %v7767
        %v7769 = vpop.f32.mrf.mxu0
        %v7770 = vadd.f32 0.0, %v7769
        %7771 = vmatmul.bf16.gmra.mxu0 %v7647
        %v7772 = vpop.f32.mrf.mxu0
        %v7773 = vadd.f32 0.0, %v7772
        %v7774 = vpop.f32.mrf.mxu0
        %v7775 = vadd.f32 0.0, %v7774
        %7776 = vmatmul.bf16.gmra.mxu0 %v7649
        %v7777 = vpop.f32.mrf.mxu0
        %v7778 = vadd.f32 0.0, %v7777
        %v7779 = vpop.f32.mrf.mxu0
        %v7780 = vadd.f32 0.0, %v7779
        %7781 = vmatmul.bf16.gmra.mxu0 %v7651
        %v7782 = vpop.f32.mrf.mxu0
        %v7783 = vadd.f32 0.0, %v7782
        %v7784 = vpop.f32.mrf.mxu0
        %v7785 = vadd.f32 0.0, %v7784
        %7786 = vmatmul.bf16.gmra.mxu0 %v7653
        %v7787 = vpop.f32.mrf.mxu0
        %v7788 = vadd.f32 0.0, %v7787
        %v7789 = vpop.f32.mrf.mxu0
        %v7790 = vadd.f32 0.0, %v7789
        %7791 = vmatmul.bf16.gmra.mxu0 %v7655
        %v7792 = vpop.f32.mrf.mxu0
        %v7793 = vadd.f32 0.0, %v7792
        %v7794 = vpop.f32.mrf.mxu0
        %v7795 = vadd.f32 0.0, %v7794
        %7796 = vmatmul.bf16.gmra.mxu0 %v7657
        %v7797 = vpop.f32.mrf.mxu0
        %v7798 = vadd.f32 0.0, %v7797
        %v7799 = vpop.f32.mrf.mxu0
        %v7800 = vadd.f32 0.0, %v7799
        %7801 = vmatmul.bf16.gmra.mxu0 %v7659
        %v7802 = vpop.f32.mrf.mxu0
        %v7803 = vadd.f32 0.0, %v7802
        %v7804 = vpop.f32.mrf.mxu0
        %v7805 = vadd.f32 0.0, %v7804
        %7806 = vmatmul.bf16.gmra.mxu0 %v7661
        %v7807 = vpop.f32.mrf.mxu0
        %v7808 = vadd.f32 0.0, %v7807
        %v7809 = vpop.f32.mrf.mxu0
        %v7810 = vadd.f32 0.0, %v7809
        %7811 = vmatmul.bf16.gmra.mxu0 %v7663
        %v7812 = vpop.f32.mrf.mxu0
        %v7813 = vadd.f32 0.0, %v7812
        %v7814 = vpop.f32.mrf.mxu0
        %v7815 = vadd.f32 0.0, %v7814
        %7816 = vmatmul.bf16.gmra.mxu0 %v7665
        %v7817 = vpop.f32.mrf.mxu0
        %v7818 = vadd.f32 0.0, %v7817
        %v7819 = vpop.f32.mrf.mxu0
        %v7820 = vadd.f32 0.0, %v7819
        %7821 = vmatmul.bf16.gmra.mxu0 %v7667
        %v7822 = vpop.f32.mrf.mxu0
        %v7823 = vadd.f32 0.0, %v7822
        %v7824 = vpop.f32.mrf.mxu0
        %v7825 = vadd.f32 0.0, %v7824
        %7826 = vmatmul.bf16.gmra.mxu0 %v7669
        %v7827 = vpop.f32.mrf.mxu0
        %v7828 = vadd.f32 0.0, %v7827
        %v7829 = vpop.f32.mrf.mxu0
        %v7830 = vadd.f32 0.0, %v7829
        %7831 = vmatmul.bf16.gmra.mxu0 %v7671
        %v7832 = vpop.f32.mrf.mxu0
        %v7833 = vadd.f32 0.0, %v7832
        %v7834 = vpop.f32.mrf.mxu0
        %v7835 = vadd.f32 0.0, %v7834
        %7836 = vmatmul.bf16.gmra.mxu0 %v7673
        %v7837 = vpop.f32.mrf.mxu0
        %v7838 = vadd.f32 0.0, %v7837
        %v7839 = vpop.f32.mrf.mxu0
        %v7840 = vadd.f32 0.0, %v7839
        %7841 = vmatmul.bf16.gmra.mxu0 %v7675
        %v7842 = vpop.f32.mrf.mxu0
        %v7843 = vadd.f32 0.0, %v7842
        %v7844 = vpop.f32.mrf.mxu0
        %v7845 = vadd.f32 0.0, %v7844
        %7846 = vmatmul.bf16.gmra.mxu0 %v7677
        %v7847 = vpop.f32.mrf.mxu0
        %v7848 = vadd.f32 0.0, %v7847
        %v7849 = vpop.f32.mrf.mxu0
        %v7850 = vadd.f32 0.0, %v7849
        %7851 = vmatmul.bf16.gmra.mxu0 %v7679
        %v7852 = vpop.f32.mrf.mxu0
        %v7853 = vadd.f32 0.0, %v7852
        %v7854 = vpop.f32.mrf.mxu0
        %v7855 = vadd.f32 0.0, %v7854
        %7856 = vdwg.mxu0
        %v7857 = vadd.f32 %v7578, %v7758
        %v7858 = vadd.f32 %v7579, %v7760
        %v7859 = vadd.f32 %v7580, %v7763
        %v7860 = vadd.f32 %v7581, %v7765
        %v7861 = vadd.f32 %v7582, %v7768
        %v7862 = vadd.f32 %v7583, %v7770
        %v7863 = vadd.f32 %v7584, %v7773
        %v7864 = vadd.f32 %v7585, %v7775
        %v7865 = vadd.f32 %v7586, %v7778
        %v7866 = vadd.f32 %v7587, %v7780
        %v7867 = vadd.f32 %v7588, %v7783
        %v7868 = vadd.f32 %v7589, %v7785
        %v7869 = vadd.f32 %v7590, %v7788
        %v7870 = vadd.f32 %v7591, %v7790
        %v7871 = vadd.f32 %v7592, %v7793
        %v7872 = vadd.f32 %v7593, %v7795
        %v7873 = vadd.f32 %v7594, %v7798
        %v7874 = vadd.f32 %v7595, %v7800
        %v7875 = vadd.f32 %v7596, %v7803
        %v7876 = vadd.f32 %v7597, %v7805
        %v7877 = vadd.f32 %v7598, %v7808
        %v7878 = vadd.f32 %v7599, %v7810
        %v7879 = vadd.f32 %v7600, %v7813
        %v7880 = vadd.f32 %v7601, %v7815
        %v7881 = vadd.f32 %v7602, %v7818
        %v7882 = vadd.f32 %v7603, %v7820
        %v7883 = vadd.f32 %v7604, %v7823
        %v7884 = vadd.f32 %v7605, %v7825
        %v7885 = vadd.f32 %v7606, %v7828
        %v7886 = vadd.f32 %v7607, %v7830
        %v7887 = vadd.f32 %v7608, %v7833
        %v7888 = vadd.f32 %v7609, %v7835
        %v7889 = vadd.f32 %v7610, %v7838
        %v7890 = vadd.f32 %v7611, %v7840
        %v7891 = vadd.f32 %v7612, %v7843
        %v7892 = vadd.f32 %v7613, %v7845
        %v7893 = vadd.f32 %v7614, %v7848
        %v7894 = vadd.f32 %v7615, %v7850
        %v7895 = vadd.f32 %v7616, %v7853
        %v7896 = vadd.f32 %v7617, %v7855
        %v7897 = vld [vmem:[%s315 + $0x14] sm:$0xe]
        %v7898 = vld [vmem:[%s315 + $0x18] sm:$0xf]
        %v7899 = vld [vmem:[%s315 + $0x1c] sm:$0xf]
        %v7900 = vld [vmem:[%s315 + $0x20] sm:$0xf]
        %v7901 = vld [vmem:[%s315 + $0x24] sm:$0xf]
        %v7902 = vld [vmem:[%s315 + $0x28] sm:$0xf]
        %v7903 = vld [vmem:[%s315 + $0x2c] sm:$0xf]
        %v7904 = vld [vmem:[%s315 + $0x30] sm:$0xf]
        %v7905 = vld [vmem:[%s315 + $0x34] sm:$0xf]
        %v7906 = vld [vmem:[%s315 + $0x38] sm:$0xf]
        %v7907 = vld [vmem:[%s315 + $0x3c] sm:$0xf]
        %v7908 = vld [vmem:[%s315 + $0x40] sm:$0xf]
        %v7909 = vld [vmem:[%s315 + $0x44] sm:$0xf]
        %v7910 = vld [vmem:[%s315 + $0x48] sm:$0xf]
        %v7911 = vld [vmem:[%s315 + $0x4c] sm:$0xf]
        %v7912 = vld [vmem:[%s315 + $0x50] sm:$0xf]
        %v7913 = vld [vmem:[%s315 + $0x54] sm:$0xf]
        %v7914 = vld [vmem:[%s315 + $0x58] sm:$0xf]
        %v7915 = vld [vmem:[%s315 + $0x5c] sm:$0xf]
        %v7916 = vld [vmem:[%s315 + $0x60] sm:$0xf]
        %v7917 = vld [vmem:[%s315 + $0x64] sm:$0xf]
        %v7918 = vld [vmem:[%s315 + $0x68] sm:$0xf]
        %v7919 = vld [vmem:[%s315 + $0x6c] sm:$0xf]
        %v7920 = vld [vmem:[%s315 + $0x70] sm:$0xf]
        %v7921 = vld [vmem:[%s315 + $0x74] sm:$0xf]
        %v7922 = vld [vmem:[%s315 + $0x78] sm:$0xf]
        %v7923 = vld [vmem:[%s315 + $0x7c] sm:$0xf]
        %v7924 = vld [vmem:[%s315 + $0x80] sm:$0xf]
        %v7925 = vld [vmem:[%s315 + $0x84] sm:$0xf]
        %v7926 = vld [vmem:[%s315 + $0x88] sm:$0xf]
        %v7927 = vld [vmem:[%s315 + $0x8c] sm:$0xf]
        %v7928 = vld [vmem:[%s315 + $0x90] sm:$0xf]
        %v7929 = vld [vmem:[%s315 + $0x94] sm:$0xf]
        %v7930 = vld [vmem:[%s315 + $0x98] sm:$0xf]
        %v7931 = vld [vmem:[%s315 + $0x9c] sm:$0xf]
        %v7932 = vld [vmem:[%s315 + $0xa0] sm:$0xf]
        %v7933 = vld [vmem:[%s315 + $0xa4] sm:$0xf]
        %v7934 = vld [vmem:[%s315 + $0xa8] sm:$0xf]
        %v7935 = vld [vmem:[%s315 + $0xac] sm:$0xf]
        %v7936 = vld [vmem:[%s315 + $0xb0] sm:$0xf]
        %v7937 = vld [vmem:[%s315 + $0xb4] sm:$0x1]
        %v7938 = vunpack.c.l.bf16 %v7897
        %v7939 = vunpack.c.l.bf16 %v7898
        %v7940 = vunpack.c.l.bf16 %v7899
        %v7941 = vunpack.c.l.bf16 %v7900
        %v7942 = vunpack.c.l.bf16 %v7901
        %v7943 = vunpack.c.l.bf16 %v7902
        %v7944 = vunpack.c.l.bf16 %v7903
        %v7945 = vunpack.c.l.bf16 %v7904
        %v7946 = vunpack.c.l.bf16 %v7905
        %v7947 = vunpack.c.l.bf16 %v7906
        %v7948 = vunpack.c.l.bf16 %v7907
        %v7949 = vunpack.c.l.bf16 %v7908
        %v7950 = vunpack.c.l.bf16 %v7909
        %v7951 = vunpack.c.l.bf16 %v7910
        %v7952 = vunpack.c.l.bf16 %v7911
        %v7953 = vunpack.c.l.bf16 %v7912
        %v7954 = vunpack.c.l.bf16 %v7913
        %v7955 = vunpack.c.l.bf16 %v7914
        %v7956 = vunpack.c.l.bf16 %v7915
        %v7957 = vunpack.c.l.bf16 %v7916
        %v7958 = vunpack.c.l.bf16 %v7917
        %v7959 = vunpack.c.l.bf16 %v7918
        %v7960 = vunpack.c.l.bf16 %v7919
        %v7961 = vunpack.c.l.bf16 %v7920
        %v7962 = vunpack.c.l.bf16 %v7921
        %v7963 = vunpack.c.l.bf16 %v7922
        %v7964 = vunpack.c.l.bf16 %v7923
        %v7965 = vunpack.c.l.bf16 %v7924
        %v7966 = vunpack.c.l.bf16 %v7925
        %v7967 = vunpack.c.l.bf16 %v7926
        %v7968 = vunpack.c.l.bf16 %v7927
        %v7969 = vunpack.c.l.bf16 %v7928
        %v7970 = vunpack.c.l.bf16 %v7929
        %v7971 = vunpack.c.l.bf16 %v7930
        %v7972 = vunpack.c.l.bf16 %v7931
        %v7973 = vunpack.c.l.bf16 %v7932
        %v7974 = vunpack.c.l.bf16 %v7933
        %v7975 = vunpack.c.l.bf16 %v7934
        %v7976 = vunpack.c.l.bf16 %v7935
        %v7977 = vunpack.c.l.bf16 %v7936
        %v7978 = vunpack.c.l.bf16 %v7937
        %v7979 = vld [vmem:[%s6] sm:$0x1]
        %v7981 = vperm.slane %v7979, 0
        %v7983 = vmul.f32 %v7857, %v7981
        %v7984 = vmul.f32 %v7858, %v7981
        %v7985 = vmul.f32 %v7859, %v7981
        %v7986 = vmul.f32 %v7860, %v7981
        %v7987 = vmul.f32 %v7861, %v7981
        %v7988 = vmul.f32 %v7862, %v7981
        %v7989 = vmul.f32 %v7863, %v7981
        %v7990 = vmul.f32 %v7864, %v7981
        %v7991 = vmul.f32 %v7865, %v7981
        %v7992 = vmul.f32 %v7866, %v7981
        %v7993 = vmul.f32 %v7867, %v7981
        %v7994 = vmul.f32 %v7868, %v7981
        %v7995 = vmul.f32 %v7869, %v7981
        %v7996 = vmul.f32 %v7870, %v7981
        %v7997 = vmul.f32 %v7871, %v7981
        %v7998 = vmul.f32 %v7872, %v7981
        %v7999 = vmul.f32 %v7873, %v7981
        %v8000 = vmul.f32 %v7874, %v7981
        %v8001 = vmul.f32 %v7875, %v7981
        %v8002 = vmul.f32 %v7876, %v7981
        %v8003 = vmul.f32 %v7877, %v7981
        %v8004 = vmul.f32 %v7878, %v7981
        %v8005 = vmul.f32 %v7879, %v7981
        %v8006 = vmul.f32 %v7880, %v7981
        %v8007 = vmul.f32 %v7881, %v7981
        %v8008 = vmul.f32 %v7882, %v7981
        %v8009 = vmul.f32 %v7883, %v7981
        %v8010 = vmul.f32 %v7884, %v7981
        %v8011 = vmul.f32 %v7885, %v7981
        %v8012 = vmul.f32 %v7886, %v7981
        %v8013 = vmul.f32 %v7887, %v7981
        %v8014 = vmul.f32 %v7888, %v7981
        %v8015 = vmul.f32 %v7889, %v7981
        %v8016 = vmul.f32 %v7890, %v7981
        %v8017 = vmul.f32 %v7891, %v7981
        %v8018 = vmul.f32 %v7892, %v7981
        %v8019 = vmul.f32 %v7893, %v7981
        %v8020 = vmul.f32 %v7894, %v7981
        %v8021 = vmul.f32 %v7895, %v7981
        %v8022 = vmul.f32 %v7896, %v7981
        %v8023 = vld [vmem:[%s7] sm:$0x1]
        %v8025 = vperm.slane %v8023, 0
        %v8027 = vadd.f32 %v7983, %v8025
        %v8028 = vadd.f32 %v7984, %v8025
        %v8029 = vadd.f32 %v7985, %v8025
        %v8030 = vadd.f32 %v7986, %v8025
        %v8031 = vadd.f32 %v7987, %v8025
        %v8032 = vadd.f32 %v7988, %v8025
        %v8033 = vadd.f32 %v7989, %v8025
        %v8034 = vadd.f32 %v7990, %v8025
        %v8035 = vadd.f32 %v7991, %v8025
        %v8036 = vadd.f32 %v7992, %v8025
        %v8037 = vadd.f32 %v7993, %v8025
        %v8038 = vadd.f32 %v7994, %v8025
        %v8039 = vadd.f32 %v7995, %v8025
        %v8040 = vadd.f32 %v7996, %v8025
        %v8041 = vadd.f32 %v7997, %v8025
        %v8042 = vadd.f32 %v7998, %v8025
        %v8043 = vadd.f32 %v7999, %v8025
        %v8044 = vadd.f32 %v8000, %v8025
        %v8045 = vadd.f32 %v8001, %v8025
        %v8046 = vadd.f32 %v8002, %v8025
        %v8047 = vadd.f32 %v8003, %v8025
        %v8048 = vadd.f32 %v8004, %v8025
        %v8049 = vadd.f32 %v8005, %v8025
        %v8050 = vadd.f32 %v8006, %v8025
        %v8051 = vadd.f32 %v8007, %v8025
        %v8052 = vadd.f32 %v8008, %v8025
        %v8053 = vadd.f32 %v8009, %v8025
        %v8054 = vadd.f32 %v8010, %v8025
        %v8055 = vadd.f32 %v8011, %v8025
        %v8056 = vadd.f32 %v8012, %v8025
        %v8057 = vadd.f32 %v8013, %v8025
        %v8058 = vadd.f32 %v8014, %v8025
        %v8059 = vadd.f32 %v8015, %v8025
        %v8060 = vadd.f32 %v8016, %v8025
        %v8061 = vadd.f32 %v8017, %v8025
        %v8062 = vadd.f32 %v8018, %v8025
        %v8063 = vadd.f32 %v8019, %v8025
        %v8064 = vadd.f32 %v8020, %v8025
        %v8065 = vadd.f32 %v8021, %v8025
        %v8066 = vadd.f32 %v8022, %v8025
        %vm8108 = vcmask 1045504
        %v8109 = vrot.slane %v7938, 2
        %v8110 = vrot.slane %v7939, 2
        %v8111 = vsel %vm8108, %v8109, %v8110
        %v8112 = vrot.slane %v7940, 2
        %v8113 = vsel %vm8108, %v8110, %v8112
        %v8114 = vrot.slane %v7941, 2
        %v8115 = vsel %vm8108, %v8112, %v8114
        %v8116 = vrot.slane %v7942, 2
        %v8117 = vsel %vm8108, %v8114, %v8116
        %v8118 = vrot.slane %v7943, 2
        %v8119 = vsel %vm8108, %v8116, %v8118
        %v8120 = vrot.slane %v7944, 2
        %v8121 = vsel %vm8108, %v8118, %v8120
        %v8122 = vrot.slane %v7945, 2
        %v8123 = vsel %vm8108, %v8120, %v8122
        %v8124 = vrot.slane %v7946, 2
        %v8125 = vsel %vm8108, %v8122, %v8124
        %v8126 = vrot.slane %v7947, 2
        %v8127 = vsel %vm8108, %v8124, %v8126
        %v8128 = vrot.slane %v7948, 2
        %v8129 = vsel %vm8108, %v8126, %v8128
        %v8130 = vrot.slane %v7949, 2
        %v8131 = vsel %vm8108, %v8128, %v8130
        %v8132 = vrot.slane %v7950, 2
        %v8133 = vsel %vm8108, %v8130, %v8132
        %v8134 = vrot.slane %v7951, 2
        %v8135 = vsel %vm8108, %v8132, %v8134
        %v8136 = vrot.slane %v7952, 2
        %v8137 = vsel %vm8108, %v8134, %v8136
        %v8138 = vrot.slane %v7953, 2
        %v8139 = vsel %vm8108, %v8136, %v8138
        %v8140 = vrot.slane %v7954, 2
        %v8141 = vsel %vm8108, %v8138, %v8140
        %v8142 = vrot.slane %v7955, 2
        %v8143 = vsel %vm8108, %v8140, %v8142
        %v8144 = vrot.slane %v7956, 2
        %v8145 = vsel %vm8108, %v8142, %v8144
        %v8146 = vrot.slane %v7957, 2
        %v8147 = vsel %vm8108, %v8144, %v8146
        %v8148 = vrot.slane %v7958, 2
        %v8149 = vsel %vm8108, %v8146, %v8148
        %v8150 = vrot.slane %v7959, 2
        %v8151 = vsel %vm8108, %v8148, %v8150
        %v8152 = vrot.slane %v7960, 2
        %v8153 = vsel %vm8108, %v8150, %v8152
        %v8154 = vrot.slane %v7961, 2
        %v8155 = vsel %vm8108, %v8152, %v8154
        %v8156 = vrot.slane %v7962, 2
        %v8157 = vsel %vm8108, %v8154, %v8156
        %v8158 = vrot.slane %v7963, 2
        %v8159 = vsel %vm8108, %v8156, %v8158
        %v8160 = vrot.slane %v7964, 2
        %v8161 = vsel %vm8108, %v8158, %v8160
        %v8162 = vrot.slane %v7965, 2
        %v8163 = vsel %vm8108, %v8160, %v8162
        %v8164 = vrot.slane %v7966, 2
        %v8165 = vsel %vm8108, %v8162, %v8164
        %v8166 = vrot.slane %v7967, 2
        %v8167 = vsel %vm8108, %v8164, %v8166
        %v8168 = vrot.slane %v7968, 2
        %v8169 = vsel %vm8108, %v8166, %v8168
        %v8170 = vrot.slane %v7969, 2
        %v8171 = vsel %vm8108, %v8168, %v8170
        %v8172 = vrot.slane %v7970, 2
        %v8173 = vsel %vm8108, %v8170, %v8172
        %v8174 = vrot.slane %v7971, 2
        %v8175 = vsel %vm8108, %v8172, %v8174
        %v8176 = vrot.slane %v7972, 2
        %v8177 = vsel %vm8108, %v8174, %v8176
        %v8178 = vrot.slane %v7973, 2
        %v8179 = vsel %vm8108, %v8176, %v8178
        %v8180 = vrot.slane %v7974, 2
        %v8181 = vsel %vm8108, %v8178, %v8180
        %v8182 = vrot.slane %v7975, 2
        %v8183 = vsel %vm8108, %v8180, %v8182
        %v8184 = vrot.slane %v7976, 2
        %v8185 = vsel %vm8108, %v8182, %v8184
        %v8186 = vrot.slane %v7977, 2
        %v8187 = vsel %vm8108, %v8184, %v8186
        %v8188 = vrot.slane %v7978, 2
        %v8189 = vsel %vm8108, %v8186, %v8188
        %v8230 = vadd.f32 %v8027, %v8111
        %v8231 = vadd.f32 %v8028, %v8113
        %v8232 = vadd.f32 %v8029, %v8115
        %v8233 = vadd.f32 %v8030, %v8117
        %v8234 = vadd.f32 %v8031, %v8119
        %v8235 = vadd.f32 %v8032, %v8121
        %v8236 = vadd.f32 %v8033, %v8123
        %v8237 = vadd.f32 %v8034, %v8125
        %v8238 = vadd.f32 %v8035, %v8127
        %v8239 = vadd.f32 %v8036, %v8129
        %v8240 = vadd.f32 %v8037, %v8131
        %v8241 = vadd.f32 %v8038, %v8133
        %v8242 = vadd.f32 %v8039, %v8135
        %v8243 = vadd.f32 %v8040, %v8137
        %v8244 = vadd.f32 %v8041, %v8139
        %v8245 = vadd.f32 %v8042, %v8141
        %v8246 = vadd.f32 %v8043, %v8143
        %v8247 = vadd.f32 %v8044, %v8145
        %v8248 = vadd.f32 %v8045, %v8147
        %v8249 = vadd.f32 %v8046, %v8149
        %v8250 = vadd.f32 %v8047, %v8151
        %v8251 = vadd.f32 %v8048, %v8153
        %v8252 = vadd.f32 %v8049, %v8155
        %v8253 = vadd.f32 %v8050, %v8157
        %v8254 = vadd.f32 %v8051, %v8159
        %v8255 = vadd.f32 %v8052, %v8161
        %v8256 = vadd.f32 %v8053, %v8163
        %v8257 = vadd.f32 %v8054, %v8165
        %v8258 = vadd.f32 %v8055, %v8167
        %v8259 = vadd.f32 %v8056, %v8169
        %v8260 = vadd.f32 %v8057, %v8171
        %v8261 = vadd.f32 %v8058, %v8173
        %v8262 = vadd.f32 %v8059, %v8175
        %v8263 = vadd.f32 %v8060, %v8177
        %v8264 = vadd.f32 %v8061, %v8179
        %v8265 = vadd.f32 %v8062, %v8181
        %v8266 = vadd.f32 %v8063, %v8183
        %v8267 = vadd.f32 %v8064, %v8185
        %v8268 = vadd.f32 %v8065, %v8187
        %v8269 = vadd.f32 %v8066, %v8189
        %v8270 = vmax.f32 %v8230, 0.0
        %v8271 = vmax.f32 %v8231, 0.0
        %v8272 = vmax.f32 %v8232, 0.0
        %v8273 = vmax.f32 %v8233, 0.0
        %v8274 = vmax.f32 %v8234, 0.0
        %v8275 = vmax.f32 %v8235, 0.0
        %v8276 = vmax.f32 %v8236, 0.0
        %v8277 = vmax.f32 %v8237, 0.0
        %v8278 = vmax.f32 %v8238, 0.0
        %v8279 = vmax.f32 %v8239, 0.0
        %v8280 = vmax.f32 %v8240, 0.0
        %v8281 = vmax.f32 %v8241, 0.0
        %v8282 = vmax.f32 %v8242, 0.0
        %v8283 = vmax.f32 %v8243, 0.0
        %v8284 = vmax.f32 %v8244, 0.0
        %v8285 = vmax.f32 %v8245, 0.0
        %v8286 = vmax.f32 %v8246, 0.0
        %v8287 = vmax.f32 %v8247, 0.0
        %v8288 = vmax.f32 %v8248, 0.0
        %v8289 = vmax.f32 %v8249, 0.0
        %v8290 = vmax.f32 %v8250, 0.0
        %v8291 = vmax.f32 %v8251, 0.0
        %v8292 = vmax.f32 %v8252, 0.0
        %v8293 = vmax.f32 %v8253, 0.0
        %v8294 = vmax.f32 %v8254, 0.0
        %v8295 = vmax.f32 %v8255, 0.0
        %v8296 = vmax.f32 %v8256, 0.0
        %v8297 = vmax.f32 %v8257, 0.0
        %v8298 = vmax.f32 %v8258, 0.0
        %v8299 = vmax.f32 %v8259, 0.0
        %v8300 = vmax.f32 %v8260, 0.0
        %v8301 = vmax.f32 %v8261, 0.0
        %v8302 = vmax.f32 %v8262, 0.0
        %v8303 = vmax.f32 %v8263, 0.0
        %v8304 = vmax.f32 %v8264, 0.0
        %v8305 = vmax.f32 %v8265, 0.0
        %v8306 = vmax.f32 %v8266, 0.0
        %v8307 = vmax.f32 %v8267, 0.0
        %v8308 = vmax.f32 %v8268, 0.0
        %v8309 = vmax.f32 %v8269, 0.0
        %8310 = vst [vmem:[%s358] sm:$0xff] %v8270
        %8311 = vst [vmem:[%s358 + $0x8] sm:$0xff] %v8271
        %8312 = vst [vmem:[%s358 + $0x10] sm:$0xff] %v8272
        %8313 = vst [vmem:[%s358 + $0x18] sm:$0xff] %v8273
        %8314 = vst [vmem:[%s358 + $0x20] sm:$0xff] %v8274
        %8315 = vst [vmem:[%s358 + $0x28] sm:$0xff] %v8275
        %8316 = vst [vmem:[%s358 + $0x30] sm:$0xff] %v8276
        %8317 = vst [vmem:[%s358 + $0x38] sm:$0xff] %v8277
        %8318 = vst [vmem:[%s358 + $0x40] sm:$0xff] %v8278
        %8319 = vst [vmem:[%s358 + $0x48] sm:$0xff] %v8279
        %8320 = vst [vmem:[%s358 + $0x50] sm:$0xff] %v8280
        %8321 = vst [vmem:[%s358 + $0x58] sm:$0xff] %v8281
        %8322 = vst [vmem:[%s358 + $0x60] sm:$0xff] %v8282
        %8323 = vst [vmem:[%s358 + $0x68] sm:$0xff] %v8283
        %8324 = vst [vmem:[%s358 + $0x70] sm:$0xff] %v8284
        %8325 = vst [vmem:[%s358 + $0x78] sm:$0xff] %v8285
        %8326 = vst [vmem:[%s358 + $0x80] sm:$0xff] %v8286
        %8327 = vst [vmem:[%s358 + $0x88] sm:$0xff] %v8287
        %8328 = vst [vmem:[%s358 + $0x90] sm:$0xff] %v8288
        %8329 = vst [vmem:[%s358 + $0x98] sm:$0xff] %v8289
        %8330 = vst [vmem:[%s358 + $0xa0] sm:$0xff] %v8290
        %8331 = vst [vmem:[%s358 + $0xa8] sm:$0xff] %v8291
        %8332 = vst [vmem:[%s358 + $0xb0] sm:$0xff] %v8292
        %8333 = vst [vmem:[%s358 + $0xb8] sm:$0xff] %v8293
        %8334 = vst [vmem:[%s358 + $0xc0] sm:$0xff] %v8294
        %8335 = vst [vmem:[%s358 + $0xc8] sm:$0xff] %v8295
        %8336 = vst [vmem:[%s358 + $0xd0] sm:$0xff] %v8296
        %8337 = vst [vmem:[%s358 + $0xd8] sm:$0xff] %v8297
        %8338 = vst [vmem:[%s358 + $0xe0] sm:$0xff] %v8298
        %8339 = vst [vmem:[%s358 + $0xe8] sm:$0xff] %v8299
        %8340 = vst [vmem:[%s358 + $0xf0] sm:$0xff] %v8300
        %8341 = vst [vmem:[%s358 + $0xf8] sm:$0xff] %v8301
        %8342 = vst [vmem:[%s358 + $0x100] sm:$0xff] %v8302
        %8343 = vst [vmem:[%s358 + $0x108] sm:$0xff] %v8303
        %8344 = vst [vmem:[%s358 + $0x110] sm:$0xff] %v8304
        %8345 = vst [vmem:[%s358 + $0x118] sm:$0xff] %v8305
        %8346 = vst [vmem:[%s358 + $0x120] sm:$0xff] %v8306
        %8347 = vst [vmem:[%s358 + $0x128] sm:$0xff] %v8307
        %8348 = vst [vmem:[%s358 + $0x130] sm:$0xff] %v8308
        %8349 = vst [vmem:[%s358 + $0x138] sm:$0xff] %v8309
        %s8350 = sand.u32 %s207, 1
        %s8351 = scalar_lea.sflag [#allocation5], %s8350
        %s8352 = sand.u32 %s207, 1
        %s8353 = smul.addr %s8352, 320
        %s8354 = scalar_lea.vmem [#allocation9], %s8353
        // Predicated region
        $region65: #{tpu_custom_call.1} parent=51 // pred_check
          %p8355 = pneg %p217
        $region66: #{tpu_custom_call.1} parent=51 // pred_check_branch
          %8357 = sbr.rel (%p8355) target = $region68
        $region67: #{tpu_custom_call.1} parent=51 // pred_region
          %8359 = vsyncadd %s8351, 0
          %s8360 = smul.addr %s26, 40
          %s8361 = smul.addr %s8360, 8
          %s8362 = scalar_lea.hbm %s8, %s8361
          %s8363 = sshll.u32 %s8354, 4
          %s8364 = int_to_ptr.vmem [resolvable:$true] %s8363
          %s8365 = sshll.u32 %s8362, 4
          %s8366 = int_to_ptr.hbm [resolvable:$true] %s8365
          %8371 = dma.vmem_to_hbm [thread:$0]  %s8364, 5120, %s8366, %s8351, 128, 128, 8
        $region68: #{tpu_custom_call.1} parent=51 // pred_fallthru
          _
      $region52: #{tpu_custom_call.1} parent=5 // pred_fallthru
        _
      %p8372 = scmp.le.s32.totalorder 2, %s21
      // Predicated region
      $region69: #{tpu_custom_call.1} parent=5 // pred_check
        %p8373 = pneg %p8372
      $region70: #{tpu_custom_call.1} parent=5 // pred_check_branch
        %8375 = sbr.rel (%p8373) target = $region72
      $region71: #{tpu_custom_call.1} parent=5 // pred_region
        %s8376 = ssub.s32 %s21, 2
        // Predicated region
        $region73: #{tpu_custom_call.1} parent=71 // pred_check
          %p8377 = pneg %p223
        $region74: #{tpu_custom_call.1} parent=71 // pred_check_branch
          %8379 = sbr.rel (%p8377) target = $region76
        $region75: #{tpu_custom_call.1} parent=71 // pred_region
          %s8380 = sand.u32 %s208, 1
          %s8381 = scalar_lea.sflag [#allocation5], %s8380
          %s8382 = sand.u32 %s208, 1
          %s8383 = smul.addr %s8382, 320
          %s8384 = scalar_lea.vmem [#allocation9], %s8383
          %8386 = dma.done %s8381, 5120
        $region76: #{tpu_custom_call.1} parent=71 // pred_fallthru
          _
      $region72: #{tpu_custom_call.1} parent=5 // pred_fallthru
        _
    $region6: #{tpu_custom_call.1} parent=1 // loop_footer
      %s25 = sadd.s32 1, %s21
    $region7: #{tpu_custom_call.1} parent=1 // loop_footer_branch
      %20 = sbr.rel target = $region3
    $region8: #{tpu_custom_call.1} parent=1 // loop_exit
      _
    %8387 = vsyncpa [#allocation4], 1
    %s8388 = scalar_lea.sflag [#allocation4], 1
    %8389 = vsyncpa %s8388, 1
    %8390 = vsyncpa [#allocation7], 1
    %8391 = vsyncpa [#allocation5], 1
    %s8392 = scalar_lea.sflag [#allocation5], 1
    %8393 = vsyncpa %s8392, 1

</llo_original>
